<compile_context>
chip_gen: v6e
topology: v6e:2x2x1
jax: 0.10.0
libtpu: 0.0.40
codegen_flags: <defaults>
</compile_context>

<pallas_src>
import jax
import jax.numpy as jnp
import numpy as np
from jax.experimental import pallas as pl
from jax.experimental.pallas import tpu as pltpu

EMB_DIM = 300
EPAD = 384                  # embedding dim padded to 3*128 lanes (aligned K-fold concat)
NUM_FILTERS = 100
OUT_DIM = 6
KSIZES = (3, 4, 4)          # kernel_sizes[0], kernel_sizes[1], kernel_sizes[1]
KMAX = max(KSIZES)          # 4 taps cover all branches (branch 0's tap 3 weight is zero)
FPAD = 128                  # filters padded to a full lane tile per branch
F3 = 3 * FPAD               # 384: fused, lane-dense conv-output width
OUT_PAD = 128               # logits padded to a full lane tile
BB = 32                     # default batch elements per grid step (BB*L MXU LHS rows)
MAX_FUSED_VOCAB = 512       # padded-vocab limit for the in-kernel one-hot gather path
NEG = -1e30                 # "minus infinity" used to mask via bias + ReLU / softmax


# ----------------------------------------------------------------------------
# Shared kernel tail: bias(+row mask) -> ReLU -> MaxPool -> FC -> softmax
# ----------------------------------------------------------------------------
def _finish_block(acc, bpos_ref, fcw_ref, fcb_ref, res_ref, feat_ref):
    bb, f3 = feat_ref.shape
    L = acc.shape[0] // bb
    # bpos carries the conv bias for valid rows and -1e30 for rows that would
    # read past the sample (or padded filter lanes); ReLU turns those into 0,
    # which is safe for the max-pool because all valid post-ReLU values are >= 0.
    y = jnp.maximum(acc.reshape(bb, L, f3) + bpos_ref[...][None], 0.0)
    pooled = jnp.max(y, axis=1)                                   # (bb, F3) f32
    feat_ref[...] = pooled

    # TODO(synk): F.dropout(p=0.5) omitted — eval-mode (identity) semantics.
    logits = (jnp.dot(pooled.astype(jnp.bfloat16), fcw_ref[...],
                      preferred_element_type=jnp.float32)
              + fcb_ref[...])                                     # (bb, OUT_PAD)
    # Padded logit lanes carry a -1e30 bias baked into fcb -> exp() == 0,
    # so no in-kernel iota/where mask is needed.
    mmax = jnp.max(logits, axis=-1, keepdims=True)
    e = jnp.exp(logits - mmax)
    denom = jnp.sum(e, axis=-1, keepdims=True)
    res_ref[...] = e * pl.reciprocal(denom, approx=True)


# ----------------------------------------------------------------------------
# Path A (small vocab): fused embedding-gather + conv via one-hot matmuls
# against precomputed per-tap tables T[dk] = emb_table @ Wconv[dk].
# Token ids are pre-shifted per tap in the wrapper, so no in-kernel rolls.
# ----------------------------------------------------------------------------
def _cnn_text_kernel_fused_gather(ids_ref, t_ref, bpos_ref, fcw_ref, fcb_ref,
                                  res_ref, feat_ref):
    rows = ids_ref.shape[0]                       # BB*L
    vpad = t_ref.shape[1]
    viota = jax.lax.broadcasted_iota(jnp.int32, (rows, vpad), 1)
    acc = None
    for dk in range(KMAX):
        # exact one-hot (0/1) in bf16 -> gather-by-matmul on the MXU
        onehot = jnp.where(ids_ref[:, dk:dk + 1] == viota, 1.0, 0.0
                           ).astype(jnp.bfloat16)                 # (rows, vpad)
        contrib = jnp.dot(onehot, t_ref[dk],
                          preferred_element_type=jnp.float32)     # (rows, F3)
        acc = contrib if acc is None else acc + contrib
    _finish_block(acc, bpos_ref, fcw_ref, fcb_ref, res_ref, feat_ref)


# ----------------------------------------------------------------------------
# Path B (generic): pre-gathered activations; conv taps folded into K so the
# whole conv is ONE (rows, 4*EPAD) @ (4*EPAD, F3) bf16 matmul.
# ----------------------------------------------------------------------------
def _cnn_text_kernel_dense(x_ref, w_ref, bpos_ref, fcw_ref, fcb_ref,
                           res_ref, feat_ref):
    rows = x_ref.shape[0]                         # BB*L
    x16 = x_ref[...]                              # (rows, EPAD) bf16
    x32 = x16.astype(jnp.float32)                 # f32 for the sublane roll
    parts = [x16]
    for dk in range(1, KMAX):
        # lhs_dk[r] = x[r + dk]; wrapped rows only land in masked tail rows.
        parts.append(pltpu.roll(x32, rows - dk, axis=0).astype(jnp.bfloat16))
    lhs = jnp.concatenate(parts, axis=-1)         # (rows, KMAX*EPAD) bf16, 128-aligned
    acc = jnp.dot(lhs, w_ref[...], preferred_element_type=jnp.float32)  # (rows, F3)
    _finish_block(acc, bpos_ref, fcw_ref, fcb_ref, res_ref, feat_ref)


# ----------------------------------------------------------------------------
# Wrapper
# ----------------------------------------------------------------------------
def cnn_text_forward(tokens, emb_table, params, *, block_batch=BB,
                     gather_in_kernel=None):
    """tokens: (B, L) int32; emb_table: (V, 300);
    params = ((w1,b1),(w2,b2),(w3,b3),(fcW,fcb)) in PyTorch layouts."""
    (w1, b1), (w2, b2), (w3, b3), (fcw, fcb) = params
    B, L = tokens.shape
    V, E = emb_table.shape
    assert E == EMB_DIM
    assert block_batch > 0 and block_batch % 8 == 0
    BBc = block_batch

    vpad = max(128, -(-V // 128) * 128)
    if gather_in_kernel is None:
        gather_in_kernel = vpad <= MAX_FUSED_VOCAB

    branches = ((w1, b1, KSIZES[0]), (w2, b2, KSIZES[1]), (w3, b3, KSIZES[2]))

    # Per-tap (E, F3) conv weight slabs + position bias (bias for valid rows,
    # -1e30 for tail rows / padded filter lanes -> masked by ReLU in-kernel).
    wmats = np.zeros((KMAX, EMB_DIM, F3), np.float32)
    b_pos = np.full((L, F3), NEG, np.float32)
    for c, (w, b, k) in enumerate(branches):
        w_np = np.asarray(w, np.float32)                          # (F, E, k)
        for dk in range(k):
            wmats[dk, :, c * FPAD:c * FPAD + NUM_FILTERS] = w_np[:, :, dk].T
        valid = L - k + 1
        if valid > 0:
            b_pos[:valid, c * FPAD:c * FPAD + NUM_FILTERS] = \
                np.asarray(b, np.float32)[None, :]
        # TODO(synk): if L < k PyTorch would raise; here the branch pools to 0.

    # FC packing: pooled lane c*128+f  <->  torch feature index f*3+c
    # (torch.cat([y1,y2,y3], dim=2).view(B, -1)).  Padded logit lanes get a
    # -1e30 bias so no in-kernel mask is needed before the softmax.
    fcw_np = np.asarray(fcw, np.float32)                          # (OUT, 300)
    fcw_k = np.zeros((F3, OUT_PAD), np.float32)
    for c in range(3):
        fcw_k[c * FPAD:c * FPAD + NUM_FILTERS, :OUT_DIM] = fcw_np.T[c::3, :]
    fcb_k = np.full((1, OUT_PAD), NEG, np.float32)
    fcb_k[0, :OUT_DIM] = np.asarray(fcb, np.float32)

    # Batch-block padding; keep the grid even and >= 2 so the "parallel" batch
    # axis can shard across v7x's two TensorCores (costs at most one block).
    nblk = max(2, -(-B // BBc))
    if nblk % 2:
        nblk += 1
    Bp = nblk * BBc
    tokens_p = jnp.pad(tokens.astype(jnp.int32), ((0, Bp - B), (0, 0)))

    common_specs = [
        pl.BlockSpec((L, F3), lambda i: (0, 0)),          # position bias (resident)
        pl.BlockSpec((F3, OUT_PAD), lambda i: (0, 0)),    # FC weight (resident)
        pl.BlockSpec((1, OUT_PAD), lambda i: (0, 0)),     # FC bias   (resident)
    ]
    common_args = (jnp.asarray(b_pos),
                   jnp.asarray(fcw_k, jnp.bfloat16),      # bf16 MXU operand
                   jnp.asarray(fcb_k))
    out_shape = (jax.ShapeDtypeStruct((Bp, OUT_PAD), jnp.float32),
                 jax.ShapeDtypeStruct((Bp, F3), jnp.float32))
    out_specs = [pl.BlockSpec((BBc, OUT_PAD), lambda i: (i, 0)),
                 pl.BlockSpec((BBc, F3), lambda i: (i, 0))]
    cparams = pltpu.CompilerParams(dimension_semantics=("parallel",))
    # TODO(synk): on v7x with much larger blocks, set vmem_limit_bytes /
    # pl.Buffered(1) on the constant operands; not needed at these sizes.

    if gather_in_kernel:
        # --- small-vocab path: no (B*L, 300) activation ever hits HBM ---
        emb_np = np.asarray(emb_table, np.float32)
        t_all = np.zeros((KMAX, vpad, F3), np.float32)
        for dk in range(KMAX):
            t_all[dk, :V, :] = emb_np @ wmats[dk]                 # (V, F3)
        ids = tokens_p.reshape(-1)                                # (Bp*L,)
        # Pre-shift ids per tap; rows that pick up the next sample are exactly
        # the bias-masked tail rows, so the wrap is harmless.
        ids_shift = jnp.stack([jnp.roll(ids, -dk) for dk in range(KMAX)],
                              axis=1)                             # (Bp*L, KMAX)
        res_p, feat_p = pl.pallas_call(
            _cnn_text_kernel_fused_gather,
            out_shape=out_shape,
            grid_spec=pltpu.PrefetchScalarGridSpec(
                num_scalar_prefetch=0,
                grid=(nblk,),
                in_specs=[pl.BlockSpec((BBc * L, KMAX), lambda i: (i, 0)),
                          pl.BlockSpec((KMAX, vpad, F3), lambda i: (0, 0, 0))]
                         + common_specs,
                out_specs=out_specs),
            compiler_params=cparams,
        )(ids_shift, jnp.asarray(t_all, jnp.bfloat16), *common_args)
    else:
        # --- generic path: XLA gather in the wrapper, K-folded conv in-kernel ---
        # TODO(synk): for huge vocabularies a DMA-gather of only the needed rows
        # would avoid this HBM round trip as well.
        w_fold = np.zeros((KMAX * EPAD, F3), np.float32)
        for dk in range(KMAX):
            w_fold[dk * EPAD:dk * EPAD + EMB_DIM, :] = wmats[dk]
        x = jnp.take(emb_table, tokens_p, axis=0).astype(jnp.bfloat16)  # (Bp, L, E)
        x = jnp.pad(x, ((0, 0), (0, 0), (0, EPAD - EMB_DIM)))           # E -> 384
        x_flat = x.reshape(Bp * L, EPAD)
        res_p, feat_p = pl.pallas_call(
            _cnn_text_kernel_dense,
            out_shape=out_shape,
            grid_spec=pltpu.PrefetchScalarGridSpec(
                num_scalar_prefetch=0,
                grid=(nblk,),
                in_specs=[pl.BlockSpec((BBc * L, EPAD), lambda i: (i, 0)),
                          pl.BlockSpec((KMAX * EPAD, F3), lambda i: (0, 0))]
                         + common_specs,
                out_specs=out_specs),
            compiler_params=cparams,
        )(x_flat, jnp.asarray(w_fold, jnp.bfloat16), *common_args)

    res = res_p[:B, :OUT_DIM]
    pooled = feat_p[:B]
    # Interleave to match torch.cat([y1,y2,y3], dim=2).view(B, -1): index f*3 + c.
    features = jnp.stack(
        [pooled[:, c * FPAD:c * FPAD + NUM_FILTERS] for c in range(3)],
        axis=2).reshape(B, 3 * NUM_FILTERS)
    return res, features


# ----------------------------------------------------------------------------
# Pure-JAX f32 reference matching the PyTorch forward (eval mode)
# ----------------------------------------------------------------------------
def reference_forward(tokens, emb_table, params):
    (w1, b1), (w2, b2), (w3, b3), (fcw, fcb) = params
    x = jnp.take(emb_table, tokens, axis=0).astype(jnp.float32)       # (B, L, E)
    x = jnp.transpose(x, (0, 2, 1))                                   # (B, E, L)

    def branch(w, b):
        y = jax.lax.conv_general_dilated(
            x, w, window_strides=(1,), padding='VALID',
            dimension_numbers=('NCH', 'OIH', 'NCH'))
        y = y + b[None, :, None]
        y = jnp.maximum(y, 0.0)
        return jnp.max(y, axis=2)                                     # (B, F)

    y1, y2, y3 = branch(w1, b1), branch(w2, b2), branch(w3, b3)
    feat = jnp.stack([y1, y2, y3], axis=2).reshape(x.shape[0], -1)    # (B, 3F)
    logits = feat @ fcw.T + fcb
    return jax.nn.softmax(logits, axis=1), feat


if __name__ == "__main__":
    vocab_size = 50
    sentence_len = 16
    batch = 2

    key = jax.random.PRNGKey(0)
    keys = jax.random.split(key, 10)

    emb_table = jax.random.normal(keys[0], (vocab_size, EMB_DIM), jnp.float32) * 0.1
    w1 = jax.random.normal(keys[1], (NUM_FILTERS, EMB_DIM, KSIZES[0]), jnp.float32) * 0.05
    b1 = jax.random.normal(keys[2], (NUM_FILTERS,), jnp.float32) * 0.01
    w2 = jax.random.normal(keys[3], (NUM_FILTERS, EMB_DIM, KSIZES[1]), jnp.float32) * 0.05
    b2 = jax.random.normal(keys[4], (NUM_FILTERS,), jnp.float32) * 0.01
    w3 = jax.random.normal(keys[5], (NUM_FILTERS, EMB_DIM, KSIZES[2]), jnp.float32) * 0.05
    b3 = jax.random.normal(keys[6], (NUM_FILTERS,), jnp.float32) * 0.01
    fcw = jax.random.normal(keys[7], (OUT_DIM, NUM_FILTERS * 3), jnp.float32) * 0.05
    fcb = jax.random.normal(keys[8], (OUT_DIM,), jnp.float32) * 0.01
    params = ((w1, b1), (w2, b2), (w3, b3), (fcw, fcb))

    tokens = jax.random.randint(keys[9], (batch, sentence_len), 0, vocab_size, jnp.int32)

    # Path A: in-kernel one-hot gather (auto-selected for this small vocab).
    res_a, feat_a = cnn_text_forward(tokens, emb_table, params)
    # Path B: generic wrapper-gather path with the K-folded conv matmul.
    res_b, feat_b = cnn_text_forward(tokens, emb_table, params, gather_in_kernel=False)
    jax.block_until_ready((res_a, feat_a, res_b, feat_b))

    res_want, feat_want = reference_forward(tokens, emb_table, params)
    # Tolerances account for bf16 MXU operands (f32 accumulation) + approx reciprocal.
    for res, feat in ((res_a, feat_a), (res_b, feat_b)):
        np.testing.assert_allclose(np.asarray(feat), np.asarray(feat_want),
                                   rtol=1e-2, atol=1e-2)
        np.testing.assert_allclose(np.asarray(res), np.asarray(res_want),
                                   rtol=1e-2, atol=6e-3)

    print("KERNEL_OK")
</pallas_src>

<mosaic_0001>
module attributes {stable_mosaic.version = 11 : i64} {
  func.func @_cnn_text_kernel_fused_gather(%arg0: i32, %arg1: memref<512x4xi32, #tpu.memory_space<vmem>>, %arg2: memref<4x128x384xbf16, #tpu.memory_space<vmem>>, %arg3: memref<16x384xf32, #tpu.memory_space<vmem>>, %arg4: memref<384x128xbf16, #tpu.memory_space<vmem>>, %arg5: memref<1x128xf32, #tpu.memory_space<vmem>>, %arg6: memref<32x128xf32, #tpu.memory_space<vmem>>, %arg7: memref<32x384xf32, #tpu.memory_space<vmem>>) attributes {dimension_semantics = [#tpu.dimension_semantics<parallel>], iteration_bounds = array<i64: 2>, scalar_prefetch = 0 : i64, scratch_operands = 0 : i64, tpu.core_type = #tpu.core_type<tc>, window_params = [{transform_indices = @transform_0, window_bounds = array<i64: 512, 4>}, {pipeline_mode = #tpu.pipeline_mode<synchronous>, transform_indices = @transform_1, window_bounds = array<i64: 4, 128, 384>}, {pipeline_mode = #tpu.pipeline_mode<synchronous>, transform_indices = @transform_2, window_bounds = array<i64: 16, 384>}, {pipeline_mode = #tpu.pipeline_mode<synchronous>, transform_indices = @transform_3, window_bounds = array<i64: 384, 128>}, {pipeline_mode = #tpu.pipeline_mode<synchronous>, transform_indices = @transform_4, window_bounds = array<i64: 1, 128>}, {transform_indices = @transform_5, window_bounds = array<i64: 32, 128>}, {transform_indices = @transform_6, window_bounds = array<i64: 32, 384>}]} {
    %0 = tpu.iota {dimensions = array<i32: 1>} : vector<512x128xi32>
    %c0 = arith.constant 0 : index
    %c0_0 = arith.constant 0 : index
    %1 = vector.load %arg1[%c0, %c0_0] : memref<512x4xi32, #tpu.memory_space<vmem>>, vector<512x1xi32>
    %2 = vector.broadcast %1 : vector<512x1xi32> to vector<512x128xi32>
    %3 = arith.cmpi eq, %2, %0 : vector<512x128xi32>
    %cst = arith.constant 1.000000e+00 : f32
    %cst_1 = arith.constant 0.000000e+00 : f32
    %4 = vector.broadcast %cst : f32 to vector<512x128xf32>
    %5 = vector.broadcast %cst_1 : f32 to vector<512x128xf32>
    %6 = arith.select %3, %4, %5 : vector<512x128xi1>, vector<512x128xf32>
    %7 = arith.truncf %6 : vector<512x128xf32> to vector<512x128xbf16>
    %c0_2 = arith.constant 0 : index
    %c0_3 = arith.constant 0 : index
    %c0_4 = arith.constant 0 : index
    %8 = vector.load %arg2[%c0_2, %c0_3, %c0_4] : memref<4x128x384xbf16, #tpu.memory_space<vmem>>, vector<1x128x384xbf16>
    %9 = vector.shape_cast %8 : vector<1x128x384xbf16> to vector<128x384xbf16>
    %cst_5 = arith.constant dense<0.000000e+00> : vector<512x384xf32>
    %10 = tpu.matmul %7, %9, %cst_5 {dimension_numbers = #tpu.dot_dimension_numbers<[1], [0], [0], [1], [0, 0, 1, 1], [], []>} : vector<512x128xbf16>, vector<128x384xbf16>, vector<512x384xf32> -> vector<512x384xf32>
    %c0_6 = arith.constant 0 : index
    %c1 = arith.constant 1 : index
    %11 = vector.load %arg1[%c0_6, %c1] : memref<512x4xi32, #tpu.memory_space<vmem>>, vector<512x1xi32>
    %12 = vector.broadcast %11 : vector<512x1xi32> to vector<512x128xi32>
    %13 = arith.cmpi eq, %12, %0 : vector<512x128xi32>
    %cst_7 = arith.constant 1.000000e+00 : f32
    %cst_8 = arith.constant 0.000000e+00 : f32
    %14 = vector.broadcast %cst_7 : f32 to vector<512x128xf32>
    %15 = vector.broadcast %cst_8 : f32 to vector<512x128xf32>
    %16 = arith.select %13, %14, %15 : vector<512x128xi1>, vector<512x128xf32>
    %17 = arith.truncf %16 : vector<512x128xf32> to vector<512x128xbf16>
    %c1_9 = arith.constant 1 : index
    %c0_10 = arith.constant 0 : index
    %c0_11 = arith.constant 0 : index
    %18 = vector.load %arg2[%c1_9, %c0_10, %c0_11] : memref<4x128x384xbf16, #tpu.memory_space<vmem>>, vector<1x128x384xbf16>
    %19 = vector.shape_cast %18 : vector<1x128x384xbf16> to vector<128x384xbf16>
    %cst_12 = arith.constant dense<0.000000e+00> : vector<512x384xf32>
    %20 = tpu.matmul %17, %19, %cst_12 {dimension_numbers = #tpu.dot_dimension_numbers<[1], [0], [0], [1], [0, 0, 1, 1], [], []>} : vector<512x128xbf16>, vector<128x384xbf16>, vector<512x384xf32> -> vector<512x384xf32>
    %21 = arith.addf %10, %20 : vector<512x384xf32>
    %c0_13 = arith.constant 0 : index
    %c2 = arith.constant 2 : index
    %22 = vector.load %arg1[%c0_13, %c2] : memref<512x4xi32, #tpu.memory_space<vmem>>, vector<512x1xi32>
    %23 = vector.broadcast %22 : vector<512x1xi32> to vector<512x128xi32>
    %24 = arith.cmpi eq, %23, %0 : vector<512x128xi32>
    %cst_14 = arith.constant 1.000000e+00 : f32
    %cst_15 = arith.constant 0.000000e+00 : f32
    %25 = vector.broadcast %cst_14 : f32 to vector<512x128xf32>
    %26 = vector.broadcast %cst_15 : f32 to vector<512x128xf32>
    %27 = arith.select %24, %25, %26 : vector<512x128xi1>, vector<512x128xf32>
    %28 = arith.truncf %27 : vector<512x128xf32> to vector<512x128xbf16>
    %c2_16 = arith.constant 2 : index
    %c0_17 = arith.constant 0 : index
    %c0_18 = arith.constant 0 : index
    %29 = vector.load %arg2[%c2_16, %c0_17, %c0_18] : memref<4x128x384xbf16, #tpu.memory_space<vmem>>, vector<1x128x384xbf16>
    %30 = vector.shape_cast %29 : vector<1x128x384xbf16> to vector<128x384xbf16>
    %cst_19 = arith.constant dense<0.000000e+00> : vector<512x384xf32>
    %31 = tpu.matmul %28, %30, %cst_19 {dimension_numbers = #tpu.dot_dimension_numbers<[1], [0], [0], [1], [0, 0, 1, 1], [], []>} : vector<512x128xbf16>, vector<128x384xbf16>, vector<512x384xf32> -> vector<512x384xf32>
    %32 = arith.addf %21, %31 : vector<512x384xf32>
    %c0_20 = arith.constant 0 : index
    %c3 = arith.constant 3 : index
    %33 = vector.load %arg1[%c0_20, %c3] : memref<512x4xi32, #tpu.memory_space<vmem>>, vector<512x1xi32>
    %34 = vector.broadcast %33 : vector<512x1xi32> to vector<512x128xi32>
    %35 = arith.cmpi eq, %34, %0 : vector<512x128xi32>
    %cst_21 = arith.constant 1.000000e+00 : f32
    %cst_22 = arith.constant 0.000000e+00 : f32
    %36 = vector.broadcast %cst_21 : f32 to vector<512x128xf32>
    %37 = vector.broadcast %cst_22 : f32 to vector<512x128xf32>
    %38 = arith.select %35, %36, %37 : vector<512x128xi1>, vector<512x128xf32>
    %39 = arith.truncf %38 : vector<512x128xf32> to vector<512x128xbf16>
    %c3_23 = arith.constant 3 : index
    %c0_24 = arith.constant 0 : index
    %c0_25 = arith.constant 0 : index
    %40 = vector.load %arg2[%c3_23, %c0_24, %c0_25] : memref<4x128x384xbf16, #tpu.memory_space<vmem>>, vector<1x128x384xbf16>
    %41 = vector.shape_cast %40 : vector<1x128x384xbf16> to vector<128x384xbf16>
    %cst_26 = arith.constant dense<0.000000e+00> : vector<512x384xf32>
    %42 = tpu.matmul %39, %41, %cst_26 {dimension_numbers = #tpu.dot_dimension_numbers<[1], [0], [0], [1], [0, 0, 1, 1], [], []>} : vector<512x128xbf16>, vector<128x384xbf16>, vector<512x384xf32> -> vector<512x384xf32>
    %43 = arith.addf %32, %42 : vector<512x384xf32>
    %44 = vector.shape_cast %43 : vector<512x384xf32> to vector<32x16x384xf32>
    %c0_27 = arith.constant 0 : index
    %c0_28 = arith.constant 0 : index
    %45 = vector.load %arg3[%c0_27, %c0_28] : memref<16x384xf32, #tpu.memory_space<vmem>>, vector<16x384xf32>
    %46 = vector.shape_cast %45 : vector<16x384xf32> to vector<1x16x384xf32>
    %47 = vector.broadcast %46 : vector<1x16x384xf32> to vector<32x16x384xf32>
    %48 = arith.addf %44, %47 : vector<32x16x384xf32>
    %cst_29 = arith.constant 0.000000e+00 : f32
    %49 = vector.broadcast %cst_29 : f32 to vector<32x16x384xf32>
    %50 = arith.maximumf %48, %49 : vector<32x16x384xf32>
    %cst_30 = arith.constant dense<0xFF800000> : vector<32x384xf32>
    %51 = vector.multi_reduction <maximumf>, %50, %cst_30 [1] : vector<32x16x384xf32> to vector<32x384xf32>
    %c0_31 = arith.constant 0 : index
    %c0_32 = arith.constant 0 : index
    %52 = vector.load %arg7[%c0_31, %c0_32] : memref<32x384xf32, #tpu.memory_space<vmem>>, vector<32x384xf32>
    tpu.vector_store %arg7[%c0_31, %c0_32], %51 {strides = array<i32>} : memref<32x384xf32, #tpu.memory_space<vmem>>, vector<32x384xf32>,
    %53 = arith.truncf %51 : vector<32x384xf32> to vector<32x384xbf16>
    %c0_33 = arith.constant 0 : index
    %c0_34 = arith.constant 0 : index
    %54 = vector.load %arg4[%c0_33, %c0_34] : memref<384x128xbf16, #tpu.memory_space<vmem>>, vector<384x128xbf16>
    %cst_35 = arith.constant dense<0.000000e+00> : vector<32x128xf32>
    %55 = tpu.matmul %53, %54, %cst_35 {dimension_numbers = #tpu.dot_dimension_numbers<[1], [0], [0], [1], [0, 0, 1, 1], [], []>} : vector<32x384xbf16>, vector<384x128xbf16>, vector<32x128xf32> -> vector<32x128xf32>
    %c0_36 = arith.constant 0 : index
    %c0_37 = arith.constant 0 : index
    %56 = vector.load %arg5[%c0_36, %c0_37] : memref<1x128xf32, #tpu.memory_space<vmem>>, vector<1x128xf32>
    %57 = vector.broadcast %56 : vector<1x128xf32> to vector<32x128xf32>
    %58 = arith.addf %55, %57 : vector<32x128xf32>
    %cst_38 = arith.constant dense<0xFF800000> : vector<32xf32>
    %59 = vector.multi_reduction <maximumf>, %58, %cst_38 [1] : vector<32x128xf32> to vector<32xf32>
    %60 = vector.shape_cast %59 : vector<32xf32> to vector<32x1xf32>
    %61 = vector.broadcast %60 : vector<32x1xf32> to vector<32x128xf32>
    %62 = arith.subf %58, %61 : vector<32x128xf32>
    %63 = math.exp %62 : vector<32x128xf32>
    %cst_39 = arith.constant dense<0.000000e+00> : vector<32xf32>
    %64 = vector.multi_reduction <add>, %63, %cst_39 [1] : vector<32x128xf32> to vector<32xf32>
    %65 = vector.shape_cast %64 : vector<32xf32> to vector<32x1xf32>
    %66 = tpu.reciprocal %65 {approx = true} : vector<32x1xf32> -> vector<32x1xf32>
    %67 = vector.broadcast %66 : vector<32x1xf32> to vector<32x128xf32>
    %68 = arith.mulf %63, %67 : vector<32x128xf32>
    %c0_40 = arith.constant 0 : index
    %c0_41 = arith.constant 0 : index
    %69 = vector.load %arg6[%c0_40, %c0_41] : memref<32x128xf32, #tpu.memory_space<vmem>>, vector<32x128xf32>
    tpu.vector_store %arg6[%c0_40, %c0_41], %68 {strides = array<i32>} : memref<32x128xf32, #tpu.memory_space<vmem>>, vector<32x128xf32>,
    return
  }
  func.func @transform_0(%arg0: i32) -> (i32, i32) {
    %c0_i32 = arith.constant 0 : i32
    %c0_i32_0 = arith.constant 0 : i32
    return %arg0, %c0_i32 : i32, i32
  }
  func.func @transform_1(%arg0: i32) -> (i32, i32, i32) {
    %c0_i32 = arith.constant 0 : i32
    %c0_i32_0 = arith.constant 0 : i32
    %c0_i32_1 = arith.constant 0 : i32
    %c0_i32_2 = arith.constant 0 : i32
    return %c0_i32, %c0_i32_0, %c0_i32_1 : i32, i32, i32
  }
  func.func @transform_2(%arg0: i32) -> (i32, i32) {
    %c0_i32 = arith.constant 0 : i32
    %c0_i32_0 = arith.constant 0 : i32
    %c0_i32_1 = arith.constant 0 : i32
    return %c0_i32, %c0_i32_0 : i32, i32
  }
  func.func @transform_3(%arg0: i32) -> (i32, i32) {
    %c0_i32 = arith.constant 0 : i32
    %c0_i32_0 = arith.constant 0 : i32
    %c0_i32_1 = arith.constant 0 : i32
    return %c0_i32, %c0_i32_0 : i32, i32
  }
  func.func @transform_4(%arg0: i32) -> (i32, i32) {
    %c0_i32 = arith.constant 0 : i32
    %c0_i32_0 = arith.constant 0 : i32
    %c0_i32_1 = arith.constant 0 : i32
    return %c0_i32, %c0_i32_0 : i32, i32
  }
  func.func @transform_5(%arg0: i32) -> (i32, i32) {
    %c0_i32 = arith.constant 0 : i32
    %c0_i32_0 = arith.constant 0 : i32
    return %arg0, %c0_i32 : i32, i32
  }
  func.func @transform_6(%arg0: i32) -> (i32, i32) {
    %c0_i32 = arith.constant 0 : i32
    %c0_i32_0 = arith.constant 0 : i32
    return %arg0, %c0_i32 : i32, i32
  }
}

</mosaic_0001>

<llo_original>
// kernel: tpu_custom_call.1
$region0: #{tpu_custom_call.1}
  #allocation0 [shape = 'u32[]', space=smem, size = 0x4, offset = 0x4, fixed_abs, tag = 'smem constant byte address 0x4 - core index']
  #allocation1 [shape = 'u32[144,128]{1,0:T(1,128)}', space=vmem, size = 0x12000, scoped, tag = 'internal scratch']
  %s0 = inlined_call_operand.vmem [shape: s32[1024,4], index: 0, kind: input, shape index: {}]
  %s1 = inlined_call_operand.vmem [shape: bf16[4,128,384], index: 1, kind: input, shape index: {}]
  %s2 = inlined_call_operand.vmem [shape: f32[16,384], index: 2, kind: input, shape index: {}]
  %s3 = inlined_call_operand.vmem [shape: bf16[384,128], index: 3, kind: input, shape index: {}]
  %s4 = inlined_call_operand.vmem [shape: f32[1,128], index: 4, kind: input, shape index: {}]
  %s5 = inlined_call_operand.hbm [shape: f32[64,128], index: 5, kind: output, shape index: {0}]
  %s6 = inlined_call_operand.hbm [shape: f32[64,384], index: 6, kind: output, shape index: {1}]
  %7 = xla_tuple %s5, %s6
  %s8 = sld [smem:[#allocation0]]
  $region61: #{tpu_custom_call.1} parent=0
    _
  %s10 = ssub.s32 1, %s8
  %s11 = scalar_select 0, %s10, %s8
  $region1: #{tpu_custom_call.1} parent=0
    #allocation2 [shape = 'u8[32768]{0}', space=vmem, size = 0x8000, scoped, tag = 'output window, operand 0']
    #allocation3 [shape = 's32[2]{0}', space=sflag, size = 0x8, scoped, tag = 'scoped memory for tpu_custom_call.1']
    #allocation4 [shape = 'u8[98304]{0}', space=vmem, size = 0x18000, scoped, tag = 'output window, operand 1']
    #allocation5 [shape = 's32[2]{0}', space=sflag, size = 0x8, scoped, tag = 'scoped memory for tpu_custom_call.1']
    %12 = vsyncpa [#allocation3], 0
    %s13 = scalar_lea.sflag [#allocation3], 1
    %14 = vsyncpa %s13, 0
    %15 = vsyncpa [#allocation5], 0
    %s16 = scalar_lea.sflag [#allocation5], 1
    %17 = vsyncpa %s16, 0
    loop: start=0, step=1, limit=4
    $region2: #{tpu_custom_call.1} parent=1 // loop_pre_header
      _
    $region3: #{tpu_custom_call.1} parent=1 // loop_header
      %s19 = sphi 0, %s23
      %p20 = scmp.ge.s32.totalorder %s19, 4
      %s29 = sphi 0, %s31
      %s32 = sphi 0, %s29
      %s33 = sphi 0, %s32
      %s49 = sphi 0, %s33
      %s53 = sphi 0, %s53
      %s55 = sphi 0, %s53
      %s56 = sphi 0, %s55
      %s70 = sphi 0, %s56
      %s74 = sphi 0, %s74
      %s76 = sphi 0, %s74
      %s77 = sphi 0, %s76
      %s91 = sphi 0, %s77
      %s95 = sphi 0, %s95
      %s97 = sphi 0, %s95
      %s98 = sphi 0, %s97
      %s112 = sphi 0, %s98
      %s116 = sphi 0, %s116
      %s118 = sphi 0, %s116
      %s119 = sphi 0, %s118
      %s133 = sphi 0, %s119
      %s139 = sphi 0, %s141
      %s142 = sphi 0, %s139
      %s143 = sphi 0, %s142
      %s159 = sphi 0, %s143
      %s165 = sphi 0, %s167
      %s168 = sphi 0, %s165
      %s169 = sphi 0, %s168
      %s185 = sphi 0, %s169
    $region4: #{tpu_custom_call.1} parent=1 // loop_header_branch
      %22 = sbr.rel (%p20) target = $region8
    $region5: #{tpu_custom_call.1} parent=1 // loop_body
      %s24 = ssub.s32 %s19, 1
      %s25 = ssub.s32 %s19, 2
      %s26 = sadd.s32 %s19, 1
      %s27 = ssub.s32 %s19, %s26
      %p28 = scmp.eq.s32.totalorder %s27, 0
      %s30 = sadd.s32 %s29, 1
      %s31 = scalar_select %p28, %s29, %s30
      %p34 = pneg %p28
      %p35 = scmp.eq.s32.totalorder %s19, 1
      %p36 = por %p34, %p35
      %p37 = scmp.ne.s32.totalorder %s29, %s32
      %p38 = scmp.eq.s32.totalorder %s19, 0
      %p39 = por %p37, %p38
      %p40 = scmp.ne.s32.totalorder %s29, %s32
      %p41 = scmp.eq.s32.totalorder %s24, 1
      %p42 = por %p40, %p41
      %p43 = scmp.ne.s32.totalorder %s32, %s33
      %p44 = scmp.eq.s32.totalorder %s24, 0
      %p45 = por %p43, %p44
      %p46 = scmp.ne.s32.totalorder %s32, %s33
      %p47 = scmp.eq.s32.totalorder %s25, 1
      %p48 = por %p46, %p47
      %p50 = scmp.ne.s32.totalorder %s33, %s49
      %p51 = scmp.eq.s32.totalorder %s25, 0
      %p52 = por %p50, %p51
      %s54 = sadd.s32 %s53, 1
      %p57 = scmp.eq.s32.totalorder %s19, 1
      %p58 = scmp.ne.s32.totalorder %s53, %s55
      %p59 = scmp.eq.s32.totalorder %s19, 0
      %p60 = por %p58, %p59
      %p61 = scmp.ne.s32.totalorder %s53, %s55
      %p62 = scmp.eq.s32.totalorder %s24, 1
      %p63 = por %p61, %p62
      %p64 = scmp.ne.s32.totalorder %s55, %s56
      %p65 = scmp.eq.s32.totalorder %s24, 0
      %p66 = por %p64, %p65
      %p67 = scmp.ne.s32.totalorder %s55, %s56
      %p68 = scmp.eq.s32.totalorder %s25, 1
      %p69 = por %p67, %p68
      %p71 = scmp.ne.s32.totalorder %s56, %s70
      %p72 = scmp.eq.s32.totalorder %s25, 0
      %p73 = por %p71, %p72
      %s75 = sadd.s32 %s74, 1
      %p78 = scmp.eq.s32.totalorder %s19, 1
      %p79 = scmp.ne.s32.totalorder %s74, %s76
      %p80 = scmp.eq.s32.totalorder %s19, 0
      %p81 = por %p79, %p80
      %p82 = scmp.ne.s32.totalorder %s74, %s76
      %p83 = scmp.eq.s32.totalorder %s24, 1
      %p84 = por %p82, %p83
      %p85 = scmp.ne.s32.totalorder %s76, %s77
      %p86 = scmp.eq.s32.totalorder %s24, 0
      %p87 = por %p85, %p86
      %p88 = scmp.ne.s32.totalorder %s76, %s77
      %p89 = scmp.eq.s32.totalorder %s25, 1
      %p90 = por %p88, %p89
      %p92 = scmp.ne.s32.totalorder %s77, %s91
      %p93 = scmp.eq.s32.totalorder %s25, 0
      %p94 = por %p92, %p93
      %s96 = sadd.s32 %s95, 1
      %p99 = scmp.eq.s32.totalorder %s19, 1
      %p100 = scmp.ne.s32.totalorder %s95, %s97
      %p101 = scmp.eq.s32.totalorder %s19, 0
      %p102 = por %p100, %p101
      %p103 = scmp.ne.s32.totalorder %s95, %s97
      %p104 = scmp.eq.s32.totalorder %s24, 1
      %p105 = por %p103, %p104
      %p106 = scmp.ne.s32.totalorder %s97, %s98
      %p107 = scmp.eq.s32.totalorder %s24, 0
      %p108 = por %p106, %p107
      %p109 = scmp.ne.s32.totalorder %s97, %s98
      %p110 = scmp.eq.s32.totalorder %s25, 1
      %p111 = por %p109, %p110
      %p113 = scmp.ne.s32.totalorder %s98, %s112
      %p114 = scmp.eq.s32.totalorder %s25, 0
      %p115 = por %p113, %p114
      %s117 = sadd.s32 %s116, 1
      %p120 = scmp.eq.s32.totalorder %s19, 1
      %p121 = scmp.ne.s32.totalorder %s116, %s118
      %p122 = scmp.eq.s32.totalorder %s19, 0
      %p123 = por %p121, %p122
      %p124 = scmp.ne.s32.totalorder %s116, %s118
      %p125 = scmp.eq.s32.totalorder %s24, 1
      %p126 = por %p124, %p125
      %p127 = scmp.ne.s32.totalorder %s118, %s119
      %p128 = scmp.eq.s32.totalorder %s24, 0
      %p129 = por %p127, %p128
      %p130 = scmp.ne.s32.totalorder %s118, %s119
      %p131 = scmp.eq.s32.totalorder %s25, 1
      %p132 = por %p130, %p131
      %p134 = scmp.ne.s32.totalorder %s119, %s133
      %p135 = scmp.eq.s32.totalorder %s25, 0
      %p136 = por %p134, %p135
      %s137 = ssub.s32 %s19, %s26
      %p138 = scmp.eq.s32.totalorder %s137, 0
      %s140 = sadd.s32 %s139, 1
      %s141 = scalar_select %p138, %s139, %s140
      %p144 = pneg %p138
      %p145 = scmp.eq.s32.totalorder %s19, 1
      %p146 = por %p144, %p145
      %p147 = scmp.ne.s32.totalorder %s139, %s142
      %p148 = scmp.eq.s32.totalorder %s19, 0
      %p149 = por %p147, %p148
      %p150 = scmp.ne.s32.totalorder %s139, %s142
      %p151 = scmp.eq.s32.totalorder %s24, 1
      %p152 = por %p150, %p151
      %p153 = scmp.ne.s32.totalorder %s142, %s143
      %p154 = scmp.eq.s32.totalorder %s24, 0
      %p155 = por %p153, %p154
      %p156 = scmp.ne.s32.totalorder %s142, %s143
      %p157 = scmp.eq.s32.totalorder %s25, 1
      %p158 = por %p156, %p157
      %p160 = scmp.ne.s32.totalorder %s143, %s159
      %p161 = scmp.eq.s32.totalorder %s25, 0
      %p162 = por %p160, %p161
      %s163 = ssub.s32 %s19, %s26
      %p164 = scmp.eq.s32.totalorder %s163, 0
      %s166 = sadd.s32 %s165, 1
      %s167 = scalar_select %p164, %s165, %s166
      %p170 = pneg %p164
      %p171 = scmp.eq.s32.totalorder %s19, 1
      %p172 = por %p170, %p171
      %p173 = scmp.ne.s32.totalorder %s165, %s168
      %p174 = scmp.eq.s32.totalorder %s19, 0
      %p175 = por %p173, %p174
      %p176 = scmp.ne.s32.totalorder %s165, %s168
      %p177 = scmp.eq.s32.totalorder %s24, 1
      %p178 = por %p176, %p177
      %p179 = scmp.ne.s32.totalorder %s168, %s169
      %p180 = scmp.eq.s32.totalorder %s24, 0
      %p181 = por %p179, %p180
      %p182 = scmp.ne.s32.totalorder %s168, %s169
      %p183 = scmp.eq.s32.totalorder %s25, 1
      %p184 = por %p182, %p183
      %p186 = scmp.ne.s32.totalorder %s169, %s185
      %p187 = scmp.eq.s32.totalorder %s25, 0
      %p188 = por %p186, %p187
      %p189 = scmp.le.s32.totalorder 1, %s19
      %p190 = scmp.lt.s32.totalorder %s19, 3
      %p191 = pnand %p189, %p190
      %p192 = pneg %p191
      // Predicated region
      $region9: #{tpu_custom_call.1} parent=5 // pred_check
        _
      $region10: #{tpu_custom_call.1} parent=5 // pred_check_branch
        %194 = sbr.rel (%p191) target = $region12
      $region11: #{tpu_custom_call.1} parent=5 // pred_region
        %s195 = ssub.s32 %s19, 1
        // Predicated region
        $region13: #{tpu_custom_call.1} parent=11 // pred_check
          %p196 = pneg %p66
        $region14: #{tpu_custom_call.1} parent=11 // pred_check_branch
          %198 = sbr.rel (%p196) target = $region16
        $region15: #{tpu_custom_call.1} parent=11 // pred_region
          _
        $region16: #{tpu_custom_call.1} parent=11 // pred_fallthru
          _
        // Predicated region
        $region17: #{tpu_custom_call.1} parent=11 // pred_check
          %p199 = pneg %p87
        $region18: #{tpu_custom_call.1} parent=11 // pred_check_branch
          %201 = sbr.rel (%p199) target = $region20
        $region19: #{tpu_custom_call.1} parent=11 // pred_region
          _
        $region20: #{tpu_custom_call.1} parent=11 // pred_fallthru
          _
        // Predicated region
        $region21: #{tpu_custom_call.1} parent=11 // pred_check
          %p202 = pneg %p108
        $region22: #{tpu_custom_call.1} parent=11 // pred_check_branch
          %204 = sbr.rel (%p202) target = $region24
        $region23: #{tpu_custom_call.1} parent=11 // pred_region
          _
        $region24: #{tpu_custom_call.1} parent=11 // pred_fallthru
          _
        // Predicated region
        $region25: #{tpu_custom_call.1} parent=11 // pred_check
          %p205 = pneg %p129
        $region26: #{tpu_custom_call.1} parent=11 // pred_check_branch
          %207 = sbr.rel (%p205) target = $region28
        $region27: #{tpu_custom_call.1} parent=11 // pred_region
          _
        $region28: #{tpu_custom_call.1} parent=11 // pred_fallthru
          _
      $region12: #{tpu_custom_call.1} parent=5 // pred_fallthru
        _
      %p208 = scmp.lt.s32.totalorder %s19, 2
      // Predicated region
      $region29: #{tpu_custom_call.1} parent=5 // pred_check
        %p209 = pneg %p208
      $region30: #{tpu_custom_call.1} parent=5 // pred_check_branch
        %211 = sbr.rel (%p209) target = $region32
      $region31: #{tpu_custom_call.1} parent=5 // pred_region
        // Predicated region
        $region33: #{tpu_custom_call.1} parent=31 // pred_check
          %p212 = pneg %p39
        $region34: #{tpu_custom_call.1} parent=31 // pred_check_branch
          %214 = sbr.rel (%p212) target = $region36
        $region35: #{tpu_custom_call.1} parent=31 // pred_region
          %s215 = smul.u32 64, %s19
          %p216 = scmp.lt.s32.totalorder %s215, 127
          %s217 = scalar_select %p216, %s215, 127
          %s218 = smul.addr %s217, 8
          %s219 = scalar_lea.vmem %s0, %s218
          %s220 = smul.u32 64, %s19
        $region36: #{tpu_custom_call.1} parent=31 // pred_fallthru
          _
      $region32: #{tpu_custom_call.1} parent=5 // pred_fallthru
        _
      %p221 = scmp.le.s32.totalorder 1, %s19
      %p222 = scmp.lt.s32.totalorder %s19, 3
      %p223 = pnand %p221, %p222
      %p224 = pneg %p223
      // Predicated region
      $region37: #{tpu_custom_call.1} parent=5 // pred_check
        _
      $region38: #{tpu_custom_call.1} parent=5 // pred_check_branch
        %226 = sbr.rel (%p223) target = $region40
      $region39: #{tpu_custom_call.1} parent=5 // pred_region
        %s227 = ssub.s32 %s19, 1
        %s228 = smul.u32 64, %s24
        %p229 = scmp.lt.s32.totalorder %s228, 127
        %s230 = scalar_select %p229, %s228, 127
        %s231 = smul.addr %s230, 8
        %s232 = scalar_lea.vmem %s0, %s231
        %p233 = pneg %p45
        %p234 = pneg %p42
        %p235 = pneg %p66
        %p236 = pneg %p63
        %p237 = pneg %p87
        %p238 = pneg %p84
        %p239 = pneg %p108
        %p240 = pneg %p105
        %p241 = pneg %p129
        %p242 = pneg %p126
        %p243 = pneg %p155
        %p244 = pneg %p152
        %s245 = sand.u32 %s142, 1
        %s246 = scalar_lea.sflag [#allocation3], %s245
        %s247 = sand.u32 %s142, 1
        %s248 = smul.addr %s247, 32
        %s249 = scalar_lea.vmem [#allocation2], %s248
        %p250 = pneg %p181
        %p251 = pneg %p178
        %s252 = sand.u32 %s168, 1
        %s253 = scalar_lea.sflag [#allocation5], %s252
        %s254 = sand.u32 %s168, 1
        %s255 = smul.addr %s254, 96
        %s256 = scalar_lea.vmem [#allocation4], %s255
        %s257 = smul.u32 64, %s24
        %p258 = scmp.lt.s32.totalorder %s257, 127
        %s259 = scalar_select %p258, %s257, 127
        %s260 = smul.addr %s259, 8
        %s261 = scalar_lea.vmem %s0, %s260
        %s262 = smul.u32 64, %s24
        %s263 = smul.u32 4, %s24
        %s264 = smul.u32 4, %s24
        %v266 = vlaneseq
        %v267 = vand.u32 %v266, 127
        %v268 = vld [vmem:[%s261] sm:$0xff]
        %v269 = vld [vmem:[%s261 + $0x8] sm:$0xff]
        %v270 = vld [vmem:[%s261 + $0x10] sm:$0xff]
        %v271 = vld [vmem:[%s261 + $0x18] sm:$0xff]
        %v272 = vld [vmem:[%s261 + $0x20] sm:$0xff]
        %v273 = vld [vmem:[%s261 + $0x28] sm:$0xff]
        %v274 = vld [vmem:[%s261 + $0x30] sm:$0xff]
        %v275 = vld [vmem:[%s261 + $0x38] sm:$0xff]
        %v276 = vld [vmem:[%s261 + $0x40] sm:$0xff]
        %v277 = vld [vmem:[%s261 + $0x48] sm:$0xff]
        %v278 = vld [vmem:[%s261 + $0x50] sm:$0xff]
        %v279 = vld [vmem:[%s261 + $0x58] sm:$0xff]
        %v280 = vld [vmem:[%s261 + $0x60] sm:$0xff]
        %v281 = vld [vmem:[%s261 + $0x68] sm:$0xff]
        %v282 = vld [vmem:[%s261 + $0x70] sm:$0xff]
        %v283 = vld [vmem:[%s261 + $0x78] sm:$0xff]
        %v284 = vld [vmem:[%s261 + $0x80] sm:$0xff]
        %v285 = vld [vmem:[%s261 + $0x88] sm:$0xff]
        %v286 = vld [vmem:[%s261 + $0x90] sm:$0xff]
        %v287 = vld [vmem:[%s261 + $0x98] sm:$0xff]
        %v288 = vld [vmem:[%s261 + $0xa0] sm:$0xff]
        %v289 = vld [vmem:[%s261 + $0xa8] sm:$0xff]
        %v290 = vld [vmem:[%s261 + $0xb0] sm:$0xff]
        %v291 = vld [vmem:[%s261 + $0xb8] sm:$0xff]
        %v292 = vld [vmem:[%s261 + $0xc0] sm:$0xff]
        %v293 = vld [vmem:[%s261 + $0xc8] sm:$0xff]
        %v294 = vld [vmem:[%s261 + $0xd0] sm:$0xff]
        %v295 = vld [vmem:[%s261 + $0xd8] sm:$0xff]
        %v296 = vld [vmem:[%s261 + $0xe0] sm:$0xff]
        %v297 = vld [vmem:[%s261 + $0xe8] sm:$0xff]
        %v298 = vld [vmem:[%s261 + $0xf0] sm:$0xff]
        %v299 = vld [vmem:[%s261 + $0xf8] sm:$0xff]
        %v300 = vld [vmem:[%s261 + $0x100] sm:$0xff]
        %v301 = vld [vmem:[%s261 + $0x108] sm:$0xff]
        %v302 = vld [vmem:[%s261 + $0x110] sm:$0xff]
        %v303 = vld [vmem:[%s261 + $0x118] sm:$0xff]
        %v304 = vld [vmem:[%s261 + $0x120] sm:$0xff]
        %v305 = vld [vmem:[%s261 + $0x128] sm:$0xff]
        %v306 = vld [vmem:[%s261 + $0x130] sm:$0xff]
        %v307 = vld [vmem:[%s261 + $0x138] sm:$0xff]
        %v308 = vld [vmem:[%s261 + $0x140] sm:$0xff]
        %v309 = vld [vmem:[%s261 + $0x148] sm:$0xff]
        %v310 = vld [vmem:[%s261 + $0x150] sm:$0xff]
        %v311 = vld [vmem:[%s261 + $0x158] sm:$0xff]
        %v312 = vld [vmem:[%s261 + $0x160] sm:$0xff]
        %v313 = vld [vmem:[%s261 + $0x168] sm:$0xff]
        %v314 = vld [vmem:[%s261 + $0x170] sm:$0xff]
        %v315 = vld [vmem:[%s261 + $0x178] sm:$0xff]
        %v316 = vld [vmem:[%s261 + $0x180] sm:$0xff]
        %v317 = vld [vmem:[%s261 + $0x188] sm:$0xff]
        %v318 = vld [vmem:[%s261 + $0x190] sm:$0xff]
        %v319 = vld [vmem:[%s261 + $0x198] sm:$0xff]
        %v320 = vld [vmem:[%s261 + $0x1a0] sm:$0xff]
        %v321 = vld [vmem:[%s261 + $0x1a8] sm:$0xff]
        %v322 = vld [vmem:[%s261 + $0x1b0] sm:$0xff]
        %v323 = vld [vmem:[%s261 + $0x1b8] sm:$0xff]
        %v324 = vld [vmem:[%s261 + $0x1c0] sm:$0xff]
        %v325 = vld [vmem:[%s261 + $0x1c8] sm:$0xff]
        %v326 = vld [vmem:[%s261 + $0x1d0] sm:$0xff]
        %v327 = vld [vmem:[%s261 + $0x1d8] sm:$0xff]
        %v328 = vld [vmem:[%s261 + $0x1e0] sm:$0xff]
        %v329 = vld [vmem:[%s261 + $0x1e8] sm:$0xff]
        %v330 = vld [vmem:[%s261 + $0x1f0] sm:$0xff]
        %v331 = vld [vmem:[%s261 + $0x1f8] sm:$0xff]
        %332 = vset.pattern.permute.xlu0 0
        %333 = vperm.xlu0 %332, %v268
        %v334 = vpop.permute.xlu0 %333
        %335 = vset.pattern.permute.xlu0 0
        %336 = vperm.xlu0 %335, %v269
        %v337 = vpop.permute.xlu0 %336
        %338 = vset.pattern.permute.xlu0 0
        %339 = vperm.xlu0 %338, %v270
        %v340 = vpop.permute.xlu0 %339
        %341 = vset.pattern.permute.xlu0 0
        %342 = vperm.xlu0 %341, %v271
        %v343 = vpop.permute.xlu0 %342
        %344 = vset.pattern.permute.xlu0 0
        %345 = vperm.xlu0 %344, %v272
        %v346 = vpop.permute.xlu0 %345
        %347 = vset.pattern.permute.xlu0 0
        %348 = vperm.xlu0 %347, %v273
        %v349 = vpop.permute.xlu0 %348
        %350 = vset.pattern.permute.xlu0 0
        %351 = vperm.xlu0 %350, %v274
        %v352 = vpop.permute.xlu0 %351
        %353 = vset.pattern.permute.xlu0 0
        %354 = vperm.xlu0 %353, %v275
        %v355 = vpop.permute.xlu0 %354
        %356 = vset.pattern.permute.xlu0 0
        %357 = vperm.xlu0 %356, %v276
        %v358 = vpop.permute.xlu0 %357
        %359 = vset.pattern.permute.xlu0 0
        %360 = vperm.xlu0 %359, %v277
        %v361 = vpop.permute.xlu0 %360
        %362 = vset.pattern.permute.xlu0 0
        %363 = vperm.xlu0 %362, %v278
        %v364 = vpop.permute.xlu0 %363
        %365 = vset.pattern.permute.xlu0 0
        %366 = vperm.xlu0 %365, %v279
        %v367 = vpop.permute.xlu0 %366
        %368 = vset.pattern.permute.xlu0 0
        %369 = vperm.xlu0 %368, %v280
        %v370 = vpop.permute.xlu0 %369
        %371 = vset.pattern.permute.xlu0 0
        %372 = vperm.xlu0 %371, %v281
        %v373 = vpop.permute.xlu0 %372
        %374 = vset.pattern.permute.xlu0 0
        %375 = vperm.xlu0 %374, %v282
        %v376 = vpop.permute.xlu0 %375
        %377 = vset.pattern.permute.xlu0 0
        %378 = vperm.xlu0 %377, %v283
        %v379 = vpop.permute.xlu0 %378
        %380 = vset.pattern.permute.xlu0 0
        %381 = vperm.xlu0 %380, %v284
        %v382 = vpop.permute.xlu0 %381
        %383 = vset.pattern.permute.xlu0 0
        %384 = vperm.xlu0 %383, %v285
        %v385 = vpop.permute.xlu0 %384
        %386 = vset.pattern.permute.xlu0 0
        %387 = vperm.xlu0 %386, %v286
        %v388 = vpop.permute.xlu0 %387
        %389 = vset.pattern.permute.xlu0 0
        %390 = vperm.xlu0 %389, %v287
        %v391 = vpop.permute.xlu0 %390
        %392 = vset.pattern.permute.xlu0 0
        %393 = vperm.xlu0 %392, %v288
        %v394 = vpop.permute.xlu0 %393
        %395 = vset.pattern.permute.xlu0 0
        %396 = vperm.xlu0 %395, %v289
        %v397 = vpop.permute.xlu0 %396
        %398 = vset.pattern.permute.xlu0 0
        %399 = vperm.xlu0 %398, %v290
        %v400 = vpop.permute.xlu0 %399
        %401 = vset.pattern.permute.xlu0 0
        %402 = vperm.xlu0 %401, %v291
        %v403 = vpop.permute.xlu0 %402
        %404 = vset.pattern.permute.xlu0 0
        %405 = vperm.xlu0 %404, %v292
        %v406 = vpop.permute.xlu0 %405
        %407 = vset.pattern.permute.xlu0 0
        %408 = vperm.xlu0 %407, %v293
        %v409 = vpop.permute.xlu0 %408
        %410 = vset.pattern.permute.xlu0 0
        %411 = vperm.xlu0 %410, %v294
        %v412 = vpop.permute.xlu0 %411
        %413 = vset.pattern.permute.xlu0 0
        %414 = vperm.xlu0 %413, %v295
        %v415 = vpop.permute.xlu0 %414
        %416 = vset.pattern.permute.xlu0 0
        %417 = vperm.xlu0 %416, %v296
        %v418 = vpop.permute.xlu0 %417
        %419 = vset.pattern.permute.xlu0 0
        %420 = vperm.xlu0 %419, %v297
        %v421 = vpop.permute.xlu0 %420
        %422 = vset.pattern.permute.xlu0 0
        %423 = vperm.xlu0 %422, %v298
        %v424 = vpop.permute.xlu0 %423
        %425 = vset.pattern.permute.xlu0 0
        %426 = vperm.xlu0 %425, %v299
        %v427 = vpop.permute.xlu0 %426
        %428 = vset.pattern.permute.xlu0 0
        %429 = vperm.xlu0 %428, %v300
        %v430 = vpop.permute.xlu0 %429
        %431 = vset.pattern.permute.xlu0 0
        %432 = vperm.xlu0 %431, %v301
        %v433 = vpop.permute.xlu0 %432
        %434 = vset.pattern.permute.xlu0 0
        %435 = vperm.xlu0 %434, %v302
        %v436 = vpop.permute.xlu0 %435
        %437 = vset.pattern.permute.xlu0 0
        %438 = vperm.xlu0 %437, %v303
        %v439 = vpop.permute.xlu0 %438
        %440 = vset.pattern.permute.xlu0 0
        %441 = vperm.xlu0 %440, %v304
        %v442 = vpop.permute.xlu0 %441
        %443 = vset.pattern.permute.xlu0 0
        %444 = vperm.xlu0 %443, %v305
        %v445 = vpop.permute.xlu0 %444
        %446 = vset.pattern.permute.xlu0 0
        %447 = vperm.xlu0 %446, %v306
        %v448 = vpop.permute.xlu0 %447
        %449 = vset.pattern.permute.xlu0 0
        %450 = vperm.xlu0 %449, %v307
        %v451 = vpop.permute.xlu0 %450
        %452 = vset.pattern.permute.xlu0 0
        %453 = vperm.xlu0 %452, %v308
        %v454 = vpop.permute.xlu0 %453
        %455 = vset.pattern.permute.xlu0 0
        %456 = vperm.xlu0 %455, %v309
        %v457 = vpop.permute.xlu0 %456
        %458 = vset.pattern.permute.xlu0 0
        %459 = vperm.xlu0 %458, %v310
        %v460 = vpop.permute.xlu0 %459
        %461 = vset.pattern.permute.xlu0 0
        %462 = vperm.xlu0 %461, %v311
        %v463 = vpop.permute.xlu0 %462
        %464 = vset.pattern.permute.xlu0 0
        %465 = vperm.xlu0 %464, %v312
        %v466 = vpop.permute.xlu0 %465
        %467 = vset.pattern.permute.xlu0 0
        %468 = vperm.xlu0 %467, %v313
        %v469 = vpop.permute.xlu0 %468
        %470 = vset.pattern.permute.xlu0 0
        %471 = vperm.xlu0 %470, %v314
        %v472 = vpop.permute.xlu0 %471
        %473 = vset.pattern.permute.xlu0 0
        %474 = vperm.xlu0 %473, %v315
        %v475 = vpop.permute.xlu0 %474
        %476 = vset.pattern.permute.xlu0 0
        %477 = vperm.xlu0 %476, %v316
        %v478 = vpop.permute.xlu0 %477
        %479 = vset.pattern.permute.xlu0 0
        %480 = vperm.xlu0 %479, %v317
        %v481 = vpop.permute.xlu0 %480
        %482 = vset.pattern.permute.xlu0 0
        %483 = vperm.xlu0 %482, %v318
        %v484 = vpop.permute.xlu0 %483
        %485 = vset.pattern.permute.xlu0 0
        %486 = vperm.xlu0 %485, %v319
        %v487 = vpop.permute.xlu0 %486
        %488 = vset.pattern.permute.xlu0 0
        %489 = vperm.xlu0 %488, %v320
        %v490 = vpop.permute.xlu0 %489
        %491 = vset.pattern.permute.xlu0 0
        %492 = vperm.xlu0 %491, %v321
        %v493 = vpop.permute.xlu0 %492
        %494 = vset.pattern.permute.xlu0 0
        %495 = vperm.xlu0 %494, %v322
        %v496 = vpop.permute.xlu0 %495
        %497 = vset.pattern.permute.xlu0 0
        %498 = vperm.xlu0 %497, %v323
        %v499 = vpop.permute.xlu0 %498
        %500 = vset.pattern.permute.xlu0 0
        %501 = vperm.xlu0 %500, %v324
        %v502 = vpop.permute.xlu0 %501
        %503 = vset.pattern.permute.xlu0 0
        %504 = vperm.xlu0 %503, %v325
        %v505 = vpop.permute.xlu0 %504
        %506 = vset.pattern.permute.xlu0 0
        %507 = vperm.xlu0 %506, %v326
        %v508 = vpop.permute.xlu0 %507
        %509 = vset.pattern.permute.xlu0 0
        %510 = vperm.xlu0 %509, %v327
        %v511 = vpop.permute.xlu0 %510
        %512 = vset.pattern.permute.xlu0 0
        %513 = vperm.xlu0 %512, %v328
        %v514 = vpop.permute.xlu0 %513
        %515 = vset.pattern.permute.xlu0 0
        %516 = vperm.xlu0 %515, %v329
        %v517 = vpop.permute.xlu0 %516
        %518 = vset.pattern.permute.xlu0 0
        %519 = vperm.xlu0 %518, %v330
        %v520 = vpop.permute.xlu0 %519
        %521 = vset.pattern.permute.xlu0 0
        %522 = vperm.xlu0 %521, %v331
        %v523 = vpop.permute.xlu0 %522
        %vm524 = vcmp.eq.s32.totalorder %v334, %v267
        %vm525 = vcmp.eq.s32.totalorder %v337, %v267
        %vm526 = vcmp.eq.s32.totalorder %v340, %v267
        %vm527 = vcmp.eq.s32.totalorder %v343, %v267
        %vm528 = vcmp.eq.s32.totalorder %v346, %v267
        %vm529 = vcmp.eq.s32.totalorder %v349, %v267
        %vm530 = vcmp.eq.s32.totalorder %v352, %v267
        %vm531 = vcmp.eq.s32.totalorder %v355, %v267
        %vm532 = vcmp.eq.s32.totalorder %v358, %v267
        %vm533 = vcmp.eq.s32.totalorder %v361, %v267
        %vm534 = vcmp.eq.s32.totalorder %v364, %v267
        %vm535 = vcmp.eq.s32.totalorder %v367, %v267
        %vm536 = vcmp.eq.s32.totalorder %v370, %v267
        %vm537 = vcmp.eq.s32.totalorder %v373, %v267
        %vm538 = vcmp.eq.s32.totalorder %v376, %v267
        %vm539 = vcmp.eq.s32.totalorder %v379, %v267
        %vm540 = vcmp.eq.s32.totalorder %v382, %v267
        %vm541 = vcmp.eq.s32.totalorder %v385, %v267
        %vm542 = vcmp.eq.s32.totalorder %v388, %v267
        %vm543 = vcmp.eq.s32.totalorder %v391, %v267
        %vm544 = vcmp.eq.s32.totalorder %v394, %v267
        %vm545 = vcmp.eq.s32.totalorder %v397, %v267
        %vm546 = vcmp.eq.s32.totalorder %v400, %v267
        %vm547 = vcmp.eq.s32.totalorder %v403, %v267
        %vm548 = vcmp.eq.s32.totalorder %v406, %v267
        %vm549 = vcmp.eq.s32.totalorder %v409, %v267
        %vm550 = vcmp.eq.s32.totalorder %v412, %v267
        %vm551 = vcmp.eq.s32.totalorder %v415, %v267
        %vm552 = vcmp.eq.s32.totalorder %v418, %v267
        %vm553 = vcmp.eq.s32.totalorder %v421, %v267
        %vm554 = vcmp.eq.s32.totalorder %v424, %v267
        %vm555 = vcmp.eq.s32.totalorder %v427, %v267
        %vm556 = vcmp.eq.s32.totalorder %v430, %v267
        %vm557 = vcmp.eq.s32.totalorder %v433, %v267
        %vm558 = vcmp.eq.s32.totalorder %v436, %v267
        %vm559 = vcmp.eq.s32.totalorder %v439, %v267
        %vm560 = vcmp.eq.s32.totalorder %v442, %v267
        %vm561 = vcmp.eq.s32.totalorder %v445, %v267
        %vm562 = vcmp.eq.s32.totalorder %v448, %v267
        %vm563 = vcmp.eq.s32.totalorder %v451, %v267
        %vm564 = vcmp.eq.s32.totalorder %v454, %v267
        %vm565 = vcmp.eq.s32.totalorder %v457, %v267
        %vm566 = vcmp.eq.s32.totalorder %v460, %v267
        %vm567 = vcmp.eq.s32.totalorder %v463, %v267
        %vm568 = vcmp.eq.s32.totalorder %v466, %v267
        %vm569 = vcmp.eq.s32.totalorder %v469, %v267
        %vm570 = vcmp.eq.s32.totalorder %v472, %v267
        %vm571 = vcmp.eq.s32.totalorder %v475, %v267
        %vm572 = vcmp.eq.s32.totalorder %v478, %v267
        %vm573 = vcmp.eq.s32.totalorder %v481, %v267
        %vm574 = vcmp.eq.s32.totalorder %v484, %v267
        %vm575 = vcmp.eq.s32.totalorder %v487, %v267
        %vm576 = vcmp.eq.s32.totalorder %v490, %v267
        %vm577 = vcmp.eq.s32.totalorder %v493, %v267
        %vm578 = vcmp.eq.s32.totalorder %v496, %v267
        %vm579 = vcmp.eq.s32.totalorder %v499, %v267
        %vm580 = vcmp.eq.s32.totalorder %v502, %v267
        %vm581 = vcmp.eq.s32.totalorder %v505, %v267
        %vm582 = vcmp.eq.s32.totalorder %v508, %v267
        %vm583 = vcmp.eq.s32.totalorder %v511, %v267
        %vm584 = vcmp.eq.s32.totalorder %v514, %v267
        %vm585 = vcmp.eq.s32.totalorder %v517, %v267
        %vm586 = vcmp.eq.s32.totalorder %v520, %v267
        %vm587 = vcmp.eq.s32.totalorder %v523, %v267
        %v588 = vsel %vm524, 1.0, 0.0
        %v589 = vsel %vm525, 1.0, 0.0
        %v590 = vsel %vm526, 1.0, 0.0
        %v591 = vsel %vm527, 1.0, 0.0
        %v592 = vsel %vm528, 1.0, 0.0
        %v593 = vsel %vm529, 1.0, 0.0
        %v594 = vsel %vm530, 1.0, 0.0
        %v595 = vsel %vm531, 1.0, 0.0
        %v596 = vsel %vm532, 1.0, 0.0
        %v597 = vsel %vm533, 1.0, 0.0
        %v598 = vsel %vm534, 1.0, 0.0
        %v599 = vsel %vm535, 1.0, 0.0
        %v600 = vsel %vm536, 1.0, 0.0
        %v601 = vsel %vm537, 1.0, 0.0
        %v602 = vsel %vm538, 1.0, 0.0
        %v603 = vsel %vm539, 1.0, 0.0
        %v604 = vsel %vm540, 1.0, 0.0
        %v605 = vsel %vm541, 1.0, 0.0
        %v606 = vsel %vm542, 1.0, 0.0
        %v607 = vsel %vm543, 1.0, 0.0
        %v608 = vsel %vm544, 1.0, 0.0
        %v609 = vsel %vm545, 1.0, 0.0
        %v610 = vsel %vm546, 1.0, 0.0
        %v611 = vsel %vm547, 1.0, 0.0
        %v612 = vsel %vm548, 1.0, 0.0
        %v613 = vsel %vm549, 1.0, 0.0
        %v614 = vsel %vm550, 1.0, 0.0
        %v615 = vsel %vm551, 1.0, 0.0
        %v616 = vsel %vm552, 1.0, 0.0
        %v617 = vsel %vm553, 1.0, 0.0
        %v618 = vsel %vm554, 1.0, 0.0
        %v619 = vsel %vm555, 1.0, 0.0
        %v620 = vsel %vm556, 1.0, 0.0
        %v621 = vsel %vm557, 1.0, 0.0
        %v622 = vsel %vm558, 1.0, 0.0
        %v623 = vsel %vm559, 1.0, 0.0
        %v624 = vsel %vm560, 1.0, 0.0
        %v625 = vsel %vm561, 1.0, 0.0
        %v626 = vsel %vm562, 1.0, 0.0
        %v627 = vsel %vm563, 1.0, 0.0
        %v628 = vsel %vm564, 1.0, 0.0
        %v629 = vsel %vm565, 1.0, 0.0
        %v630 = vsel %vm566, 1.0, 0.0
        %v631 = vsel %vm567, 1.0, 0.0
        %v632 = vsel %vm568, 1.0, 0.0
        %v633 = vsel %vm569, 1.0, 0.0
        %v634 = vsel %vm570, 1.0, 0.0
        %v635 = vsel %vm571, 1.0, 0.0
        %v636 = vsel %vm572, 1.0, 0.0
        %v637 = vsel %vm573, 1.0, 0.0
        %v638 = vsel %vm574, 1.0, 0.0
        %v639 = vsel %vm575, 1.0, 0.0
        %v640 = vsel %vm576, 1.0, 0.0
        %v641 = vsel %vm577, 1.0, 0.0
        %v642 = vsel %vm578, 1.0, 0.0
        %v643 = vsel %vm579, 1.0, 0.0
        %v644 = vsel %vm580, 1.0, 0.0
        %v645 = vsel %vm581, 1.0, 0.0
        %v646 = vsel %vm582, 1.0, 0.0
        %v647 = vsel %vm583, 1.0, 0.0
        %v648 = vsel %vm584, 1.0, 0.0
        %v649 = vsel %vm585, 1.0, 0.0
        %v650 = vsel %vm586, 1.0, 0.0
        %v651 = vsel %vm587, 1.0, 0.0
        %v652 = vpack.c.bf16 %v589, %v588
        %v653 = vpack.c.bf16 %v591, %v590
        %v654 = vpack.c.bf16 %v593, %v592
        %v655 = vpack.c.bf16 %v595, %v594
        %v656 = vpack.c.bf16 %v597, %v596
        %v657 = vpack.c.bf16 %v599, %v598
        %v658 = vpack.c.bf16 %v601, %v600
        %v659 = vpack.c.bf16 %v603, %v602
        %v660 = vpack.c.bf16 %v605, %v604
        %v661 = vpack.c.bf16 %v607, %v606
        %v662 = vpack.c.bf16 %v609, %v608
        %v663 = vpack.c.bf16 %v611, %v610
        %v664 = vpack.c.bf16 %v613, %v612
        %v665 = vpack.c.bf16 %v615, %v614
        %v666 = vpack.c.bf16 %v617, %v616
        %v667 = vpack.c.bf16 %v619, %v618
        %v668 = vpack.c.bf16 %v621, %v620
        %v669 = vpack.c.bf16 %v623, %v622
        %v670 = vpack.c.bf16 %v625, %v624
        %v671 = vpack.c.bf16 %v627, %v626
        %v672 = vpack.c.bf16 %v629, %v628
        %v673 = vpack.c.bf16 %v631, %v630
        %v674 = vpack.c.bf16 %v633, %v632
        %v675 = vpack.c.bf16 %v635, %v634
        %v676 = vpack.c.bf16 %v637, %v636
        %v677 = vpack.c.bf16 %v639, %v638
        %v678 = vpack.c.bf16 %v641, %v640
        %v679 = vpack.c.bf16 %v643, %v642
        %v680 = vpack.c.bf16 %v645, %v644
        %v681 = vpack.c.bf16 %v647, %v646
        %v682 = vpack.c.bf16 %v649, %v648
        %v683 = vpack.c.bf16 %v651, %v650
        %v684 = vld [vmem:[%s1] sm:$0xff]
        %v685 = vld [vmem:[%s1 + $0x8] sm:$0xf]
        %v686 = vld [vmem:[%s1 + $0xc] sm:$0xff]
        %v687 = vld [vmem:[%s1 + $0x14] sm:$0xf]
        %v688 = vld [vmem:[%s1 + $0x18] sm:$0xff]
        %v689 = vld [vmem:[%s1 + $0x20] sm:$0xf]
        %v690 = vld [vmem:[%s1 + $0x24] sm:$0xff]
        %v691 = vld [vmem:[%s1 + $0x2c] sm:$0xf]
        %v692 = vld [vmem:[%s1 + $0x30] sm:$0xff]
        %v693 = vld [vmem:[%s1 + $0x38] sm:$0xf]
        %v694 = vld [vmem:[%s1 + $0x3c] sm:$0xff]
        %v695 = vld [vmem:[%s1 + $0x44] sm:$0xf]
        %v696 = vld [vmem:[%s1 + $0x48] sm:$0xff]
        %v697 = vld [vmem:[%s1 + $0x50] sm:$0xf]
        %v698 = vld [vmem:[%s1 + $0x54] sm:$0xff]
        %v699 = vld [vmem:[%s1 + $0x5c] sm:$0xf]
        %v700 = vld [vmem:[%s1 + $0x60] sm:$0xff]
        %v701 = vld [vmem:[%s1 + $0x68] sm:$0xf]
        %v702 = vld [vmem:[%s1 + $0x6c] sm:$0xff]
        %v703 = vld [vmem:[%s1 + $0x74] sm:$0xf]
        %v704 = vld [vmem:[%s1 + $0x78] sm:$0xff]
        %v705 = vld [vmem:[%s1 + $0x80] sm:$0xf]
        %v706 = vld [vmem:[%s1 + $0x84] sm:$0xff]
        %v707 = vld [vmem:[%s1 + $0x8c] sm:$0xf]
        %v708 = vld [vmem:[%s1 + $0x90] sm:$0xff]
        %v709 = vld [vmem:[%s1 + $0x98] sm:$0xf]
        %v710 = vld [vmem:[%s1 + $0x9c] sm:$0xff]
        %v711 = vld [vmem:[%s1 + $0xa4] sm:$0xf]
        %v712 = vld [vmem:[%s1 + $0xa8] sm:$0xff]
        %v713 = vld [vmem:[%s1 + $0xb0] sm:$0xf]
        %v714 = vld [vmem:[%s1 + $0xb4] sm:$0xff]
        %v715 = vld [vmem:[%s1 + $0xbc] sm:$0xf]
        %716 = vset.pattern.permute.xlu0 1
        %717 = vperm.xlu0 %716, %v268
        %v718 = vpop.permute.xlu0 %717
        %719 = vset.pattern.permute.xlu0 1
        %720 = vperm.xlu0 %719, %v269
        %v721 = vpop.permute.xlu0 %720
        %722 = vset.pattern.permute.xlu0 1
        %723 = vperm.xlu0 %722, %v270
        %v724 = vpop.permute.xlu0 %723
        %725 = vset.pattern.permute.xlu0 1
        %726 = vperm.xlu0 %725, %v271
        %v727 = vpop.permute.xlu0 %726
        %728 = vset.pattern.permute.xlu0 1
        %729 = vperm.xlu0 %728, %v272
        %v730 = vpop.permute.xlu0 %729
        %731 = vset.pattern.permute.xlu0 1
        %732 = vperm.xlu0 %731, %v273
        %v733 = vpop.permute.xlu0 %732
        %734 = vset.pattern.permute.xlu0 1
        %735 = vperm.xlu0 %734, %v274
        %v736 = vpop.permute.xlu0 %735
        %737 = vset.pattern.permute.xlu0 1
        %738 = vperm.xlu0 %737, %v275
        %v739 = vpop.permute.xlu0 %738
        %740 = vset.pattern.permute.xlu0 1
        %741 = vperm.xlu0 %740, %v276
        %v742 = vpop.permute.xlu0 %741
        %743 = vset.pattern.permute.xlu0 1
        %744 = vperm.xlu0 %743, %v277
        %v745 = vpop.permute.xlu0 %744
        %746 = vset.pattern.permute.xlu0 1
        %747 = vperm.xlu0 %746, %v278
        %v748 = vpop.permute.xlu0 %747
        %749 = vset.pattern.permute.xlu0 1
        %750 = vperm.xlu0 %749, %v279
        %v751 = vpop.permute.xlu0 %750
        %752 = vset.pattern.permute.xlu0 1
        %753 = vperm.xlu0 %752, %v280
        %v754 = vpop.permute.xlu0 %753
        %755 = vset.pattern.permute.xlu0 1
        %756 = vperm.xlu0 %755, %v281
        %v757 = vpop.permute.xlu0 %756
        %758 = vset.pattern.permute.xlu0 1
        %759 = vperm.xlu0 %758, %v282
        %v760 = vpop.permute.xlu0 %759
        %761 = vset.pattern.permute.xlu0 1
        %762 = vperm.xlu0 %761, %v283
        %v763 = vpop.permute.xlu0 %762
        %764 = vset.pattern.permute.xlu0 1
        %765 = vperm.xlu0 %764, %v284
        %v766 = vpop.permute.xlu0 %765
        %767 = vset.pattern.permute.xlu0 1
        %768 = vperm.xlu0 %767, %v285
        %v769 = vpop.permute.xlu0 %768
        %770 = vset.pattern.permute.xlu0 1
        %771 = vperm.xlu0 %770, %v286
        %v772 = vpop.permute.xlu0 %771
        %773 = vset.pattern.permute.xlu0 1
        %774 = vperm.xlu0 %773, %v287
        %v775 = vpop.permute.xlu0 %774
        %776 = vset.pattern.permute.xlu0 1
        %777 = vperm.xlu0 %776, %v288
        %v778 = vpop.permute.xlu0 %777
        %779 = vset.pattern.permute.xlu0 1
        %780 = vperm.xlu0 %779, %v289
        %v781 = vpop.permute.xlu0 %780
        %782 = vset.pattern.permute.xlu0 1
        %783 = vperm.xlu0 %782, %v290
        %v784 = vpop.permute.xlu0 %783
        %785 = vset.pattern.permute.xlu0 1
        %786 = vperm.xlu0 %785, %v291
        %v787 = vpop.permute.xlu0 %786
        %788 = vset.pattern.permute.xlu0 1
        %789 = vperm.xlu0 %788, %v292
        %v790 = vpop.permute.xlu0 %789
        %791 = vset.pattern.permute.xlu0 1
        %792 = vperm.xlu0 %791, %v293
        %v793 = vpop.permute.xlu0 %792
        %794 = vset.pattern.permute.xlu0 1
        %795 = vperm.xlu0 %794, %v294
        %v796 = vpop.permute.xlu0 %795
        %797 = vset.pattern.permute.xlu0 1
        %798 = vperm.xlu0 %797, %v295
        %v799 = vpop.permute.xlu0 %798
        %800 = vset.pattern.permute.xlu0 1
        %801 = vperm.xlu0 %800, %v296
        %v802 = vpop.permute.xlu0 %801
        %803 = vset.pattern.permute.xlu0 1
        %804 = vperm.xlu0 %803, %v297
        %v805 = vpop.permute.xlu0 %804
        %806 = vset.pattern.permute.xlu0 1
        %807 = vperm.xlu0 %806, %v298
        %v808 = vpop.permute.xlu0 %807
        %809 = vset.pattern.permute.xlu0 1
        %810 = vperm.xlu0 %809, %v299
        %v811 = vpop.permute.xlu0 %810
        %812 = vset.pattern.permute.xlu0 1
        %813 = vperm.xlu0 %812, %v300
        %v814 = vpop.permute.xlu0 %813
        %815 = vset.pattern.permute.xlu0 1
        %816 = vperm.xlu0 %815, %v301
        %v817 = vpop.permute.xlu0 %816
        %818 = vset.pattern.permute.xlu0 1
        %819 = vperm.xlu0 %818, %v302
        %v820 = vpop.permute.xlu0 %819
        %821 = vset.pattern.permute.xlu0 1
        %822 = vperm.xlu0 %821, %v303
        %v823 = vpop.permute.xlu0 %822
        %824 = vset.pattern.permute.xlu0 1
        %825 = vperm.xlu0 %824, %v304
        %v826 = vpop.permute.xlu0 %825
        %827 = vset.pattern.permute.xlu0 1
        %828 = vperm.xlu0 %827, %v305
        %v829 = vpop.permute.xlu0 %828
        %830 = vset.pattern.permute.xlu0 1
        %831 = vperm.xlu0 %830, %v306
        %v832 = vpop.permute.xlu0 %831
        %833 = vset.pattern.permute.xlu0 1
        %834 = vperm.xlu0 %833, %v307
        %v835 = vpop.permute.xlu0 %834
        %836 = vset.pattern.permute.xlu0 1
        %837 = vperm.xlu0 %836, %v308
        %v838 = vpop.permute.xlu0 %837
        %839 = vset.pattern.permute.xlu0 1
        %840 = vperm.xlu0 %839, %v309
        %v841 = vpop.permute.xlu0 %840
        %842 = vset.pattern.permute.xlu0 1
        %843 = vperm.xlu0 %842, %v310
        %v844 = vpop.permute.xlu0 %843
        %845 = vset.pattern.permute.xlu0 1
        %846 = vperm.xlu0 %845, %v311
        %v847 = vpop.permute.xlu0 %846
        %848 = vset.pattern.permute.xlu0 1
        %849 = vperm.xlu0 %848, %v312
        %v850 = vpop.permute.xlu0 %849
        %851 = vset.pattern.permute.xlu0 1
        %852 = vperm.xlu0 %851, %v313
        %v853 = vpop.permute.xlu0 %852
        %854 = vset.pattern.permute.xlu0 1
        %855 = vperm.xlu0 %854, %v314
        %v856 = vpop.permute.xlu0 %855
        %857 = vset.pattern.permute.xlu0 1
        %858 = vperm.xlu0 %857, %v315
        %v859 = vpop.permute.xlu0 %858
        %860 = vset.pattern.permute.xlu0 1
        %861 = vperm.xlu0 %860, %v316
        %v862 = vpop.permute.xlu0 %861
        %863 = vset.pattern.permute.xlu0 1
        %864 = vperm.xlu0 %863, %v317
        %v865 = vpop.permute.xlu0 %864
        %866 = vset.pattern.permute.xlu0 1
        %867 = vperm.xlu0 %866, %v318
        %v868 = vpop.permute.xlu0 %867
        %869 = vset.pattern.permute.xlu0 1
        %870 = vperm.xlu0 %869, %v319
        %v871 = vpop.permute.xlu0 %870
        %872 = vset.pattern.permute.xlu0 1
        %873 = vperm.xlu0 %872, %v320
        %v874 = vpop.permute.xlu0 %873
        %875 = vset.pattern.permute.xlu0 1
        %876 = vperm.xlu0 %875, %v321
        %v877 = vpop.permute.xlu0 %876
        %878 = vset.pattern.permute.xlu0 1
        %879 = vperm.xlu0 %878, %v322
        %v880 = vpop.permute.xlu0 %879
        %881 = vset.pattern.permute.xlu0 1
        %882 = vperm.xlu0 %881, %v323
        %v883 = vpop.permute.xlu0 %882
        %884 = vset.pattern.permute.xlu0 1
        %885 = vperm.xlu0 %884, %v324
        %v886 = vpop.permute.xlu0 %885
        %887 = vset.pattern.permute.xlu0 1
        %888 = vperm.xlu0 %887, %v325
        %v889 = vpop.permute.xlu0 %888
        %890 = vset.pattern.permute.xlu0 1
        %891 = vperm.xlu0 %890, %v326
        %v892 = vpop.permute.xlu0 %891
        %893 = vset.pattern.permute.xlu0 1
        %894 = vperm.xlu0 %893, %v327
        %v895 = vpop.permute.xlu0 %894
        %896 = vset.pattern.permute.xlu0 1
        %897 = vperm.xlu0 %896, %v328
        %v898 = vpop.permute.xlu0 %897
        %899 = vset.pattern.permute.xlu0 1
        %900 = vperm.xlu0 %899, %v329
        %v901 = vpop.permute.xlu0 %900
        %902 = vset.pattern.permute.xlu0 1
        %903 = vperm.xlu0 %902, %v330
        %v904 = vpop.permute.xlu0 %903
        %905 = vset.pattern.permute.xlu0 1
        %906 = vperm.xlu0 %905, %v331
        %v907 = vpop.permute.xlu0 %906
        %vm908 = vcmp.eq.s32.totalorder %v718, %v267
        %vm909 = vcmp.eq.s32.totalorder %v721, %v267
        %vm910 = vcmp.eq.s32.totalorder %v724, %v267
        %vm911 = vcmp.eq.s32.totalorder %v727, %v267
        %vm912 = vcmp.eq.s32.totalorder %v730, %v267
        %vm913 = vcmp.eq.s32.totalorder %v733, %v267
        %vm914 = vcmp.eq.s32.totalorder %v736, %v267
        %vm915 = vcmp.eq.s32.totalorder %v739, %v267
        %vm916 = vcmp.eq.s32.totalorder %v742, %v267
        %vm917 = vcmp.eq.s32.totalorder %v745, %v267
        %vm918 = vcmp.eq.s32.totalorder %v748, %v267
        %vm919 = vcmp.eq.s32.totalorder %v751, %v267
        %vm920 = vcmp.eq.s32.totalorder %v754, %v267
        %vm921 = vcmp.eq.s32.totalorder %v757, %v267
        %vm922 = vcmp.eq.s32.totalorder %v760, %v267
        %vm923 = vcmp.eq.s32.totalorder %v763, %v267
        %vm924 = vcmp.eq.s32.totalorder %v766, %v267
        %vm925 = vcmp.eq.s32.totalorder %v769, %v267
        %vm926 = vcmp.eq.s32.totalorder %v772, %v267
        %vm927 = vcmp.eq.s32.totalorder %v775, %v267
        %vm928 = vcmp.eq.s32.totalorder %v778, %v267
        %vm929 = vcmp.eq.s32.totalorder %v781, %v267
        %vm930 = vcmp.eq.s32.totalorder %v784, %v267
        %vm931 = vcmp.eq.s32.totalorder %v787, %v267
        %vm932 = vcmp.eq.s32.totalorder %v790, %v267
        %vm933 = vcmp.eq.s32.totalorder %v793, %v267
        %vm934 = vcmp.eq.s32.totalorder %v796, %v267
        %vm935 = vcmp.eq.s32.totalorder %v799, %v267
        %vm936 = vcmp.eq.s32.totalorder %v802, %v267
        %vm937 = vcmp.eq.s32.totalorder %v805, %v267
        %vm938 = vcmp.eq.s32.totalorder %v808, %v267
        %vm939 = vcmp.eq.s32.totalorder %v811, %v267
        %vm940 = vcmp.eq.s32.totalorder %v814, %v267
        %vm941 = vcmp.eq.s32.totalorder %v817, %v267
        %vm942 = vcmp.eq.s32.totalorder %v820, %v267
        %vm943 = vcmp.eq.s32.totalorder %v823, %v267
        %vm944 = vcmp.eq.s32.totalorder %v826, %v267
        %vm945 = vcmp.eq.s32.totalorder %v829, %v267
        %vm946 = vcmp.eq.s32.totalorder %v832, %v267
        %vm947 = vcmp.eq.s32.totalorder %v835, %v267
        %vm948 = vcmp.eq.s32.totalorder %v838, %v267
        %vm949 = vcmp.eq.s32.totalorder %v841, %v267
        %vm950 = vcmp.eq.s32.totalorder %v844, %v267
        %vm951 = vcmp.eq.s32.totalorder %v847, %v267
        %vm952 = vcmp.eq.s32.totalorder %v850, %v267
        %vm953 = vcmp.eq.s32.totalorder %v853, %v267
        %vm954 = vcmp.eq.s32.totalorder %v856, %v267
        %vm955 = vcmp.eq.s32.totalorder %v859, %v267
        %vm956 = vcmp.eq.s32.totalorder %v862, %v267
        %vm957 = vcmp.eq.s32.totalorder %v865, %v267
        %vm958 = vcmp.eq.s32.totalorder %v868, %v267
        %vm959 = vcmp.eq.s32.totalorder %v871, %v267
        %vm960 = vcmp.eq.s32.totalorder %v874, %v267
        %vm961 = vcmp.eq.s32.totalorder %v877, %v267
        %vm962 = vcmp.eq.s32.totalorder %v880, %v267
        %vm963 = vcmp.eq.s32.totalorder %v883, %v267
        %vm964 = vcmp.eq.s32.totalorder %v886, %v267
        %vm965 = vcmp.eq.s32.totalorder %v889, %v267
        %vm966 = vcmp.eq.s32.totalorder %v892, %v267
        %vm967 = vcmp.eq.s32.totalorder %v895, %v267
        %vm968 = vcmp.eq.s32.totalorder %v898, %v267
        %vm969 = vcmp.eq.s32.totalorder %v901, %v267
        %vm970 = vcmp.eq.s32.totalorder %v904, %v267
        %vm971 = vcmp.eq.s32.totalorder %v907, %v267
        %v972 = vsel %vm908, 1.0, 0.0
        %v973 = vsel %vm909, 1.0, 0.0
        %v974 = vsel %vm910, 1.0, 0.0
        %v975 = vsel %vm911, 1.0, 0.0
        %v976 = vsel %vm912, 1.0, 0.0
        %v977 = vsel %vm913, 1.0, 0.0
        %v978 = vsel %vm914, 1.0, 0.0
        %v979 = vsel %vm915, 1.0, 0.0
        %v980 = vsel %vm916, 1.0, 0.0
        %v981 = vsel %vm917, 1.0, 0.0
        %v982 = vsel %vm918, 1.0, 0.0
        %v983 = vsel %vm919, 1.0, 0.0
        %v984 = vsel %vm920, 1.0, 0.0
        %v985 = vsel %vm921, 1.0, 0.0
        %v986 = vsel %vm922, 1.0, 0.0
        %v987 = vsel %vm923, 1.0, 0.0
        %v988 = vsel %vm924, 1.0, 0.0
        %v989 = vsel %vm925, 1.0, 0.0
        %v990 = vsel %vm926, 1.0, 0.0
        %v991 = vsel %vm927, 1.0, 0.0
        %v992 = vsel %vm928, 1.0, 0.0
        %v993 = vsel %vm929, 1.0, 0.0
        %v994 = vsel %vm930, 1.0, 0.0
        %v995 = vsel %vm931, 1.0, 0.0
        %v996 = vsel %vm932, 1.0, 0.0
        %v997 = vsel %vm933, 1.0, 0.0
        %v998 = vsel %vm934, 1.0, 0.0
        %v999 = vsel %vm935, 1.0, 0.0
        %v1000 = vsel %vm936, 1.0, 0.0
        %v1001 = vsel %vm937, 1.0, 0.0
        %v1002 = vsel %vm938, 1.0, 0.0
        %v1003 = vsel %vm939, 1.0, 0.0
        %v1004 = vsel %vm940, 1.0, 0.0
        %v1005 = vsel %vm941, 1.0, 0.0
        %v1006 = vsel %vm942, 1.0, 0.0
        %v1007 = vsel %vm943, 1.0, 0.0
        %v1008 = vsel %vm944, 1.0, 0.0
        %v1009 = vsel %vm945, 1.0, 0.0
        %v1010 = vsel %vm946, 1.0, 0.0
        %v1011 = vsel %vm947, 1.0, 0.0
        %v1012 = vsel %vm948, 1.0, 0.0
        %v1013 = vsel %vm949, 1.0, 0.0
        %v1014 = vsel %vm950, 1.0, 0.0
        %v1015 = vsel %vm951, 1.0, 0.0
        %v1016 = vsel %vm952, 1.0, 0.0
        %v1017 = vsel %vm953, 1.0, 0.0
        %v1018 = vsel %vm954, 1.0, 0.0
        %v1019 = vsel %vm955, 1.0, 0.0
        %v1020 = vsel %vm956, 1.0, 0.0
        %v1021 = vsel %vm957, 1.0, 0.0
        %v1022 = vsel %vm958, 1.0, 0.0
        %v1023 = vsel %vm959, 1.0, 0.0
        %v1024 = vsel %vm960, 1.0, 0.0
        %v1025 = vsel %vm961, 1.0, 0.0
        %v1026 = vsel %vm962, 1.0, 0.0
        %v1027 = vsel %vm963, 1.0, 0.0
        %v1028 = vsel %vm964, 1.0, 0.0
        %v1029 = vsel %vm965, 1.0, 0.0
        %v1030 = vsel %vm966, 1.0, 0.0
        %v1031 = vsel %vm967, 1.0, 0.0
        %v1032 = vsel %vm968, 1.0, 0.0
        %v1033 = vsel %vm969, 1.0, 0.0
        %v1034 = vsel %vm970, 1.0, 0.0
        %v1035 = vsel %vm971, 1.0, 0.0
        %v1036 = vpack.c.bf16 %v973, %v972
        %v1037 = vpack.c.bf16 %v975, %v974
        %v1038 = vpack.c.bf16 %v977, %v976
        %v1039 = vpack.c.bf16 %v979, %v978
        %v1040 = vpack.c.bf16 %v981, %v980
        %v1041 = vpack.c.bf16 %v983, %v982
        %v1042 = vpack.c.bf16 %v985, %v984
        %v1043 = vpack.c.bf16 %v987, %v986
        %v1044 = vpack.c.bf16 %v989, %v988
        %v1045 = vpack.c.bf16 %v991, %v990
        %v1046 = vpack.c.bf16 %v993, %v992
        %v1047 = vpack.c.bf16 %v995, %v994
        %v1048 = vpack.c.bf16 %v997, %v996
        %v1049 = vpack.c.bf16 %v999, %v998
        %v1050 = vpack.c.bf16 %v1001, %v1000
        %v1051 = vpack.c.bf16 %v1003, %v1002
        %v1052 = vpack.c.bf16 %v1005, %v1004
        %v1053 = vpack.c.bf16 %v1007, %v1006
        %v1054 = vpack.c.bf16 %v1009, %v1008
        %v1055 = vpack.c.bf16 %v1011, %v1010
        %v1056 = vpack.c.bf16 %v1013, %v1012
        %v1057 = vpack.c.bf16 %v1015, %v1014
        %v1058 = vpack.c.bf16 %v1017, %v1016
        %v1059 = vpack.c.bf16 %v1019, %v1018
        %v1060 = vpack.c.bf16 %v1021, %v1020
        %v1061 = vpack.c.bf16 %v1023, %v1022
        %v1062 = vpack.c.bf16 %v1025, %v1024
        %v1063 = vpack.c.bf16 %v1027, %v1026
        %v1064 = vpack.c.bf16 %v1029, %v1028
        %v1065 = vpack.c.bf16 %v1031, %v1030
        %v1066 = vpack.c.bf16 %v1033, %v1032
        %v1067 = vpack.c.bf16 %v1035, %v1034
        %s1068 = scalar_lea.vmem %s1, 192
        %v1069 = vld [vmem:[%s1068] sm:$0xff]
        %v1070 = vld [vmem:[%s1068 + $0x8] sm:$0xf]
        %v1071 = vld [vmem:[%s1068 + $0xc] sm:$0xff]
        %v1072 = vld [vmem:[%s1068 + $0x14] sm:$0xf]
        %v1073 = vld [vmem:[%s1068 + $0x18] sm:$0xff]
        %v1074 = vld [vmem:[%s1068 + $0x20] sm:$0xf]
        %v1075 = vld [vmem:[%s1068 + $0x24] sm:$0xff]
        %v1076 = vld [vmem:[%s1068 + $0x2c] sm:$0xf]
        %v1077 = vld [vmem:[%s1068 + $0x30] sm:$0xff]
        %v1078 = vld [vmem:[%s1068 + $0x38] sm:$0xf]
        %v1079 = vld [vmem:[%s1068 + $0x3c] sm:$0xff]
        %v1080 = vld [vmem:[%s1068 + $0x44] sm:$0xf]
        %v1081 = vld [vmem:[%s1068 + $0x48] sm:$0xff]
        %v1082 = vld [vmem:[%s1068 + $0x50] sm:$0xf]
        %v1083 = vld [vmem:[%s1068 + $0x54] sm:$0xff]
        %v1084 = vld [vmem:[%s1068 + $0x5c] sm:$0xf]
        %v1085 = vld [vmem:[%s1068 + $0x60] sm:$0xff]
        %v1086 = vld [vmem:[%s1068 + $0x68] sm:$0xf]
        %v1087 = vld [vmem:[%s1068 + $0x6c] sm:$0xff]
        %v1088 = vld [vmem:[%s1068 + $0x74] sm:$0xf]
        %v1089 = vld [vmem:[%s1068 + $0x78] sm:$0xff]
        %v1090 = vld [vmem:[%s1068 + $0x80] sm:$0xf]
        %v1091 = vld [vmem:[%s1068 + $0x84] sm:$0xff]
        %v1092 = vld [vmem:[%s1068 + $0x8c] sm:$0xf]
        %v1093 = vld [vmem:[%s1068 + $0x90] sm:$0xff]
        %v1094 = vld [vmem:[%s1068 + $0x98] sm:$0xf]
        %v1095 = vld [vmem:[%s1068 + $0x9c] sm:$0xff]
        %v1096 = vld [vmem:[%s1068 + $0xa4] sm:$0xf]
        %v1097 = vld [vmem:[%s1068 + $0xa8] sm:$0xff]
        %v1098 = vld [vmem:[%s1068 + $0xb0] sm:$0xf]
        %v1099 = vld [vmem:[%s1068 + $0xb4] sm:$0xff]
        %v1100 = vld [vmem:[%s1068 + $0xbc] sm:$0xf]
        %v1133 = vunpack.c.l.b16 %v1069
        %v1134 = vunpack.c.h.b16 %v1069
        %v1135 = vunpack.c.l.b16 %v1070
        %v1136 = vunpack.c.l.b16 %v1071
        %v1137 = vunpack.c.h.b16 %v1071
        %v1138 = vunpack.c.l.b16 %v1072
        %v1139 = vunpack.c.l.b16 %v1073
        %v1140 = vunpack.c.h.b16 %v1073
        %v1141 = vunpack.c.l.b16 %v1074
        %v1142 = vunpack.c.l.b16 %v1075
        %v1143 = vunpack.c.h.b16 %v1075
        %v1144 = vunpack.c.l.b16 %v1076
        %v1145 = vunpack.c.l.b16 %v1077
        %v1146 = vunpack.c.h.b16 %v1077
        %v1147 = vunpack.c.l.b16 %v1078
        %v1148 = vunpack.c.l.b16 %v1079
        %v1149 = vunpack.c.h.b16 %v1079
        %v1150 = vunpack.c.l.b16 %v1080
        %v1151 = vunpack.c.l.b16 %v1081
        %v1152 = vunpack.c.h.b16 %v1081
        %v1153 = vunpack.c.l.b16 %v1082
        %v1154 = vunpack.c.l.b16 %v1083
        %v1155 = vunpack.c.h.b16 %v1083
        %v1156 = vunpack.c.l.b16 %v1084
        %v1157 = vunpack.c.l.b16 %v1085
        %v1158 = vunpack.c.h.b16 %v1085
        %v1159 = vunpack.c.l.b16 %v1086
        %v1160 = vunpack.c.l.b16 %v1087
        %v1161 = vunpack.c.h.b16 %v1087
        %v1162 = vunpack.c.l.b16 %v1088
        %v1163 = vunpack.c.l.b16 %v1089
        %v1164 = vunpack.c.h.b16 %v1089
        %v1165 = vunpack.c.l.b16 %v1090
        %v1166 = vunpack.c.l.b16 %v1091
        %v1167 = vunpack.c.h.b16 %v1091
        %v1168 = vunpack.c.l.b16 %v1092
        %v1169 = vunpack.c.l.b16 %v1093
        %v1170 = vunpack.c.h.b16 %v1093
        %v1171 = vunpack.c.l.b16 %v1094
        %v1172 = vunpack.c.l.b16 %v1095
        %v1173 = vunpack.c.h.b16 %v1095
        %v1174 = vunpack.c.l.b16 %v1096
        %v1175 = vunpack.c.l.b16 %v1097
        %v1176 = vunpack.c.h.b16 %v1097
        %v1177 = vunpack.c.l.b16 %v1098
        %v1178 = vunpack.c.l.b16 %v1099
        %v1179 = vunpack.c.h.b16 %v1099
        %v1180 = vunpack.c.l.b16 %v1100
        %v1181 = vpack.c.b16 %v1136, %v1133
        %v1182 = vpack.c.b16 %v1137, %v1134
        %v1183 = vpack.c.b16 %v1138, %v1135
        %v1184 = vpack.c.b16 %v1142, %v1139
        %v1185 = vpack.c.b16 %v1143, %v1140
        %v1186 = vpack.c.b16 %v1144, %v1141
        %v1187 = vpack.c.b16 %v1148, %v1145
        %v1188 = vpack.c.b16 %v1149, %v1146
        %v1189 = vpack.c.b16 %v1150, %v1147
        %v1190 = vpack.c.b16 %v1154, %v1151
        %v1191 = vpack.c.b16 %v1155, %v1152
        %v1192 = vpack.c.b16 %v1156, %v1153
        %v1193 = vpack.c.b16 %v1160, %v1157
        %v1194 = vpack.c.b16 %v1161, %v1158
        %v1195 = vpack.c.b16 %v1162, %v1159
        %v1196 = vpack.c.b16 %v1166, %v1163
        %v1197 = vpack.c.b16 %v1167, %v1164
        %v1198 = vpack.c.b16 %v1168, %v1165
        %v1199 = vpack.c.b16 %v1172, %v1169
        %v1200 = vpack.c.b16 %v1173, %v1170
        %v1201 = vpack.c.b16 %v1174, %v1171
        %v1202 = vpack.c.b16 %v1178, %v1175
        %v1203 = vpack.c.b16 %v1179, %v1176
        %v1204 = vpack.c.b16 %v1180, %v1177
        %1229 = vmatprep.subr.bf16.mxu0 %v1203
        %1230 = vmatpush1.bf16.msra.mxu0 %v1202
        %1231 = vmatprep.subr.bf16.mxu0 %v1200
        %1232 = vmatpush1.bf16.msra.mxu0 %v1199
        %1233 = vmatprep.subr.bf16.mxu0 %v1197
        %1234 = vmatpush1.bf16.msra.mxu0 %v1196
        %1235 = vmatprep.subr.bf16.mxu0 %v1194
        %1236 = vmatpush1.bf16.msra.mxu0 %v1193
        %1237 = vmatprep.subr.bf16.mxu0 %v1191
        %1238 = vmatpush1.bf16.msra.mxu0 %v1190
        %1239 = vmatprep.subr.bf16.mxu0 %v1188
        %1240 = vmatpush1.bf16.msra.mxu0 %v1187
        %1241 = vmatprep.subr.bf16.mxu0 %v1185
        %1242 = vmatpush1.bf16.msra.mxu0 %v1184
        %1243 = vmatprep.subr.bf16.mxu0 %v1182
        %1244 = vmatpush1.bf16.msra.mxu0 %v1181
        %1245 = vmatprep.subr.bf16.mxu0 0
        %1246 = vmatpush2.bf16.msra.mxu0 0
        %1247 = vmatprep.subr.bf16.mxu0 0
        %1248 = vmatpush2.bf16.msra.mxu0 0
        %1249 = vmatprep.subr.bf16.mxu0 0
        %1250 = vmatpush2.bf16.msra.mxu0 0
        %1251 = vmatprep.subr.bf16.mxu0 0
        %1252 = vmatpush2.bf16.msra.mxu0 0
        %1253 = vmatprep.subr.bf16.mxu0 0
        %1254 = vmatpush2.bf16.msra.mxu0 0
        %1255 = vmatprep.subr.bf16.mxu0 0
        %1256 = vmatpush2.bf16.msra.mxu0 0
        %1257 = vmatprep.subr.bf16.mxu0 0
        %1258 = vmatpush2.bf16.msra.mxu0 0
        %1259 = vmatprep.subr.bf16.mxu0 0
        %1260 = vmatpush2.bf16.msra.mxu0 0
        %1261 = vmatprep.mubr.bf16.mxu0 0
        %1262 = vmatmul.mubr.bf16.gmra.mxu0 %v1036
        %v1263 = vpop.f32.mrf.mxu0
        %v1264 = vadd.f32 0.0, %v1263
        %v1265 = vpop.f32.mrf.mxu0
        %v1266 = vadd.f32 0.0, %v1265
        %v1267 = vpop.f32.mrf.mxu0
        %v1268 = vadd.f32 0.0, %v1267
        %v1269 = vpop.f32.mrf.mxu0
        %v1270 = vadd.f32 0.0, %v1269
        %1271 = vmatprep.mubr.bf16.mxu0 0
        %1272 = vmatmul.mubr.bf16.gmra.mxu0 %v1037
        %v1273 = vpop.f32.mrf.mxu0
        %v1274 = vadd.f32 0.0, %v1273
        %v1275 = vpop.f32.mrf.mxu0
        %v1276 = vadd.f32 0.0, %v1275
        %v1277 = vpop.f32.mrf.mxu0
        %v1278 = vadd.f32 0.0, %v1277
        %v1279 = vpop.f32.mrf.mxu0
        %v1280 = vadd.f32 0.0, %v1279
        %1281 = vmatprep.mubr.bf16.mxu0 0
        %1282 = vmatmul.mubr.bf16.gmra.mxu0 %v1038
        %v1283 = vpop.f32.mrf.mxu0
        %v1284 = vadd.f32 0.0, %v1283
        %v1285 = vpop.f32.mrf.mxu0
        %v1286 = vadd.f32 0.0, %v1285
        %v1287 = vpop.f32.mrf.mxu0
        %v1288 = vadd.f32 0.0, %v1287
        %v1289 = vpop.f32.mrf.mxu0
        %v1290 = vadd.f32 0.0, %v1289
        %1291 = vmatprep.mubr.bf16.mxu0 0
        %1292 = vmatmul.mubr.bf16.gmra.mxu0 %v1039
        %v1293 = vpop.f32.mrf.mxu0
        %v1294 = vadd.f32 0.0, %v1293
        %v1295 = vpop.f32.mrf.mxu0
        %v1296 = vadd.f32 0.0, %v1295
        %v1297 = vpop.f32.mrf.mxu0
        %v1298 = vadd.f32 0.0, %v1297
        %v1299 = vpop.f32.mrf.mxu0
        %v1300 = vadd.f32 0.0, %v1299
        %1301 = vmatprep.mubr.bf16.mxu0 0
        %1302 = vmatmul.mubr.bf16.gmra.mxu0 %v1040
        %v1303 = vpop.f32.mrf.mxu0
        %v1304 = vadd.f32 0.0, %v1303
        %v1305 = vpop.f32.mrf.mxu0
        %v1306 = vadd.f32 0.0, %v1305
        %v1307 = vpop.f32.mrf.mxu0
        %v1308 = vadd.f32 0.0, %v1307
        %v1309 = vpop.f32.mrf.mxu0
        %v1310 = vadd.f32 0.0, %v1309
        %1311 = vmatprep.mubr.bf16.mxu0 0
        %1312 = vmatmul.mubr.bf16.gmra.mxu0 %v1041
        %v1313 = vpop.f32.mrf.mxu0
        %v1314 = vadd.f32 0.0, %v1313
        %v1315 = vpop.f32.mrf.mxu0
        %v1316 = vadd.f32 0.0, %v1315
        %v1317 = vpop.f32.mrf.mxu0
        %v1318 = vadd.f32 0.0, %v1317
        %v1319 = vpop.f32.mrf.mxu0
        %v1320 = vadd.f32 0.0, %v1319
        %1321 = vmatprep.mubr.bf16.mxu0 0
        %1322 = vmatmul.mubr.bf16.gmra.mxu0 %v1042
        %v1323 = vpop.f32.mrf.mxu0
        %v1324 = vadd.f32 0.0, %v1323
        %v1325 = vpop.f32.mrf.mxu0
        %v1326 = vadd.f32 0.0, %v1325
        %v1327 = vpop.f32.mrf.mxu0
        %v1328 = vadd.f32 0.0, %v1327
        %v1329 = vpop.f32.mrf.mxu0
        %v1330 = vadd.f32 0.0, %v1329
        %1331 = vmatprep.mubr.bf16.mxu0 0
        %1332 = vmatmul.mubr.bf16.gmra.mxu0 %v1043
        %v1333 = vpop.f32.mrf.mxu0
        %v1334 = vadd.f32 0.0, %v1333
        %v1335 = vpop.f32.mrf.mxu0
        %v1336 = vadd.f32 0.0, %v1335
        %v1337 = vpop.f32.mrf.mxu0
        %v1338 = vadd.f32 0.0, %v1337
        %v1339 = vpop.f32.mrf.mxu0
        %v1340 = vadd.f32 0.0, %v1339
        %1341 = vmatprep.mubr.bf16.mxu0 0
        %1342 = vmatmul.mubr.bf16.gmra.mxu0 %v1044
        %v1343 = vpop.f32.mrf.mxu0
        %v1344 = vadd.f32 0.0, %v1343
        %v1345 = vpop.f32.mrf.mxu0
        %v1346 = vadd.f32 0.0, %v1345
        %v1347 = vpop.f32.mrf.mxu0
        %v1348 = vadd.f32 0.0, %v1347
        %v1349 = vpop.f32.mrf.mxu0
        %v1350 = vadd.f32 0.0, %v1349
        %1351 = vmatprep.mubr.bf16.mxu0 0
        %1352 = vmatmul.mubr.bf16.gmra.mxu0 %v1045
        %v1353 = vpop.f32.mrf.mxu0
        %v1354 = vadd.f32 0.0, %v1353
        %v1355 = vpop.f32.mrf.mxu0
        %v1356 = vadd.f32 0.0, %v1355
        %v1357 = vpop.f32.mrf.mxu0
        %v1358 = vadd.f32 0.0, %v1357
        %v1359 = vpop.f32.mrf.mxu0
        %v1360 = vadd.f32 0.0, %v1359
        %1361 = vmatprep.mubr.bf16.mxu0 0
        %1362 = vmatmul.mubr.bf16.gmra.mxu0 %v1046
        %v1363 = vpop.f32.mrf.mxu0
        %v1364 = vadd.f32 0.0, %v1363
        %v1365 = vpop.f32.mrf.mxu0
        %v1366 = vadd.f32 0.0, %v1365
        %v1367 = vpop.f32.mrf.mxu0
        %v1368 = vadd.f32 0.0, %v1367
        %v1369 = vpop.f32.mrf.mxu0
        %v1370 = vadd.f32 0.0, %v1369
        %1371 = vmatprep.mubr.bf16.mxu0 0
        %1372 = vmatmul.mubr.bf16.gmra.mxu0 %v1047
        %v1373 = vpop.f32.mrf.mxu0
        %v1374 = vadd.f32 0.0, %v1373
        %v1375 = vpop.f32.mrf.mxu0
        %v1376 = vadd.f32 0.0, %v1375
        %v1377 = vpop.f32.mrf.mxu0
        %v1378 = vadd.f32 0.0, %v1377
        %v1379 = vpop.f32.mrf.mxu0
        %v1380 = vadd.f32 0.0, %v1379
        %1381 = vmatprep.mubr.bf16.mxu0 0
        %1382 = vmatmul.mubr.bf16.gmra.mxu0 %v1048
        %v1383 = vpop.f32.mrf.mxu0
        %v1384 = vadd.f32 0.0, %v1383
        %v1385 = vpop.f32.mrf.mxu0
        %v1386 = vadd.f32 0.0, %v1385
        %v1387 = vpop.f32.mrf.mxu0
        %v1388 = vadd.f32 0.0, %v1387
        %v1389 = vpop.f32.mrf.mxu0
        %v1390 = vadd.f32 0.0, %v1389
        %1391 = vmatprep.mubr.bf16.mxu0 0
        %1392 = vmatmul.mubr.bf16.gmra.mxu0 %v1049
        %v1393 = vpop.f32.mrf.mxu0
        %v1394 = vadd.f32 0.0, %v1393
        %v1395 = vpop.f32.mrf.mxu0
        %v1396 = vadd.f32 0.0, %v1395
        %v1397 = vpop.f32.mrf.mxu0
        %v1398 = vadd.f32 0.0, %v1397
        %v1399 = vpop.f32.mrf.mxu0
        %v1400 = vadd.f32 0.0, %v1399
        %1401 = vmatprep.mubr.bf16.mxu0 0
        %1402 = vmatmul.mubr.bf16.gmra.mxu0 %v1050
        %v1403 = vpop.f32.mrf.mxu0
        %v1404 = vadd.f32 0.0, %v1403
        %v1405 = vpop.f32.mrf.mxu0
        %v1406 = vadd.f32 0.0, %v1405
        %v1407 = vpop.f32.mrf.mxu0
        %v1408 = vadd.f32 0.0, %v1407
        %v1409 = vpop.f32.mrf.mxu0
        %v1410 = vadd.f32 0.0, %v1409
        %1411 = vmatprep.mubr.bf16.mxu0 0
        %1412 = vmatmul.mubr.bf16.gmra.mxu0 %v1051
        %v1413 = vpop.f32.mrf.mxu0
        %v1414 = vadd.f32 0.0, %v1413
        %v1415 = vpop.f32.mrf.mxu0
        %v1416 = vadd.f32 0.0, %v1415
        %v1417 = vpop.f32.mrf.mxu0
        %v1418 = vadd.f32 0.0, %v1417
        %v1419 = vpop.f32.mrf.mxu0
        %v1420 = vadd.f32 0.0, %v1419
        %1421 = vmatprep.mubr.bf16.mxu0 0
        %1422 = vmatmul.mubr.bf16.gmra.mxu0 %v1052
        %v1423 = vpop.f32.mrf.mxu0
        %v1424 = vadd.f32 0.0, %v1423
        %v1425 = vpop.f32.mrf.mxu0
        %v1426 = vadd.f32 0.0, %v1425
        %v1427 = vpop.f32.mrf.mxu0
        %v1428 = vadd.f32 0.0, %v1427
        %v1429 = vpop.f32.mrf.mxu0
        %v1430 = vadd.f32 0.0, %v1429
        %1431 = vmatprep.mubr.bf16.mxu0 0
        %1432 = vmatmul.mubr.bf16.gmra.mxu0 %v1053
        %v1433 = vpop.f32.mrf.mxu0
        %v1434 = vadd.f32 0.0, %v1433
        %v1435 = vpop.f32.mrf.mxu0
        %v1436 = vadd.f32 0.0, %v1435
        %v1437 = vpop.f32.mrf.mxu0
        %v1438 = vadd.f32 0.0, %v1437
        %v1439 = vpop.f32.mrf.mxu0
        %v1440 = vadd.f32 0.0, %v1439
        %1441 = vmatprep.mubr.bf16.mxu0 0
        %1442 = vmatmul.mubr.bf16.gmra.mxu0 %v1054
        %v1443 = vpop.f32.mrf.mxu0
        %v1444 = vadd.f32 0.0, %v1443
        %v1445 = vpop.f32.mrf.mxu0
        %v1446 = vadd.f32 0.0, %v1445
        %v1447 = vpop.f32.mrf.mxu0
        %v1448 = vadd.f32 0.0, %v1447
        %v1449 = vpop.f32.mrf.mxu0
        %v1450 = vadd.f32 0.0, %v1449
        %1451 = vmatprep.mubr.bf16.mxu0 0
        %1452 = vmatmul.mubr.bf16.gmra.mxu0 %v1055
        %v1453 = vpop.f32.mrf.mxu0
        %v1454 = vadd.f32 0.0, %v1453
        %v1455 = vpop.f32.mrf.mxu0
        %v1456 = vadd.f32 0.0, %v1455
        %v1457 = vpop.f32.mrf.mxu0
        %v1458 = vadd.f32 0.0, %v1457
        %v1459 = vpop.f32.mrf.mxu0
        %v1460 = vadd.f32 0.0, %v1459
        %1461 = vmatprep.mubr.bf16.mxu0 0
        %1462 = vmatmul.mubr.bf16.gmra.mxu0 %v1056
        %v1463 = vpop.f32.mrf.mxu0
        %v1464 = vadd.f32 0.0, %v1463
        %v1465 = vpop.f32.mrf.mxu0
        %v1466 = vadd.f32 0.0, %v1465
        %v1467 = vpop.f32.mrf.mxu0
        %v1468 = vadd.f32 0.0, %v1467
        %v1469 = vpop.f32.mrf.mxu0
        %v1470 = vadd.f32 0.0, %v1469
        %1471 = vmatprep.mubr.bf16.mxu0 0
        %1472 = vmatmul.mubr.bf16.gmra.mxu0 %v1057
        %v1473 = vpop.f32.mrf.mxu0
        %v1474 = vadd.f32 0.0, %v1473
        %v1475 = vpop.f32.mrf.mxu0
        %v1476 = vadd.f32 0.0, %v1475
        %v1477 = vpop.f32.mrf.mxu0
        %v1478 = vadd.f32 0.0, %v1477
        %v1479 = vpop.f32.mrf.mxu0
        %v1480 = vadd.f32 0.0, %v1479
        %1481 = vmatprep.mubr.bf16.mxu0 0
        %1482 = vmatmul.mubr.bf16.gmra.mxu0 %v1058
        %v1483 = vpop.f32.mrf.mxu0
        %v1484 = vadd.f32 0.0, %v1483
        %v1485 = vpop.f32.mrf.mxu0
        %v1486 = vadd.f32 0.0, %v1485
        %v1487 = vpop.f32.mrf.mxu0
        %v1488 = vadd.f32 0.0, %v1487
        %v1489 = vpop.f32.mrf.mxu0
        %v1490 = vadd.f32 0.0, %v1489
        %1491 = vmatprep.mubr.bf16.mxu0 0
        %1492 = vmatmul.mubr.bf16.gmra.mxu0 %v1059
        %v1493 = vpop.f32.mrf.mxu0
        %v1494 = vadd.f32 0.0, %v1493
        %v1495 = vpop.f32.mrf.mxu0
        %v1496 = vadd.f32 0.0, %v1495
        %v1497 = vpop.f32.mrf.mxu0
        %v1498 = vadd.f32 0.0, %v1497
        %v1499 = vpop.f32.mrf.mxu0
        %v1500 = vadd.f32 0.0, %v1499
        %1501 = vmatprep.mubr.bf16.mxu0 0
        %1502 = vmatmul.mubr.bf16.gmra.mxu0 %v1060
        %v1503 = vpop.f32.mrf.mxu0
        %v1504 = vadd.f32 0.0, %v1503
        %v1505 = vpop.f32.mrf.mxu0
        %v1506 = vadd.f32 0.0, %v1505
        %v1507 = vpop.f32.mrf.mxu0
        %v1508 = vadd.f32 0.0, %v1507
        %v1509 = vpop.f32.mrf.mxu0
        %v1510 = vadd.f32 0.0, %v1509
        %1511 = vmatprep.mubr.bf16.mxu0 0
        %1512 = vmatmul.mubr.bf16.gmra.mxu0 %v1061
        %v1513 = vpop.f32.mrf.mxu0
        %v1514 = vadd.f32 0.0, %v1513
        %v1515 = vpop.f32.mrf.mxu0
        %v1516 = vadd.f32 0.0, %v1515
        %v1517 = vpop.f32.mrf.mxu0
        %v1518 = vadd.f32 0.0, %v1517
        %v1519 = vpop.f32.mrf.mxu0
        %v1520 = vadd.f32 0.0, %v1519
        %1521 = vmatprep.mubr.bf16.mxu0 0
        %1522 = vmatmul.mubr.bf16.gmra.mxu0 %v1062
        %v1523 = vpop.f32.mrf.mxu0
        %v1524 = vadd.f32 0.0, %v1523
        %v1525 = vpop.f32.mrf.mxu0
        %v1526 = vadd.f32 0.0, %v1525
        %v1527 = vpop.f32.mrf.mxu0
        %v1528 = vadd.f32 0.0, %v1527
        %v1529 = vpop.f32.mrf.mxu0
        %v1530 = vadd.f32 0.0, %v1529
        %1531 = vmatprep.mubr.bf16.mxu0 0
        %1532 = vmatmul.mubr.bf16.gmra.mxu0 %v1063
        %v1533 = vpop.f32.mrf.mxu0
        %v1534 = vadd.f32 0.0, %v1533
        %v1535 = vpop.f32.mrf.mxu0
        %v1536 = vadd.f32 0.0, %v1535
        %v1537 = vpop.f32.mrf.mxu0
        %v1538 = vadd.f32 0.0, %v1537
        %v1539 = vpop.f32.mrf.mxu0
        %v1540 = vadd.f32 0.0, %v1539
        %1541 = vmatprep.mubr.bf16.mxu0 0
        %1542 = vmatmul.mubr.bf16.gmra.mxu0 %v1064
        %v1543 = vpop.f32.mrf.mxu0
        %v1544 = vadd.f32 0.0, %v1543
        %v1545 = vpop.f32.mrf.mxu0
        %v1546 = vadd.f32 0.0, %v1545
        %v1547 = vpop.f32.mrf.mxu0
        %v1548 = vadd.f32 0.0, %v1547
        %v1549 = vpop.f32.mrf.mxu0
        %v1550 = vadd.f32 0.0, %v1549
        %1551 = vmatprep.mubr.bf16.mxu0 0
        %1552 = vmatmul.mubr.bf16.gmra.mxu0 %v1065
        %v1553 = vpop.f32.mrf.mxu0
        %v1554 = vadd.f32 0.0, %v1553
        %v1555 = vpop.f32.mrf.mxu0
        %v1556 = vadd.f32 0.0, %v1555
        %v1557 = vpop.f32.mrf.mxu0
        %v1558 = vadd.f32 0.0, %v1557
        %v1559 = vpop.f32.mrf.mxu0
        %v1560 = vadd.f32 0.0, %v1559
        %1561 = vmatprep.mubr.bf16.mxu0 0
        %1562 = vmatmul.mubr.bf16.gmra.mxu0 %v1066
        %v1563 = vpop.f32.mrf.mxu0
        %v1564 = vadd.f32 0.0, %v1563
        %v1565 = vpop.f32.mrf.mxu0
        %v1566 = vadd.f32 0.0, %v1565
        %v1567 = vpop.f32.mrf.mxu0
        %v1568 = vadd.f32 0.0, %v1567
        %v1569 = vpop.f32.mrf.mxu0
        %v1570 = vadd.f32 0.0, %v1569
        %1571 = vmatprep.mubr.bf16.mxu0 0
        %1572 = vmatmul.mubr.bf16.gmra.mxu0 %v1067
        %v1573 = vpop.f32.mrf.mxu0
        %v1574 = vadd.f32 0.0, %v1573
        %v1575 = vpop.f32.mrf.mxu0
        %v1576 = vadd.f32 0.0, %v1575
        %v1577 = vpop.f32.mrf.mxu0
        %v1578 = vadd.f32 0.0, %v1577
        %v1579 = vpop.f32.mrf.mxu0
        %v1580 = vadd.f32 0.0, %v1579
        %1581 = vdwg.mxu0
        %1582 = vmatprep.subr.bf16.mxu0 0
        %1583 = vmatpush1.bf16.msra.mxu0 %v1204
        %1584 = vmatprep.subr.bf16.mxu0 0
        %1585 = vmatpush1.bf16.msra.mxu0 %v1201
        %1586 = vmatprep.subr.bf16.mxu0 0
        %1587 = vmatpush1.bf16.msra.mxu0 %v1198
        %1588 = vmatprep.subr.bf16.mxu0 0
        %1589 = vmatpush1.bf16.msra.mxu0 %v1195
        %1590 = vmatprep.subr.bf16.mxu0 0
        %1591 = vmatpush1.bf16.msra.mxu0 %v1192
        %1592 = vmatprep.subr.bf16.mxu0 0
        %1593 = vmatpush1.bf16.msra.mxu0 %v1189
        %1594 = vmatprep.subr.bf16.mxu0 0
        %1595 = vmatpush1.bf16.msra.mxu0 %v1186
        %1596 = vmatprep.subr.bf16.mxu0 0
        %1597 = vmatpush1.bf16.msra.mxu0 %v1183
        %1598 = vmatprep.subr.bf16.mxu0 0
        %1599 = vmatpush2.bf16.msra.mxu0 0
        %1600 = vmatprep.subr.bf16.mxu0 0
        %1601 = vmatpush2.bf16.msra.mxu0 0
        %1602 = vmatprep.subr.bf16.mxu0 0
        %1603 = vmatpush2.bf16.msra.mxu0 0
        %1604 = vmatprep.subr.bf16.mxu0 0
        %1605 = vmatpush2.bf16.msra.mxu0 0
        %1606 = vmatprep.subr.bf16.mxu0 0
        %1607 = vmatpush2.bf16.msra.mxu0 0
        %1608 = vmatprep.subr.bf16.mxu0 0
        %1609 = vmatpush2.bf16.msra.mxu0 0
        %1610 = vmatprep.subr.bf16.mxu0 0
        %1611 = vmatpush2.bf16.msra.mxu0 0
        %1612 = vmatprep.subr.bf16.mxu0 0
        %1613 = vmatpush2.bf16.msra.mxu0 0
        %1614 = vmatprep.mubr.bf16.mxu0 0
        %1615 = vmatmul.mubr.bf16.gmra.mxu0 %v1036
        %v1616 = vpop.f32.mrf.mxu0
        %v1617 = vadd.f32 0.0, %v1616
        %v1618 = vpop.f32.mrf.mxu0
        %v1619 = vpop.f32.mrf.mxu0
        %v1620 = vadd.f32 0.0, %v1619
        %v1621 = vpop.f32.mrf.mxu0
        %1622 = vmatprep.mubr.bf16.mxu0 0
        %1623 = vmatmul.mubr.bf16.gmra.mxu0 %v1037
        %v1624 = vpop.f32.mrf.mxu0
        %v1625 = vadd.f32 0.0, %v1624
        %v1626 = vpop.f32.mrf.mxu0
        %v1627 = vpop.f32.mrf.mxu0
        %v1628 = vadd.f32 0.0, %v1627
        %v1629 = vpop.f32.mrf.mxu0
        %1630 = vmatprep.mubr.bf16.mxu0 0
        %1631 = vmatmul.mubr.bf16.gmra.mxu0 %v1038
        %v1632 = vpop.f32.mrf.mxu0
        %v1633 = vadd.f32 0.0, %v1632
        %v1634 = vpop.f32.mrf.mxu0
        %v1635 = vpop.f32.mrf.mxu0
        %v1636 = vadd.f32 0.0, %v1635
        %v1637 = vpop.f32.mrf.mxu0
        %1638 = vmatprep.mubr.bf16.mxu0 0
        %1639 = vmatmul.mubr.bf16.gmra.mxu0 %v1039
        %v1640 = vpop.f32.mrf.mxu0
        %v1641 = vadd.f32 0.0, %v1640
        %v1642 = vpop.f32.mrf.mxu0
        %v1643 = vpop.f32.mrf.mxu0
        %v1644 = vadd.f32 0.0, %v1643
        %v1645 = vpop.f32.mrf.mxu0
        %1646 = vmatprep.mubr.bf16.mxu0 0
        %1647 = vmatmul.mubr.bf16.gmra.mxu0 %v1040
        %v1648 = vpop.f32.mrf.mxu0
        %v1649 = vadd.f32 0.0, %v1648
        %v1650 = vpop.f32.mrf.mxu0
        %v1651 = vpop.f32.mrf.mxu0
        %v1652 = vadd.f32 0.0, %v1651
        %v1653 = vpop.f32.mrf.mxu0
        %1654 = vmatprep.mubr.bf16.mxu0 0
        %1655 = vmatmul.mubr.bf16.gmra.mxu0 %v1041
        %v1656 = vpop.f32.mrf.mxu0
        %v1657 = vadd.f32 0.0, %v1656
        %v1658 = vpop.f32.mrf.mxu0
        %v1659 = vpop.f32.mrf.mxu0
        %v1660 = vadd.f32 0.0, %v1659
        %v1661 = vpop.f32.mrf.mxu0
        %1662 = vmatprep.mubr.bf16.mxu0 0
        %1663 = vmatmul.mubr.bf16.gmra.mxu0 %v1042
        %v1664 = vpop.f32.mrf.mxu0
        %v1665 = vadd.f32 0.0, %v1664
        %v1666 = vpop.f32.mrf.mxu0
        %v1667 = vpop.f32.mrf.mxu0
        %v1668 = vadd.f32 0.0, %v1667
        %v1669 = vpop.f32.mrf.mxu0
        %1670 = vmatprep.mubr.bf16.mxu0 0
        %1671 = vmatmul.mubr.bf16.gmra.mxu0 %v1043
        %v1672 = vpop.f32.mrf.mxu0
        %v1673 = vadd.f32 0.0, %v1672
        %v1674 = vpop.f32.mrf.mxu0
        %v1675 = vpop.f32.mrf.mxu0
        %v1676 = vadd.f32 0.0, %v1675
        %v1677 = vpop.f32.mrf.mxu0
        %1678 = vmatprep.mubr.bf16.mxu0 0
        %1679 = vmatmul.mubr.bf16.gmra.mxu0 %v1044
        %v1680 = vpop.f32.mrf.mxu0
        %v1681 = vadd.f32 0.0, %v1680
        %v1682 = vpop.f32.mrf.mxu0
        %v1683 = vpop.f32.mrf.mxu0
        %v1684 = vadd.f32 0.0, %v1683
        %v1685 = vpop.f32.mrf.mxu0
        %1686 = vmatprep.mubr.bf16.mxu0 0
        %1687 = vmatmul.mubr.bf16.gmra.mxu0 %v1045
        %v1688 = vpop.f32.mrf.mxu0
        %v1689 = vadd.f32 0.0, %v1688
        %v1690 = vpop.f32.mrf.mxu0
        %v1691 = vpop.f32.mrf.mxu0
        %v1692 = vadd.f32 0.0, %v1691
        %v1693 = vpop.f32.mrf.mxu0
        %1694 = vmatprep.mubr.bf16.mxu0 0
        %1695 = vmatmul.mubr.bf16.gmra.mxu0 %v1046
        %v1696 = vpop.f32.mrf.mxu0
        %v1697 = vadd.f32 0.0, %v1696
        %v1698 = vpop.f32.mrf.mxu0
        %v1699 = vpop.f32.mrf.mxu0
        %v1700 = vadd.f32 0.0, %v1699
        %v1701 = vpop.f32.mrf.mxu0
        %1702 = vmatprep.mubr.bf16.mxu0 0
        %1703 = vmatmul.mubr.bf16.gmra.mxu0 %v1047
        %v1704 = vpop.f32.mrf.mxu0
        %v1705 = vadd.f32 0.0, %v1704
        %v1706 = vpop.f32.mrf.mxu0
        %v1707 = vpop.f32.mrf.mxu0
        %v1708 = vadd.f32 0.0, %v1707
        %v1709 = vpop.f32.mrf.mxu0
        %1710 = vmatprep.mubr.bf16.mxu0 0
        %1711 = vmatmul.mubr.bf16.gmra.mxu0 %v1048
        %v1712 = vpop.f32.mrf.mxu0
        %v1713 = vadd.f32 0.0, %v1712
        %v1714 = vpop.f32.mrf.mxu0
        %v1715 = vpop.f32.mrf.mxu0
        %v1716 = vadd.f32 0.0, %v1715
        %v1717 = vpop.f32.mrf.mxu0
        %1718 = vmatprep.mubr.bf16.mxu0 0
        %1719 = vmatmul.mubr.bf16.gmra.mxu0 %v1049
        %v1720 = vpop.f32.mrf.mxu0
        %v1721 = vadd.f32 0.0, %v1720
        %v1722 = vpop.f32.mrf.mxu0
        %v1723 = vpop.f32.mrf.mxu0
        %v1724 = vadd.f32 0.0, %v1723
        %v1725 = vpop.f32.mrf.mxu0
        %1726 = vmatprep.mubr.bf16.mxu0 0
        %1727 = vmatmul.mubr.bf16.gmra.mxu0 %v1050
        %v1728 = vpop.f32.mrf.mxu0
        %v1729 = vadd.f32 0.0, %v1728
        %v1730 = vpop.f32.mrf.mxu0
        %v1731 = vpop.f32.mrf.mxu0
        %v1732 = vadd.f32 0.0, %v1731
        %v1733 = vpop.f32.mrf.mxu0
        %1734 = vmatprep.mubr.bf16.mxu0 0
        %1735 = vmatmul.mubr.bf16.gmra.mxu0 %v1051
        %v1736 = vpop.f32.mrf.mxu0
        %v1737 = vadd.f32 0.0, %v1736
        %v1738 = vpop.f32.mrf.mxu0
        %v1739 = vpop.f32.mrf.mxu0
        %v1740 = vadd.f32 0.0, %v1739
        %v1741 = vpop.f32.mrf.mxu0
        %1742 = vmatprep.mubr.bf16.mxu0 0
        %1743 = vmatmul.mubr.bf16.gmra.mxu0 %v1052
        %v1744 = vpop.f32.mrf.mxu0
        %v1745 = vadd.f32 0.0, %v1744
        %v1746 = vpop.f32.mrf.mxu0
        %v1747 = vpop.f32.mrf.mxu0
        %v1748 = vadd.f32 0.0, %v1747
        %v1749 = vpop.f32.mrf.mxu0
        %1750 = vmatprep.mubr.bf16.mxu0 0
        %1751 = vmatmul.mubr.bf16.gmra.mxu0 %v1053
        %v1752 = vpop.f32.mrf.mxu0
        %v1753 = vadd.f32 0.0, %v1752
        %v1754 = vpop.f32.mrf.mxu0
        %v1755 = vpop.f32.mrf.mxu0
        %v1756 = vadd.f32 0.0, %v1755
        %v1757 = vpop.f32.mrf.mxu0
        %1758 = vmatprep.mubr.bf16.mxu0 0
        %1759 = vmatmul.mubr.bf16.gmra.mxu0 %v1054
        %v1760 = vpop.f32.mrf.mxu0
        %v1761 = vadd.f32 0.0, %v1760
        %v1762 = vpop.f32.mrf.mxu0
        %v1763 = vpop.f32.mrf.mxu0
        %v1764 = vadd.f32 0.0, %v1763
        %v1765 = vpop.f32.mrf.mxu0
        %1766 = vmatprep.mubr.bf16.mxu0 0
        %1767 = vmatmul.mubr.bf16.gmra.mxu0 %v1055
        %v1768 = vpop.f32.mrf.mxu0
        %v1769 = vadd.f32 0.0, %v1768
        %v1770 = vpop.f32.mrf.mxu0
        %v1771 = vpop.f32.mrf.mxu0
        %v1772 = vadd.f32 0.0, %v1771
        %v1773 = vpop.f32.mrf.mxu0
        %1774 = vmatprep.mubr.bf16.mxu0 0
        %1775 = vmatmul.mubr.bf16.gmra.mxu0 %v1056
        %v1776 = vpop.f32.mrf.mxu0
        %v1777 = vadd.f32 0.0, %v1776
        %v1778 = vpop.f32.mrf.mxu0
        %v1779 = vpop.f32.mrf.mxu0
        %v1780 = vadd.f32 0.0, %v1779
        %v1781 = vpop.f32.mrf.mxu0
        %1782 = vmatprep.mubr.bf16.mxu0 0
        %1783 = vmatmul.mubr.bf16.gmra.mxu0 %v1057
        %v1784 = vpop.f32.mrf.mxu0
        %v1785 = vadd.f32 0.0, %v1784
        %v1786 = vpop.f32.mrf.mxu0
        %v1787 = vpop.f32.mrf.mxu0
        %v1788 = vadd.f32 0.0, %v1787
        %v1789 = vpop.f32.mrf.mxu0
        %1790 = vmatprep.mubr.bf16.mxu0 0
        %1791 = vmatmul.mubr.bf16.gmra.mxu0 %v1058
        %v1792 = vpop.f32.mrf.mxu0
        %v1793 = vadd.f32 0.0, %v1792
        %v1794 = vpop.f32.mrf.mxu0
        %v1795 = vpop.f32.mrf.mxu0
        %v1796 = vadd.f32 0.0, %v1795
        %v1797 = vpop.f32.mrf.mxu0
        %1798 = vmatprep.mubr.bf16.mxu0 0
        %1799 = vmatmul.mubr.bf16.gmra.mxu0 %v1059
        %v1800 = vpop.f32.mrf.mxu0
        %v1801 = vadd.f32 0.0, %v1800
        %v1802 = vpop.f32.mrf.mxu0
        %v1803 = vpop.f32.mrf.mxu0
        %v1804 = vadd.f32 0.0, %v1803
        %v1805 = vpop.f32.mrf.mxu0
        %1806 = vmatprep.mubr.bf16.mxu0 0
        %1807 = vmatmul.mubr.bf16.gmra.mxu0 %v1060
        %v1808 = vpop.f32.mrf.mxu0
        %v1809 = vadd.f32 0.0, %v1808
        %v1810 = vpop.f32.mrf.mxu0
        %v1811 = vpop.f32.mrf.mxu0
        %v1812 = vadd.f32 0.0, %v1811
        %v1813 = vpop.f32.mrf.mxu0
        %1814 = vmatprep.mubr.bf16.mxu0 0
        %1815 = vmatmul.mubr.bf16.gmra.mxu0 %v1061
        %v1816 = vpop.f32.mrf.mxu0
        %v1817 = vadd.f32 0.0, %v1816
        %v1818 = vpop.f32.mrf.mxu0
        %v1819 = vpop.f32.mrf.mxu0
        %v1820 = vadd.f32 0.0, %v1819
        %v1821 = vpop.f32.mrf.mxu0
        %1822 = vmatprep.mubr.bf16.mxu0 0
        %1823 = vmatmul.mubr.bf16.gmra.mxu0 %v1062
        %v1824 = vpop.f32.mrf.mxu0
        %v1825 = vadd.f32 0.0, %v1824
        %v1826 = vpop.f32.mrf.mxu0
        %v1827 = vpop.f32.mrf.mxu0
        %v1828 = vadd.f32 0.0, %v1827
        %v1829 = vpop.f32.mrf.mxu0
        %1830 = vmatprep.mubr.bf16.mxu0 0
        %1831 = vmatmul.mubr.bf16.gmra.mxu0 %v1063
        %v1832 = vpop.f32.mrf.mxu0
        %v1833 = vadd.f32 0.0, %v1832
        %v1834 = vpop.f32.mrf.mxu0
        %v1835 = vpop.f32.mrf.mxu0
        %v1836 = vadd.f32 0.0, %v1835
        %v1837 = vpop.f32.mrf.mxu0
        %1838 = vmatprep.mubr.bf16.mxu0 0
        %1839 = vmatmul.mubr.bf16.gmra.mxu0 %v1064
        %v1840 = vpop.f32.mrf.mxu0
        %v1841 = vadd.f32 0.0, %v1840
        %v1842 = vpop.f32.mrf.mxu0
        %v1843 = vpop.f32.mrf.mxu0
        %v1844 = vadd.f32 0.0, %v1843
        %v1845 = vpop.f32.mrf.mxu0
        %1846 = vmatprep.mubr.bf16.mxu0 0
        %1847 = vmatmul.mubr.bf16.gmra.mxu0 %v1065
        %v1848 = vpop.f32.mrf.mxu0
        %v1849 = vadd.f32 0.0, %v1848
        %v1850 = vpop.f32.mrf.mxu0
        %v1851 = vpop.f32.mrf.mxu0
        %v1852 = vadd.f32 0.0, %v1851
        %v1853 = vpop.f32.mrf.mxu0
        %1854 = vmatprep.mubr.bf16.mxu0 0
        %1855 = vmatmul.mubr.bf16.gmra.mxu0 %v1066
        %v1856 = vpop.f32.mrf.mxu0
        %v1857 = vadd.f32 0.0, %v1856
        %v1858 = vpop.f32.mrf.mxu0
        %v1859 = vpop.f32.mrf.mxu0
        %v1860 = vadd.f32 0.0, %v1859
        %v1861 = vpop.f32.mrf.mxu0
        %1862 = vmatprep.mubr.bf16.mxu0 0
        %1863 = vmatmul.mubr.bf16.gmra.mxu0 %v1067
        %v1864 = vpop.f32.mrf.mxu0
        %v1865 = vadd.f32 0.0, %v1864
        %v1866 = vpop.f32.mrf.mxu0
        %v1867 = vpop.f32.mrf.mxu0
        %v1868 = vadd.f32 0.0, %v1867
        %v1869 = vpop.f32.mrf.mxu0
        %1870 = vdwg.mxu0
        %v1903 = vunpack.c.l.b16 %v684
        %v1904 = vunpack.c.h.b16 %v684
        %v1905 = vunpack.c.l.b16 %v685
        %v1906 = vunpack.c.l.b16 %v686
        %v1907 = vunpack.c.h.b16 %v686
        %v1908 = vunpack.c.l.b16 %v687
        %v1909 = vunpack.c.l.b16 %v688
        %v1910 = vunpack.c.h.b16 %v688
        %v1911 = vunpack.c.l.b16 %v689
        %v1912 = vunpack.c.l.b16 %v690
        %v1913 = vunpack.c.h.b16 %v690
        %v1914 = vunpack.c.l.b16 %v691
        %v1915 = vunpack.c.l.b16 %v692
        %v1916 = vunpack.c.h.b16 %v692
        %v1917 = vunpack.c.l.b16 %v693
        %v1918 = vunpack.c.l.b16 %v694
        %v1919 = vunpack.c.h.b16 %v694
        %v1920 = vunpack.c.l.b16 %v695
        %v1921 = vunpack.c.l.b16 %v696
        %v1922 = vunpack.c.h.b16 %v696
        %v1923 = vunpack.c.l.b16 %v697
        %v1924 = vunpack.c.l.b16 %v698
        %v1925 = vunpack.c.h.b16 %v698
        %v1926 = vunpack.c.l.b16 %v699
        %v1927 = vunpack.c.l.b16 %v700
        %v1928 = vunpack.c.h.b16 %v700
        %v1929 = vunpack.c.l.b16 %v701
        %v1930 = vunpack.c.l.b16 %v702
        %v1931 = vunpack.c.h.b16 %v702
        %v1932 = vunpack.c.l.b16 %v703
        %v1933 = vunpack.c.l.b16 %v704
        %v1934 = vunpack.c.h.b16 %v704
        %v1935 = vunpack.c.l.b16 %v705
        %v1936 = vunpack.c.l.b16 %v706
        %v1937 = vunpack.c.h.b16 %v706
        %v1938 = vunpack.c.l.b16 %v707
        %v1939 = vunpack.c.l.b16 %v708
        %v1940 = vunpack.c.h.b16 %v708
        %v1941 = vunpack.c.l.b16 %v709
        %v1942 = vunpack.c.l.b16 %v710
        %v1943 = vunpack.c.h.b16 %v710
        %v1944 = vunpack.c.l.b16 %v711
        %v1945 = vunpack.c.l.b16 %v712
        %v1946 = vunpack.c.h.b16 %v712
        %v1947 = vunpack.c.l.b16 %v713
        %v1948 = vunpack.c.l.b16 %v714
        %v1949 = vunpack.c.h.b16 %v714
        %v1950 = vunpack.c.l.b16 %v715
        %v1951 = vpack.c.b16 %v1906, %v1903
        %v1952 = vpack.c.b16 %v1907, %v1904
        %v1953 = vpack.c.b16 %v1908, %v1905
        %v1954 = vpack.c.b16 %v1912, %v1909
        %v1955 = vpack.c.b16 %v1913, %v1910
        %v1956 = vpack.c.b16 %v1914, %v1911
        %v1957 = vpack.c.b16 %v1918, %v1915
        %v1958 = vpack.c.b16 %v1919, %v1916
        %v1959 = vpack.c.b16 %v1920, %v1917
        %v1960 = vpack.c.b16 %v1924, %v1921
        %v1961 = vpack.c.b16 %v1925, %v1922
        %v1962 = vpack.c.b16 %v1926, %v1923
        %v1963 = vpack.c.b16 %v1930, %v1927
        %v1964 = vpack.c.b16 %v1931, %v1928
        %v1965 = vpack.c.b16 %v1932, %v1929
        %v1966 = vpack.c.b16 %v1936, %v1933
        %v1967 = vpack.c.b16 %v1937, %v1934
        %v1968 = vpack.c.b16 %v1938, %v1935
        %v1969 = vpack.c.b16 %v1942, %v1939
        %v1970 = vpack.c.b16 %v1943, %v1940
        %v1971 = vpack.c.b16 %v1944, %v1941
        %v1972 = vpack.c.b16 %v1948, %v1945
        %v1973 = vpack.c.b16 %v1949, %v1946
        %v1974 = vpack.c.b16 %v1950, %v1947
        %1999 = vmatprep.subr.bf16.mxu0 %v1973
        %2000 = vmatpush1.bf16.msra.mxu0 %v1972
        %2001 = vmatprep.subr.bf16.mxu0 %v1970
        %2002 = vmatpush1.bf16.msra.mxu0 %v1969
        %2003 = vmatprep.subr.bf16.mxu0 %v1967
        %2004 = vmatpush1.bf16.msra.mxu0 %v1966
        %2005 = vmatprep.subr.bf16.mxu0 %v1964
        %2006 = vmatpush1.bf16.msra.mxu0 %v1963
        %2007 = vmatprep.subr.bf16.mxu0 %v1961
        %2008 = vmatpush1.bf16.msra.mxu0 %v1960
        %2009 = vmatprep.subr.bf16.mxu0 %v1958
        %2010 = vmatpush1.bf16.msra.mxu0 %v1957
        %2011 = vmatprep.subr.bf16.mxu0 %v1955
        %2012 = vmatpush1.bf16.msra.mxu0 %v1954
        %2013 = vmatprep.subr.bf16.mxu0 %v1952
        %2014 = vmatpush1.bf16.msra.mxu0 %v1951
        %2015 = vmatprep.subr.bf16.mxu0 0
        %2016 = vmatpush2.bf16.msra.mxu0 0
        %2017 = vmatprep.subr.bf16.mxu0 0
        %2018 = vmatpush2.bf16.msra.mxu0 0
        %2019 = vmatprep.subr.bf16.mxu0 0
        %2020 = vmatpush2.bf16.msra.mxu0 0
        %2021 = vmatprep.subr.bf16.mxu0 0
        %2022 = vmatpush2.bf16.msra.mxu0 0
        %2023 = vmatprep.subr.bf16.mxu0 0
        %2024 = vmatpush2.bf16.msra.mxu0 0
        %2025 = vmatprep.subr.bf16.mxu0 0
        %2026 = vmatpush2.bf16.msra.mxu0 0
        %2027 = vmatprep.subr.bf16.mxu0 0
        %2028 = vmatpush2.bf16.msra.mxu0 0
        %2029 = vmatprep.subr.bf16.mxu0 0
        %2030 = vmatpush2.bf16.msra.mxu0 0
        %2031 = vmatprep.mubr.bf16.mxu0 0
        %2032 = vmatmul.mubr.bf16.gmra.mxu0 %v652
        %v2033 = vpop.f32.mrf.mxu0
        %v2034 = vadd.f32 %v1264, %v2033
        %v2035 = vpop.f32.mrf.mxu0
        %v2036 = vadd.f32 %v1266, %v2035
        %v2037 = vpop.f32.mrf.mxu0
        %v2038 = vadd.f32 %v1268, %v2037
        %v2039 = vpop.f32.mrf.mxu0
        %v2040 = vadd.f32 %v1270, %v2039
        %2041 = vmatprep.mubr.bf16.mxu0 0
        %2042 = vmatmul.mubr.bf16.gmra.mxu0 %v653
        %v2043 = vpop.f32.mrf.mxu0
        %v2044 = vadd.f32 %v1274, %v2043
        %v2045 = vpop.f32.mrf.mxu0
        %v2046 = vadd.f32 %v1276, %v2045
        %v2047 = vpop.f32.mrf.mxu0
        %v2048 = vadd.f32 %v1278, %v2047
        %v2049 = vpop.f32.mrf.mxu0
        %v2050 = vadd.f32 %v1280, %v2049
        %2051 = vmatprep.mubr.bf16.mxu0 0
        %2052 = vmatmul.mubr.bf16.gmra.mxu0 %v654
        %v2053 = vpop.f32.mrf.mxu0
        %v2054 = vadd.f32 %v1284, %v2053
        %v2055 = vpop.f32.mrf.mxu0
        %v2056 = vadd.f32 %v1286, %v2055
        %v2057 = vpop.f32.mrf.mxu0
        %v2058 = vadd.f32 %v1288, %v2057
        %v2059 = vpop.f32.mrf.mxu0
        %v2060 = vadd.f32 %v1290, %v2059
        %2061 = vmatprep.mubr.bf16.mxu0 0
        %2062 = vmatmul.mubr.bf16.gmra.mxu0 %v655
        %v2063 = vpop.f32.mrf.mxu0
        %v2064 = vadd.f32 %v1294, %v2063
        %v2065 = vpop.f32.mrf.mxu0
        %v2066 = vadd.f32 %v1296, %v2065
        %v2067 = vpop.f32.mrf.mxu0
        %v2068 = vadd.f32 %v1298, %v2067
        %v2069 = vpop.f32.mrf.mxu0
        %v2070 = vadd.f32 %v1300, %v2069
        %2071 = vmatprep.mubr.bf16.mxu0 0
        %2072 = vmatmul.mubr.bf16.gmra.mxu0 %v656
        %v2073 = vpop.f32.mrf.mxu0
        %v2074 = vadd.f32 %v1304, %v2073
        %v2075 = vpop.f32.mrf.mxu0
        %v2076 = vadd.f32 %v1306, %v2075
        %v2077 = vpop.f32.mrf.mxu0
        %v2078 = vadd.f32 %v1308, %v2077
        %v2079 = vpop.f32.mrf.mxu0
        %v2080 = vadd.f32 %v1310, %v2079
        %2081 = vmatprep.mubr.bf16.mxu0 0
        %2082 = vmatmul.mubr.bf16.gmra.mxu0 %v657
        %v2083 = vpop.f32.mrf.mxu0
        %v2084 = vadd.f32 %v1314, %v2083
        %v2085 = vpop.f32.mrf.mxu0
        %v2086 = vadd.f32 %v1316, %v2085
        %v2087 = vpop.f32.mrf.mxu0
        %v2088 = vadd.f32 %v1318, %v2087
        %v2089 = vpop.f32.mrf.mxu0
        %v2090 = vadd.f32 %v1320, %v2089
        %2091 = vmatprep.mubr.bf16.mxu0 0
        %2092 = vmatmul.mubr.bf16.gmra.mxu0 %v658
        %v2093 = vpop.f32.mrf.mxu0
        %v2094 = vadd.f32 %v1324, %v2093
        %v2095 = vpop.f32.mrf.mxu0
        %v2096 = vadd.f32 %v1326, %v2095
        %v2097 = vpop.f32.mrf.mxu0
        %v2098 = vadd.f32 %v1328, %v2097
        %v2099 = vpop.f32.mrf.mxu0
        %v2100 = vadd.f32 %v1330, %v2099
        %2101 = vmatprep.mubr.bf16.mxu0 0
        %2102 = vmatmul.mubr.bf16.gmra.mxu0 %v659
        %v2103 = vpop.f32.mrf.mxu0
        %v2104 = vadd.f32 %v1334, %v2103
        %v2105 = vpop.f32.mrf.mxu0
        %v2106 = vadd.f32 %v1336, %v2105
        %v2107 = vpop.f32.mrf.mxu0
        %v2108 = vadd.f32 %v1338, %v2107
        %v2109 = vpop.f32.mrf.mxu0
        %v2110 = vadd.f32 %v1340, %v2109
        %2111 = vmatprep.mubr.bf16.mxu0 0
        %2112 = vmatmul.mubr.bf16.gmra.mxu0 %v660
        %v2113 = vpop.f32.mrf.mxu0
        %v2114 = vadd.f32 %v1344, %v2113
        %v2115 = vpop.f32.mrf.mxu0
        %v2116 = vadd.f32 %v1346, %v2115
        %v2117 = vpop.f32.mrf.mxu0
        %v2118 = vadd.f32 %v1348, %v2117
        %v2119 = vpop.f32.mrf.mxu0
        %v2120 = vadd.f32 %v1350, %v2119
        %2121 = vmatprep.mubr.bf16.mxu0 0
        %2122 = vmatmul.mubr.bf16.gmra.mxu0 %v661
        %v2123 = vpop.f32.mrf.mxu0
        %v2124 = vadd.f32 %v1354, %v2123
        %v2125 = vpop.f32.mrf.mxu0
        %v2126 = vadd.f32 %v1356, %v2125
        %v2127 = vpop.f32.mrf.mxu0
        %v2128 = vadd.f32 %v1358, %v2127
        %v2129 = vpop.f32.mrf.mxu0
        %v2130 = vadd.f32 %v1360, %v2129
        %2131 = vmatprep.mubr.bf16.mxu0 0
        %2132 = vmatmul.mubr.bf16.gmra.mxu0 %v662
        %v2133 = vpop.f32.mrf.mxu0
        %v2134 = vadd.f32 %v1364, %v2133
        %v2135 = vpop.f32.mrf.mxu0
        %v2136 = vadd.f32 %v1366, %v2135
        %v2137 = vpop.f32.mrf.mxu0
        %v2138 = vadd.f32 %v1368, %v2137
        %v2139 = vpop.f32.mrf.mxu0
        %v2140 = vadd.f32 %v1370, %v2139
        %2141 = vmatprep.mubr.bf16.mxu0 0
        %2142 = vmatmul.mubr.bf16.gmra.mxu0 %v663
        %v2143 = vpop.f32.mrf.mxu0
        %v2144 = vadd.f32 %v1374, %v2143
        %v2145 = vpop.f32.mrf.mxu0
        %v2146 = vadd.f32 %v1376, %v2145
        %v2147 = vpop.f32.mrf.mxu0
        %v2148 = vadd.f32 %v1378, %v2147
        %v2149 = vpop.f32.mrf.mxu0
        %v2150 = vadd.f32 %v1380, %v2149
        %2151 = vmatprep.mubr.bf16.mxu0 0
        %2152 = vmatmul.mubr.bf16.gmra.mxu0 %v664
        %v2153 = vpop.f32.mrf.mxu0
        %v2154 = vadd.f32 %v1384, %v2153
        %v2155 = vpop.f32.mrf.mxu0
        %v2156 = vadd.f32 %v1386, %v2155
        %v2157 = vpop.f32.mrf.mxu0
        %v2158 = vadd.f32 %v1388, %v2157
        %v2159 = vpop.f32.mrf.mxu0
        %v2160 = vadd.f32 %v1390, %v2159
        %2161 = vmatprep.mubr.bf16.mxu0 0
        %2162 = vmatmul.mubr.bf16.gmra.mxu0 %v665
        %v2163 = vpop.f32.mrf.mxu0
        %v2164 = vadd.f32 %v1394, %v2163
        %v2165 = vpop.f32.mrf.mxu0
        %v2166 = vadd.f32 %v1396, %v2165
        %v2167 = vpop.f32.mrf.mxu0
        %v2168 = vadd.f32 %v1398, %v2167
        %v2169 = vpop.f32.mrf.mxu0
        %v2170 = vadd.f32 %v1400, %v2169
        %2171 = vmatprep.mubr.bf16.mxu0 0
        %2172 = vmatmul.mubr.bf16.gmra.mxu0 %v666
        %v2173 = vpop.f32.mrf.mxu0
        %v2174 = vadd.f32 %v1404, %v2173
        %v2175 = vpop.f32.mrf.mxu0
        %v2176 = vadd.f32 %v1406, %v2175
        %v2177 = vpop.f32.mrf.mxu0
        %v2178 = vadd.f32 %v1408, %v2177
        %v2179 = vpop.f32.mrf.mxu0
        %v2180 = vadd.f32 %v1410, %v2179
        %2181 = vmatprep.mubr.bf16.mxu0 0
        %2182 = vmatmul.mubr.bf16.gmra.mxu0 %v667
        %v2183 = vpop.f32.mrf.mxu0
        %v2184 = vadd.f32 %v1414, %v2183
        %v2185 = vpop.f32.mrf.mxu0
        %v2186 = vadd.f32 %v1416, %v2185
        %v2187 = vpop.f32.mrf.mxu0
        %v2188 = vadd.f32 %v1418, %v2187
        %v2189 = vpop.f32.mrf.mxu0
        %v2190 = vadd.f32 %v1420, %v2189
        %2191 = vmatprep.mubr.bf16.mxu0 0
        %2192 = vmatmul.mubr.bf16.gmra.mxu0 %v668
        %v2193 = vpop.f32.mrf.mxu0
        %v2194 = vadd.f32 %v1424, %v2193
        %v2195 = vpop.f32.mrf.mxu0
        %v2196 = vadd.f32 %v1426, %v2195
        %v2197 = vpop.f32.mrf.mxu0
        %v2198 = vadd.f32 %v1428, %v2197
        %v2199 = vpop.f32.mrf.mxu0
        %v2200 = vadd.f32 %v1430, %v2199
        %2201 = vmatprep.mubr.bf16.mxu0 0
        %2202 = vmatmul.mubr.bf16.gmra.mxu0 %v669
        %v2203 = vpop.f32.mrf.mxu0
        %v2204 = vadd.f32 %v1434, %v2203
        %v2205 = vpop.f32.mrf.mxu0
        %v2206 = vadd.f32 %v1436, %v2205
        %v2207 = vpop.f32.mrf.mxu0
        %v2208 = vadd.f32 %v1438, %v2207
        %v2209 = vpop.f32.mrf.mxu0
        %v2210 = vadd.f32 %v1440, %v2209
        %2211 = vmatprep.mubr.bf16.mxu0 0
        %2212 = vmatmul.mubr.bf16.gmra.mxu0 %v670
        %v2213 = vpop.f32.mrf.mxu0
        %v2214 = vadd.f32 %v1444, %v2213
        %v2215 = vpop.f32.mrf.mxu0
        %v2216 = vadd.f32 %v1446, %v2215
        %v2217 = vpop.f32.mrf.mxu0
        %v2218 = vadd.f32 %v1448, %v2217
        %v2219 = vpop.f32.mrf.mxu0
        %v2220 = vadd.f32 %v1450, %v2219
        %2221 = vmatprep.mubr.bf16.mxu0 0
        %2222 = vmatmul.mubr.bf16.gmra.mxu0 %v671
        %v2223 = vpop.f32.mrf.mxu0
        %v2224 = vadd.f32 %v1454, %v2223
        %v2225 = vpop.f32.mrf.mxu0
        %v2226 = vadd.f32 %v1456, %v2225
        %v2227 = vpop.f32.mrf.mxu0
        %v2228 = vadd.f32 %v1458, %v2227
        %v2229 = vpop.f32.mrf.mxu0
        %v2230 = vadd.f32 %v1460, %v2229
        %2231 = vmatprep.mubr.bf16.mxu0 0
        %2232 = vmatmul.mubr.bf16.gmra.mxu0 %v672
        %v2233 = vpop.f32.mrf.mxu0
        %v2234 = vadd.f32 %v1464, %v2233
        %v2235 = vpop.f32.mrf.mxu0
        %v2236 = vadd.f32 %v1466, %v2235
        %v2237 = vpop.f32.mrf.mxu0
        %v2238 = vadd.f32 %v1468, %v2237
        %v2239 = vpop.f32.mrf.mxu0
        %v2240 = vadd.f32 %v1470, %v2239
        %2241 = vmatprep.mubr.bf16.mxu0 0
        %2242 = vmatmul.mubr.bf16.gmra.mxu0 %v673
        %v2243 = vpop.f32.mrf.mxu0
        %v2244 = vadd.f32 %v1474, %v2243
        %v2245 = vpop.f32.mrf.mxu0
        %v2246 = vadd.f32 %v1476, %v2245
        %v2247 = vpop.f32.mrf.mxu0
        %v2248 = vadd.f32 %v1478, %v2247
        %v2249 = vpop.f32.mrf.mxu0
        %v2250 = vadd.f32 %v1480, %v2249
        %2251 = vmatprep.mubr.bf16.mxu0 0
        %2252 = vmatmul.mubr.bf16.gmra.mxu0 %v674
        %v2253 = vpop.f32.mrf.mxu0
        %v2254 = vadd.f32 %v1484, %v2253
        %v2255 = vpop.f32.mrf.mxu0
        %v2256 = vadd.f32 %v1486, %v2255
        %v2257 = vpop.f32.mrf.mxu0
        %v2258 = vadd.f32 %v1488, %v2257
        %v2259 = vpop.f32.mrf.mxu0
        %v2260 = vadd.f32 %v1490, %v2259
        %2261 = vmatprep.mubr.bf16.mxu0 0
        %2262 = vmatmul.mubr.bf16.gmra.mxu0 %v675
        %v2263 = vpop.f32.mrf.mxu0
        %v2264 = vadd.f32 %v1494, %v2263
        %v2265 = vpop.f32.mrf.mxu0
        %v2266 = vadd.f32 %v1496, %v2265
        %v2267 = vpop.f32.mrf.mxu0
        %v2268 = vadd.f32 %v1498, %v2267
        %v2269 = vpop.f32.mrf.mxu0
        %v2270 = vadd.f32 %v1500, %v2269
        %2271 = vmatprep.mubr.bf16.mxu0 0
        %2272 = vmatmul.mubr.bf16.gmra.mxu0 %v676
        %v2273 = vpop.f32.mrf.mxu0
        %v2274 = vadd.f32 %v1504, %v2273
        %v2275 = vpop.f32.mrf.mxu0
        %v2276 = vadd.f32 %v1506, %v2275
        %v2277 = vpop.f32.mrf.mxu0
        %v2278 = vadd.f32 %v1508, %v2277
        %v2279 = vpop.f32.mrf.mxu0
        %v2280 = vadd.f32 %v1510, %v2279
        %2281 = vmatprep.mubr.bf16.mxu0 0
        %2282 = vmatmul.mubr.bf16.gmra.mxu0 %v677
        %v2283 = vpop.f32.mrf.mxu0
        %v2284 = vadd.f32 %v1514, %v2283
        %v2285 = vpop.f32.mrf.mxu0
        %v2286 = vadd.f32 %v1516, %v2285
        %v2287 = vpop.f32.mrf.mxu0
        %v2288 = vadd.f32 %v1518, %v2287
        %v2289 = vpop.f32.mrf.mxu0
        %v2290 = vadd.f32 %v1520, %v2289
        %2291 = vmatprep.mubr.bf16.mxu0 0
        %2292 = vmatmul.mubr.bf16.gmra.mxu0 %v678
        %v2293 = vpop.f32.mrf.mxu0
        %v2294 = vadd.f32 %v1524, %v2293
        %v2295 = vpop.f32.mrf.mxu0
        %v2296 = vadd.f32 %v1526, %v2295
        %v2297 = vpop.f32.mrf.mxu0
        %v2298 = vadd.f32 %v1528, %v2297
        %v2299 = vpop.f32.mrf.mxu0
        %v2300 = vadd.f32 %v1530, %v2299
        %2301 = vmatprep.mubr.bf16.mxu0 0
        %2302 = vmatmul.mubr.bf16.gmra.mxu0 %v679
        %v2303 = vpop.f32.mrf.mxu0
        %v2304 = vadd.f32 %v1534, %v2303
        %v2305 = vpop.f32.mrf.mxu0
        %v2306 = vadd.f32 %v1536, %v2305
        %v2307 = vpop.f32.mrf.mxu0
        %v2308 = vadd.f32 %v1538, %v2307
        %v2309 = vpop.f32.mrf.mxu0
        %v2310 = vadd.f32 %v1540, %v2309
        %2311 = vmatprep.mubr.bf16.mxu0 0
        %2312 = vmatmul.mubr.bf16.gmra.mxu0 %v680
        %v2313 = vpop.f32.mrf.mxu0
        %v2314 = vadd.f32 %v1544, %v2313
        %v2315 = vpop.f32.mrf.mxu0
        %v2316 = vadd.f32 %v1546, %v2315
        %v2317 = vpop.f32.mrf.mxu0
        %v2318 = vadd.f32 %v1548, %v2317
        %v2319 = vpop.f32.mrf.mxu0
        %v2320 = vadd.f32 %v1550, %v2319
        %2321 = vmatprep.mubr.bf16.mxu0 0
        %2322 = vmatmul.mubr.bf16.gmra.mxu0 %v681
        %v2323 = vpop.f32.mrf.mxu0
        %v2324 = vadd.f32 %v1554, %v2323
        %v2325 = vpop.f32.mrf.mxu0
        %v2326 = vadd.f32 %v1556, %v2325
        %v2327 = vpop.f32.mrf.mxu0
        %v2328 = vadd.f32 %v1558, %v2327
        %v2329 = vpop.f32.mrf.mxu0
        %v2330 = vadd.f32 %v1560, %v2329
        %2331 = vmatprep.mubr.bf16.mxu0 0
        %2332 = vmatmul.mubr.bf16.gmra.mxu0 %v682
        %v2333 = vpop.f32.mrf.mxu0
        %v2334 = vadd.f32 %v1564, %v2333
        %v2335 = vpop.f32.mrf.mxu0
        %v2336 = vadd.f32 %v1566, %v2335
        %v2337 = vpop.f32.mrf.mxu0
        %v2338 = vadd.f32 %v1568, %v2337
        %v2339 = vpop.f32.mrf.mxu0
        %v2340 = vadd.f32 %v1570, %v2339
        %2341 = vmatprep.mubr.bf16.mxu0 0
        %2342 = vmatmul.mubr.bf16.gmra.mxu0 %v683
        %v2343 = vpop.f32.mrf.mxu0
        %v2344 = vadd.f32 %v1574, %v2343
        %v2345 = vpop.f32.mrf.mxu0
        %v2346 = vadd.f32 %v1576, %v2345
        %v2347 = vpop.f32.mrf.mxu0
        %v2348 = vadd.f32 %v1578, %v2347
        %v2349 = vpop.f32.mrf.mxu0
        %v2350 = vadd.f32 %v1580, %v2349
        %2351 = vdwg.mxu0
        %2352 = vmatprep.subr.bf16.mxu0 0
        %2353 = vmatpush1.bf16.msra.mxu0 %v1974
        %2354 = vmatprep.subr.bf16.mxu0 0
        %2355 = vmatpush1.bf16.msra.mxu0 %v1971
        %2356 = vmatprep.subr.bf16.mxu0 0
        %2357 = vmatpush1.bf16.msra.mxu0 %v1968
        %2358 = vmatprep.subr.bf16.mxu0 0
        %2359 = vmatpush1.bf16.msra.mxu0 %v1965
        %2360 = vmatprep.subr.bf16.mxu0 0
        %2361 = vmatpush1.bf16.msra.mxu0 %v1962
        %2362 = vmatprep.subr.bf16.mxu0 0
        %2363 = vmatpush1.bf16.msra.mxu0 %v1959
        %2364 = vmatprep.subr.bf16.mxu0 0
        %2365 = vmatpush1.bf16.msra.mxu0 %v1956
        %2366 = vmatprep.subr.bf16.mxu0 0
        %2367 = vmatpush1.bf16.msra.mxu0 %v1953
        %2368 = vmatprep.subr.bf16.mxu0 0
        %2369 = vmatpush2.bf16.msra.mxu0 0
        %2370 = vmatprep.subr.bf16.mxu0 0
        %2371 = vmatpush2.bf16.msra.mxu0 0
        %2372 = vmatprep.subr.bf16.mxu0 0
        %2373 = vmatpush2.bf16.msra.mxu0 0
        %2374 = vmatprep.subr.bf16.mxu0 0
        %2375 = vmatpush2.bf16.msra.mxu0 0
        %2376 = vmatprep.subr.bf16.mxu0 0
        %2377 = vmatpush2.bf16.msra.mxu0 0
        %2378 = vmatprep.subr.bf16.mxu0 0
        %2379 = vmatpush2.bf16.msra.mxu0 0
        %2380 = vmatprep.subr.bf16.mxu0 0
        %2381 = vmatpush2.bf16.msra.mxu0 0
        %2382 = vmatprep.subr.bf16.mxu0 0
        %2383 = vmatpush2.bf16.msra.mxu0 0
        %2384 = vmatprep.mubr.bf16.mxu0 0
        %2385 = vmatmul.mubr.bf16.gmra.mxu0 %v652
        %v2386 = vpop.f32.mrf.mxu0
        %v2387 = vadd.f32 %v1617, %v2386
        %v2388 = vpop.f32.mrf.mxu0
        %v2389 = vpop.f32.mrf.mxu0
        %v2390 = vadd.f32 %v1620, %v2389
        %v2391 = vpop.f32.mrf.mxu0
        %2392 = vmatprep.mubr.bf16.mxu0 0
        %2393 = vmatmul.mubr.bf16.gmra.mxu0 %v653
        %v2394 = vpop.f32.mrf.mxu0
        %v2395 = vadd.f32 %v1625, %v2394
        %v2396 = vpop.f32.mrf.mxu0
        %v2397 = vpop.f32.mrf.mxu0
        %v2398 = vadd.f32 %v1628, %v2397
        %v2399 = vpop.f32.mrf.mxu0
        %2400 = vmatprep.mubr.bf16.mxu0 0
        %2401 = vmatmul.mubr.bf16.gmra.mxu0 %v654
        %v2402 = vpop.f32.mrf.mxu0
        %v2403 = vadd.f32 %v1633, %v2402
        %v2404 = vpop.f32.mrf.mxu0
        %v2405 = vpop.f32.mrf.mxu0
        %v2406 = vadd.f32 %v1636, %v2405
        %v2407 = vpop.f32.mrf.mxu0
        %2408 = vmatprep.mubr.bf16.mxu0 0
        %2409 = vmatmul.mubr.bf16.gmra.mxu0 %v655
        %v2410 = vpop.f32.mrf.mxu0
        %v2411 = vadd.f32 %v1641, %v2410
        %v2412 = vpop.f32.mrf.mxu0
        %v2413 = vpop.f32.mrf.mxu0
        %v2414 = vadd.f32 %v1644, %v2413
        %v2415 = vpop.f32.mrf.mxu0
        %2416 = vmatprep.mubr.bf16.mxu0 0
        %2417 = vmatmul.mubr.bf16.gmra.mxu0 %v656
        %v2418 = vpop.f32.mrf.mxu0
        %v2419 = vadd.f32 %v1649, %v2418
        %v2420 = vpop.f32.mrf.mxu0
        %v2421 = vpop.f32.mrf.mxu0
        %v2422 = vadd.f32 %v1652, %v2421
        %v2423 = vpop.f32.mrf.mxu0
        %2424 = vmatprep.mubr.bf16.mxu0 0
        %2425 = vmatmul.mubr.bf16.gmra.mxu0 %v657
        %v2426 = vpop.f32.mrf.mxu0
        %v2427 = vadd.f32 %v1657, %v2426
        %v2428 = vpop.f32.mrf.mxu0
        %v2429 = vpop.f32.mrf.mxu0
        %v2430 = vadd.f32 %v1660, %v2429
        %v2431 = vpop.f32.mrf.mxu0
        %2432 = vmatprep.mubr.bf16.mxu0 0
        %2433 = vmatmul.mubr.bf16.gmra.mxu0 %v658
        %v2434 = vpop.f32.mrf.mxu0
        %v2435 = vadd.f32 %v1665, %v2434
        %v2436 = vpop.f32.mrf.mxu0
        %v2437 = vpop.f32.mrf.mxu0
        %v2438 = vadd.f32 %v1668, %v2437
        %v2439 = vpop.f32.mrf.mxu0
        %2440 = vmatprep.mubr.bf16.mxu0 0
        %2441 = vmatmul.mubr.bf16.gmra.mxu0 %v659
        %v2442 = vpop.f32.mrf.mxu0
        %v2443 = vadd.f32 %v1673, %v2442
        %v2444 = vpop.f32.mrf.mxu0
        %v2445 = vpop.f32.mrf.mxu0
        %v2446 = vadd.f32 %v1676, %v2445
        %v2447 = vpop.f32.mrf.mxu0
        %2448 = vmatprep.mubr.bf16.mxu0 0
        %2449 = vmatmul.mubr.bf16.gmra.mxu0 %v660
        %v2450 = vpop.f32.mrf.mxu0
        %v2451 = vadd.f32 %v1681, %v2450
        %v2452 = vpop.f32.mrf.mxu0
        %v2453 = vpop.f32.mrf.mxu0
        %v2454 = vadd.f32 %v1684, %v2453
        %v2455 = vpop.f32.mrf.mxu0
        %2456 = vmatprep.mubr.bf16.mxu0 0
        %2457 = vmatmul.mubr.bf16.gmra.mxu0 %v661
        %v2458 = vpop.f32.mrf.mxu0
        %v2459 = vadd.f32 %v1689, %v2458
        %v2460 = vpop.f32.mrf.mxu0
        %v2461 = vpop.f32.mrf.mxu0
        %v2462 = vadd.f32 %v1692, %v2461
        %v2463 = vpop.f32.mrf.mxu0
        %2464 = vmatprep.mubr.bf16.mxu0 0
        %2465 = vmatmul.mubr.bf16.gmra.mxu0 %v662
        %v2466 = vpop.f32.mrf.mxu0
        %v2467 = vadd.f32 %v1697, %v2466
        %v2468 = vpop.f32.mrf.mxu0
        %v2469 = vpop.f32.mrf.mxu0
        %v2470 = vadd.f32 %v1700, %v2469
        %v2471 = vpop.f32.mrf.mxu0
        %2472 = vmatprep.mubr.bf16.mxu0 0
        %2473 = vmatmul.mubr.bf16.gmra.mxu0 %v663
        %v2474 = vpop.f32.mrf.mxu0
        %v2475 = vadd.f32 %v1705, %v2474
        %v2476 = vpop.f32.mrf.mxu0
        %v2477 = vpop.f32.mrf.mxu0
        %v2478 = vadd.f32 %v1708, %v2477
        %v2479 = vpop.f32.mrf.mxu0
        %2480 = vmatprep.mubr.bf16.mxu0 0
        %2481 = vmatmul.mubr.bf16.gmra.mxu0 %v664
        %v2482 = vpop.f32.mrf.mxu0
        %v2483 = vadd.f32 %v1713, %v2482
        %v2484 = vpop.f32.mrf.mxu0
        %v2485 = vpop.f32.mrf.mxu0
        %v2486 = vadd.f32 %v1716, %v2485
        %v2487 = vpop.f32.mrf.mxu0
        %2488 = vmatprep.mubr.bf16.mxu0 0
        %2489 = vmatmul.mubr.bf16.gmra.mxu0 %v665
        %v2490 = vpop.f32.mrf.mxu0
        %v2491 = vadd.f32 %v1721, %v2490
        %v2492 = vpop.f32.mrf.mxu0
        %v2493 = vpop.f32.mrf.mxu0
        %v2494 = vadd.f32 %v1724, %v2493
        %v2495 = vpop.f32.mrf.mxu0
        %2496 = vmatprep.mubr.bf16.mxu0 0
        %2497 = vmatmul.mubr.bf16.gmra.mxu0 %v666
        %v2498 = vpop.f32.mrf.mxu0
        %v2499 = vadd.f32 %v1729, %v2498
        %v2500 = vpop.f32.mrf.mxu0
        %v2501 = vpop.f32.mrf.mxu0
        %v2502 = vadd.f32 %v1732, %v2501
        %v2503 = vpop.f32.mrf.mxu0
        %2504 = vmatprep.mubr.bf16.mxu0 0
        %2505 = vmatmul.mubr.bf16.gmra.mxu0 %v667
        %v2506 = vpop.f32.mrf.mxu0
        %v2507 = vadd.f32 %v1737, %v2506
        %v2508 = vpop.f32.mrf.mxu0
        %v2509 = vpop.f32.mrf.mxu0
        %v2510 = vadd.f32 %v1740, %v2509
        %v2511 = vpop.f32.mrf.mxu0
        %2512 = vmatprep.mubr.bf16.mxu0 0
        %2513 = vmatmul.mubr.bf16.gmra.mxu0 %v668
        %v2514 = vpop.f32.mrf.mxu0
        %v2515 = vadd.f32 %v1745, %v2514
        %v2516 = vpop.f32.mrf.mxu0
        %v2517 = vpop.f32.mrf.mxu0
        %v2518 = vadd.f32 %v1748, %v2517
        %v2519 = vpop.f32.mrf.mxu0
        %2520 = vmatprep.mubr.bf16.mxu0 0
        %2521 = vmatmul.mubr.bf16.gmra.mxu0 %v669
        %v2522 = vpop.f32.mrf.mxu0
        %v2523 = vadd.f32 %v1753, %v2522
        %v2524 = vpop.f32.mrf.mxu0
        %v2525 = vpop.f32.mrf.mxu0
        %v2526 = vadd.f32 %v1756, %v2525
        %v2527 = vpop.f32.mrf.mxu0
        %2528 = vmatprep.mubr.bf16.mxu0 0
        %2529 = vmatmul.mubr.bf16.gmra.mxu0 %v670
        %v2530 = vpop.f32.mrf.mxu0
        %v2531 = vadd.f32 %v1761, %v2530
        %v2532 = vpop.f32.mrf.mxu0
        %v2533 = vpop.f32.mrf.mxu0
        %v2534 = vadd.f32 %v1764, %v2533
        %v2535 = vpop.f32.mrf.mxu0
        %2536 = vmatprep.mubr.bf16.mxu0 0
        %2537 = vmatmul.mubr.bf16.gmra.mxu0 %v671
        %v2538 = vpop.f32.mrf.mxu0
        %v2539 = vadd.f32 %v1769, %v2538
        %v2540 = vpop.f32.mrf.mxu0
        %v2541 = vpop.f32.mrf.mxu0
        %v2542 = vadd.f32 %v1772, %v2541
        %v2543 = vpop.f32.mrf.mxu0
        %2544 = vmatprep.mubr.bf16.mxu0 0
        %2545 = vmatmul.mubr.bf16.gmra.mxu0 %v672
        %v2546 = vpop.f32.mrf.mxu0
        %v2547 = vadd.f32 %v1777, %v2546
        %v2548 = vpop.f32.mrf.mxu0
        %v2549 = vpop.f32.mrf.mxu0
        %v2550 = vadd.f32 %v1780, %v2549
        %v2551 = vpop.f32.mrf.mxu0
        %2552 = vmatprep.mubr.bf16.mxu0 0
        %2553 = vmatmul.mubr.bf16.gmra.mxu0 %v673
        %v2554 = vpop.f32.mrf.mxu0
        %v2555 = vadd.f32 %v1785, %v2554
        %v2556 = vpop.f32.mrf.mxu0
        %v2557 = vpop.f32.mrf.mxu0
        %v2558 = vadd.f32 %v1788, %v2557
        %v2559 = vpop.f32.mrf.mxu0
        %2560 = vmatprep.mubr.bf16.mxu0 0
        %2561 = vmatmul.mubr.bf16.gmra.mxu0 %v674
        %v2562 = vpop.f32.mrf.mxu0
        %v2563 = vadd.f32 %v1793, %v2562
        %v2564 = vpop.f32.mrf.mxu0
        %v2565 = vpop.f32.mrf.mxu0
        %v2566 = vadd.f32 %v1796, %v2565
        %v2567 = vpop.f32.mrf.mxu0
        %2568 = vmatprep.mubr.bf16.mxu0 0
        %2569 = vmatmul.mubr.bf16.gmra.mxu0 %v675
        %v2570 = vpop.f32.mrf.mxu0
        %v2571 = vadd.f32 %v1801, %v2570
        %v2572 = vpop.f32.mrf.mxu0
        %v2573 = vpop.f32.mrf.mxu0
        %v2574 = vadd.f32 %v1804, %v2573
        %v2575 = vpop.f32.mrf.mxu0
        %2576 = vmatprep.mubr.bf16.mxu0 0
        %2577 = vmatmul.mubr.bf16.gmra.mxu0 %v676
        %v2578 = vpop.f32.mrf.mxu0
        %v2579 = vadd.f32 %v1809, %v2578
        %v2580 = vpop.f32.mrf.mxu0
        %v2581 = vpop.f32.mrf.mxu0
        %v2582 = vadd.f32 %v1812, %v2581
        %v2583 = vpop.f32.mrf.mxu0
        %2584 = vmatprep.mubr.bf16.mxu0 0
        %2585 = vmatmul.mubr.bf16.gmra.mxu0 %v677
        %v2586 = vpop.f32.mrf.mxu0
        %v2587 = vadd.f32 %v1817, %v2586
        %v2588 = vpop.f32.mrf.mxu0
        %v2589 = vpop.f32.mrf.mxu0
        %v2590 = vadd.f32 %v1820, %v2589
        %v2591 = vpop.f32.mrf.mxu0
        %2592 = vmatprep.mubr.bf16.mxu0 0
        %2593 = vmatmul.mubr.bf16.gmra.mxu0 %v678
        %v2594 = vpop.f32.mrf.mxu0
        %v2595 = vadd.f32 %v1825, %v2594
        %v2596 = vpop.f32.mrf.mxu0
        %v2597 = vpop.f32.mrf.mxu0
        %v2598 = vadd.f32 %v1828, %v2597
        %v2599 = vpop.f32.mrf.mxu0
        %2600 = vmatprep.mubr.bf16.mxu0 0
        %2601 = vmatmul.mubr.bf16.gmra.mxu0 %v679
        %v2602 = vpop.f32.mrf.mxu0
        %v2603 = vadd.f32 %v1833, %v2602
        %v2604 = vpop.f32.mrf.mxu0
        %v2605 = vpop.f32.mrf.mxu0
        %v2606 = vadd.f32 %v1836, %v2605
        %v2607 = vpop.f32.mrf.mxu0
        %2608 = vmatprep.mubr.bf16.mxu0 0
        %2609 = vmatmul.mubr.bf16.gmra.mxu0 %v680
        %v2610 = vpop.f32.mrf.mxu0
        %v2611 = vadd.f32 %v1841, %v2610
        %v2612 = vpop.f32.mrf.mxu0
        %v2613 = vpop.f32.mrf.mxu0
        %v2614 = vadd.f32 %v1844, %v2613
        %v2615 = vpop.f32.mrf.mxu0
        %2616 = vmatprep.mubr.bf16.mxu0 0
        %2617 = vmatmul.mubr.bf16.gmra.mxu0 %v681
        %v2618 = vpop.f32.mrf.mxu0
        %v2619 = vadd.f32 %v1849, %v2618
        %v2620 = vpop.f32.mrf.mxu0
        %v2621 = vpop.f32.mrf.mxu0
        %v2622 = vadd.f32 %v1852, %v2621
        %v2623 = vpop.f32.mrf.mxu0
        %2624 = vmatprep.mubr.bf16.mxu0 0
        %2625 = vmatmul.mubr.bf16.gmra.mxu0 %v682
        %v2626 = vpop.f32.mrf.mxu0
        %v2627 = vadd.f32 %v1857, %v2626
        %v2628 = vpop.f32.mrf.mxu0
        %v2629 = vpop.f32.mrf.mxu0
        %v2630 = vadd.f32 %v1860, %v2629
        %v2631 = vpop.f32.mrf.mxu0
        %2632 = vmatprep.mubr.bf16.mxu0 0
        %2633 = vmatmul.mubr.bf16.gmra.mxu0 %v683
        %v2634 = vpop.f32.mrf.mxu0
        %v2635 = vadd.f32 %v1865, %v2634
        %v2636 = vpop.f32.mrf.mxu0
        %v2637 = vpop.f32.mrf.mxu0
        %v2638 = vadd.f32 %v1868, %v2637
        %v2639 = vpop.f32.mrf.mxu0
        %2640 = vdwg.mxu0
        %2641 = vset.pattern.permute.xlu0 2
        %2642 = vperm.xlu0 %2641, %v268
        %v2643 = vpop.permute.xlu0 %2642
        %2644 = vset.pattern.permute.xlu0 2
        %2645 = vperm.xlu0 %2644, %v269
        %v2646 = vpop.permute.xlu0 %2645
        %2647 = vset.pattern.permute.xlu0 2
        %2648 = vperm.xlu0 %2647, %v270
        %v2649 = vpop.permute.xlu0 %2648
        %2650 = vset.pattern.permute.xlu0 2
        %2651 = vperm.xlu0 %2650, %v271
        %v2652 = vpop.permute.xlu0 %2651
        %2653 = vset.pattern.permute.xlu0 2
        %2654 = vperm.xlu0 %2653, %v272
        %v2655 = vpop.permute.xlu0 %2654
        %2656 = vset.pattern.permute.xlu0 2
        %2657 = vperm.xlu0 %2656, %v273
        %v2658 = vpop.permute.xlu0 %2657
        %2659 = vset.pattern.permute.xlu0 2
        %2660 = vperm.xlu0 %2659, %v274
        %v2661 = vpop.permute.xlu0 %2660
        %2662 = vset.pattern.permute.xlu0 2
        %2663 = vperm.xlu0 %2662, %v275
        %v2664 = vpop.permute.xlu0 %2663
        %2665 = vset.pattern.permute.xlu0 2
        %2666 = vperm.xlu0 %2665, %v276
        %v2667 = vpop.permute.xlu0 %2666
        %2668 = vset.pattern.permute.xlu0 2
        %2669 = vperm.xlu0 %2668, %v277
        %v2670 = vpop.permute.xlu0 %2669
        %2671 = vset.pattern.permute.xlu0 2
        %2672 = vperm.xlu0 %2671, %v278
        %v2673 = vpop.permute.xlu0 %2672
        %2674 = vset.pattern.permute.xlu0 2
        %2675 = vperm.xlu0 %2674, %v279
        %v2676 = vpop.permute.xlu0 %2675
        %2677 = vset.pattern.permute.xlu0 2
        %2678 = vperm.xlu0 %2677, %v280
        %v2679 = vpop.permute.xlu0 %2678
        %2680 = vset.pattern.permute.xlu0 2
        %2681 = vperm.xlu0 %2680, %v281
        %v2682 = vpop.permute.xlu0 %2681
        %2683 = vset.pattern.permute.xlu0 2
        %2684 = vperm.xlu0 %2683, %v282
        %v2685 = vpop.permute.xlu0 %2684
        %2686 = vset.pattern.permute.xlu0 2
        %2687 = vperm.xlu0 %2686, %v283
        %v2688 = vpop.permute.xlu0 %2687
        %2689 = vset.pattern.permute.xlu0 2
        %2690 = vperm.xlu0 %2689, %v284
        %v2691 = vpop.permute.xlu0 %2690
        %2692 = vset.pattern.permute.xlu0 2
        %2693 = vperm.xlu0 %2692, %v285
        %v2694 = vpop.permute.xlu0 %2693
        %2695 = vset.pattern.permute.xlu0 2
        %2696 = vperm.xlu0 %2695, %v286
        %v2697 = vpop.permute.xlu0 %2696
        %2698 = vset.pattern.permute.xlu0 2
        %2699 = vperm.xlu0 %2698, %v287
        %v2700 = vpop.permute.xlu0 %2699
        %2701 = vset.pattern.permute.xlu0 2
        %2702 = vperm.xlu0 %2701, %v288
        %v2703 = vpop.permute.xlu0 %2702
        %2704 = vset.pattern.permute.xlu0 2
        %2705 = vperm.xlu0 %2704, %v289
        %v2706 = vpop.permute.xlu0 %2705
        %2707 = vset.pattern.permute.xlu0 2
        %2708 = vperm.xlu0 %2707, %v290
        %v2709 = vpop.permute.xlu0 %2708
        %2710 = vset.pattern.permute.xlu0 2
        %2711 = vperm.xlu0 %2710, %v291
        %v2712 = vpop.permute.xlu0 %2711
        %2713 = vset.pattern.permute.xlu0 2
        %2714 = vperm.xlu0 %2713, %v292
        %v2715 = vpop.permute.xlu0 %2714
        %2716 = vset.pattern.permute.xlu0 2
        %2717 = vperm.xlu0 %2716, %v293
        %v2718 = vpop.permute.xlu0 %2717
        %2719 = vset.pattern.permute.xlu0 2
        %2720 = vperm.xlu0 %2719, %v294
        %v2721 = vpop.permute.xlu0 %2720
        %2722 = vset.pattern.permute.xlu0 2
        %2723 = vperm.xlu0 %2722, %v295
        %v2724 = vpop.permute.xlu0 %2723
        %2725 = vset.pattern.permute.xlu0 2
        %2726 = vperm.xlu0 %2725, %v296
        %v2727 = vpop.permute.xlu0 %2726
        %2728 = vset.pattern.permute.xlu0 2
        %2729 = vperm.xlu0 %2728, %v297
        %v2730 = vpop.permute.xlu0 %2729
        %2731 = vset.pattern.permute.xlu0 2
        %2732 = vperm.xlu0 %2731, %v298
        %v2733 = vpop.permute.xlu0 %2732
        %2734 = vset.pattern.permute.xlu0 2
        %2735 = vperm.xlu0 %2734, %v299
        %v2736 = vpop.permute.xlu0 %2735
        %2737 = vset.pattern.permute.xlu0 2
        %2738 = vperm.xlu0 %2737, %v300
        %v2739 = vpop.permute.xlu0 %2738
        %2740 = vset.pattern.permute.xlu0 2
        %2741 = vperm.xlu0 %2740, %v301
        %v2742 = vpop.permute.xlu0 %2741
        %2743 = vset.pattern.permute.xlu0 2
        %2744 = vperm.xlu0 %2743, %v302
        %v2745 = vpop.permute.xlu0 %2744
        %2746 = vset.pattern.permute.xlu0 2
        %2747 = vperm.xlu0 %2746, %v303
        %v2748 = vpop.permute.xlu0 %2747
        %2749 = vset.pattern.permute.xlu0 2
        %2750 = vperm.xlu0 %2749, %v304
        %v2751 = vpop.permute.xlu0 %2750
        %2752 = vset.pattern.permute.xlu0 2
        %2753 = vperm.xlu0 %2752, %v305
        %v2754 = vpop.permute.xlu0 %2753
        %2755 = vset.pattern.permute.xlu0 2
        %2756 = vperm.xlu0 %2755, %v306
        %v2757 = vpop.permute.xlu0 %2756
        %2758 = vset.pattern.permute.xlu0 2
        %2759 = vperm.xlu0 %2758, %v307
        %v2760 = vpop.permute.xlu0 %2759
        %2761 = vset.pattern.permute.xlu0 2
        %2762 = vperm.xlu0 %2761, %v308
        %v2763 = vpop.permute.xlu0 %2762
        %2764 = vset.pattern.permute.xlu0 2
        %2765 = vperm.xlu0 %2764, %v309
        %v2766 = vpop.permute.xlu0 %2765
        %2767 = vset.pattern.permute.xlu0 2
        %2768 = vperm.xlu0 %2767, %v310
        %v2769 = vpop.permute.xlu0 %2768
        %2770 = vset.pattern.permute.xlu0 2
        %2771 = vperm.xlu0 %2770, %v311
        %v2772 = vpop.permute.xlu0 %2771
        %2773 = vset.pattern.permute.xlu0 2
        %2774 = vperm.xlu0 %2773, %v312
        %v2775 = vpop.permute.xlu0 %2774
        %2776 = vset.pattern.permute.xlu0 2
        %2777 = vperm.xlu0 %2776, %v313
        %v2778 = vpop.permute.xlu0 %2777
        %2779 = vset.pattern.permute.xlu0 2
        %2780 = vperm.xlu0 %2779, %v314
        %v2781 = vpop.permute.xlu0 %2780
        %2782 = vset.pattern.permute.xlu0 2
        %2783 = vperm.xlu0 %2782, %v315
        %v2784 = vpop.permute.xlu0 %2783
        %2785 = vset.pattern.permute.xlu0 2
        %2786 = vperm.xlu0 %2785, %v316
        %v2787 = vpop.permute.xlu0 %2786
        %2788 = vset.pattern.permute.xlu0 2
        %2789 = vperm.xlu0 %2788, %v317
        %v2790 = vpop.permute.xlu0 %2789
        %2791 = vset.pattern.permute.xlu0 2
        %2792 = vperm.xlu0 %2791, %v318
        %v2793 = vpop.permute.xlu0 %2792
        %2794 = vset.pattern.permute.xlu0 2
        %2795 = vperm.xlu0 %2794, %v319
        %v2796 = vpop.permute.xlu0 %2795
        %2797 = vset.pattern.permute.xlu0 2
        %2798 = vperm.xlu0 %2797, %v320
        %v2799 = vpop.permute.xlu0 %2798
        %2800 = vset.pattern.permute.xlu0 2
        %2801 = vperm.xlu0 %2800, %v321
        %v2802 = vpop.permute.xlu0 %2801
        %2803 = vset.pattern.permute.xlu0 2
        %2804 = vperm.xlu0 %2803, %v322
        %v2805 = vpop.permute.xlu0 %2804
        %2806 = vset.pattern.permute.xlu0 2
        %2807 = vperm.xlu0 %2806, %v323
        %v2808 = vpop.permute.xlu0 %2807
        %2809 = vset.pattern.permute.xlu0 2
        %2810 = vperm.xlu0 %2809, %v324
        %v2811 = vpop.permute.xlu0 %2810
        %2812 = vset.pattern.permute.xlu0 2
        %2813 = vperm.xlu0 %2812, %v325
        %v2814 = vpop.permute.xlu0 %2813
        %2815 = vset.pattern.permute.xlu0 2
        %2816 = vperm.xlu0 %2815, %v326
        %v2817 = vpop.permute.xlu0 %2816
        %2818 = vset.pattern.permute.xlu0 2
        %2819 = vperm.xlu0 %2818, %v327
        %v2820 = vpop.permute.xlu0 %2819
        %2821 = vset.pattern.permute.xlu0 2
        %2822 = vperm.xlu0 %2821, %v328
        %v2823 = vpop.permute.xlu0 %2822
        %2824 = vset.pattern.permute.xlu0 2
        %2825 = vperm.xlu0 %2824, %v329
        %v2826 = vpop.permute.xlu0 %2825
        %2827 = vset.pattern.permute.xlu0 2
        %2828 = vperm.xlu0 %2827, %v330
        %v2829 = vpop.permute.xlu0 %2828
        %2830 = vset.pattern.permute.xlu0 2
        %2831 = vperm.xlu0 %2830, %v331
        %v2832 = vpop.permute.xlu0 %2831
        %vm2833 = vcmp.eq.s32.totalorder %v2643, %v267
        %vm2834 = vcmp.eq.s32.totalorder %v2646, %v267
        %vm2835 = vcmp.eq.s32.totalorder %v2649, %v267
        %vm2836 = vcmp.eq.s32.totalorder %v2652, %v267
        %vm2837 = vcmp.eq.s32.totalorder %v2655, %v267
        %vm2838 = vcmp.eq.s32.totalorder %v2658, %v267
        %vm2839 = vcmp.eq.s32.totalorder %v2661, %v267
        %vm2840 = vcmp.eq.s32.totalorder %v2664, %v267
        %vm2841 = vcmp.eq.s32.totalorder %v2667, %v267
        %vm2842 = vcmp.eq.s32.totalorder %v2670, %v267
        %vm2843 = vcmp.eq.s32.totalorder %v2673, %v267
        %vm2844 = vcmp.eq.s32.totalorder %v2676, %v267
        %vm2845 = vcmp.eq.s32.totalorder %v2679, %v267
        %vm2846 = vcmp.eq.s32.totalorder %v2682, %v267
        %vm2847 = vcmp.eq.s32.totalorder %v2685, %v267
        %vm2848 = vcmp.eq.s32.totalorder %v2688, %v267
        %vm2849 = vcmp.eq.s32.totalorder %v2691, %v267
        %vm2850 = vcmp.eq.s32.totalorder %v2694, %v267
        %vm2851 = vcmp.eq.s32.totalorder %v2697, %v267
        %vm2852 = vcmp.eq.s32.totalorder %v2700, %v267
        %vm2853 = vcmp.eq.s32.totalorder %v2703, %v267
        %vm2854 = vcmp.eq.s32.totalorder %v2706, %v267
        %vm2855 = vcmp.eq.s32.totalorder %v2709, %v267
        %vm2856 = vcmp.eq.s32.totalorder %v2712, %v267
        %vm2857 = vcmp.eq.s32.totalorder %v2715, %v267
        %vm2858 = vcmp.eq.s32.totalorder %v2718, %v267
        %vm2859 = vcmp.eq.s32.totalorder %v2721, %v267
        %vm2860 = vcmp.eq.s32.totalorder %v2724, %v267
        %vm2861 = vcmp.eq.s32.totalorder %v2727, %v267
        %vm2862 = vcmp.eq.s32.totalorder %v2730, %v267
        %vm2863 = vcmp.eq.s32.totalorder %v2733, %v267
        %vm2864 = vcmp.eq.s32.totalorder %v2736, %v267
        %vm2865 = vcmp.eq.s32.totalorder %v2739, %v267
        %vm2866 = vcmp.eq.s32.totalorder %v2742, %v267
        %vm2867 = vcmp.eq.s32.totalorder %v2745, %v267
        %vm2868 = vcmp.eq.s32.totalorder %v2748, %v267
        %vm2869 = vcmp.eq.s32.totalorder %v2751, %v267
        %vm2870 = vcmp.eq.s32.totalorder %v2754, %v267
        %vm2871 = vcmp.eq.s32.totalorder %v2757, %v267
        %vm2872 = vcmp.eq.s32.totalorder %v2760, %v267
        %vm2873 = vcmp.eq.s32.totalorder %v2763, %v267
        %vm2874 = vcmp.eq.s32.totalorder %v2766, %v267
        %vm2875 = vcmp.eq.s32.totalorder %v2769, %v267
        %vm2876 = vcmp.eq.s32.totalorder %v2772, %v267
        %vm2877 = vcmp.eq.s32.totalorder %v2775, %v267
        %vm2878 = vcmp.eq.s32.totalorder %v2778, %v267
        %vm2879 = vcmp.eq.s32.totalorder %v2781, %v267
        %vm2880 = vcmp.eq.s32.totalorder %v2784, %v267
        %vm2881 = vcmp.eq.s32.totalorder %v2787, %v267
        %vm2882 = vcmp.eq.s32.totalorder %v2790, %v267
        %vm2883 = vcmp.eq.s32.totalorder %v2793, %v267
        %vm2884 = vcmp.eq.s32.totalorder %v2796, %v267
        %vm2885 = vcmp.eq.s32.totalorder %v2799, %v267
        %vm2886 = vcmp.eq.s32.totalorder %v2802, %v267
        %vm2887 = vcmp.eq.s32.totalorder %v2805, %v267
        %vm2888 = vcmp.eq.s32.totalorder %v2808, %v267
        %vm2889 = vcmp.eq.s32.totalorder %v2811, %v267
        %vm2890 = vcmp.eq.s32.totalorder %v2814, %v267
        %vm2891 = vcmp.eq.s32.totalorder %v2817, %v267
        %vm2892 = vcmp.eq.s32.totalorder %v2820, %v267
        %vm2893 = vcmp.eq.s32.totalorder %v2823, %v267
        %vm2894 = vcmp.eq.s32.totalorder %v2826, %v267
        %vm2895 = vcmp.eq.s32.totalorder %v2829, %v267
        %vm2896 = vcmp.eq.s32.totalorder %v2832, %v267
        %v2897 = vsel %vm2833, 1.0, 0.0
        %v2898 = vsel %vm2834, 1.0, 0.0
        %v2899 = vsel %vm2835, 1.0, 0.0
        %v2900 = vsel %vm2836, 1.0, 0.0
        %v2901 = vsel %vm2837, 1.0, 0.0
        %v2902 = vsel %vm2838, 1.0, 0.0
        %v2903 = vsel %vm2839, 1.0, 0.0
        %v2904 = vsel %vm2840, 1.0, 0.0
        %v2905 = vsel %vm2841, 1.0, 0.0
        %v2906 = vsel %vm2842, 1.0, 0.0
        %v2907 = vsel %vm2843, 1.0, 0.0
        %v2908 = vsel %vm2844, 1.0, 0.0
        %v2909 = vsel %vm2845, 1.0, 0.0
        %v2910 = vsel %vm2846, 1.0, 0.0
        %v2911 = vsel %vm2847, 1.0, 0.0
        %v2912 = vsel %vm2848, 1.0, 0.0
        %v2913 = vsel %vm2849, 1.0, 0.0
        %v2914 = vsel %vm2850, 1.0, 0.0
        %v2915 = vsel %vm2851, 1.0, 0.0
        %v2916 = vsel %vm2852, 1.0, 0.0
        %v2917 = vsel %vm2853, 1.0, 0.0
        %v2918 = vsel %vm2854, 1.0, 0.0
        %v2919 = vsel %vm2855, 1.0, 0.0
        %v2920 = vsel %vm2856, 1.0, 0.0
        %v2921 = vsel %vm2857, 1.0, 0.0
        %v2922 = vsel %vm2858, 1.0, 0.0
        %v2923 = vsel %vm2859, 1.0, 0.0
        %v2924 = vsel %vm2860, 1.0, 0.0
        %v2925 = vsel %vm2861, 1.0, 0.0
        %v2926 = vsel %vm2862, 1.0, 0.0
        %v2927 = vsel %vm2863, 1.0, 0.0
        %v2928 = vsel %vm2864, 1.0, 0.0
        %v2929 = vsel %vm2865, 1.0, 0.0
        %v2930 = vsel %vm2866, 1.0, 0.0
        %v2931 = vsel %vm2867, 1.0, 0.0
        %v2932 = vsel %vm2868, 1.0, 0.0
        %v2933 = vsel %vm2869, 1.0, 0.0
        %v2934 = vsel %vm2870, 1.0, 0.0
        %v2935 = vsel %vm2871, 1.0, 0.0
        %v2936 = vsel %vm2872, 1.0, 0.0
        %v2937 = vsel %vm2873, 1.0, 0.0
        %v2938 = vsel %vm2874, 1.0, 0.0
        %v2939 = vsel %vm2875, 1.0, 0.0
        %v2940 = vsel %vm2876, 1.0, 0.0
        %v2941 = vsel %vm2877, 1.0, 0.0
        %v2942 = vsel %vm2878, 1.0, 0.0
        %v2943 = vsel %vm2879, 1.0, 0.0
        %v2944 = vsel %vm2880, 1.0, 0.0
        %v2945 = vsel %vm2881, 1.0, 0.0
        %v2946 = vsel %vm2882, 1.0, 0.0
        %v2947 = vsel %vm2883, 1.0, 0.0
        %v2948 = vsel %vm2884, 1.0, 0.0
        %v2949 = vsel %vm2885, 1.0, 0.0
        %v2950 = vsel %vm2886, 1.0, 0.0
        %v2951 = vsel %vm2887, 1.0, 0.0
        %v2952 = vsel %vm2888, 1.0, 0.0
        %v2953 = vsel %vm2889, 1.0, 0.0
        %v2954 = vsel %vm2890, 1.0, 0.0
        %v2955 = vsel %vm2891, 1.0, 0.0
        %v2956 = vsel %vm2892, 1.0, 0.0
        %v2957 = vsel %vm2893, 1.0, 0.0
        %v2958 = vsel %vm2894, 1.0, 0.0
        %v2959 = vsel %vm2895, 1.0, 0.0
        %v2960 = vsel %vm2896, 1.0, 0.0
        %v2961 = vpack.c.bf16 %v2898, %v2897
        %v2962 = vpack.c.bf16 %v2900, %v2899
        %v2963 = vpack.c.bf16 %v2902, %v2901
        %v2964 = vpack.c.bf16 %v2904, %v2903
        %v2965 = vpack.c.bf16 %v2906, %v2905
        %v2966 = vpack.c.bf16 %v2908, %v2907
        %v2967 = vpack.c.bf16 %v2910, %v2909
        %v2968 = vpack.c.bf16 %v2912, %v2911
        %v2969 = vpack.c.bf16 %v2914, %v2913
        %v2970 = vpack.c.bf16 %v2916, %v2915
        %v2971 = vpack.c.bf16 %v2918, %v2917
        %v2972 = vpack.c.bf16 %v2920, %v2919
        %v2973 = vpack.c.bf16 %v2922, %v2921
        %v2974 = vpack.c.bf16 %v2924, %v2923
        %v2975 = vpack.c.bf16 %v2926, %v2925
        %v2976 = vpack.c.bf16 %v2928, %v2927
        %v2977 = vpack.c.bf16 %v2930, %v2929
        %v2978 = vpack.c.bf16 %v2932, %v2931
        %v2979 = vpack.c.bf16 %v2934, %v2933
        %v2980 = vpack.c.bf16 %v2936, %v2935
        %v2981 = vpack.c.bf16 %v2938, %v2937
        %v2982 = vpack.c.bf16 %v2940, %v2939
        %v2983 = vpack.c.bf16 %v2942, %v2941
        %v2984 = vpack.c.bf16 %v2944, %v2943
        %v2985 = vpack.c.bf16 %v2946, %v2945
        %v2986 = vpack.c.bf16 %v2948, %v2947
        %v2987 = vpack.c.bf16 %v2950, %v2949
        %v2988 = vpack.c.bf16 %v2952, %v2951
        %v2989 = vpack.c.bf16 %v2954, %v2953
        %v2990 = vpack.c.bf16 %v2956, %v2955
        %v2991 = vpack.c.bf16 %v2958, %v2957
        %v2992 = vpack.c.bf16 %v2960, %v2959
        %s2993 = scalar_lea.vmem %s1, 384
        %v2994 = vld [vmem:[%s2993] sm:$0xff]
        %v2995 = vld [vmem:[%s2993 + $0x8] sm:$0xf]
        %v2996 = vld [vmem:[%s2993 + $0xc] sm:$0xff]
        %v2997 = vld [vmem:[%s2993 + $0x14] sm:$0xf]
        %v2998 = vld [vmem:[%s2993 + $0x18] sm:$0xff]
        %v2999 = vld [vmem:[%s2993 + $0x20] sm:$0xf]
        %v3000 = vld [vmem:[%s2993 + $0x24] sm:$0xff]
        %v3001 = vld [vmem:[%s2993 + $0x2c] sm:$0xf]
        %v3002 = vld [vmem:[%s2993 + $0x30] sm:$0xff]
        %v3003 = vld [vmem:[%s2993 + $0x38] sm:$0xf]
        %v3004 = vld [vmem:[%s2993 + $0x3c] sm:$0xff]
        %v3005 = vld [vmem:[%s2993 + $0x44] sm:$0xf]
        %v3006 = vld [vmem:[%s2993 + $0x48] sm:$0xff]
        %v3007 = vld [vmem:[%s2993 + $0x50] sm:$0xf]
        %v3008 = vld [vmem:[%s2993 + $0x54] sm:$0xff]
        %v3009 = vld [vmem:[%s2993 + $0x5c] sm:$0xf]
        %v3010 = vld [vmem:[%s2993 + $0x60] sm:$0xff]
        %v3011 = vld [vmem:[%s2993 + $0x68] sm:$0xf]
        %v3012 = vld [vmem:[%s2993 + $0x6c] sm:$0xff]
        %v3013 = vld [vmem:[%s2993 + $0x74] sm:$0xf]
        %v3014 = vld [vmem:[%s2993 + $0x78] sm:$0xff]
        %v3015 = vld [vmem:[%s2993 + $0x80] sm:$0xf]
        %v3016 = vld [vmem:[%s2993 + $0x84] sm:$0xff]
        %v3017 = vld [vmem:[%s2993 + $0x8c] sm:$0xf]
        %v3018 = vld [vmem:[%s2993 + $0x90] sm:$0xff]
        %v3019 = vld [vmem:[%s2993 + $0x98] sm:$0xf]
        %v3020 = vld [vmem:[%s2993 + $0x9c] sm:$0xff]
        %v3021 = vld [vmem:[%s2993 + $0xa4] sm:$0xf]
        %v3022 = vld [vmem:[%s2993 + $0xa8] sm:$0xff]
        %v3023 = vld [vmem:[%s2993 + $0xb0] sm:$0xf]
        %v3024 = vld [vmem:[%s2993 + $0xb4] sm:$0xff]
        %v3025 = vld [vmem:[%s2993 + $0xbc] sm:$0xf]
        %v3058 = vunpack.c.l.b16 %v2994
        %v3059 = vunpack.c.h.b16 %v2994
        %v3060 = vunpack.c.l.b16 %v2995
        %v3061 = vunpack.c.l.b16 %v2996
        %v3062 = vunpack.c.h.b16 %v2996
        %v3063 = vunpack.c.l.b16 %v2997
        %v3064 = vunpack.c.l.b16 %v2998
        %v3065 = vunpack.c.h.b16 %v2998
        %v3066 = vunpack.c.l.b16 %v2999
        %v3067 = vunpack.c.l.b16 %v3000
        %v3068 = vunpack.c.h.b16 %v3000
        %v3069 = vunpack.c.l.b16 %v3001
        %v3070 = vunpack.c.l.b16 %v3002
        %v3071 = vunpack.c.h.b16 %v3002
        %v3072 = vunpack.c.l.b16 %v3003
        %v3073 = vunpack.c.l.b16 %v3004
        %v3074 = vunpack.c.h.b16 %v3004
        %v3075 = vunpack.c.l.b16 %v3005
        %v3076 = vunpack.c.l.b16 %v3006
        %v3077 = vunpack.c.h.b16 %v3006
        %v3078 = vunpack.c.l.b16 %v3007
        %v3079 = vunpack.c.l.b16 %v3008
        %v3080 = vunpack.c.h.b16 %v3008
        %v3081 = vunpack.c.l.b16 %v3009
        %v3082 = vunpack.c.l.b16 %v3010
        %v3083 = vunpack.c.h.b16 %v3010
        %v3084 = vunpack.c.l.b16 %v3011
        %v3085 = vunpack.c.l.b16 %v3012
        %v3086 = vunpack.c.h.b16 %v3012
        %v3087 = vunpack.c.l.b16 %v3013
        %v3088 = vunpack.c.l.b16 %v3014
        %v3089 = vunpack.c.h.b16 %v3014
        %v3090 = vunpack.c.l.b16 %v3015
        %v3091 = vunpack.c.l.b16 %v3016
        %v3092 = vunpack.c.h.b16 %v3016
        %v3093 = vunpack.c.l.b16 %v3017
        %v3094 = vunpack.c.l.b16 %v3018
        %v3095 = vunpack.c.h.b16 %v3018
        %v3096 = vunpack.c.l.b16 %v3019
        %v3097 = vunpack.c.l.b16 %v3020
        %v3098 = vunpack.c.h.b16 %v3020
        %v3099 = vunpack.c.l.b16 %v3021
        %v3100 = vunpack.c.l.b16 %v3022
        %v3101 = vunpack.c.h.b16 %v3022
        %v3102 = vunpack.c.l.b16 %v3023
        %v3103 = vunpack.c.l.b16 %v3024
        %v3104 = vunpack.c.h.b16 %v3024
        %v3105 = vunpack.c.l.b16 %v3025
        %v3106 = vpack.c.b16 %v3061, %v3058
        %v3107 = vpack.c.b16 %v3062, %v3059
        %v3108 = vpack.c.b16 %v3063, %v3060
        %v3109 = vpack.c.b16 %v3067, %v3064
        %v3110 = vpack.c.b16 %v3068, %v3065
        %v3111 = vpack.c.b16 %v3069, %v3066
        %v3112 = vpack.c.b16 %v3073, %v3070
        %v3113 = vpack.c.b16 %v3074, %v3071
        %v3114 = vpack.c.b16 %v3075, %v3072
        %v3115 = vpack.c.b16 %v3079, %v3076
        %v3116 = vpack.c.b16 %v3080, %v3077
        %v3117 = vpack.c.b16 %v3081, %v3078
        %v3118 = vpack.c.b16 %v3085, %v3082
        %v3119 = vpack.c.b16 %v3086, %v3083
        %v3120 = vpack.c.b16 %v3087, %v3084
        %v3121 = vpack.c.b16 %v3091, %v3088
        %v3122 = vpack.c.b16 %v3092, %v3089
        %v3123 = vpack.c.b16 %v3093, %v3090
        %v3124 = vpack.c.b16 %v3097, %v3094
        %v3125 = vpack.c.b16 %v3098, %v3095
        %v3126 = vpack.c.b16 %v3099, %v3096
        %v3127 = vpack.c.b16 %v3103, %v3100
        %v3128 = vpack.c.b16 %v3104, %v3101
        %v3129 = vpack.c.b16 %v3105, %v3102
        %3154 = vmatprep.subr.bf16.mxu0 %v3128
        %3155 = vmatpush1.bf16.msra.mxu0 %v3127
        %3156 = vmatprep.subr.bf16.mxu0 %v3125
        %3157 = vmatpush1.bf16.msra.mxu0 %v3124
        %3158 = vmatprep.subr.bf16.mxu0 %v3122
        %3159 = vmatpush1.bf16.msra.mxu0 %v3121
        %3160 = vmatprep.subr.bf16.mxu0 %v3119
        %3161 = vmatpush1.bf16.msra.mxu0 %v3118
        %3162 = vmatprep.subr.bf16.mxu0 %v3116
        %3163 = vmatpush1.bf16.msra.mxu0 %v3115
        %3164 = vmatprep.subr.bf16.mxu0 %v3113
        %3165 = vmatpush1.bf16.msra.mxu0 %v3112
        %3166 = vmatprep.subr.bf16.mxu0 %v3110
        %3167 = vmatpush1.bf16.msra.mxu0 %v3109
        %3168 = vmatprep.subr.bf16.mxu0 %v3107
        %3169 = vmatpush1.bf16.msra.mxu0 %v3106
        %3170 = vmatprep.subr.bf16.mxu0 0
        %3171 = vmatpush2.bf16.msra.mxu0 0
        %3172 = vmatprep.subr.bf16.mxu0 0
        %3173 = vmatpush2.bf16.msra.mxu0 0
        %3174 = vmatprep.subr.bf16.mxu0 0
        %3175 = vmatpush2.bf16.msra.mxu0 0
        %3176 = vmatprep.subr.bf16.mxu0 0
        %3177 = vmatpush2.bf16.msra.mxu0 0
        %3178 = vmatprep.subr.bf16.mxu0 0
        %3179 = vmatpush2.bf16.msra.mxu0 0
        %3180 = vmatprep.subr.bf16.mxu0 0
        %3181 = vmatpush2.bf16.msra.mxu0 0
        %3182 = vmatprep.subr.bf16.mxu0 0
        %3183 = vmatpush2.bf16.msra.mxu0 0
        %3184 = vmatprep.subr.bf16.mxu0 0
        %3185 = vmatpush2.bf16.msra.mxu0 0
        %3186 = vmatprep.mubr.bf16.mxu0 0
        %3187 = vmatmul.mubr.bf16.gmra.mxu0 %v2961
        %v3188 = vpop.f32.mrf.mxu0
        %v3189 = vadd.f32 0.0, %v3188
        %v3190 = vpop.f32.mrf.mxu0
        %v3191 = vadd.f32 0.0, %v3190
        %v3192 = vpop.f32.mrf.mxu0
        %v3193 = vadd.f32 0.0, %v3192
        %v3194 = vpop.f32.mrf.mxu0
        %v3195 = vadd.f32 0.0, %v3194
        %3196 = vmatprep.mubr.bf16.mxu0 0
        %3197 = vmatmul.mubr.bf16.gmra.mxu0 %v2962
        %v3198 = vpop.f32.mrf.mxu0
        %v3199 = vadd.f32 0.0, %v3198
        %v3200 = vpop.f32.mrf.mxu0
        %v3201 = vadd.f32 0.0, %v3200
        %v3202 = vpop.f32.mrf.mxu0
        %v3203 = vadd.f32 0.0, %v3202
        %v3204 = vpop.f32.mrf.mxu0
        %v3205 = vadd.f32 0.0, %v3204
        %3206 = vmatprep.mubr.bf16.mxu0 0
        %3207 = vmatmul.mubr.bf16.gmra.mxu0 %v2963
        %v3208 = vpop.f32.mrf.mxu0
        %v3209 = vadd.f32 0.0, %v3208
        %v3210 = vpop.f32.mrf.mxu0
        %v3211 = vadd.f32 0.0, %v3210
        %v3212 = vpop.f32.mrf.mxu0
        %v3213 = vadd.f32 0.0, %v3212
        %v3214 = vpop.f32.mrf.mxu0
        %v3215 = vadd.f32 0.0, %v3214
        %3216 = vmatprep.mubr.bf16.mxu0 0
        %3217 = vmatmul.mubr.bf16.gmra.mxu0 %v2964
        %v3218 = vpop.f32.mrf.mxu0
        %v3219 = vadd.f32 0.0, %v3218
        %v3220 = vpop.f32.mrf.mxu0
        %v3221 = vadd.f32 0.0, %v3220
        %v3222 = vpop.f32.mrf.mxu0
        %v3223 = vadd.f32 0.0, %v3222
        %v3224 = vpop.f32.mrf.mxu0
        %v3225 = vadd.f32 0.0, %v3224
        %3226 = vmatprep.mubr.bf16.mxu0 0
        %3227 = vmatmul.mubr.bf16.gmra.mxu0 %v2965
        %v3228 = vpop.f32.mrf.mxu0
        %v3229 = vadd.f32 0.0, %v3228
        %v3230 = vpop.f32.mrf.mxu0
        %v3231 = vadd.f32 0.0, %v3230
        %v3232 = vpop.f32.mrf.mxu0
        %v3233 = vadd.f32 0.0, %v3232
        %v3234 = vpop.f32.mrf.mxu0
        %v3235 = vadd.f32 0.0, %v3234
        %3236 = vmatprep.mubr.bf16.mxu0 0
        %3237 = vmatmul.mubr.bf16.gmra.mxu0 %v2966
        %v3238 = vpop.f32.mrf.mxu0
        %v3239 = vadd.f32 0.0, %v3238
        %v3240 = vpop.f32.mrf.mxu0
        %v3241 = vadd.f32 0.0, %v3240
        %v3242 = vpop.f32.mrf.mxu0
        %v3243 = vadd.f32 0.0, %v3242
        %v3244 = vpop.f32.mrf.mxu0
        %v3245 = vadd.f32 0.0, %v3244
        %3246 = vmatprep.mubr.bf16.mxu0 0
        %3247 = vmatmul.mubr.bf16.gmra.mxu0 %v2967
        %v3248 = vpop.f32.mrf.mxu0
        %v3249 = vadd.f32 0.0, %v3248
        %v3250 = vpop.f32.mrf.mxu0
        %v3251 = vadd.f32 0.0, %v3250
        %v3252 = vpop.f32.mrf.mxu0
        %v3253 = vadd.f32 0.0, %v3252
        %v3254 = vpop.f32.mrf.mxu0
        %v3255 = vadd.f32 0.0, %v3254
        %3256 = vmatprep.mubr.bf16.mxu0 0
        %3257 = vmatmul.mubr.bf16.gmra.mxu0 %v2968
        %v3258 = vpop.f32.mrf.mxu0
        %v3259 = vadd.f32 0.0, %v3258
        %v3260 = vpop.f32.mrf.mxu0
        %v3261 = vadd.f32 0.0, %v3260
        %v3262 = vpop.f32.mrf.mxu0
        %v3263 = vadd.f32 0.0, %v3262
        %v3264 = vpop.f32.mrf.mxu0
        %v3265 = vadd.f32 0.0, %v3264
        %3266 = vmatprep.mubr.bf16.mxu0 0
        %3267 = vmatmul.mubr.bf16.gmra.mxu0 %v2969
        %v3268 = vpop.f32.mrf.mxu0
        %v3269 = vadd.f32 0.0, %v3268
        %v3270 = vpop.f32.mrf.mxu0
        %v3271 = vadd.f32 0.0, %v3270
        %v3272 = vpop.f32.mrf.mxu0
        %v3273 = vadd.f32 0.0, %v3272
        %v3274 = vpop.f32.mrf.mxu0
        %v3275 = vadd.f32 0.0, %v3274
        %3276 = vmatprep.mubr.bf16.mxu0 0
        %3277 = vmatmul.mubr.bf16.gmra.mxu0 %v2970
        %v3278 = vpop.f32.mrf.mxu0
        %v3279 = vadd.f32 0.0, %v3278
        %v3280 = vpop.f32.mrf.mxu0
        %v3281 = vadd.f32 0.0, %v3280
        %v3282 = vpop.f32.mrf.mxu0
        %v3283 = vadd.f32 0.0, %v3282
        %v3284 = vpop.f32.mrf.mxu0
        %v3285 = vadd.f32 0.0, %v3284
        %3286 = vmatprep.mubr.bf16.mxu0 0
        %3287 = vmatmul.mubr.bf16.gmra.mxu0 %v2971
        %v3288 = vpop.f32.mrf.mxu0
        %v3289 = vadd.f32 0.0, %v3288
        %v3290 = vpop.f32.mrf.mxu0
        %v3291 = vadd.f32 0.0, %v3290
        %v3292 = vpop.f32.mrf.mxu0
        %v3293 = vadd.f32 0.0, %v3292
        %v3294 = vpop.f32.mrf.mxu0
        %v3295 = vadd.f32 0.0, %v3294
        %3296 = vmatprep.mubr.bf16.mxu0 0
        %3297 = vmatmul.mubr.bf16.gmra.mxu0 %v2972
        %v3298 = vpop.f32.mrf.mxu0
        %v3299 = vadd.f32 0.0, %v3298
        %v3300 = vpop.f32.mrf.mxu0
        %v3301 = vadd.f32 0.0, %v3300
        %v3302 = vpop.f32.mrf.mxu0
        %v3303 = vadd.f32 0.0, %v3302
        %v3304 = vpop.f32.mrf.mxu0
        %v3305 = vadd.f32 0.0, %v3304
        %3306 = vmatprep.mubr.bf16.mxu0 0
        %3307 = vmatmul.mubr.bf16.gmra.mxu0 %v2973
        %v3308 = vpop.f32.mrf.mxu0
        %v3309 = vadd.f32 0.0, %v3308
        %v3310 = vpop.f32.mrf.mxu0
        %v3311 = vadd.f32 0.0, %v3310
        %v3312 = vpop.f32.mrf.mxu0
        %v3313 = vadd.f32 0.0, %v3312
        %v3314 = vpop.f32.mrf.mxu0
        %v3315 = vadd.f32 0.0, %v3314
        %3316 = vmatprep.mubr.bf16.mxu0 0
        %3317 = vmatmul.mubr.bf16.gmra.mxu0 %v2974
        %v3318 = vpop.f32.mrf.mxu0
        %v3319 = vadd.f32 0.0, %v3318
        %v3320 = vpop.f32.mrf.mxu0
        %v3321 = vadd.f32 0.0, %v3320
        %v3322 = vpop.f32.mrf.mxu0
        %v3323 = vadd.f32 0.0, %v3322
        %v3324 = vpop.f32.mrf.mxu0
        %v3325 = vadd.f32 0.0, %v3324
        %3326 = vmatprep.mubr.bf16.mxu0 0
        %3327 = vmatmul.mubr.bf16.gmra.mxu0 %v2975
        %v3328 = vpop.f32.mrf.mxu0
        %v3329 = vadd.f32 0.0, %v3328
        %v3330 = vpop.f32.mrf.mxu0
        %v3331 = vadd.f32 0.0, %v3330
        %v3332 = vpop.f32.mrf.mxu0
        %v3333 = vadd.f32 0.0, %v3332
        %v3334 = vpop.f32.mrf.mxu0
        %v3335 = vadd.f32 0.0, %v3334
        %3336 = vmatprep.mubr.bf16.mxu0 0
        %3337 = vmatmul.mubr.bf16.gmra.mxu0 %v2976
        %v3338 = vpop.f32.mrf.mxu0
        %v3339 = vadd.f32 0.0, %v3338
        %v3340 = vpop.f32.mrf.mxu0
        %v3341 = vadd.f32 0.0, %v3340
        %v3342 = vpop.f32.mrf.mxu0
        %v3343 = vadd.f32 0.0, %v3342
        %v3344 = vpop.f32.mrf.mxu0
        %v3345 = vadd.f32 0.0, %v3344
        %3346 = vmatprep.mubr.bf16.mxu0 0
        %3347 = vmatmul.mubr.bf16.gmra.mxu0 %v2977
        %v3348 = vpop.f32.mrf.mxu0
        %v3349 = vadd.f32 0.0, %v3348
        %v3350 = vpop.f32.mrf.mxu0
        %v3351 = vadd.f32 0.0, %v3350
        %v3352 = vpop.f32.mrf.mxu0
        %v3353 = vadd.f32 0.0, %v3352
        %v3354 = vpop.f32.mrf.mxu0
        %v3355 = vadd.f32 0.0, %v3354
        %3356 = vmatprep.mubr.bf16.mxu0 0
        %3357 = vmatmul.mubr.bf16.gmra.mxu0 %v2978
        %v3358 = vpop.f32.mrf.mxu0
        %v3359 = vadd.f32 0.0, %v3358
        %v3360 = vpop.f32.mrf.mxu0
        %v3361 = vadd.f32 0.0, %v3360
        %v3362 = vpop.f32.mrf.mxu0
        %v3363 = vadd.f32 0.0, %v3362
        %v3364 = vpop.f32.mrf.mxu0
        %v3365 = vadd.f32 0.0, %v3364
        %3366 = vmatprep.mubr.bf16.mxu0 0
        %3367 = vmatmul.mubr.bf16.gmra.mxu0 %v2979
        %v3368 = vpop.f32.mrf.mxu0
        %v3369 = vadd.f32 0.0, %v3368
        %v3370 = vpop.f32.mrf.mxu0
        %v3371 = vadd.f32 0.0, %v3370
        %v3372 = vpop.f32.mrf.mxu0
        %v3373 = vadd.f32 0.0, %v3372
        %v3374 = vpop.f32.mrf.mxu0
        %v3375 = vadd.f32 0.0, %v3374
        %3376 = vmatprep.mubr.bf16.mxu0 0
        %3377 = vmatmul.mubr.bf16.gmra.mxu0 %v2980
        %v3378 = vpop.f32.mrf.mxu0
        %v3379 = vadd.f32 0.0, %v3378
        %v3380 = vpop.f32.mrf.mxu0
        %v3381 = vadd.f32 0.0, %v3380
        %v3382 = vpop.f32.mrf.mxu0
        %v3383 = vadd.f32 0.0, %v3382
        %v3384 = vpop.f32.mrf.mxu0
        %v3385 = vadd.f32 0.0, %v3384
        %3386 = vmatprep.mubr.bf16.mxu0 0
        %3387 = vmatmul.mubr.bf16.gmra.mxu0 %v2981
        %v3388 = vpop.f32.mrf.mxu0
        %v3389 = vadd.f32 0.0, %v3388
        %v3390 = vpop.f32.mrf.mxu0
        %v3391 = vadd.f32 0.0, %v3390
        %v3392 = vpop.f32.mrf.mxu0
        %v3393 = vadd.f32 0.0, %v3392
        %v3394 = vpop.f32.mrf.mxu0
        %v3395 = vadd.f32 0.0, %v3394
        %3396 = vmatprep.mubr.bf16.mxu0 0
        %3397 = vmatmul.mubr.bf16.gmra.mxu0 %v2982
        %v3398 = vpop.f32.mrf.mxu0
        %v3399 = vadd.f32 0.0, %v3398
        %v3400 = vpop.f32.mrf.mxu0
        %v3401 = vadd.f32 0.0, %v3400
        %v3402 = vpop.f32.mrf.mxu0
        %v3403 = vadd.f32 0.0, %v3402
        %v3404 = vpop.f32.mrf.mxu0
        %v3405 = vadd.f32 0.0, %v3404
        %3406 = vmatprep.mubr.bf16.mxu0 0
        %3407 = vmatmul.mubr.bf16.gmra.mxu0 %v2983
        %v3408 = vpop.f32.mrf.mxu0
        %v3409 = vadd.f32 0.0, %v3408
        %v3410 = vpop.f32.mrf.mxu0
        %v3411 = vadd.f32 0.0, %v3410
        %v3412 = vpop.f32.mrf.mxu0
        %v3413 = vadd.f32 0.0, %v3412
        %v3414 = vpop.f32.mrf.mxu0
        %v3415 = vadd.f32 0.0, %v3414
        %3416 = vmatprep.mubr.bf16.mxu0 0
        %3417 = vmatmul.mubr.bf16.gmra.mxu0 %v2984
        %v3418 = vpop.f32.mrf.mxu0
        %v3419 = vadd.f32 0.0, %v3418
        %v3420 = vpop.f32.mrf.mxu0
        %v3421 = vadd.f32 0.0, %v3420
        %v3422 = vpop.f32.mrf.mxu0
        %v3423 = vadd.f32 0.0, %v3422
        %v3424 = vpop.f32.mrf.mxu0
        %v3425 = vadd.f32 0.0, %v3424
        %3426 = vmatprep.mubr.bf16.mxu0 0
        %3427 = vmatmul.mubr.bf16.gmra.mxu0 %v2985
        %v3428 = vpop.f32.mrf.mxu0
        %v3429 = vadd.f32 0.0, %v3428
        %v3430 = vpop.f32.mrf.mxu0
        %v3431 = vadd.f32 0.0, %v3430
        %v3432 = vpop.f32.mrf.mxu0
        %v3433 = vadd.f32 0.0, %v3432
        %v3434 = vpop.f32.mrf.mxu0
        %v3435 = vadd.f32 0.0, %v3434
        %3436 = vmatprep.mubr.bf16.mxu0 0
        %3437 = vmatmul.mubr.bf16.gmra.mxu0 %v2986
        %v3438 = vpop.f32.mrf.mxu0
        %v3439 = vadd.f32 0.0, %v3438
        %v3440 = vpop.f32.mrf.mxu0
        %v3441 = vadd.f32 0.0, %v3440
        %v3442 = vpop.f32.mrf.mxu0
        %v3443 = vadd.f32 0.0, %v3442
        %v3444 = vpop.f32.mrf.mxu0
        %v3445 = vadd.f32 0.0, %v3444
        %3446 = vmatprep.mubr.bf16.mxu0 0
        %3447 = vmatmul.mubr.bf16.gmra.mxu0 %v2987
        %v3448 = vpop.f32.mrf.mxu0
        %v3449 = vadd.f32 0.0, %v3448
        %v3450 = vpop.f32.mrf.mxu0
        %v3451 = vadd.f32 0.0, %v3450
        %v3452 = vpop.f32.mrf.mxu0
        %v3453 = vadd.f32 0.0, %v3452
        %v3454 = vpop.f32.mrf.mxu0
        %v3455 = vadd.f32 0.0, %v3454
        %3456 = vmatprep.mubr.bf16.mxu0 0
        %3457 = vmatmul.mubr.bf16.gmra.mxu0 %v2988
        %v3458 = vpop.f32.mrf.mxu0
        %v3459 = vadd.f32 0.0, %v3458
        %v3460 = vpop.f32.mrf.mxu0
        %v3461 = vadd.f32 0.0, %v3460
        %v3462 = vpop.f32.mrf.mxu0
        %v3463 = vadd.f32 0.0, %v3462
        %v3464 = vpop.f32.mrf.mxu0
        %v3465 = vadd.f32 0.0, %v3464
        %3466 = vmatprep.mubr.bf16.mxu0 0
        %3467 = vmatmul.mubr.bf16.gmra.mxu0 %v2989
        %v3468 = vpop.f32.mrf.mxu0
        %v3469 = vadd.f32 0.0, %v3468
        %v3470 = vpop.f32.mrf.mxu0
        %v3471 = vadd.f32 0.0, %v3470
        %v3472 = vpop.f32.mrf.mxu0
        %v3473 = vadd.f32 0.0, %v3472
        %v3474 = vpop.f32.mrf.mxu0
        %v3475 = vadd.f32 0.0, %v3474
        %3476 = vmatprep.mubr.bf16.mxu0 0
        %3477 = vmatmul.mubr.bf16.gmra.mxu0 %v2990
        %v3478 = vpop.f32.mrf.mxu0
        %v3479 = vadd.f32 0.0, %v3478
        %v3480 = vpop.f32.mrf.mxu0
        %v3481 = vadd.f32 0.0, %v3480
        %v3482 = vpop.f32.mrf.mxu0
        %v3483 = vadd.f32 0.0, %v3482
        %v3484 = vpop.f32.mrf.mxu0
        %v3485 = vadd.f32 0.0, %v3484
        %3486 = vmatprep.mubr.bf16.mxu0 0
        %3487 = vmatmul.mubr.bf16.gmra.mxu0 %v2991
        %v3488 = vpop.f32.mrf.mxu0
        %v3489 = vadd.f32 0.0, %v3488
        %v3490 = vpop.f32.mrf.mxu0
        %v3491 = vadd.f32 0.0, %v3490
        %v3492 = vpop.f32.mrf.mxu0
        %v3493 = vadd.f32 0.0, %v3492
        %v3494 = vpop.f32.mrf.mxu0
        %v3495 = vadd.f32 0.0, %v3494
        %3496 = vmatprep.mubr.bf16.mxu0 0
        %3497 = vmatmul.mubr.bf16.gmra.mxu0 %v2992
        %v3498 = vpop.f32.mrf.mxu0
        %v3499 = vadd.f32 0.0, %v3498
        %v3500 = vpop.f32.mrf.mxu0
        %v3501 = vadd.f32 0.0, %v3500
        %v3502 = vpop.f32.mrf.mxu0
        %v3503 = vadd.f32 0.0, %v3502
        %v3504 = vpop.f32.mrf.mxu0
        %v3505 = vadd.f32 0.0, %v3504
        %3506 = vdwg.mxu0
        %3507 = vmatprep.subr.bf16.mxu0 0
        %3508 = vmatpush1.bf16.msra.mxu0 %v3129
        %3509 = vmatprep.subr.bf16.mxu0 0
        %3510 = vmatpush1.bf16.msra.mxu0 %v3126
        %3511 = vmatprep.subr.bf16.mxu0 0
        %3512 = vmatpush1.bf16.msra.mxu0 %v3123
        %3513 = vmatprep.subr.bf16.mxu0 0
        %3514 = vmatpush1.bf16.msra.mxu0 %v3120
        %3515 = vmatprep.subr.bf16.mxu0 0
        %3516 = vmatpush1.bf16.msra.mxu0 %v3117
        %3517 = vmatprep.subr.bf16.mxu0 0
        %3518 = vmatpush1.bf16.msra.mxu0 %v3114
        %3519 = vmatprep.subr.bf16.mxu0 0
        %3520 = vmatpush1.bf16.msra.mxu0 %v3111
        %3521 = vmatprep.subr.bf16.mxu0 0
        %3522 = vmatpush1.bf16.msra.mxu0 %v3108
        %3523 = vmatprep.subr.bf16.mxu0 0
        %3524 = vmatpush2.bf16.msra.mxu0 0
        %3525 = vmatprep.subr.bf16.mxu0 0
        %3526 = vmatpush2.bf16.msra.mxu0 0
        %3527 = vmatprep.subr.bf16.mxu0 0
        %3528 = vmatpush2.bf16.msra.mxu0 0
        %3529 = vmatprep.subr.bf16.mxu0 0
        %3530 = vmatpush2.bf16.msra.mxu0 0
        %3531 = vmatprep.subr.bf16.mxu0 0
        %3532 = vmatpush2.bf16.msra.mxu0 0
        %3533 = vmatprep.subr.bf16.mxu0 0
        %3534 = vmatpush2.bf16.msra.mxu0 0
        %3535 = vmatprep.subr.bf16.mxu0 0
        %3536 = vmatpush2.bf16.msra.mxu0 0
        %3537 = vmatprep.subr.bf16.mxu0 0
        %3538 = vmatpush2.bf16.msra.mxu0 0
        %3539 = vmatprep.mubr.bf16.mxu0 0
        %3540 = vmatmul.mubr.bf16.gmra.mxu0 %v2961
        %v3541 = vpop.f32.mrf.mxu0
        %v3542 = vadd.f32 0.0, %v3541
        %v3543 = vpop.f32.mrf.mxu0
        %v3544 = vpop.f32.mrf.mxu0
        %v3545 = vadd.f32 0.0, %v3544
        %v3546 = vpop.f32.mrf.mxu0
        %3547 = vmatprep.mubr.bf16.mxu0 0
        %3548 = vmatmul.mubr.bf16.gmra.mxu0 %v2962
        %v3549 = vpop.f32.mrf.mxu0
        %v3550 = vadd.f32 0.0, %v3549
        %v3551 = vpop.f32.mrf.mxu0
        %v3552 = vpop.f32.mrf.mxu0
        %v3553 = vadd.f32 0.0, %v3552
        %v3554 = vpop.f32.mrf.mxu0
        %3555 = vmatprep.mubr.bf16.mxu0 0
        %3556 = vmatmul.mubr.bf16.gmra.mxu0 %v2963
        %v3557 = vpop.f32.mrf.mxu0
        %v3558 = vadd.f32 0.0, %v3557
        %v3559 = vpop.f32.mrf.mxu0
        %v3560 = vpop.f32.mrf.mxu0
        %v3561 = vadd.f32 0.0, %v3560
        %v3562 = vpop.f32.mrf.mxu0
        %3563 = vmatprep.mubr.bf16.mxu0 0
        %3564 = vmatmul.mubr.bf16.gmra.mxu0 %v2964
        %v3565 = vpop.f32.mrf.mxu0
        %v3566 = vadd.f32 0.0, %v3565
        %v3567 = vpop.f32.mrf.mxu0
        %v3568 = vpop.f32.mrf.mxu0
        %v3569 = vadd.f32 0.0, %v3568
        %v3570 = vpop.f32.mrf.mxu0
        %3571 = vmatprep.mubr.bf16.mxu0 0
        %3572 = vmatmul.mubr.bf16.gmra.mxu0 %v2965
        %v3573 = vpop.f32.mrf.mxu0
        %v3574 = vadd.f32 0.0, %v3573
        %v3575 = vpop.f32.mrf.mxu0
        %v3576 = vpop.f32.mrf.mxu0
        %v3577 = vadd.f32 0.0, %v3576
        %v3578 = vpop.f32.mrf.mxu0
        %3579 = vmatprep.mubr.bf16.mxu0 0
        %3580 = vmatmul.mubr.bf16.gmra.mxu0 %v2966
        %v3581 = vpop.f32.mrf.mxu0
        %v3582 = vadd.f32 0.0, %v3581
        %v3583 = vpop.f32.mrf.mxu0
        %v3584 = vpop.f32.mrf.mxu0
        %v3585 = vadd.f32 0.0, %v3584
        %v3586 = vpop.f32.mrf.mxu0
        %3587 = vmatprep.mubr.bf16.mxu0 0
        %3588 = vmatmul.mubr.bf16.gmra.mxu0 %v2967
        %v3589 = vpop.f32.mrf.mxu0
        %v3590 = vadd.f32 0.0, %v3589
        %v3591 = vpop.f32.mrf.mxu0
        %v3592 = vpop.f32.mrf.mxu0
        %v3593 = vadd.f32 0.0, %v3592
        %v3594 = vpop.f32.mrf.mxu0
        %3595 = vmatprep.mubr.bf16.mxu0 0
        %3596 = vmatmul.mubr.bf16.gmra.mxu0 %v2968
        %v3597 = vpop.f32.mrf.mxu0
        %v3598 = vadd.f32 0.0, %v3597
        %v3599 = vpop.f32.mrf.mxu0
        %v3600 = vpop.f32.mrf.mxu0
        %v3601 = vadd.f32 0.0, %v3600
        %v3602 = vpop.f32.mrf.mxu0
        %3603 = vmatprep.mubr.bf16.mxu0 0
        %3604 = vmatmul.mubr.bf16.gmra.mxu0 %v2969
        %v3605 = vpop.f32.mrf.mxu0
        %v3606 = vadd.f32 0.0, %v3605
        %v3607 = vpop.f32.mrf.mxu0
        %v3608 = vpop.f32.mrf.mxu0
        %v3609 = vadd.f32 0.0, %v3608
        %v3610 = vpop.f32.mrf.mxu0
        %3611 = vmatprep.mubr.bf16.mxu0 0
        %3612 = vmatmul.mubr.bf16.gmra.mxu0 %v2970
        %v3613 = vpop.f32.mrf.mxu0
        %v3614 = vadd.f32 0.0, %v3613
        %v3615 = vpop.f32.mrf.mxu0
        %v3616 = vpop.f32.mrf.mxu0
        %v3617 = vadd.f32 0.0, %v3616
        %v3618 = vpop.f32.mrf.mxu0
        %3619 = vmatprep.mubr.bf16.mxu0 0
        %3620 = vmatmul.mubr.bf16.gmra.mxu0 %v2971
        %v3621 = vpop.f32.mrf.mxu0
        %v3622 = vadd.f32 0.0, %v3621
        %v3623 = vpop.f32.mrf.mxu0
        %v3624 = vpop.f32.mrf.mxu0
        %v3625 = vadd.f32 0.0, %v3624
        %v3626 = vpop.f32.mrf.mxu0
        %3627 = vmatprep.mubr.bf16.mxu0 0
        %3628 = vmatmul.mubr.bf16.gmra.mxu0 %v2972
        %v3629 = vpop.f32.mrf.mxu0
        %v3630 = vadd.f32 0.0, %v3629
        %v3631 = vpop.f32.mrf.mxu0
        %v3632 = vpop.f32.mrf.mxu0
        %v3633 = vadd.f32 0.0, %v3632
        %v3634 = vpop.f32.mrf.mxu0
        %3635 = vmatprep.mubr.bf16.mxu0 0
        %3636 = vmatmul.mubr.bf16.gmra.mxu0 %v2973
        %v3637 = vpop.f32.mrf.mxu0
        %v3638 = vadd.f32 0.0, %v3637
        %v3639 = vpop.f32.mrf.mxu0
        %v3640 = vpop.f32.mrf.mxu0
        %v3641 = vadd.f32 0.0, %v3640
        %v3642 = vpop.f32.mrf.mxu0
        %3643 = vmatprep.mubr.bf16.mxu0 0
        %3644 = vmatmul.mubr.bf16.gmra.mxu0 %v2974
        %v3645 = vpop.f32.mrf.mxu0
        %v3646 = vadd.f32 0.0, %v3645
        %v3647 = vpop.f32.mrf.mxu0
        %v3648 = vpop.f32.mrf.mxu0
        %v3649 = vadd.f32 0.0, %v3648
        %v3650 = vpop.f32.mrf.mxu0
        %3651 = vmatprep.mubr.bf16.mxu0 0
        %3652 = vmatmul.mubr.bf16.gmra.mxu0 %v2975
        %v3653 = vpop.f32.mrf.mxu0
        %v3654 = vadd.f32 0.0, %v3653
        %v3655 = vpop.f32.mrf.mxu0
        %v3656 = vpop.f32.mrf.mxu0
        %v3657 = vadd.f32 0.0, %v3656
        %v3658 = vpop.f32.mrf.mxu0
        %3659 = vmatprep.mubr.bf16.mxu0 0
        %3660 = vmatmul.mubr.bf16.gmra.mxu0 %v2976
        %v3661 = vpop.f32.mrf.mxu0
        %v3662 = vadd.f32 0.0, %v3661
        %v3663 = vpop.f32.mrf.mxu0
        %v3664 = vpop.f32.mrf.mxu0
        %v3665 = vadd.f32 0.0, %v3664
        %v3666 = vpop.f32.mrf.mxu0
        %3667 = vmatprep.mubr.bf16.mxu0 0
        %3668 = vmatmul.mubr.bf16.gmra.mxu0 %v2977
        %v3669 = vpop.f32.mrf.mxu0
        %v3670 = vadd.f32 0.0, %v3669
        %v3671 = vpop.f32.mrf.mxu0
        %v3672 = vpop.f32.mrf.mxu0
        %v3673 = vadd.f32 0.0, %v3672
        %v3674 = vpop.f32.mrf.mxu0
        %3675 = vmatprep.mubr.bf16.mxu0 0
        %3676 = vmatmul.mubr.bf16.gmra.mxu0 %v2978
        %v3677 = vpop.f32.mrf.mxu0
        %v3678 = vadd.f32 0.0, %v3677
        %v3679 = vpop.f32.mrf.mxu0
        %v3680 = vpop.f32.mrf.mxu0
        %v3681 = vadd.f32 0.0, %v3680
        %v3682 = vpop.f32.mrf.mxu0
        %3683 = vmatprep.mubr.bf16.mxu0 0
        %3684 = vmatmul.mubr.bf16.gmra.mxu0 %v2979
        %v3685 = vpop.f32.mrf.mxu0
        %v3686 = vadd.f32 0.0, %v3685
        %v3687 = vpop.f32.mrf.mxu0
        %v3688 = vpop.f32.mrf.mxu0
        %v3689 = vadd.f32 0.0, %v3688
        %v3690 = vpop.f32.mrf.mxu0
        %3691 = vmatprep.mubr.bf16.mxu0 0
        %3692 = vmatmul.mubr.bf16.gmra.mxu0 %v2980
        %v3693 = vpop.f32.mrf.mxu0
        %v3694 = vadd.f32 0.0, %v3693
        %v3695 = vpop.f32.mrf.mxu0
        %v3696 = vpop.f32.mrf.mxu0
        %v3697 = vadd.f32 0.0, %v3696
        %v3698 = vpop.f32.mrf.mxu0
        %3699 = vmatprep.mubr.bf16.mxu0 0
        %3700 = vmatmul.mubr.bf16.gmra.mxu0 %v2981
        %v3701 = vpop.f32.mrf.mxu0
        %v3702 = vadd.f32 0.0, %v3701
        %v3703 = vpop.f32.mrf.mxu0
        %v3704 = vpop.f32.mrf.mxu0
        %v3705 = vadd.f32 0.0, %v3704
        %v3706 = vpop.f32.mrf.mxu0
        %3707 = vmatprep.mubr.bf16.mxu0 0
        %3708 = vmatmul.mubr.bf16.gmra.mxu0 %v2982
        %v3709 = vpop.f32.mrf.mxu0
        %v3710 = vadd.f32 0.0, %v3709
        %v3711 = vpop.f32.mrf.mxu0
        %v3712 = vpop.f32.mrf.mxu0
        %v3713 = vadd.f32 0.0, %v3712
        %v3714 = vpop.f32.mrf.mxu0
        %3715 = vmatprep.mubr.bf16.mxu0 0
        %3716 = vmatmul.mubr.bf16.gmra.mxu0 %v2983
        %v3717 = vpop.f32.mrf.mxu0
        %v3718 = vadd.f32 0.0, %v3717
        %v3719 = vpop.f32.mrf.mxu0
        %v3720 = vpop.f32.mrf.mxu0
        %v3721 = vadd.f32 0.0, %v3720
        %v3722 = vpop.f32.mrf.mxu0
        %3723 = vmatprep.mubr.bf16.mxu0 0
        %3724 = vmatmul.mubr.bf16.gmra.mxu0 %v2984
        %v3725 = vpop.f32.mrf.mxu0
        %v3726 = vadd.f32 0.0, %v3725
        %v3727 = vpop.f32.mrf.mxu0
        %v3728 = vpop.f32.mrf.mxu0
        %v3729 = vadd.f32 0.0, %v3728
        %v3730 = vpop.f32.mrf.mxu0
        %3731 = vmatprep.mubr.bf16.mxu0 0
        %3732 = vmatmul.mubr.bf16.gmra.mxu0 %v2985
        %v3733 = vpop.f32.mrf.mxu0
        %v3734 = vadd.f32 0.0, %v3733
        %v3735 = vpop.f32.mrf.mxu0
        %v3736 = vpop.f32.mrf.mxu0
        %v3737 = vadd.f32 0.0, %v3736
        %v3738 = vpop.f32.mrf.mxu0
        %3739 = vmatprep.mubr.bf16.mxu0 0
        %3740 = vmatmul.mubr.bf16.gmra.mxu0 %v2986
        %v3741 = vpop.f32.mrf.mxu0
        %v3742 = vadd.f32 0.0, %v3741
        %v3743 = vpop.f32.mrf.mxu0
        %v3744 = vpop.f32.mrf.mxu0
        %v3745 = vadd.f32 0.0, %v3744
        %v3746 = vpop.f32.mrf.mxu0
        %3747 = vmatprep.mubr.bf16.mxu0 0
        %3748 = vmatmul.mubr.bf16.gmra.mxu0 %v2987
        %v3749 = vpop.f32.mrf.mxu0
        %v3750 = vadd.f32 0.0, %v3749
        %v3751 = vpop.f32.mrf.mxu0
        %v3752 = vpop.f32.mrf.mxu0
        %v3753 = vadd.f32 0.0, %v3752
        %v3754 = vpop.f32.mrf.mxu0
        %3755 = vmatprep.mubr.bf16.mxu0 0
        %3756 = vmatmul.mubr.bf16.gmra.mxu0 %v2988
        %v3757 = vpop.f32.mrf.mxu0
        %v3758 = vadd.f32 0.0, %v3757
        %v3759 = vpop.f32.mrf.mxu0
        %v3760 = vpop.f32.mrf.mxu0
        %v3761 = vadd.f32 0.0, %v3760
        %v3762 = vpop.f32.mrf.mxu0
        %3763 = vmatprep.mubr.bf16.mxu0 0
        %3764 = vmatmul.mubr.bf16.gmra.mxu0 %v2989
        %v3765 = vpop.f32.mrf.mxu0
        %v3766 = vadd.f32 0.0, %v3765
        %v3767 = vpop.f32.mrf.mxu0
        %v3768 = vpop.f32.mrf.mxu0
        %v3769 = vadd.f32 0.0, %v3768
        %v3770 = vpop.f32.mrf.mxu0
        %3771 = vmatprep.mubr.bf16.mxu0 0
        %3772 = vmatmul.mubr.bf16.gmra.mxu0 %v2990
        %v3773 = vpop.f32.mrf.mxu0
        %v3774 = vadd.f32 0.0, %v3773
        %v3775 = vpop.f32.mrf.mxu0
        %v3776 = vpop.f32.mrf.mxu0
        %v3777 = vadd.f32 0.0, %v3776
        %v3778 = vpop.f32.mrf.mxu0
        %3779 = vmatprep.mubr.bf16.mxu0 0
        %3780 = vmatmul.mubr.bf16.gmra.mxu0 %v2991
        %v3781 = vpop.f32.mrf.mxu0
        %v3782 = vadd.f32 0.0, %v3781
        %v3783 = vpop.f32.mrf.mxu0
        %v3784 = vpop.f32.mrf.mxu0
        %v3785 = vadd.f32 0.0, %v3784
        %v3786 = vpop.f32.mrf.mxu0
        %3787 = vmatprep.mubr.bf16.mxu0 0
        %3788 = vmatmul.mubr.bf16.gmra.mxu0 %v2992
        %v3789 = vpop.f32.mrf.mxu0
        %v3790 = vadd.f32 0.0, %v3789
        %v3791 = vpop.f32.mrf.mxu0
        %v3792 = vpop.f32.mrf.mxu0
        %v3793 = vadd.f32 0.0, %v3792
        %v3794 = vpop.f32.mrf.mxu0
        %3795 = vdwg.mxu0
        %v3796 = vadd.f32 %v2034, %v3189
        %v3797 = vadd.f32 %v2036, %v3191
        %v3798 = vadd.f32 %v2387, %v3542
        %v3799 = vadd.f32 %v2038, %v3193
        %v3800 = vadd.f32 %v2040, %v3195
        %v3801 = vadd.f32 %v2390, %v3545
        %v3802 = vadd.f32 %v2044, %v3199
        %v3803 = vadd.f32 %v2046, %v3201
        %v3804 = vadd.f32 %v2395, %v3550
        %v3805 = vadd.f32 %v2048, %v3203
        %v3806 = vadd.f32 %v2050, %v3205
        %v3807 = vadd.f32 %v2398, %v3553
        %v3808 = vadd.f32 %v2054, %v3209
        %v3809 = vadd.f32 %v2056, %v3211
        %v3810 = vadd.f32 %v2403, %v3558
        %v3811 = vadd.f32 %v2058, %v3213
        %v3812 = vadd.f32 %v2060, %v3215
        %v3813 = vadd.f32 %v2406, %v3561
        %v3814 = vadd.f32 %v2064, %v3219
        %v3815 = vadd.f32 %v2066, %v3221
        %v3816 = vadd.f32 %v2411, %v3566
        %v3817 = vadd.f32 %v2068, %v3223
        %v3818 = vadd.f32 %v2070, %v3225
        %v3819 = vadd.f32 %v2414, %v3569
        %v3820 = vadd.f32 %v2074, %v3229
        %v3821 = vadd.f32 %v2076, %v3231
        %v3822 = vadd.f32 %v2419, %v3574
        %v3823 = vadd.f32 %v2078, %v3233
        %v3824 = vadd.f32 %v2080, %v3235
        %v3825 = vadd.f32 %v2422, %v3577
        %v3826 = vadd.f32 %v2084, %v3239
        %v3827 = vadd.f32 %v2086, %v3241
        %v3828 = vadd.f32 %v2427, %v3582
        %v3829 = vadd.f32 %v2088, %v3243
        %v3830 = vadd.f32 %v2090, %v3245
        %v3831 = vadd.f32 %v2430, %v3585
        %v3832 = vadd.f32 %v2094, %v3249
        %v3833 = vadd.f32 %v2096, %v3251
        %v3834 = vadd.f32 %v2435, %v3590
        %v3835 = vadd.f32 %v2098, %v3253
        %v3836 = vadd.f32 %v2100, %v3255
        %v3837 = vadd.f32 %v2438, %v3593
        %v3838 = vadd.f32 %v2104, %v3259
        %v3839 = vadd.f32 %v2106, %v3261
        %v3840 = vadd.f32 %v2443, %v3598
        %v3841 = vadd.f32 %v2108, %v3263
        %v3842 = vadd.f32 %v2110, %v3265
        %v3843 = vadd.f32 %v2446, %v3601
        %v3844 = vadd.f32 %v2114, %v3269
        %v3845 = vadd.f32 %v2116, %v3271
        %v3846 = vadd.f32 %v2451, %v3606
        %v3847 = vadd.f32 %v2118, %v3273
        %v3848 = vadd.f32 %v2120, %v3275
        %v3849 = vadd.f32 %v2454, %v3609
        %v3850 = vadd.f32 %v2124, %v3279
        %v3851 = vadd.f32 %v2126, %v3281
        %v3852 = vadd.f32 %v2459, %v3614
        %v3853 = vadd.f32 %v2128, %v3283
        %v3854 = vadd.f32 %v2130, %v3285
        %v3855 = vadd.f32 %v2462, %v3617
        %v3856 = vadd.f32 %v2134, %v3289
        %v3857 = vadd.f32 %v2136, %v3291
        %v3858 = vadd.f32 %v2467, %v3622
        %v3859 = vadd.f32 %v2138, %v3293
        %v3860 = vadd.f32 %v2140, %v3295
        %v3861 = vadd.f32 %v2470, %v3625
        %v3862 = vadd.f32 %v2144, %v3299
        %v3863 = vadd.f32 %v2146, %v3301
        %v3864 = vadd.f32 %v2475, %v3630
        %v3865 = vadd.f32 %v2148, %v3303
        %v3866 = vadd.f32 %v2150, %v3305
        %v3867 = vadd.f32 %v2478, %v3633
        %v3868 = vadd.f32 %v2154, %v3309
        %v3869 = vadd.f32 %v2156, %v3311
        %v3870 = vadd.f32 %v2483, %v3638
        %v3871 = vadd.f32 %v2158, %v3313
        %v3872 = vadd.f32 %v2160, %v3315
        %v3873 = vadd.f32 %v2486, %v3641
        %v3874 = vadd.f32 %v2164, %v3319
        %v3875 = vadd.f32 %v2166, %v3321
        %v3876 = vadd.f32 %v2491, %v3646
        %v3877 = vadd.f32 %v2168, %v3323
        %v3878 = vadd.f32 %v2170, %v3325
        %v3879 = vadd.f32 %v2494, %v3649
        %v3880 = vadd.f32 %v2174, %v3329
        %v3881 = vadd.f32 %v2176, %v3331
        %v3882 = vadd.f32 %v2499, %v3654
        %v3883 = vadd.f32 %v2178, %v3333
        %v3884 = vadd.f32 %v2180, %v3335
        %v3885 = vadd.f32 %v2502, %v3657
        %v3886 = vadd.f32 %v2184, %v3339
        %v3887 = vadd.f32 %v2186, %v3341
        %v3888 = vadd.f32 %v2507, %v3662
        %v3889 = vadd.f32 %v2188, %v3343
        %v3890 = vadd.f32 %v2190, %v3345
        %v3891 = vadd.f32 %v2510, %v3665
        %v3892 = vadd.f32 %v2194, %v3349
        %v3893 = vadd.f32 %v2196, %v3351
        %v3894 = vadd.f32 %v2515, %v3670
        %v3895 = vadd.f32 %v2198, %v3353
        %v3896 = vadd.f32 %v2200, %v3355
        %v3897 = vadd.f32 %v2518, %v3673
        %v3898 = vadd.f32 %v2204, %v3359
        %v3899 = vadd.f32 %v2206, %v3361
        %v3900 = vadd.f32 %v2523, %v3678
        %v3901 = vadd.f32 %v2208, %v3363
        %v3902 = vadd.f32 %v2210, %v3365
        %v3903 = vadd.f32 %v2526, %v3681
        %v3904 = vadd.f32 %v2214, %v3369
        %v3905 = vadd.f32 %v2216, %v3371
        %v3906 = vadd.f32 %v2531, %v3686
        %v3907 = vadd.f32 %v2218, %v3373
        %v3908 = vadd.f32 %v2220, %v3375
        %v3909 = vadd.f32 %v2534, %v3689
        %v3910 = vadd.f32 %v2224, %v3379
        %v3911 = vadd.f32 %v2226, %v3381
        %v3912 = vadd.f32 %v2539, %v3694
        %v3913 = vadd.f32 %v2228, %v3383
        %v3914 = vadd.f32 %v2230, %v3385
        %v3915 = vadd.f32 %v2542, %v3697
        %v3916 = vadd.f32 %v2234, %v3389
        %v3917 = vadd.f32 %v2236, %v3391
        %v3918 = vadd.f32 %v2547, %v3702
        %v3919 = vadd.f32 %v2238, %v3393
        %v3920 = vadd.f32 %v2240, %v3395
        %v3921 = vadd.f32 %v2550, %v3705
        %v3922 = vadd.f32 %v2244, %v3399
        %v3923 = vadd.f32 %v2246, %v3401
        %v3924 = vadd.f32 %v2555, %v3710
        %v3925 = vadd.f32 %v2248, %v3403
        %v3926 = vadd.f32 %v2250, %v3405
        %v3927 = vadd.f32 %v2558, %v3713
        %v3928 = vadd.f32 %v2254, %v3409
        %v3929 = vadd.f32 %v2256, %v3411
        %v3930 = vadd.f32 %v2563, %v3718
        %v3931 = vadd.f32 %v2258, %v3413
        %v3932 = vadd.f32 %v2260, %v3415
        %v3933 = vadd.f32 %v2566, %v3721
        %v3934 = vadd.f32 %v2264, %v3419
        %v3935 = vadd.f32 %v2266, %v3421
        %v3936 = vadd.f32 %v2571, %v3726
        %v3937 = vadd.f32 %v2268, %v3423
        %v3938 = vadd.f32 %v2270, %v3425
        %v3939 = vadd.f32 %v2574, %v3729
        %v3940 = vadd.f32 %v2274, %v3429
        %v3941 = vadd.f32 %v2276, %v3431
        %v3942 = vadd.f32 %v2579, %v3734
        %v3943 = vadd.f32 %v2278, %v3433
        %v3944 = vadd.f32 %v2280, %v3435
        %v3945 = vadd.f32 %v2582, %v3737
        %v3946 = vadd.f32 %v2284, %v3439
        %v3947 = vadd.f32 %v2286, %v3441
        %v3948 = vadd.f32 %v2587, %v3742
        %v3949 = vadd.f32 %v2288, %v3443
        %v3950 = vadd.f32 %v2290, %v3445
        %v3951 = vadd.f32 %v2590, %v3745
        %v3952 = vadd.f32 %v2294, %v3449
        %v3953 = vadd.f32 %v2296, %v3451
        %v3954 = vadd.f32 %v2595, %v3750
        %v3955 = vadd.f32 %v2298, %v3453
        %v3956 = vadd.f32 %v2300, %v3455
        %v3957 = vadd.f32 %v2598, %v3753
        %v3958 = vadd.f32 %v2304, %v3459
        %v3959 = vadd.f32 %v2306, %v3461
        %v3960 = vadd.f32 %v2603, %v3758
        %v3961 = vadd.f32 %v2308, %v3463
        %v3962 = vadd.f32 %v2310, %v3465
        %v3963 = vadd.f32 %v2606, %v3761
        %v3964 = vadd.f32 %v2314, %v3469
        %v3965 = vadd.f32 %v2316, %v3471
        %v3966 = vadd.f32 %v2611, %v3766
        %v3967 = vadd.f32 %v2318, %v3473
        %v3968 = vadd.f32 %v2320, %v3475
        %v3969 = vadd.f32 %v2614, %v3769
        %v3970 = vadd.f32 %v2324, %v3479
        %v3971 = vadd.f32 %v2326, %v3481
        %v3972 = vadd.f32 %v2619, %v3774
        %v3973 = vadd.f32 %v2328, %v3483
        %v3974 = vadd.f32 %v2330, %v3485
        %v3975 = vadd.f32 %v2622, %v3777
        %v3976 = vadd.f32 %v2334, %v3489
        %v3977 = vadd.f32 %v2336, %v3491
        %v3978 = vadd.f32 %v2627, %v3782
        %v3979 = vadd.f32 %v2338, %v3493
        %v3980 = vadd.f32 %v2340, %v3495
        %v3981 = vadd.f32 %v2630, %v3785
        %v3982 = vadd.f32 %v2344, %v3499
        %v3983 = vadd.f32 %v2346, %v3501
        %v3984 = vadd.f32 %v2635, %v3790
        %v3985 = vadd.f32 %v2348, %v3503
        %v3986 = vadd.f32 %v2350, %v3505
        %v3987 = vadd.f32 %v2638, %v3793
        %3988 = vset.pattern.permute.xlu0 3
        %3989 = vperm.xlu0 %3988, %v268
        %v3990 = vpop.permute.xlu0 %3989
        %3991 = vset.pattern.permute.xlu0 3
        %3992 = vperm.xlu0 %3991, %v269
        %v3993 = vpop.permute.xlu0 %3992
        %3994 = vset.pattern.permute.xlu0 3
        %3995 = vperm.xlu0 %3994, %v270
        %v3996 = vpop.permute.xlu0 %3995
        %3997 = vset.pattern.permute.xlu0 3
        %3998 = vperm.xlu0 %3997, %v271
        %v3999 = vpop.permute.xlu0 %3998
        %4000 = vset.pattern.permute.xlu0 3
        %4001 = vperm.xlu0 %4000, %v272
        %v4002 = vpop.permute.xlu0 %4001
        %4003 = vset.pattern.permute.xlu0 3
        %4004 = vperm.xlu0 %4003, %v273
        %v4005 = vpop.permute.xlu0 %4004
        %4006 = vset.pattern.permute.xlu0 3
        %4007 = vperm.xlu0 %4006, %v274
        %v4008 = vpop.permute.xlu0 %4007
        %4009 = vset.pattern.permute.xlu0 3
        %4010 = vperm.xlu0 %4009, %v275
        %v4011 = vpop.permute.xlu0 %4010
        %4012 = vset.pattern.permute.xlu0 3
        %4013 = vperm.xlu0 %4012, %v276
        %v4014 = vpop.permute.xlu0 %4013
        %4015 = vset.pattern.permute.xlu0 3
        %4016 = vperm.xlu0 %4015, %v277
        %v4017 = vpop.permute.xlu0 %4016
        %4018 = vset.pattern.permute.xlu0 3
        %4019 = vperm.xlu0 %4018, %v278
        %v4020 = vpop.permute.xlu0 %4019
        %4021 = vset.pattern.permute.xlu0 3
        %4022 = vperm.xlu0 %4021, %v279
        %v4023 = vpop.permute.xlu0 %4022
        %4024 = vset.pattern.permute.xlu0 3
        %4025 = vperm.xlu0 %4024, %v280
        %v4026 = vpop.permute.xlu0 %4025
        %4027 = vset.pattern.permute.xlu0 3
        %4028 = vperm.xlu0 %4027, %v281
        %v4029 = vpop.permute.xlu0 %4028
        %4030 = vset.pattern.permute.xlu0 3
        %4031 = vperm.xlu0 %4030, %v282
        %v4032 = vpop.permute.xlu0 %4031
        %4033 = vset.pattern.permute.xlu0 3
        %4034 = vperm.xlu0 %4033, %v283
        %v4035 = vpop.permute.xlu0 %4034
        %4036 = vset.pattern.permute.xlu0 3
        %4037 = vperm.xlu0 %4036, %v284
        %v4038 = vpop.permute.xlu0 %4037
        %4039 = vset.pattern.permute.xlu0 3
        %4040 = vperm.xlu0 %4039, %v285
        %v4041 = vpop.permute.xlu0 %4040
        %4042 = vset.pattern.permute.xlu0 3
        %4043 = vperm.xlu0 %4042, %v286
        %v4044 = vpop.permute.xlu0 %4043
        %4045 = vset.pattern.permute.xlu0 3
        %4046 = vperm.xlu0 %4045, %v287
        %v4047 = vpop.permute.xlu0 %4046
        %4048 = vset.pattern.permute.xlu0 3
        %4049 = vperm.xlu0 %4048, %v288
        %v4050 = vpop.permute.xlu0 %4049
        %4051 = vset.pattern.permute.xlu0 3
        %4052 = vperm.xlu0 %4051, %v289
        %v4053 = vpop.permute.xlu0 %4052
        %4054 = vset.pattern.permute.xlu0 3
        %4055 = vperm.xlu0 %4054, %v290
        %v4056 = vpop.permute.xlu0 %4055
        %4057 = vset.pattern.permute.xlu0 3
        %4058 = vperm.xlu0 %4057, %v291
        %v4059 = vpop.permute.xlu0 %4058
        %4060 = vset.pattern.permute.xlu0 3
        %4061 = vperm.xlu0 %4060, %v292
        %v4062 = vpop.permute.xlu0 %4061
        %4063 = vset.pattern.permute.xlu0 3
        %4064 = vperm.xlu0 %4063, %v293
        %v4065 = vpop.permute.xlu0 %4064
        %4066 = vset.pattern.permute.xlu0 3
        %4067 = vperm.xlu0 %4066, %v294
        %v4068 = vpop.permute.xlu0 %4067
        %4069 = vset.pattern.permute.xlu0 3
        %4070 = vperm.xlu0 %4069, %v295
        %v4071 = vpop.permute.xlu0 %4070
        %4072 = vset.pattern.permute.xlu0 3
        %4073 = vperm.xlu0 %4072, %v296
        %v4074 = vpop.permute.xlu0 %4073
        %4075 = vset.pattern.permute.xlu0 3
        %4076 = vperm.xlu0 %4075, %v297
        %v4077 = vpop.permute.xlu0 %4076
        %4078 = vset.pattern.permute.xlu0 3
        %4079 = vperm.xlu0 %4078, %v298
        %v4080 = vpop.permute.xlu0 %4079
        %4081 = vset.pattern.permute.xlu0 3
        %4082 = vperm.xlu0 %4081, %v299
        %v4083 = vpop.permute.xlu0 %4082
        %4084 = vset.pattern.permute.xlu0 3
        %4085 = vperm.xlu0 %4084, %v300
        %v4086 = vpop.permute.xlu0 %4085
        %4087 = vset.pattern.permute.xlu0 3
        %4088 = vperm.xlu0 %4087, %v301
        %v4089 = vpop.permute.xlu0 %4088
        %4090 = vset.pattern.permute.xlu0 3
        %4091 = vperm.xlu0 %4090, %v302
        %v4092 = vpop.permute.xlu0 %4091
        %4093 = vset.pattern.permute.xlu0 3
        %4094 = vperm.xlu0 %4093, %v303
        %v4095 = vpop.permute.xlu0 %4094
        %4096 = vset.pattern.permute.xlu0 3
        %4097 = vperm.xlu0 %4096, %v304
        %v4098 = vpop.permute.xlu0 %4097
        %4099 = vset.pattern.permute.xlu0 3
        %4100 = vperm.xlu0 %4099, %v305
        %v4101 = vpop.permute.xlu0 %4100
        %4102 = vset.pattern.permute.xlu0 3
        %4103 = vperm.xlu0 %4102, %v306
        %v4104 = vpop.permute.xlu0 %4103
        %4105 = vset.pattern.permute.xlu0 3
        %4106 = vperm.xlu0 %4105, %v307
        %v4107 = vpop.permute.xlu0 %4106
        %4108 = vset.pattern.permute.xlu0 3
        %4109 = vperm.xlu0 %4108, %v308
        %v4110 = vpop.permute.xlu0 %4109
        %4111 = vset.pattern.permute.xlu0 3
        %4112 = vperm.xlu0 %4111, %v309
        %v4113 = vpop.permute.xlu0 %4112
        %4114 = vset.pattern.permute.xlu0 3
        %4115 = vperm.xlu0 %4114, %v310
        %v4116 = vpop.permute.xlu0 %4115
        %4117 = vset.pattern.permute.xlu0 3
        %4118 = vperm.xlu0 %4117, %v311
        %v4119 = vpop.permute.xlu0 %4118
        %4120 = vset.pattern.permute.xlu0 3
        %4121 = vperm.xlu0 %4120, %v312
        %v4122 = vpop.permute.xlu0 %4121
        %4123 = vset.pattern.permute.xlu0 3
        %4124 = vperm.xlu0 %4123, %v313
        %v4125 = vpop.permute.xlu0 %4124
        %4126 = vset.pattern.permute.xlu0 3
        %4127 = vperm.xlu0 %4126, %v314
        %v4128 = vpop.permute.xlu0 %4127
        %4129 = vset.pattern.permute.xlu0 3
        %4130 = vperm.xlu0 %4129, %v315
        %v4131 = vpop.permute.xlu0 %4130
        %4132 = vset.pattern.permute.xlu0 3
        %4133 = vperm.xlu0 %4132, %v316
        %v4134 = vpop.permute.xlu0 %4133
        %4135 = vset.pattern.permute.xlu0 3
        %4136 = vperm.xlu0 %4135, %v317
        %v4137 = vpop.permute.xlu0 %4136
        %4138 = vset.pattern.permute.xlu0 3
        %4139 = vperm.xlu0 %4138, %v318
        %v4140 = vpop.permute.xlu0 %4139
        %4141 = vset.pattern.permute.xlu0 3
        %4142 = vperm.xlu0 %4141, %v319
        %v4143 = vpop.permute.xlu0 %4142
        %4144 = vset.pattern.permute.xlu0 3
        %4145 = vperm.xlu0 %4144, %v320
        %v4146 = vpop.permute.xlu0 %4145
        %4147 = vset.pattern.permute.xlu0 3
        %4148 = vperm.xlu0 %4147, %v321
        %v4149 = vpop.permute.xlu0 %4148
        %4150 = vset.pattern.permute.xlu0 3
        %4151 = vperm.xlu0 %4150, %v322
        %v4152 = vpop.permute.xlu0 %4151
        %4153 = vset.pattern.permute.xlu0 3
        %4154 = vperm.xlu0 %4153, %v323
        %v4155 = vpop.permute.xlu0 %4154
        %4156 = vset.pattern.permute.xlu0 3
        %4157 = vperm.xlu0 %4156, %v324
        %v4158 = vpop.permute.xlu0 %4157
        %4159 = vset.pattern.permute.xlu0 3
        %4160 = vperm.xlu0 %4159, %v325
        %v4161 = vpop.permute.xlu0 %4160
        %4162 = vset.pattern.permute.xlu0 3
        %4163 = vperm.xlu0 %4162, %v326
        %v4164 = vpop.permute.xlu0 %4163
        %4165 = vset.pattern.permute.xlu0 3
        %4166 = vperm.xlu0 %4165, %v327
        %v4167 = vpop.permute.xlu0 %4166
        %4168 = vset.pattern.permute.xlu0 3
        %4169 = vperm.xlu0 %4168, %v328
        %v4170 = vpop.permute.xlu0 %4169
        %4171 = vset.pattern.permute.xlu0 3
        %4172 = vperm.xlu0 %4171, %v329
        %v4173 = vpop.permute.xlu0 %4172
        %4174 = vset.pattern.permute.xlu0 3
        %4175 = vperm.xlu0 %4174, %v330
        %v4176 = vpop.permute.xlu0 %4175
        %4177 = vset.pattern.permute.xlu0 3
        %4178 = vperm.xlu0 %4177, %v331
        %v4179 = vpop.permute.xlu0 %4178
        %vm4180 = vcmp.eq.s32.totalorder %v3990, %v267
        %vm4181 = vcmp.eq.s32.totalorder %v3993, %v267
        %vm4182 = vcmp.eq.s32.totalorder %v3996, %v267
        %vm4183 = vcmp.eq.s32.totalorder %v3999, %v267
        %vm4184 = vcmp.eq.s32.totalorder %v4002, %v267
        %vm4185 = vcmp.eq.s32.totalorder %v4005, %v267
        %vm4186 = vcmp.eq.s32.totalorder %v4008, %v267
        %vm4187 = vcmp.eq.s32.totalorder %v4011, %v267
        %vm4188 = vcmp.eq.s32.totalorder %v4014, %v267
        %vm4189 = vcmp.eq.s32.totalorder %v4017, %v267
        %vm4190 = vcmp.eq.s32.totalorder %v4020, %v267
        %vm4191 = vcmp.eq.s32.totalorder %v4023, %v267
        %vm4192 = vcmp.eq.s32.totalorder %v4026, %v267
        %vm4193 = vcmp.eq.s32.totalorder %v4029, %v267
        %vm4194 = vcmp.eq.s32.totalorder %v4032, %v267
        %vm4195 = vcmp.eq.s32.totalorder %v4035, %v267
        %vm4196 = vcmp.eq.s32.totalorder %v4038, %v267
        %vm4197 = vcmp.eq.s32.totalorder %v4041, %v267
        %vm4198 = vcmp.eq.s32.totalorder %v4044, %v267
        %vm4199 = vcmp.eq.s32.totalorder %v4047, %v267
        %vm4200 = vcmp.eq.s32.totalorder %v4050, %v267
        %vm4201 = vcmp.eq.s32.totalorder %v4053, %v267
        %vm4202 = vcmp.eq.s32.totalorder %v4056, %v267
        %vm4203 = vcmp.eq.s32.totalorder %v4059, %v267
        %vm4204 = vcmp.eq.s32.totalorder %v4062, %v267
        %vm4205 = vcmp.eq.s32.totalorder %v4065, %v267
        %vm4206 = vcmp.eq.s32.totalorder %v4068, %v267
        %vm4207 = vcmp.eq.s32.totalorder %v4071, %v267
        %vm4208 = vcmp.eq.s32.totalorder %v4074, %v267
        %vm4209 = vcmp.eq.s32.totalorder %v4077, %v267
        %vm4210 = vcmp.eq.s32.totalorder %v4080, %v267
        %vm4211 = vcmp.eq.s32.totalorder %v4083, %v267
        %vm4212 = vcmp.eq.s32.totalorder %v4086, %v267
        %vm4213 = vcmp.eq.s32.totalorder %v4089, %v267
        %vm4214 = vcmp.eq.s32.totalorder %v4092, %v267
        %vm4215 = vcmp.eq.s32.totalorder %v4095, %v267
        %vm4216 = vcmp.eq.s32.totalorder %v4098, %v267
        %vm4217 = vcmp.eq.s32.totalorder %v4101, %v267
        %vm4218 = vcmp.eq.s32.totalorder %v4104, %v267
        %vm4219 = vcmp.eq.s32.totalorder %v4107, %v267
        %vm4220 = vcmp.eq.s32.totalorder %v4110, %v267
        %vm4221 = vcmp.eq.s32.totalorder %v4113, %v267
        %vm4222 = vcmp.eq.s32.totalorder %v4116, %v267
        %vm4223 = vcmp.eq.s32.totalorder %v4119, %v267
        %vm4224 = vcmp.eq.s32.totalorder %v4122, %v267
        %vm4225 = vcmp.eq.s32.totalorder %v4125, %v267
        %vm4226 = vcmp.eq.s32.totalorder %v4128, %v267
        %vm4227 = vcmp.eq.s32.totalorder %v4131, %v267
        %vm4228 = vcmp.eq.s32.totalorder %v4134, %v267
        %vm4229 = vcmp.eq.s32.totalorder %v4137, %v267
        %vm4230 = vcmp.eq.s32.totalorder %v4140, %v267
        %vm4231 = vcmp.eq.s32.totalorder %v4143, %v267
        %vm4232 = vcmp.eq.s32.totalorder %v4146, %v267
        %vm4233 = vcmp.eq.s32.totalorder %v4149, %v267
        %vm4234 = vcmp.eq.s32.totalorder %v4152, %v267
        %vm4235 = vcmp.eq.s32.totalorder %v4155, %v267
        %vm4236 = vcmp.eq.s32.totalorder %v4158, %v267
        %vm4237 = vcmp.eq.s32.totalorder %v4161, %v267
        %vm4238 = vcmp.eq.s32.totalorder %v4164, %v267
        %vm4239 = vcmp.eq.s32.totalorder %v4167, %v267
        %vm4240 = vcmp.eq.s32.totalorder %v4170, %v267
        %vm4241 = vcmp.eq.s32.totalorder %v4173, %v267
        %vm4242 = vcmp.eq.s32.totalorder %v4176, %v267
        %vm4243 = vcmp.eq.s32.totalorder %v4179, %v267
        %v4244 = vsel %vm4180, 1.0, 0.0
        %v4245 = vsel %vm4181, 1.0, 0.0
        %v4246 = vsel %vm4182, 1.0, 0.0
        %v4247 = vsel %vm4183, 1.0, 0.0
        %v4248 = vsel %vm4184, 1.0, 0.0
        %v4249 = vsel %vm4185, 1.0, 0.0
        %v4250 = vsel %vm4186, 1.0, 0.0
        %v4251 = vsel %vm4187, 1.0, 0.0
        %v4252 = vsel %vm4188, 1.0, 0.0
        %v4253 = vsel %vm4189, 1.0, 0.0
        %v4254 = vsel %vm4190, 1.0, 0.0
        %v4255 = vsel %vm4191, 1.0, 0.0
        %v4256 = vsel %vm4192, 1.0, 0.0
        %v4257 = vsel %vm4193, 1.0, 0.0
        %v4258 = vsel %vm4194, 1.0, 0.0
        %v4259 = vsel %vm4195, 1.0, 0.0
        %v4260 = vsel %vm4196, 1.0, 0.0
        %v4261 = vsel %vm4197, 1.0, 0.0
        %v4262 = vsel %vm4198, 1.0, 0.0
        %v4263 = vsel %vm4199, 1.0, 0.0
        %v4264 = vsel %vm4200, 1.0, 0.0
        %v4265 = vsel %vm4201, 1.0, 0.0
        %v4266 = vsel %vm4202, 1.0, 0.0
        %v4267 = vsel %vm4203, 1.0, 0.0
        %v4268 = vsel %vm4204, 1.0, 0.0
        %v4269 = vsel %vm4205, 1.0, 0.0
        %v4270 = vsel %vm4206, 1.0, 0.0
        %v4271 = vsel %vm4207, 1.0, 0.0
        %v4272 = vsel %vm4208, 1.0, 0.0
        %v4273 = vsel %vm4209, 1.0, 0.0
        %v4274 = vsel %vm4210, 1.0, 0.0
        %v4275 = vsel %vm4211, 1.0, 0.0
        %v4276 = vsel %vm4212, 1.0, 0.0
        %v4277 = vsel %vm4213, 1.0, 0.0
        %v4278 = vsel %vm4214, 1.0, 0.0
        %v4279 = vsel %vm4215, 1.0, 0.0
        %v4280 = vsel %vm4216, 1.0, 0.0
        %v4281 = vsel %vm4217, 1.0, 0.0
        %v4282 = vsel %vm4218, 1.0, 0.0
        %v4283 = vsel %vm4219, 1.0, 0.0
        %v4284 = vsel %vm4220, 1.0, 0.0
        %v4285 = vsel %vm4221, 1.0, 0.0
        %v4286 = vsel %vm4222, 1.0, 0.0
        %v4287 = vsel %vm4223, 1.0, 0.0
        %v4288 = vsel %vm4224, 1.0, 0.0
        %v4289 = vsel %vm4225, 1.0, 0.0
        %v4290 = vsel %vm4226, 1.0, 0.0
        %v4291 = vsel %vm4227, 1.0, 0.0
        %v4292 = vsel %vm4228, 1.0, 0.0
        %v4293 = vsel %vm4229, 1.0, 0.0
        %v4294 = vsel %vm4230, 1.0, 0.0
        %v4295 = vsel %vm4231, 1.0, 0.0
        %v4296 = vsel %vm4232, 1.0, 0.0
        %v4297 = vsel %vm4233, 1.0, 0.0
        %v4298 = vsel %vm4234, 1.0, 0.0
        %v4299 = vsel %vm4235, 1.0, 0.0
        %v4300 = vsel %vm4236, 1.0, 0.0
        %v4301 = vsel %vm4237, 1.0, 0.0
        %v4302 = vsel %vm4238, 1.0, 0.0
        %v4303 = vsel %vm4239, 1.0, 0.0
        %v4304 = vsel %vm4240, 1.0, 0.0
        %v4305 = vsel %vm4241, 1.0, 0.0
        %v4306 = vsel %vm4242, 1.0, 0.0
        %v4307 = vsel %vm4243, 1.0, 0.0
        %v4308 = vpack.c.bf16 %v4245, %v4244
        %v4309 = vpack.c.bf16 %v4247, %v4246
        %v4310 = vpack.c.bf16 %v4249, %v4248
        %v4311 = vpack.c.bf16 %v4251, %v4250
        %v4312 = vpack.c.bf16 %v4253, %v4252
        %v4313 = vpack.c.bf16 %v4255, %v4254
        %v4314 = vpack.c.bf16 %v4257, %v4256
        %v4315 = vpack.c.bf16 %v4259, %v4258
        %v4316 = vpack.c.bf16 %v4261, %v4260
        %v4317 = vpack.c.bf16 %v4263, %v4262
        %v4318 = vpack.c.bf16 %v4265, %v4264
        %v4319 = vpack.c.bf16 %v4267, %v4266
        %v4320 = vpack.c.bf16 %v4269, %v4268
        %v4321 = vpack.c.bf16 %v4271, %v4270
        %v4322 = vpack.c.bf16 %v4273, %v4272
        %v4323 = vpack.c.bf16 %v4275, %v4274
        %v4324 = vpack.c.bf16 %v4277, %v4276
        %v4325 = vpack.c.bf16 %v4279, %v4278
        %v4326 = vpack.c.bf16 %v4281, %v4280
        %v4327 = vpack.c.bf16 %v4283, %v4282
        %v4328 = vpack.c.bf16 %v4285, %v4284
        %v4329 = vpack.c.bf16 %v4287, %v4286
        %v4330 = vpack.c.bf16 %v4289, %v4288
        %v4331 = vpack.c.bf16 %v4291, %v4290
        %v4332 = vpack.c.bf16 %v4293, %v4292
        %v4333 = vpack.c.bf16 %v4295, %v4294
        %v4334 = vpack.c.bf16 %v4297, %v4296
        %v4335 = vpack.c.bf16 %v4299, %v4298
        %v4336 = vpack.c.bf16 %v4301, %v4300
        %v4337 = vpack.c.bf16 %v4303, %v4302
        %v4338 = vpack.c.bf16 %v4305, %v4304
        %v4339 = vpack.c.bf16 %v4307, %v4306
        %s4340 = scalar_lea.vmem %s1, 576
        %v4341 = vld [vmem:[%s4340] sm:$0xff]
        %v4342 = vld [vmem:[%s4340 + $0x8] sm:$0xf]
        %v4343 = vld [vmem:[%s4340 + $0xc] sm:$0xff]
        %v4344 = vld [vmem:[%s4340 + $0x14] sm:$0xf]
        %v4345 = vld [vmem:[%s4340 + $0x18] sm:$0xff]
        %v4346 = vld [vmem:[%s4340 + $0x20] sm:$0xf]
        %v4347 = vld [vmem:[%s4340 + $0x24] sm:$0xff]
        %v4348 = vld [vmem:[%s4340 + $0x2c] sm:$0xf]
        %v4349 = vld [vmem:[%s4340 + $0x30] sm:$0xff]
        %v4350 = vld [vmem:[%s4340 + $0x38] sm:$0xf]
        %v4351 = vld [vmem:[%s4340 + $0x3c] sm:$0xff]
        %v4352 = vld [vmem:[%s4340 + $0x44] sm:$0xf]
        %v4353 = vld [vmem:[%s4340 + $0x48] sm:$0xff]
        %v4354 = vld [vmem:[%s4340 + $0x50] sm:$0xf]
        %v4355 = vld [vmem:[%s4340 + $0x54] sm:$0xff]
        %v4356 = vld [vmem:[%s4340 + $0x5c] sm:$0xf]
        %v4357 = vld [vmem:[%s4340 + $0x60] sm:$0xff]
        %v4358 = vld [vmem:[%s4340 + $0x68] sm:$0xf]
        %v4359 = vld [vmem:[%s4340 + $0x6c] sm:$0xff]
        %v4360 = vld [vmem:[%s4340 + $0x74] sm:$0xf]
        %v4361 = vld [vmem:[%s4340 + $0x78] sm:$0xff]
        %v4362 = vld [vmem:[%s4340 + $0x80] sm:$0xf]
        %v4363 = vld [vmem:[%s4340 + $0x84] sm:$0xff]
        %v4364 = vld [vmem:[%s4340 + $0x8c] sm:$0xf]
        %v4365 = vld [vmem:[%s4340 + $0x90] sm:$0xff]
        %v4366 = vld [vmem:[%s4340 + $0x98] sm:$0xf]
        %v4367 = vld [vmem:[%s4340 + $0x9c] sm:$0xff]
        %v4368 = vld [vmem:[%s4340 + $0xa4] sm:$0xf]
        %v4369 = vld [vmem:[%s4340 + $0xa8] sm:$0xff]
        %v4370 = vld [vmem:[%s4340 + $0xb0] sm:$0xf]
        %v4371 = vld [vmem:[%s4340 + $0xb4] sm:$0xff]
        %v4372 = vld [vmem:[%s4340 + $0xbc] sm:$0xf]
        %v4405 = vunpack.c.l.b16 %v4341
        %v4406 = vunpack.c.h.b16 %v4341
        %v4407 = vunpack.c.l.b16 %v4342
        %v4408 = vunpack.c.l.b16 %v4343
        %v4409 = vunpack.c.h.b16 %v4343
        %v4410 = vunpack.c.l.b16 %v4344
        %v4411 = vunpack.c.l.b16 %v4345
        %v4412 = vunpack.c.h.b16 %v4345
        %v4413 = vunpack.c.l.b16 %v4346
        %v4414 = vunpack.c.l.b16 %v4347
        %v4415 = vunpack.c.h.b16 %v4347
        %v4416 = vunpack.c.l.b16 %v4348
        %v4417 = vunpack.c.l.b16 %v4349
        %v4418 = vunpack.c.h.b16 %v4349
        %v4419 = vunpack.c.l.b16 %v4350
        %v4420 = vunpack.c.l.b16 %v4351
        %v4421 = vunpack.c.h.b16 %v4351
        %v4422 = vunpack.c.l.b16 %v4352
        %v4423 = vunpack.c.l.b16 %v4353
        %v4424 = vunpack.c.h.b16 %v4353
        %v4425 = vunpack.c.l.b16 %v4354
        %v4426 = vunpack.c.l.b16 %v4355
        %v4427 = vunpack.c.h.b16 %v4355
        %v4428 = vunpack.c.l.b16 %v4356
        %v4429 = vunpack.c.l.b16 %v4357
        %v4430 = vunpack.c.h.b16 %v4357
        %v4431 = vunpack.c.l.b16 %v4358
        %v4432 = vunpack.c.l.b16 %v4359
        %v4433 = vunpack.c.h.b16 %v4359
        %v4434 = vunpack.c.l.b16 %v4360
        %v4435 = vunpack.c.l.b16 %v4361
        %v4436 = vunpack.c.h.b16 %v4361
        %v4437 = vunpack.c.l.b16 %v4362
        %v4438 = vunpack.c.l.b16 %v4363
        %v4439 = vunpack.c.h.b16 %v4363
        %v4440 = vunpack.c.l.b16 %v4364
        %v4441 = vunpack.c.l.b16 %v4365
        %v4442 = vunpack.c.h.b16 %v4365
        %v4443 = vunpack.c.l.b16 %v4366
        %v4444 = vunpack.c.l.b16 %v4367
        %v4445 = vunpack.c.h.b16 %v4367
        %v4446 = vunpack.c.l.b16 %v4368
        %v4447 = vunpack.c.l.b16 %v4369
        %v4448 = vunpack.c.h.b16 %v4369
        %v4449 = vunpack.c.l.b16 %v4370
        %v4450 = vunpack.c.l.b16 %v4371
        %v4451 = vunpack.c.h.b16 %v4371
        %v4452 = vunpack.c.l.b16 %v4372
        %v4453 = vpack.c.b16 %v4408, %v4405
        %v4454 = vpack.c.b16 %v4409, %v4406
        %v4455 = vpack.c.b16 %v4410, %v4407
        %v4456 = vpack.c.b16 %v4414, %v4411
        %v4457 = vpack.c.b16 %v4415, %v4412
        %v4458 = vpack.c.b16 %v4416, %v4413
        %v4459 = vpack.c.b16 %v4420, %v4417
        %v4460 = vpack.c.b16 %v4421, %v4418
        %v4461 = vpack.c.b16 %v4422, %v4419
        %v4462 = vpack.c.b16 %v4426, %v4423
        %v4463 = vpack.c.b16 %v4427, %v4424
        %v4464 = vpack.c.b16 %v4428, %v4425
        %v4465 = vpack.c.b16 %v4432, %v4429
        %v4466 = vpack.c.b16 %v4433, %v4430
        %v4467 = vpack.c.b16 %v4434, %v4431
        %v4468 = vpack.c.b16 %v4438, %v4435
        %v4469 = vpack.c.b16 %v4439, %v4436
        %v4470 = vpack.c.b16 %v4440, %v4437
        %v4471 = vpack.c.b16 %v4444, %v4441
        %v4472 = vpack.c.b16 %v4445, %v4442
        %v4473 = vpack.c.b16 %v4446, %v4443
        %v4474 = vpack.c.b16 %v4450, %v4447
        %v4475 = vpack.c.b16 %v4451, %v4448
        %v4476 = vpack.c.b16 %v4452, %v4449
        %4501 = vmatprep.subr.bf16.mxu0 %v4475
        %4502 = vmatpush1.bf16.msra.mxu0 %v4474
        %4503 = vmatprep.subr.bf16.mxu0 %v4472
        %4504 = vmatpush1.bf16.msra.mxu0 %v4471
        %4505 = vmatprep.subr.bf16.mxu0 %v4469
        %4506 = vmatpush1.bf16.msra.mxu0 %v4468
        %4507 = vmatprep.subr.bf16.mxu0 %v4466
        %4508 = vmatpush1.bf16.msra.mxu0 %v4465
        %4509 = vmatprep.subr.bf16.mxu0 %v4463
        %4510 = vmatpush1.bf16.msra.mxu0 %v4462
        %4511 = vmatprep.subr.bf16.mxu0 %v4460
        %4512 = vmatpush1.bf16.msra.mxu0 %v4459
        %4513 = vmatprep.subr.bf16.mxu0 %v4457
        %4514 = vmatpush1.bf16.msra.mxu0 %v4456
        %4515 = vmatprep.subr.bf16.mxu0 %v4454
        %4516 = vmatpush1.bf16.msra.mxu0 %v4453
        %4517 = vmatprep.subr.bf16.mxu0 0
        %4518 = vmatpush2.bf16.msra.mxu0 0
        %4519 = vmatprep.subr.bf16.mxu0 0
        %4520 = vmatpush2.bf16.msra.mxu0 0
        %4521 = vmatprep.subr.bf16.mxu0 0
        %4522 = vmatpush2.bf16.msra.mxu0 0
        %4523 = vmatprep.subr.bf16.mxu0 0
        %4524 = vmatpush2.bf16.msra.mxu0 0
        %4525 = vmatprep.subr.bf16.mxu0 0
        %4526 = vmatpush2.bf16.msra.mxu0 0
        %4527 = vmatprep.subr.bf16.mxu0 0
        %4528 = vmatpush2.bf16.msra.mxu0 0
        %4529 = vmatprep.subr.bf16.mxu0 0
        %4530 = vmatpush2.bf16.msra.mxu0 0
        %4531 = vmatprep.subr.bf16.mxu0 0
        %4532 = vmatpush2.bf16.msra.mxu0 0
        %4533 = vmatprep.mubr.bf16.mxu0 0
        %4534 = vmatmul.mubr.bf16.gmra.mxu0 %v4308
        %v4535 = vpop.f32.mrf.mxu0
        %v4536 = vadd.f32 0.0, %v4535
        %v4537 = vpop.f32.mrf.mxu0
        %v4538 = vadd.f32 0.0, %v4537
        %v4539 = vpop.f32.mrf.mxu0
        %v4540 = vadd.f32 0.0, %v4539
        %v4541 = vpop.f32.mrf.mxu0
        %v4542 = vadd.f32 0.0, %v4541
        %4543 = vmatprep.mubr.bf16.mxu0 0
        %4544 = vmatmul.mubr.bf16.gmra.mxu0 %v4309
        %v4545 = vpop.f32.mrf.mxu0
        %v4546 = vadd.f32 0.0, %v4545
        %v4547 = vpop.f32.mrf.mxu0
        %v4548 = vadd.f32 0.0, %v4547
        %v4549 = vpop.f32.mrf.mxu0
        %v4550 = vadd.f32 0.0, %v4549
        %v4551 = vpop.f32.mrf.mxu0
        %v4552 = vadd.f32 0.0, %v4551
        %4553 = vmatprep.mubr.bf16.mxu0 0
        %4554 = vmatmul.mubr.bf16.gmra.mxu0 %v4310
        %v4555 = vpop.f32.mrf.mxu0
        %v4556 = vadd.f32 0.0, %v4555
        %v4557 = vpop.f32.mrf.mxu0
        %v4558 = vadd.f32 0.0, %v4557
        %v4559 = vpop.f32.mrf.mxu0
        %v4560 = vadd.f32 0.0, %v4559
        %v4561 = vpop.f32.mrf.mxu0
        %v4562 = vadd.f32 0.0, %v4561
        %4563 = vmatprep.mubr.bf16.mxu0 0
        %4564 = vmatmul.mubr.bf16.gmra.mxu0 %v4311
        %v4565 = vpop.f32.mrf.mxu0
        %v4566 = vadd.f32 0.0, %v4565
        %v4567 = vpop.f32.mrf.mxu0
        %v4568 = vadd.f32 0.0, %v4567
        %v4569 = vpop.f32.mrf.mxu0
        %v4570 = vadd.f32 0.0, %v4569
        %v4571 = vpop.f32.mrf.mxu0
        %v4572 = vadd.f32 0.0, %v4571
        %4573 = vmatprep.mubr.bf16.mxu0 0
        %4574 = vmatmul.mubr.bf16.gmra.mxu0 %v4312
        %v4575 = vpop.f32.mrf.mxu0
        %v4576 = vadd.f32 0.0, %v4575
        %v4577 = vpop.f32.mrf.mxu0
        %v4578 = vadd.f32 0.0, %v4577
        %v4579 = vpop.f32.mrf.mxu0
        %v4580 = vadd.f32 0.0, %v4579
        %v4581 = vpop.f32.mrf.mxu0
        %v4582 = vadd.f32 0.0, %v4581
        %4583 = vmatprep.mubr.bf16.mxu0 0
        %4584 = vmatmul.mubr.bf16.gmra.mxu0 %v4313
        %v4585 = vpop.f32.mrf.mxu0
        %v4586 = vadd.f32 0.0, %v4585
        %v4587 = vpop.f32.mrf.mxu0
        %v4588 = vadd.f32 0.0, %v4587
        %v4589 = vpop.f32.mrf.mxu0
        %v4590 = vadd.f32 0.0, %v4589
        %v4591 = vpop.f32.mrf.mxu0
        %v4592 = vadd.f32 0.0, %v4591
        %4593 = vmatprep.mubr.bf16.mxu0 0
        %4594 = vmatmul.mubr.bf16.gmra.mxu0 %v4314
        %v4595 = vpop.f32.mrf.mxu0
        %v4596 = vadd.f32 0.0, %v4595
        %v4597 = vpop.f32.mrf.mxu0
        %v4598 = vadd.f32 0.0, %v4597
        %v4599 = vpop.f32.mrf.mxu0
        %v4600 = vadd.f32 0.0, %v4599
        %v4601 = vpop.f32.mrf.mxu0
        %v4602 = vadd.f32 0.0, %v4601
        %4603 = vmatprep.mubr.bf16.mxu0 0
        %4604 = vmatmul.mubr.bf16.gmra.mxu0 %v4315
        %v4605 = vpop.f32.mrf.mxu0
        %v4606 = vadd.f32 0.0, %v4605
        %v4607 = vpop.f32.mrf.mxu0
        %v4608 = vadd.f32 0.0, %v4607
        %v4609 = vpop.f32.mrf.mxu0
        %v4610 = vadd.f32 0.0, %v4609
        %v4611 = vpop.f32.mrf.mxu0
        %v4612 = vadd.f32 0.0, %v4611
        %4613 = vmatprep.mubr.bf16.mxu0 0
        %4614 = vmatmul.mubr.bf16.gmra.mxu0 %v4316
        %v4615 = vpop.f32.mrf.mxu0
        %v4616 = vadd.f32 0.0, %v4615
        %v4617 = vpop.f32.mrf.mxu0
        %v4618 = vadd.f32 0.0, %v4617
        %v4619 = vpop.f32.mrf.mxu0
        %v4620 = vadd.f32 0.0, %v4619
        %v4621 = vpop.f32.mrf.mxu0
        %v4622 = vadd.f32 0.0, %v4621
        %4623 = vmatprep.mubr.bf16.mxu0 0
        %4624 = vmatmul.mubr.bf16.gmra.mxu0 %v4317
        %v4625 = vpop.f32.mrf.mxu0
        %v4626 = vadd.f32 0.0, %v4625
        %v4627 = vpop.f32.mrf.mxu0
        %v4628 = vadd.f32 0.0, %v4627
        %v4629 = vpop.f32.mrf.mxu0
        %v4630 = vadd.f32 0.0, %v4629
        %v4631 = vpop.f32.mrf.mxu0
        %v4632 = vadd.f32 0.0, %v4631
        %4633 = vmatprep.mubr.bf16.mxu0 0
        %4634 = vmatmul.mubr.bf16.gmra.mxu0 %v4318
        %v4635 = vpop.f32.mrf.mxu0
        %v4636 = vadd.f32 0.0, %v4635
        %v4637 = vpop.f32.mrf.mxu0
        %v4638 = vadd.f32 0.0, %v4637
        %v4639 = vpop.f32.mrf.mxu0
        %v4640 = vadd.f32 0.0, %v4639
        %v4641 = vpop.f32.mrf.mxu0
        %v4642 = vadd.f32 0.0, %v4641
        %4643 = vmatprep.mubr.bf16.mxu0 0
        %4644 = vmatmul.mubr.bf16.gmra.mxu0 %v4319
        %v4645 = vpop.f32.mrf.mxu0
        %v4646 = vadd.f32 0.0, %v4645
        %v4647 = vpop.f32.mrf.mxu0
        %v4648 = vadd.f32 0.0, %v4647
        %v4649 = vpop.f32.mrf.mxu0
        %v4650 = vadd.f32 0.0, %v4649
        %v4651 = vpop.f32.mrf.mxu0
        %v4652 = vadd.f32 0.0, %v4651
        %4653 = vmatprep.mubr.bf16.mxu0 0
        %4654 = vmatmul.mubr.bf16.gmra.mxu0 %v4320
        %v4655 = vpop.f32.mrf.mxu0
        %v4656 = vadd.f32 0.0, %v4655
        %v4657 = vpop.f32.mrf.mxu0
        %v4658 = vadd.f32 0.0, %v4657
        %v4659 = vpop.f32.mrf.mxu0
        %v4660 = vadd.f32 0.0, %v4659
        %v4661 = vpop.f32.mrf.mxu0
        %v4662 = vadd.f32 0.0, %v4661
        %4663 = vmatprep.mubr.bf16.mxu0 0
        %4664 = vmatmul.mubr.bf16.gmra.mxu0 %v4321
        %v4665 = vpop.f32.mrf.mxu0
        %v4666 = vadd.f32 0.0, %v4665
        %v4667 = vpop.f32.mrf.mxu0
        %v4668 = vadd.f32 0.0, %v4667
        %v4669 = vpop.f32.mrf.mxu0
        %v4670 = vadd.f32 0.0, %v4669
        %v4671 = vpop.f32.mrf.mxu0
        %v4672 = vadd.f32 0.0, %v4671
        %4673 = vmatprep.mubr.bf16.mxu0 0
        %4674 = vmatmul.mubr.bf16.gmra.mxu0 %v4322
        %v4675 = vpop.f32.mrf.mxu0
        %v4676 = vadd.f32 0.0, %v4675
        %v4677 = vpop.f32.mrf.mxu0
        %v4678 = vadd.f32 0.0, %v4677
        %v4679 = vpop.f32.mrf.mxu0
        %v4680 = vadd.f32 0.0, %v4679
        %v4681 = vpop.f32.mrf.mxu0
        %v4682 = vadd.f32 0.0, %v4681
        %4683 = vmatprep.mubr.bf16.mxu0 0
        %4684 = vmatmul.mubr.bf16.gmra.mxu0 %v4323
        %v4685 = vpop.f32.mrf.mxu0
        %v4686 = vadd.f32 0.0, %v4685
        %v4687 = vpop.f32.mrf.mxu0
        %v4688 = vadd.f32 0.0, %v4687
        %v4689 = vpop.f32.mrf.mxu0
        %v4690 = vadd.f32 0.0, %v4689
        %v4691 = vpop.f32.mrf.mxu0
        %v4692 = vadd.f32 0.0, %v4691
        %4693 = vmatprep.mubr.bf16.mxu0 0
        %4694 = vmatmul.mubr.bf16.gmra.mxu0 %v4324
        %v4695 = vpop.f32.mrf.mxu0
        %v4696 = vadd.f32 0.0, %v4695
        %v4697 = vpop.f32.mrf.mxu0
        %v4698 = vadd.f32 0.0, %v4697
        %v4699 = vpop.f32.mrf.mxu0
        %v4700 = vadd.f32 0.0, %v4699
        %v4701 = vpop.f32.mrf.mxu0
        %v4702 = vadd.f32 0.0, %v4701
        %4703 = vmatprep.mubr.bf16.mxu0 0
        %4704 = vmatmul.mubr.bf16.gmra.mxu0 %v4325
        %v4705 = vpop.f32.mrf.mxu0
        %v4706 = vadd.f32 0.0, %v4705
        %v4707 = vpop.f32.mrf.mxu0
        %v4708 = vadd.f32 0.0, %v4707
        %v4709 = vpop.f32.mrf.mxu0
        %v4710 = vadd.f32 0.0, %v4709
        %v4711 = vpop.f32.mrf.mxu0
        %v4712 = vadd.f32 0.0, %v4711
        %4713 = vmatprep.mubr.bf16.mxu0 0
        %4714 = vmatmul.mubr.bf16.gmra.mxu0 %v4326
        %v4715 = vpop.f32.mrf.mxu0
        %v4716 = vadd.f32 0.0, %v4715
        %v4717 = vpop.f32.mrf.mxu0
        %v4718 = vadd.f32 0.0, %v4717
        %v4719 = vpop.f32.mrf.mxu0
        %v4720 = vadd.f32 0.0, %v4719
        %v4721 = vpop.f32.mrf.mxu0
        %v4722 = vadd.f32 0.0, %v4721
        %4723 = vmatprep.mubr.bf16.mxu0 0
        %4724 = vmatmul.mubr.bf16.gmra.mxu0 %v4327
        %v4725 = vpop.f32.mrf.mxu0
        %v4726 = vadd.f32 0.0, %v4725
        %v4727 = vpop.f32.mrf.mxu0
        %v4728 = vadd.f32 0.0, %v4727
        %v4729 = vpop.f32.mrf.mxu0
        %v4730 = vadd.f32 0.0, %v4729
        %v4731 = vpop.f32.mrf.mxu0
        %v4732 = vadd.f32 0.0, %v4731
        %4733 = vmatprep.mubr.bf16.mxu0 0
        %4734 = vmatmul.mubr.bf16.gmra.mxu0 %v4328
        %v4735 = vpop.f32.mrf.mxu0
        %v4736 = vadd.f32 0.0, %v4735
        %v4737 = vpop.f32.mrf.mxu0
        %v4738 = vadd.f32 0.0, %v4737
        %v4739 = vpop.f32.mrf.mxu0
        %v4740 = vadd.f32 0.0, %v4739
        %v4741 = vpop.f32.mrf.mxu0
        %v4742 = vadd.f32 0.0, %v4741
        %4743 = vmatprep.mubr.bf16.mxu0 0
        %4744 = vmatmul.mubr.bf16.gmra.mxu0 %v4329
        %v4745 = vpop.f32.mrf.mxu0
        %v4746 = vadd.f32 0.0, %v4745
        %v4747 = vpop.f32.mrf.mxu0
        %v4748 = vadd.f32 0.0, %v4747
        %v4749 = vpop.f32.mrf.mxu0
        %v4750 = vadd.f32 0.0, %v4749
        %v4751 = vpop.f32.mrf.mxu0
        %v4752 = vadd.f32 0.0, %v4751
        %4753 = vmatprep.mubr.bf16.mxu0 0
        %4754 = vmatmul.mubr.bf16.gmra.mxu0 %v4330
        %v4755 = vpop.f32.mrf.mxu0
        %v4756 = vadd.f32 0.0, %v4755
        %v4757 = vpop.f32.mrf.mxu0
        %v4758 = vadd.f32 0.0, %v4757
        %v4759 = vpop.f32.mrf.mxu0
        %v4760 = vadd.f32 0.0, %v4759
        %v4761 = vpop.f32.mrf.mxu0
        %v4762 = vadd.f32 0.0, %v4761
        %4763 = vmatprep.mubr.bf16.mxu0 0
        %4764 = vmatmul.mubr.bf16.gmra.mxu0 %v4331
        %v4765 = vpop.f32.mrf.mxu0
        %v4766 = vadd.f32 0.0, %v4765
        %v4767 = vpop.f32.mrf.mxu0
        %v4768 = vadd.f32 0.0, %v4767
        %v4769 = vpop.f32.mrf.mxu0
        %v4770 = vadd.f32 0.0, %v4769
        %v4771 = vpop.f32.mrf.mxu0
        %v4772 = vadd.f32 0.0, %v4771
        %4773 = vmatprep.mubr.bf16.mxu0 0
        %4774 = vmatmul.mubr.bf16.gmra.mxu0 %v4332
        %v4775 = vpop.f32.mrf.mxu0
        %v4776 = vadd.f32 0.0, %v4775
        %v4777 = vpop.f32.mrf.mxu0
        %v4778 = vadd.f32 0.0, %v4777
        %v4779 = vpop.f32.mrf.mxu0
        %v4780 = vadd.f32 0.0, %v4779
        %v4781 = vpop.f32.mrf.mxu0
        %v4782 = vadd.f32 0.0, %v4781
        %4783 = vmatprep.mubr.bf16.mxu0 0
        %4784 = vmatmul.mubr.bf16.gmra.mxu0 %v4333
        %v4785 = vpop.f32.mrf.mxu0
        %v4786 = vadd.f32 0.0, %v4785
        %v4787 = vpop.f32.mrf.mxu0
        %v4788 = vadd.f32 0.0, %v4787
        %v4789 = vpop.f32.mrf.mxu0
        %v4790 = vadd.f32 0.0, %v4789
        %v4791 = vpop.f32.mrf.mxu0
        %v4792 = vadd.f32 0.0, %v4791
        %4793 = vmatprep.mubr.bf16.mxu0 0
        %4794 = vmatmul.mubr.bf16.gmra.mxu0 %v4334
        %v4795 = vpop.f32.mrf.mxu0
        %v4796 = vadd.f32 0.0, %v4795
        %v4797 = vpop.f32.mrf.mxu0
        %v4798 = vadd.f32 0.0, %v4797
        %v4799 = vpop.f32.mrf.mxu0
        %v4800 = vadd.f32 0.0, %v4799
        %v4801 = vpop.f32.mrf.mxu0
        %v4802 = vadd.f32 0.0, %v4801
        %4803 = vmatprep.mubr.bf16.mxu0 0
        %4804 = vmatmul.mubr.bf16.gmra.mxu0 %v4335
        %v4805 = vpop.f32.mrf.mxu0
        %v4806 = vadd.f32 0.0, %v4805
        %v4807 = vpop.f32.mrf.mxu0
        %v4808 = vadd.f32 0.0, %v4807
        %v4809 = vpop.f32.mrf.mxu0
        %v4810 = vadd.f32 0.0, %v4809
        %v4811 = vpop.f32.mrf.mxu0
        %v4812 = vadd.f32 0.0, %v4811
        %4813 = vmatprep.mubr.bf16.mxu0 0
        %4814 = vmatmul.mubr.bf16.gmra.mxu0 %v4336
        %v4815 = vpop.f32.mrf.mxu0
        %v4816 = vadd.f32 0.0, %v4815
        %v4817 = vpop.f32.mrf.mxu0
        %v4818 = vadd.f32 0.0, %v4817
        %v4819 = vpop.f32.mrf.mxu0
        %v4820 = vadd.f32 0.0, %v4819
        %v4821 = vpop.f32.mrf.mxu0
        %v4822 = vadd.f32 0.0, %v4821
        %4823 = vmatprep.mubr.bf16.mxu0 0
        %4824 = vmatmul.mubr.bf16.gmra.mxu0 %v4337
        %v4825 = vpop.f32.mrf.mxu0
        %v4826 = vadd.f32 0.0, %v4825
        %v4827 = vpop.f32.mrf.mxu0
        %v4828 = vadd.f32 0.0, %v4827
        %v4829 = vpop.f32.mrf.mxu0
        %v4830 = vadd.f32 0.0, %v4829
        %v4831 = vpop.f32.mrf.mxu0
        %v4832 = vadd.f32 0.0, %v4831
        %4833 = vmatprep.mubr.bf16.mxu0 0
        %4834 = vmatmul.mubr.bf16.gmra.mxu0 %v4338
        %v4835 = vpop.f32.mrf.mxu0
        %v4836 = vadd.f32 0.0, %v4835
        %v4837 = vpop.f32.mrf.mxu0
        %v4838 = vadd.f32 0.0, %v4837
        %v4839 = vpop.f32.mrf.mxu0
        %v4840 = vadd.f32 0.0, %v4839
        %v4841 = vpop.f32.mrf.mxu0
        %v4842 = vadd.f32 0.0, %v4841
        %4843 = vmatprep.mubr.bf16.mxu0 0
        %4844 = vmatmul.mubr.bf16.gmra.mxu0 %v4339
        %v4845 = vpop.f32.mrf.mxu0
        %v4846 = vadd.f32 0.0, %v4845
        %v4847 = vpop.f32.mrf.mxu0
        %v4848 = vadd.f32 0.0, %v4847
        %v4849 = vpop.f32.mrf.mxu0
        %v4850 = vadd.f32 0.0, %v4849
        %v4851 = vpop.f32.mrf.mxu0
        %v4852 = vadd.f32 0.0, %v4851
        %4853 = vdwg.mxu0
        %4854 = vmatprep.subr.bf16.mxu0 0
        %4855 = vmatpush1.bf16.msra.mxu0 %v4476
        %4856 = vmatprep.subr.bf16.mxu0 0
        %4857 = vmatpush1.bf16.msra.mxu0 %v4473
        %4858 = vmatprep.subr.bf16.mxu0 0
        %4859 = vmatpush1.bf16.msra.mxu0 %v4470
        %4860 = vmatprep.subr.bf16.mxu0 0
        %4861 = vmatpush1.bf16.msra.mxu0 %v4467
        %4862 = vmatprep.subr.bf16.mxu0 0
        %4863 = vmatpush1.bf16.msra.mxu0 %v4464
        %4864 = vmatprep.subr.bf16.mxu0 0
        %4865 = vmatpush1.bf16.msra.mxu0 %v4461
        %4866 = vmatprep.subr.bf16.mxu0 0
        %4867 = vmatpush1.bf16.msra.mxu0 %v4458
        %4868 = vmatprep.subr.bf16.mxu0 0
        %4869 = vmatpush1.bf16.msra.mxu0 %v4455
        %4870 = vmatprep.subr.bf16.mxu0 0
        %4871 = vmatpush2.bf16.msra.mxu0 0
        %4872 = vmatprep.subr.bf16.mxu0 0
        %4873 = vmatpush2.bf16.msra.mxu0 0
        %4874 = vmatprep.subr.bf16.mxu0 0
        %4875 = vmatpush2.bf16.msra.mxu0 0
        %4876 = vmatprep.subr.bf16.mxu0 0
        %4877 = vmatpush2.bf16.msra.mxu0 0
        %4878 = vmatprep.subr.bf16.mxu0 0
        %4879 = vmatpush2.bf16.msra.mxu0 0
        %4880 = vmatprep.subr.bf16.mxu0 0
        %4881 = vmatpush2.bf16.msra.mxu0 0
        %4882 = vmatprep.subr.bf16.mxu0 0
        %4883 = vmatpush2.bf16.msra.mxu0 0
        %4884 = vmatprep.subr.bf16.mxu0 0
        %4885 = vmatpush2.bf16.msra.mxu0 0
        %4886 = vmatprep.mubr.bf16.mxu0 0
        %4887 = vmatmul.mubr.bf16.gmra.mxu0 %v4308
        %v4888 = vpop.f32.mrf.mxu0
        %v4889 = vadd.f32 0.0, %v4888
        %v4890 = vpop.f32.mrf.mxu0
        %v4891 = vpop.f32.mrf.mxu0
        %v4892 = vadd.f32 0.0, %v4891
        %v4893 = vpop.f32.mrf.mxu0
        %4894 = vmatprep.mubr.bf16.mxu0 0
        %4895 = vmatmul.mubr.bf16.gmra.mxu0 %v4309
        %v4896 = vpop.f32.mrf.mxu0
        %v4897 = vadd.f32 0.0, %v4896
        %v4898 = vpop.f32.mrf.mxu0
        %v4899 = vpop.f32.mrf.mxu0
        %v4900 = vadd.f32 0.0, %v4899
        %v4901 = vpop.f32.mrf.mxu0
        %4902 = vmatprep.mubr.bf16.mxu0 0
        %4903 = vmatmul.mubr.bf16.gmra.mxu0 %v4310
        %v4904 = vpop.f32.mrf.mxu0
        %v4905 = vadd.f32 0.0, %v4904
        %v4906 = vpop.f32.mrf.mxu0
        %v4907 = vpop.f32.mrf.mxu0
        %v4908 = vadd.f32 0.0, %v4907
        %v4909 = vpop.f32.mrf.mxu0
        %4910 = vmatprep.mubr.bf16.mxu0 0
        %4911 = vmatmul.mubr.bf16.gmra.mxu0 %v4311
        %v4912 = vpop.f32.mrf.mxu0
        %v4913 = vadd.f32 0.0, %v4912
        %v4914 = vpop.f32.mrf.mxu0
        %v4915 = vpop.f32.mrf.mxu0
        %v4916 = vadd.f32 0.0, %v4915
        %v4917 = vpop.f32.mrf.mxu0
        %4918 = vmatprep.mubr.bf16.mxu0 0
        %4919 = vmatmul.mubr.bf16.gmra.mxu0 %v4312
        %v4920 = vpop.f32.mrf.mxu0
        %v4921 = vadd.f32 0.0, %v4920
        %v4922 = vpop.f32.mrf.mxu0
        %v4923 = vpop.f32.mrf.mxu0
        %v4924 = vadd.f32 0.0, %v4923
        %v4925 = vpop.f32.mrf.mxu0
        %4926 = vmatprep.mubr.bf16.mxu0 0
        %4927 = vmatmul.mubr.bf16.gmra.mxu0 %v4313
        %v4928 = vpop.f32.mrf.mxu0
        %v4929 = vadd.f32 0.0, %v4928
        %v4930 = vpop.f32.mrf.mxu0
        %v4931 = vpop.f32.mrf.mxu0
        %v4932 = vadd.f32 0.0, %v4931
        %v4933 = vpop.f32.mrf.mxu0
        %4934 = vmatprep.mubr.bf16.mxu0 0
        %4935 = vmatmul.mubr.bf16.gmra.mxu0 %v4314
        %v4936 = vpop.f32.mrf.mxu0
        %v4937 = vadd.f32 0.0, %v4936
        %v4938 = vpop.f32.mrf.mxu0
        %v4939 = vpop.f32.mrf.mxu0
        %v4940 = vadd.f32 0.0, %v4939
        %v4941 = vpop.f32.mrf.mxu0
        %4942 = vmatprep.mubr.bf16.mxu0 0
        %4943 = vmatmul.mubr.bf16.gmra.mxu0 %v4315
        %v4944 = vpop.f32.mrf.mxu0
        %v4945 = vadd.f32 0.0, %v4944
        %v4946 = vpop.f32.mrf.mxu0
        %v4947 = vpop.f32.mrf.mxu0
        %v4948 = vadd.f32 0.0, %v4947
        %v4949 = vpop.f32.mrf.mxu0
        %4950 = vmatprep.mubr.bf16.mxu0 0
        %4951 = vmatmul.mubr.bf16.gmra.mxu0 %v4316
        %v4952 = vpop.f32.mrf.mxu0
        %v4953 = vadd.f32 0.0, %v4952
        %v4954 = vpop.f32.mrf.mxu0
        %v4955 = vpop.f32.mrf.mxu0
        %v4956 = vadd.f32 0.0, %v4955
        %v4957 = vpop.f32.mrf.mxu0
        %4958 = vmatprep.mubr.bf16.mxu0 0
        %4959 = vmatmul.mubr.bf16.gmra.mxu0 %v4317
        %v4960 = vpop.f32.mrf.mxu0
        %v4961 = vadd.f32 0.0, %v4960
        %v4962 = vpop.f32.mrf.mxu0
        %v4963 = vpop.f32.mrf.mxu0
        %v4964 = vadd.f32 0.0, %v4963
        %v4965 = vpop.f32.mrf.mxu0
        %4966 = vmatprep.mubr.bf16.mxu0 0
        %4967 = vmatmul.mubr.bf16.gmra.mxu0 %v4318
        %v4968 = vpop.f32.mrf.mxu0
        %v4969 = vadd.f32 0.0, %v4968
        %v4970 = vpop.f32.mrf.mxu0
        %v4971 = vpop.f32.mrf.mxu0
        %v4972 = vadd.f32 0.0, %v4971
        %v4973 = vpop.f32.mrf.mxu0
        %4974 = vmatprep.mubr.bf16.mxu0 0
        %4975 = vmatmul.mubr.bf16.gmra.mxu0 %v4319
        %v4976 = vpop.f32.mrf.mxu0
        %v4977 = vadd.f32 0.0, %v4976
        %v4978 = vpop.f32.mrf.mxu0
        %v4979 = vpop.f32.mrf.mxu0
        %v4980 = vadd.f32 0.0, %v4979
        %v4981 = vpop.f32.mrf.mxu0
        %4982 = vmatprep.mubr.bf16.mxu0 0
        %4983 = vmatmul.mubr.bf16.gmra.mxu0 %v4320
        %v4984 = vpop.f32.mrf.mxu0
        %v4985 = vadd.f32 0.0, %v4984
        %v4986 = vpop.f32.mrf.mxu0
        %v4987 = vpop.f32.mrf.mxu0
        %v4988 = vadd.f32 0.0, %v4987
        %v4989 = vpop.f32.mrf.mxu0
        %4990 = vmatprep.mubr.bf16.mxu0 0
        %4991 = vmatmul.mubr.bf16.gmra.mxu0 %v4321
        %v4992 = vpop.f32.mrf.mxu0
        %v4993 = vadd.f32 0.0, %v4992
        %v4994 = vpop.f32.mrf.mxu0
        %v4995 = vpop.f32.mrf.mxu0
        %v4996 = vadd.f32 0.0, %v4995
        %v4997 = vpop.f32.mrf.mxu0
        %4998 = vmatprep.mubr.bf16.mxu0 0
        %4999 = vmatmul.mubr.bf16.gmra.mxu0 %v4322
        %v5000 = vpop.f32.mrf.mxu0
        %v5001 = vadd.f32 0.0, %v5000
        %v5002 = vpop.f32.mrf.mxu0
        %v5003 = vpop.f32.mrf.mxu0
        %v5004 = vadd.f32 0.0, %v5003
        %v5005 = vpop.f32.mrf.mxu0
        %5006 = vmatprep.mubr.bf16.mxu0 0
        %5007 = vmatmul.mubr.bf16.gmra.mxu0 %v4323
        %v5008 = vpop.f32.mrf.mxu0
        %v5009 = vadd.f32 0.0, %v5008
        %v5010 = vpop.f32.mrf.mxu0
        %v5011 = vpop.f32.mrf.mxu0
        %v5012 = vadd.f32 0.0, %v5011
        %v5013 = vpop.f32.mrf.mxu0
        %5014 = vmatprep.mubr.bf16.mxu0 0
        %5015 = vmatmul.mubr.bf16.gmra.mxu0 %v4324
        %v5016 = vpop.f32.mrf.mxu0
        %v5017 = vadd.f32 0.0, %v5016
        %v5018 = vpop.f32.mrf.mxu0
        %v5019 = vpop.f32.mrf.mxu0
        %v5020 = vadd.f32 0.0, %v5019
        %v5021 = vpop.f32.mrf.mxu0
        %5022 = vmatprep.mubr.bf16.mxu0 0
        %5023 = vmatmul.mubr.bf16.gmra.mxu0 %v4325
        %v5024 = vpop.f32.mrf.mxu0
        %v5025 = vadd.f32 0.0, %v5024
        %v5026 = vpop.f32.mrf.mxu0
        %v5027 = vpop.f32.mrf.mxu0
        %v5028 = vadd.f32 0.0, %v5027
        %v5029 = vpop.f32.mrf.mxu0
        %5030 = vmatprep.mubr.bf16.mxu0 0
        %5031 = vmatmul.mubr.bf16.gmra.mxu0 %v4326
        %v5032 = vpop.f32.mrf.mxu0
        %v5033 = vadd.f32 0.0, %v5032
        %v5034 = vpop.f32.mrf.mxu0
        %v5035 = vpop.f32.mrf.mxu0
        %v5036 = vadd.f32 0.0, %v5035
        %v5037 = vpop.f32.mrf.mxu0
        %5038 = vmatprep.mubr.bf16.mxu0 0
        %5039 = vmatmul.mubr.bf16.gmra.mxu0 %v4327
        %v5040 = vpop.f32.mrf.mxu0
        %v5041 = vadd.f32 0.0, %v5040
        %v5042 = vpop.f32.mrf.mxu0
        %v5043 = vpop.f32.mrf.mxu0
        %v5044 = vadd.f32 0.0, %v5043
        %v5045 = vpop.f32.mrf.mxu0
        %5046 = vmatprep.mubr.bf16.mxu0 0
        %5047 = vmatmul.mubr.bf16.gmra.mxu0 %v4328
        %v5048 = vpop.f32.mrf.mxu0
        %v5049 = vadd.f32 0.0, %v5048
        %v5050 = vpop.f32.mrf.mxu0
        %v5051 = vpop.f32.mrf.mxu0
        %v5052 = vadd.f32 0.0, %v5051
        %v5053 = vpop.f32.mrf.mxu0
        %5054 = vmatprep.mubr.bf16.mxu0 0
        %5055 = vmatmul.mubr.bf16.gmra.mxu0 %v4329
        %v5056 = vpop.f32.mrf.mxu0
        %v5057 = vadd.f32 0.0, %v5056
        %v5058 = vpop.f32.mrf.mxu0
        %v5059 = vpop.f32.mrf.mxu0
        %v5060 = vadd.f32 0.0, %v5059
        %v5061 = vpop.f32.mrf.mxu0
        %5062 = vmatprep.mubr.bf16.mxu0 0
        %5063 = vmatmul.mubr.bf16.gmra.mxu0 %v4330
        %v5064 = vpop.f32.mrf.mxu0
        %v5065 = vadd.f32 0.0, %v5064
        %v5066 = vpop.f32.mrf.mxu0
        %v5067 = vpop.f32.mrf.mxu0
        %v5068 = vadd.f32 0.0, %v5067
        %v5069 = vpop.f32.mrf.mxu0
        %5070 = vmatprep.mubr.bf16.mxu0 0
        %5071 = vmatmul.mubr.bf16.gmra.mxu0 %v4331
        %v5072 = vpop.f32.mrf.mxu0
        %v5073 = vadd.f32 0.0, %v5072
        %v5074 = vpop.f32.mrf.mxu0
        %v5075 = vpop.f32.mrf.mxu0
        %v5076 = vadd.f32 0.0, %v5075
        %v5077 = vpop.f32.mrf.mxu0
        %5078 = vmatprep.mubr.bf16.mxu0 0
        %5079 = vmatmul.mubr.bf16.gmra.mxu0 %v4332
        %v5080 = vpop.f32.mrf.mxu0
        %v5081 = vadd.f32 0.0, %v5080
        %v5082 = vpop.f32.mrf.mxu0
        %v5083 = vpop.f32.mrf.mxu0
        %v5084 = vadd.f32 0.0, %v5083
        %v5085 = vpop.f32.mrf.mxu0
        %5086 = vmatprep.mubr.bf16.mxu0 0
        %5087 = vmatmul.mubr.bf16.gmra.mxu0 %v4333
        %v5088 = vpop.f32.mrf.mxu0
        %v5089 = vadd.f32 0.0, %v5088
        %v5090 = vpop.f32.mrf.mxu0
        %v5091 = vpop.f32.mrf.mxu0
        %v5092 = vadd.f32 0.0, %v5091
        %v5093 = vpop.f32.mrf.mxu0
        %5094 = vmatprep.mubr.bf16.mxu0 0
        %5095 = vmatmul.mubr.bf16.gmra.mxu0 %v4334
        %v5096 = vpop.f32.mrf.mxu0
        %v5097 = vadd.f32 0.0, %v5096
        %v5098 = vpop.f32.mrf.mxu0
        %v5099 = vpop.f32.mrf.mxu0
        %v5100 = vadd.f32 0.0, %v5099
        %v5101 = vpop.f32.mrf.mxu0
        %5102 = vmatprep.mubr.bf16.mxu0 0
        %5103 = vmatmul.mubr.bf16.gmra.mxu0 %v4335
        %v5104 = vpop.f32.mrf.mxu0
        %v5105 = vadd.f32 0.0, %v5104
        %v5106 = vpop.f32.mrf.mxu0
        %v5107 = vpop.f32.mrf.mxu0
        %v5108 = vadd.f32 0.0, %v5107
        %v5109 = vpop.f32.mrf.mxu0
        %5110 = vmatprep.mubr.bf16.mxu0 0
        %5111 = vmatmul.mubr.bf16.gmra.mxu0 %v4336
        %v5112 = vpop.f32.mrf.mxu0
        %v5113 = vadd.f32 0.0, %v5112
        %v5114 = vpop.f32.mrf.mxu0
        %v5115 = vpop.f32.mrf.mxu0
        %v5116 = vadd.f32 0.0, %v5115
        %v5117 = vpop.f32.mrf.mxu0
        %5118 = vmatprep.mubr.bf16.mxu0 0
        %5119 = vmatmul.mubr.bf16.gmra.mxu0 %v4337
        %v5120 = vpop.f32.mrf.mxu0
        %v5121 = vadd.f32 0.0, %v5120
        %v5122 = vpop.f32.mrf.mxu0
        %v5123 = vpop.f32.mrf.mxu0
        %v5124 = vadd.f32 0.0, %v5123
        %v5125 = vpop.f32.mrf.mxu0
        %5126 = vmatprep.mubr.bf16.mxu0 0
        %5127 = vmatmul.mubr.bf16.gmra.mxu0 %v4338
        %v5128 = vpop.f32.mrf.mxu0
        %v5129 = vadd.f32 0.0, %v5128
        %v5130 = vpop.f32.mrf.mxu0
        %v5131 = vpop.f32.mrf.mxu0
        %v5132 = vadd.f32 0.0, %v5131
        %v5133 = vpop.f32.mrf.mxu0
        %5134 = vmatprep.mubr.bf16.mxu0 0
        %5135 = vmatmul.mubr.bf16.gmra.mxu0 %v4339
        %v5136 = vpop.f32.mrf.mxu0
        %v5137 = vadd.f32 0.0, %v5136
        %v5138 = vpop.f32.mrf.mxu0
        %v5139 = vpop.f32.mrf.mxu0
        %v5140 = vadd.f32 0.0, %v5139
        %v5141 = vpop.f32.mrf.mxu0
        %5142 = vdwg.mxu0
        %v5143 = vadd.f32 %v3796, %v4536
        %v5144 = vadd.f32 %v3797, %v4538
        %v5145 = vadd.f32 %v3798, %v4889
        %v5146 = vadd.f32 %v3799, %v4540
        %v5147 = vadd.f32 %v3800, %v4542
        %v5148 = vadd.f32 %v3801, %v4892
        %v5149 = vadd.f32 %v3802, %v4546
        %v5150 = vadd.f32 %v3803, %v4548
        %v5151 = vadd.f32 %v3804, %v4897
        %v5152 = vadd.f32 %v3805, %v4550
        %v5153 = vadd.f32 %v3806, %v4552
        %v5154 = vadd.f32 %v3807, %v4900
        %v5155 = vadd.f32 %v3808, %v4556
        %v5156 = vadd.f32 %v3809, %v4558
        %v5157 = vadd.f32 %v3810, %v4905
        %v5158 = vadd.f32 %v3811, %v4560
        %v5159 = vadd.f32 %v3812, %v4562
        %v5160 = vadd.f32 %v3813, %v4908
        %v5161 = vadd.f32 %v3814, %v4566
        %v5162 = vadd.f32 %v3815, %v4568
        %v5163 = vadd.f32 %v3816, %v4913
        %v5164 = vadd.f32 %v3817, %v4570
        %v5165 = vadd.f32 %v3818, %v4572
        %v5166 = vadd.f32 %v3819, %v4916
        %v5167 = vadd.f32 %v3820, %v4576
        %v5168 = vadd.f32 %v3821, %v4578
        %v5169 = vadd.f32 %v3822, %v4921
        %v5170 = vadd.f32 %v3823, %v4580
        %v5171 = vadd.f32 %v3824, %v4582
        %v5172 = vadd.f32 %v3825, %v4924
        %v5173 = vadd.f32 %v3826, %v4586
        %v5174 = vadd.f32 %v3827, %v4588
        %v5175 = vadd.f32 %v3828, %v4929
        %v5176 = vadd.f32 %v3829, %v4590
        %v5177 = vadd.f32 %v3830, %v4592
        %v5178 = vadd.f32 %v3831, %v4932
        %v5179 = vadd.f32 %v3832, %v4596
        %v5180 = vadd.f32 %v3833, %v4598
        %v5181 = vadd.f32 %v3834, %v4937
        %v5182 = vadd.f32 %v3835, %v4600
        %v5183 = vadd.f32 %v3836, %v4602
        %v5184 = vadd.f32 %v3837, %v4940
        %v5185 = vadd.f32 %v3838, %v4606
        %v5186 = vadd.f32 %v3839, %v4608
        %v5187 = vadd.f32 %v3840, %v4945
        %v5188 = vadd.f32 %v3841, %v4610
        %v5189 = vadd.f32 %v3842, %v4612
        %v5190 = vadd.f32 %v3843, %v4948
        %v5191 = vadd.f32 %v3844, %v4616
        %v5192 = vadd.f32 %v3845, %v4618
        %v5193 = vadd.f32 %v3846, %v4953
        %v5194 = vadd.f32 %v3847, %v4620
        %v5195 = vadd.f32 %v3848, %v4622
        %v5196 = vadd.f32 %v3849, %v4956
        %v5197 = vadd.f32 %v3850, %v4626
        %v5198 = vadd.f32 %v3851, %v4628
        %v5199 = vadd.f32 %v3852, %v4961
        %v5200 = vadd.f32 %v3853, %v4630
        %v5201 = vadd.f32 %v3854, %v4632
        %v5202 = vadd.f32 %v3855, %v4964
        %v5203 = vadd.f32 %v3856, %v4636
        %v5204 = vadd.f32 %v3857, %v4638
        %v5205 = vadd.f32 %v3858, %v4969
        %v5206 = vadd.f32 %v3859, %v4640
        %v5207 = vadd.f32 %v3860, %v4642
        %v5208 = vadd.f32 %v3861, %v4972
        %v5209 = vadd.f32 %v3862, %v4646
        %v5210 = vadd.f32 %v3863, %v4648
        %v5211 = vadd.f32 %v3864, %v4977
        %v5212 = vadd.f32 %v3865, %v4650
        %v5213 = vadd.f32 %v3866, %v4652
        %v5214 = vadd.f32 %v3867, %v4980
        %v5215 = vadd.f32 %v3868, %v4656
        %v5216 = vadd.f32 %v3869, %v4658
        %v5217 = vadd.f32 %v3870, %v4985
        %v5218 = vadd.f32 %v3871, %v4660
        %v5219 = vadd.f32 %v3872, %v4662
        %v5220 = vadd.f32 %v3873, %v4988
        %v5221 = vadd.f32 %v3874, %v4666
        %v5222 = vadd.f32 %v3875, %v4668
        %v5223 = vadd.f32 %v3876, %v4993
        %v5224 = vadd.f32 %v3877, %v4670
        %v5225 = vadd.f32 %v3878, %v4672
        %v5226 = vadd.f32 %v3879, %v4996
        %v5227 = vadd.f32 %v3880, %v4676
        %v5228 = vadd.f32 %v3881, %v4678
        %v5229 = vadd.f32 %v3882, %v5001
        %v5230 = vadd.f32 %v3883, %v4680
        %v5231 = vadd.f32 %v3884, %v4682
        %v5232 = vadd.f32 %v3885, %v5004
        %v5233 = vadd.f32 %v3886, %v4686
        %v5234 = vadd.f32 %v3887, %v4688
        %v5235 = vadd.f32 %v3888, %v5009
        %v5236 = vadd.f32 %v3889, %v4690
        %v5237 = vadd.f32 %v3890, %v4692
        %v5238 = vadd.f32 %v3891, %v5012
        %v5239 = vadd.f32 %v3892, %v4696
        %v5240 = vadd.f32 %v3893, %v4698
        %v5241 = vadd.f32 %v3894, %v5017
        %v5242 = vadd.f32 %v3895, %v4700
        %v5243 = vadd.f32 %v3896, %v4702
        %v5244 = vadd.f32 %v3897, %v5020
        %v5245 = vadd.f32 %v3898, %v4706
        %v5246 = vadd.f32 %v3899, %v4708
        %v5247 = vadd.f32 %v3900, %v5025
        %v5248 = vadd.f32 %v3901, %v4710
        %v5249 = vadd.f32 %v3902, %v4712
        %v5250 = vadd.f32 %v3903, %v5028
        %v5251 = vadd.f32 %v3904, %v4716
        %v5252 = vadd.f32 %v3905, %v4718
        %v5253 = vadd.f32 %v3906, %v5033
        %v5254 = vadd.f32 %v3907, %v4720
        %v5255 = vadd.f32 %v3908, %v4722
        %v5256 = vadd.f32 %v3909, %v5036
        %v5257 = vadd.f32 %v3910, %v4726
        %v5258 = vadd.f32 %v3911, %v4728
        %v5259 = vadd.f32 %v3912, %v5041
        %v5260 = vadd.f32 %v3913, %v4730
        %v5261 = vadd.f32 %v3914, %v4732
        %v5262 = vadd.f32 %v3915, %v5044
        %v5263 = vadd.f32 %v3916, %v4736
        %v5264 = vadd.f32 %v3917, %v4738
        %v5265 = vadd.f32 %v3918, %v5049
        %v5266 = vadd.f32 %v3919, %v4740
        %v5267 = vadd.f32 %v3920, %v4742
        %v5268 = vadd.f32 %v3921, %v5052
        %v5269 = vadd.f32 %v3922, %v4746
        %v5270 = vadd.f32 %v3923, %v4748
        %v5271 = vadd.f32 %v3924, %v5057
        %v5272 = vadd.f32 %v3925, %v4750
        %v5273 = vadd.f32 %v3926, %v4752
        %v5274 = vadd.f32 %v3927, %v5060
        %v5275 = vadd.f32 %v3928, %v4756
        %v5276 = vadd.f32 %v3929, %v4758
        %v5277 = vadd.f32 %v3930, %v5065
        %v5278 = vadd.f32 %v3931, %v4760
        %v5279 = vadd.f32 %v3932, %v4762
        %v5280 = vadd.f32 %v3933, %v5068
        %v5281 = vadd.f32 %v3934, %v4766
        %v5282 = vadd.f32 %v3935, %v4768
        %v5283 = vadd.f32 %v3936, %v5073
        %v5284 = vadd.f32 %v3937, %v4770
        %v5285 = vadd.f32 %v3938, %v4772
        %v5286 = vadd.f32 %v3939, %v5076
        %v5287 = vadd.f32 %v3940, %v4776
        %v5288 = vadd.f32 %v3941, %v4778
        %v5289 = vadd.f32 %v3942, %v5081
        %v5290 = vadd.f32 %v3943, %v4780
        %v5291 = vadd.f32 %v3944, %v4782
        %v5292 = vadd.f32 %v3945, %v5084
        %v5293 = vadd.f32 %v3946, %v4786
        %v5294 = vadd.f32 %v3947, %v4788
        %v5295 = vadd.f32 %v3948, %v5089
        %v5296 = vadd.f32 %v3949, %v4790
        %v5297 = vadd.f32 %v3950, %v4792
        %v5298 = vadd.f32 %v3951, %v5092
        %v5299 = vadd.f32 %v3952, %v4796
        %v5300 = vadd.f32 %v3953, %v4798
        %v5301 = vadd.f32 %v3954, %v5097
        %v5302 = vadd.f32 %v3955, %v4800
        %v5303 = vadd.f32 %v3956, %v4802
        %v5304 = vadd.f32 %v3957, %v5100
        %v5305 = vadd.f32 %v3958, %v4806
        %v5306 = vadd.f32 %v3959, %v4808
        %v5307 = vadd.f32 %v3960, %v5105
        %v5308 = vadd.f32 %v3961, %v4810
        %v5309 = vadd.f32 %v3962, %v4812
        %v5310 = vadd.f32 %v3963, %v5108
        %v5311 = vadd.f32 %v3964, %v4816
        %v5312 = vadd.f32 %v3965, %v4818
        %v5313 = vadd.f32 %v3966, %v5113
        %v5314 = vadd.f32 %v3967, %v4820
        %v5315 = vadd.f32 %v3968, %v4822
        %v5316 = vadd.f32 %v3969, %v5116
        %v5317 = vadd.f32 %v3970, %v4826
        %v5318 = vadd.f32 %v3971, %v4828
        %v5319 = vadd.f32 %v3972, %v5121
        %v5320 = vadd.f32 %v3973, %v4830
        %v5321 = vadd.f32 %v3974, %v4832
        %v5322 = vadd.f32 %v3975, %v5124
        %v5323 = vadd.f32 %v3976, %v4836
        %v5324 = vadd.f32 %v3977, %v4838
        %v5325 = vadd.f32 %v3978, %v5129
        %v5326 = vadd.f32 %v3979, %v4840
        %v5327 = vadd.f32 %v3980, %v4842
        %v5328 = vadd.f32 %v3981, %v5132
        %v5329 = vadd.f32 %v3982, %v4846
        %v5330 = vadd.f32 %v3983, %v4848
        %v5331 = vadd.f32 %v3984, %v5137
        %v5332 = vadd.f32 %v3985, %v4850
        %v5333 = vadd.f32 %v3986, %v4852
        %v5334 = vadd.f32 %v3987, %v5140
        %v5335 = vld [vmem:[%s2] sm:$0xff]
        %v5336 = vld [vmem:[%s2 + $0x8] sm:$0xff]
        %v5337 = vld [vmem:[%s2 + $0x10] sm:$0xff]
        %v5338 = vld [vmem:[%s2 + $0x18] sm:$0xff]
        %v5339 = vld [vmem:[%s2 + $0x20] sm:$0xff]
        %v5340 = vld [vmem:[%s2 + $0x28] sm:$0xff]
        %v5341 = vadd.f32 %v5143, %v5335
        %v5342 = vadd.f32 %v5144, %v5336
        %v5343 = vadd.f32 %v5145, %v5337
        %v5344 = vadd.f32 %v5146, %v5338
        %v5345 = vadd.f32 %v5147, %v5339
        %v5346 = vadd.f32 %v5148, %v5340
        %v5347 = vadd.f32 %v5149, %v5335
        %v5348 = vadd.f32 %v5150, %v5336
        %v5349 = vadd.f32 %v5151, %v5337
        %v5350 = vadd.f32 %v5152, %v5338
        %v5351 = vadd.f32 %v5153, %v5339
        %v5352 = vadd.f32 %v5154, %v5340
        %v5353 = vadd.f32 %v5155, %v5335
        %v5354 = vadd.f32 %v5156, %v5336
        %v5355 = vadd.f32 %v5157, %v5337
        %v5356 = vadd.f32 %v5158, %v5338
        %v5357 = vadd.f32 %v5159, %v5339
        %v5358 = vadd.f32 %v5160, %v5340
        %v5359 = vadd.f32 %v5161, %v5335
        %v5360 = vadd.f32 %v5162, %v5336
        %v5361 = vadd.f32 %v5163, %v5337
        %v5362 = vadd.f32 %v5164, %v5338
        %v5363 = vadd.f32 %v5165, %v5339
        %v5364 = vadd.f32 %v5166, %v5340
        %v5365 = vadd.f32 %v5167, %v5335
        %v5366 = vadd.f32 %v5168, %v5336
        %v5367 = vadd.f32 %v5169, %v5337
        %v5368 = vadd.f32 %v5170, %v5338
        %v5369 = vadd.f32 %v5171, %v5339
        %v5370 = vadd.f32 %v5172, %v5340
        %v5371 = vadd.f32 %v5173, %v5335
        %v5372 = vadd.f32 %v5174, %v5336
        %v5373 = vadd.f32 %v5175, %v5337
        %v5374 = vadd.f32 %v5176, %v5338
        %v5375 = vadd.f32 %v5177, %v5339
        %v5376 = vadd.f32 %v5178, %v5340
        %v5377 = vadd.f32 %v5179, %v5335
        %v5378 = vadd.f32 %v5180, %v5336
        %v5379 = vadd.f32 %v5181, %v5337
        %v5380 = vadd.f32 %v5182, %v5338
        %v5381 = vadd.f32 %v5183, %v5339
        %v5382 = vadd.f32 %v5184, %v5340
        %v5383 = vadd.f32 %v5185, %v5335
        %v5384 = vadd.f32 %v5186, %v5336
        %v5385 = vadd.f32 %v5187, %v5337
        %v5386 = vadd.f32 %v5188, %v5338
        %v5387 = vadd.f32 %v5189, %v5339
        %v5388 = vadd.f32 %v5190, %v5340
        %v5389 = vadd.f32 %v5191, %v5335
        %v5390 = vadd.f32 %v5192, %v5336
        %v5391 = vadd.f32 %v5193, %v5337
        %v5392 = vadd.f32 %v5194, %v5338
        %v5393 = vadd.f32 %v5195, %v5339
        %v5394 = vadd.f32 %v5196, %v5340
        %v5395 = vadd.f32 %v5197, %v5335
        %v5396 = vadd.f32 %v5198, %v5336
        %v5397 = vadd.f32 %v5199, %v5337
        %v5398 = vadd.f32 %v5200, %v5338
        %v5399 = vadd.f32 %v5201, %v5339
        %v5400 = vadd.f32 %v5202, %v5340
        %v5401 = vadd.f32 %v5203, %v5335
        %v5402 = vadd.f32 %v5204, %v5336
        %v5403 = vadd.f32 %v5205, %v5337
        %v5404 = vadd.f32 %v5206, %v5338
        %v5405 = vadd.f32 %v5207, %v5339
        %v5406 = vadd.f32 %v5208, %v5340
        %v5407 = vadd.f32 %v5209, %v5335
        %v5408 = vadd.f32 %v5210, %v5336
        %v5409 = vadd.f32 %v5211, %v5337
        %v5410 = vadd.f32 %v5212, %v5338
        %v5411 = vadd.f32 %v5213, %v5339
        %v5412 = vadd.f32 %v5214, %v5340
        %v5413 = vadd.f32 %v5215, %v5335
        %v5414 = vadd.f32 %v5216, %v5336
        %v5415 = vadd.f32 %v5217, %v5337
        %v5416 = vadd.f32 %v5218, %v5338
        %v5417 = vadd.f32 %v5219, %v5339
        %v5418 = vadd.f32 %v5220, %v5340
        %v5419 = vadd.f32 %v5221, %v5335
        %v5420 = vadd.f32 %v5222, %v5336
        %v5421 = vadd.f32 %v5223, %v5337
        %v5422 = vadd.f32 %v5224, %v5338
        %v5423 = vadd.f32 %v5225, %v5339
        %v5424 = vadd.f32 %v5226, %v5340
        %v5425 = vadd.f32 %v5227, %v5335
        %v5426 = vadd.f32 %v5228, %v5336
        %v5427 = vadd.f32 %v5229, %v5337
        %v5428 = vadd.f32 %v5230, %v5338
        %v5429 = vadd.f32 %v5231, %v5339
        %v5430 = vadd.f32 %v5232, %v5340
        %v5431 = vadd.f32 %v5233, %v5335
        %v5432 = vadd.f32 %v5234, %v5336
        %v5433 = vadd.f32 %v5235, %v5337
        %v5434 = vadd.f32 %v5236, %v5338
        %v5435 = vadd.f32 %v5237, %v5339
        %v5436 = vadd.f32 %v5238, %v5340
        %v5437 = vadd.f32 %v5239, %v5335
        %v5438 = vadd.f32 %v5240, %v5336
        %v5439 = vadd.f32 %v5241, %v5337
        %v5440 = vadd.f32 %v5242, %v5338
        %v5441 = vadd.f32 %v5243, %v5339
        %v5442 = vadd.f32 %v5244, %v5340
        %v5443 = vadd.f32 %v5245, %v5335
        %v5444 = vadd.f32 %v5246, %v5336
        %v5445 = vadd.f32 %v5247, %v5337
        %v5446 = vadd.f32 %v5248, %v5338
        %v5447 = vadd.f32 %v5249, %v5339
        %v5448 = vadd.f32 %v5250, %v5340
        %v5449 = vadd.f32 %v5251, %v5335
        %v5450 = vadd.f32 %v5252, %v5336
        %v5451 = vadd.f32 %v5253, %v5337
        %v5452 = vadd.f32 %v5254, %v5338
        %v5453 = vadd.f32 %v5255, %v5339
        %v5454 = vadd.f32 %v5256, %v5340
        %v5455 = vadd.f32 %v5257, %v5335
        %v5456 = vadd.f32 %v5258, %v5336
        %v5457 = vadd.f32 %v5259, %v5337
        %v5458 = vadd.f32 %v5260, %v5338
        %v5459 = vadd.f32 %v5261, %v5339
        %v5460 = vadd.f32 %v5262, %v5340
        %v5461 = vadd.f32 %v5263, %v5335
        %v5462 = vadd.f32 %v5264, %v5336
        %v5463 = vadd.f32 %v5265, %v5337
        %v5464 = vadd.f32 %v5266, %v5338
        %v5465 = vadd.f32 %v5267, %v5339
        %v5466 = vadd.f32 %v5268, %v5340
        %v5467 = vadd.f32 %v5269, %v5335
        %v5468 = vadd.f32 %v5270, %v5336
        %v5469 = vadd.f32 %v5271, %v5337
        %v5470 = vadd.f32 %v5272, %v5338
        %v5471 = vadd.f32 %v5273, %v5339
        %v5472 = vadd.f32 %v5274, %v5340
        %v5473 = vadd.f32 %v5275, %v5335
        %v5474 = vadd.f32 %v5276, %v5336
        %v5475 = vadd.f32 %v5277, %v5337
        %v5476 = vadd.f32 %v5278, %v5338
        %v5477 = vadd.f32 %v5279, %v5339
        %v5478 = vadd.f32 %v5280, %v5340
        %v5479 = vadd.f32 %v5281, %v5335
        %v5480 = vadd.f32 %v5282, %v5336
        %v5481 = vadd.f32 %v5283, %v5337
        %v5482 = vadd.f32 %v5284, %v5338
        %v5483 = vadd.f32 %v5285, %v5339
        %v5484 = vadd.f32 %v5286, %v5340
        %v5485 = vadd.f32 %v5287, %v5335
        %v5486 = vadd.f32 %v5288, %v5336
        %v5487 = vadd.f32 %v5289, %v5337
        %v5488 = vadd.f32 %v5290, %v5338
        %v5489 = vadd.f32 %v5291, %v5339
        %v5490 = vadd.f32 %v5292, %v5340
        %v5491 = vadd.f32 %v5293, %v5335
        %v5492 = vadd.f32 %v5294, %v5336
        %v5493 = vadd.f32 %v5295, %v5337
        %v5494 = vadd.f32 %v5296, %v5338
        %v5495 = vadd.f32 %v5297, %v5339
        %v5496 = vadd.f32 %v5298, %v5340
        %v5497 = vadd.f32 %v5299, %v5335
        %v5498 = vadd.f32 %v5300, %v5336
        %v5499 = vadd.f32 %v5301, %v5337
        %v5500 = vadd.f32 %v5302, %v5338
        %v5501 = vadd.f32 %v5303, %v5339
        %v5502 = vadd.f32 %v5304, %v5340
        %v5503 = vadd.f32 %v5305, %v5335
        %v5504 = vadd.f32 %v5306, %v5336
        %v5505 = vadd.f32 %v5307, %v5337
        %v5506 = vadd.f32 %v5308, %v5338
        %v5507 = vadd.f32 %v5309, %v5339
        %v5508 = vadd.f32 %v5310, %v5340
        %v5509 = vadd.f32 %v5311, %v5335
        %v5510 = vadd.f32 %v5312, %v5336
        %v5511 = vadd.f32 %v5313, %v5337
        %v5512 = vadd.f32 %v5314, %v5338
        %v5513 = vadd.f32 %v5315, %v5339
        %v5514 = vadd.f32 %v5316, %v5340
        %v5515 = vadd.f32 %v5317, %v5335
        %v5516 = vadd.f32 %v5318, %v5336
        %v5517 = vadd.f32 %v5319, %v5337
        %v5518 = vadd.f32 %v5320, %v5338
        %v5519 = vadd.f32 %v5321, %v5339
        %v5520 = vadd.f32 %v5322, %v5340
        %v5521 = vadd.f32 %v5323, %v5335
        %v5522 = vadd.f32 %v5324, %v5336
        %v5523 = vadd.f32 %v5325, %v5337
        %v5524 = vadd.f32 %v5326, %v5338
        %v5525 = vadd.f32 %v5327, %v5339
        %v5526 = vadd.f32 %v5328, %v5340
        %v5527 = vadd.f32 %v5329, %v5335
        %v5528 = vadd.f32 %v5330, %v5336
        %v5529 = vadd.f32 %v5331, %v5337
        %v5530 = vadd.f32 %v5332, %v5338
        %v5531 = vadd.f32 %v5333, %v5339
        %v5532 = vadd.f32 %v5334, %v5340
        %v5533 = vmax.f32 %v5341, 0.0
        %v5534 = vmax.f32 %v5342, 0.0
        %v5535 = vmax.f32 %v5343, 0.0
        %v5536 = vmax.f32 %v5344, 0.0
        %v5537 = vmax.f32 %v5345, 0.0
        %v5538 = vmax.f32 %v5346, 0.0
        %v5539 = vmax.f32 %v5347, 0.0
        %v5540 = vmax.f32 %v5348, 0.0
        %v5541 = vmax.f32 %v5349, 0.0
        %v5542 = vmax.f32 %v5350, 0.0
        %v5543 = vmax.f32 %v5351, 0.0
        %v5544 = vmax.f32 %v5352, 0.0
        %v5545 = vmax.f32 %v5353, 0.0
        %v5546 = vmax.f32 %v5354, 0.0
        %v5547 = vmax.f32 %v5355, 0.0
        %v5548 = vmax.f32 %v5356, 0.0
        %v5549 = vmax.f32 %v5357, 0.0
        %v5550 = vmax.f32 %v5358, 0.0
        %v5551 = vmax.f32 %v5359, 0.0
        %v5552 = vmax.f32 %v5360, 0.0
        %v5553 = vmax.f32 %v5361, 0.0
        %v5554 = vmax.f32 %v5362, 0.0
        %v5555 = vmax.f32 %v5363, 0.0
        %v5556 = vmax.f32 %v5364, 0.0
        %v5557 = vmax.f32 %v5365, 0.0
        %v5558 = vmax.f32 %v5366, 0.0
        %v5559 = vmax.f32 %v5367, 0.0
        %v5560 = vmax.f32 %v5368, 0.0
        %v5561 = vmax.f32 %v5369, 0.0
        %v5562 = vmax.f32 %v5370, 0.0
        %v5563 = vmax.f32 %v5371, 0.0
        %v5564 = vmax.f32 %v5372, 0.0
        %v5565 = vmax.f32 %v5373, 0.0
        %v5566 = vmax.f32 %v5374, 0.0
        %v5567 = vmax.f32 %v5375, 0.0
        %v5568 = vmax.f32 %v5376, 0.0
        %v5569 = vmax.f32 %v5377, 0.0
        %v5570 = vmax.f32 %v5378, 0.0
        %v5571 = vmax.f32 %v5379, 0.0
        %v5572 = vmax.f32 %v5380, 0.0
        %v5573 = vmax.f32 %v5381, 0.0
        %v5574 = vmax.f32 %v5382, 0.0
        %v5575 = vmax.f32 %v5383, 0.0
        %v5576 = vmax.f32 %v5384, 0.0
        %v5577 = vmax.f32 %v5385, 0.0
        %v5578 = vmax.f32 %v5386, 0.0
        %v5579 = vmax.f32 %v5387, 0.0
        %v5580 = vmax.f32 %v5388, 0.0
        %v5581 = vmax.f32 %v5389, 0.0
        %v5582 = vmax.f32 %v5390, 0.0
        %v5583 = vmax.f32 %v5391, 0.0
        %v5584 = vmax.f32 %v5392, 0.0
        %v5585 = vmax.f32 %v5393, 0.0
        %v5586 = vmax.f32 %v5394, 0.0
        %v5587 = vmax.f32 %v5395, 0.0
        %v5588 = vmax.f32 %v5396, 0.0
        %v5589 = vmax.f32 %v5397, 0.0
        %v5590 = vmax.f32 %v5398, 0.0
        %v5591 = vmax.f32 %v5399, 0.0
        %v5592 = vmax.f32 %v5400, 0.0
        %v5593 = vmax.f32 %v5401, 0.0
        %v5594 = vmax.f32 %v5402, 0.0
        %v5595 = vmax.f32 %v5403, 0.0
        %v5596 = vmax.f32 %v5404, 0.0
        %v5597 = vmax.f32 %v5405, 0.0
        %v5598 = vmax.f32 %v5406, 0.0
        %v5599 = vmax.f32 %v5407, 0.0
        %v5600 = vmax.f32 %v5408, 0.0
        %v5601 = vmax.f32 %v5409, 0.0
        %v5602 = vmax.f32 %v5410, 0.0
        %v5603 = vmax.f32 %v5411, 0.0
        %v5604 = vmax.f32 %v5412, 0.0
        %v5605 = vmax.f32 %v5413, 0.0
        %v5606 = vmax.f32 %v5414, 0.0
        %v5607 = vmax.f32 %v5415, 0.0
        %v5608 = vmax.f32 %v5416, 0.0
        %v5609 = vmax.f32 %v5417, 0.0
        %v5610 = vmax.f32 %v5418, 0.0
        %v5611 = vmax.f32 %v5419, 0.0
        %v5612 = vmax.f32 %v5420, 0.0
        %v5613 = vmax.f32 %v5421, 0.0
        %v5614 = vmax.f32 %v5422, 0.0
        %v5615 = vmax.f32 %v5423, 0.0
        %v5616 = vmax.f32 %v5424, 0.0
        %v5617 = vmax.f32 %v5425, 0.0
        %v5618 = vmax.f32 %v5426, 0.0
        %v5619 = vmax.f32 %v5427, 0.0
        %v5620 = vmax.f32 %v5428, 0.0
        %v5621 = vmax.f32 %v5429, 0.0
        %v5622 = vmax.f32 %v5430, 0.0
        %v5623 = vmax.f32 %v5431, 0.0
        %v5624 = vmax.f32 %v5432, 0.0
        %v5625 = vmax.f32 %v5433, 0.0
        %v5626 = vmax.f32 %v5434, 0.0
        %v5627 = vmax.f32 %v5435, 0.0
        %v5628 = vmax.f32 %v5436, 0.0
        %v5629 = vmax.f32 %v5437, 0.0
        %v5630 = vmax.f32 %v5438, 0.0
        %v5631 = vmax.f32 %v5439, 0.0
        %v5632 = vmax.f32 %v5440, 0.0
        %v5633 = vmax.f32 %v5441, 0.0
        %v5634 = vmax.f32 %v5442, 0.0
        %v5635 = vmax.f32 %v5443, 0.0
        %v5636 = vmax.f32 %v5444, 0.0
        %v5637 = vmax.f32 %v5445, 0.0
        %v5638 = vmax.f32 %v5446, 0.0
        %v5639 = vmax.f32 %v5447, 0.0
        %v5640 = vmax.f32 %v5448, 0.0
        %v5641 = vmax.f32 %v5449, 0.0
        %v5642 = vmax.f32 %v5450, 0.0
        %v5643 = vmax.f32 %v5451, 0.0
        %v5644 = vmax.f32 %v5452, 0.0
        %v5645 = vmax.f32 %v5453, 0.0
        %v5646 = vmax.f32 %v5454, 0.0
        %v5647 = vmax.f32 %v5455, 0.0
        %v5648 = vmax.f32 %v5456, 0.0
        %v5649 = vmax.f32 %v5457, 0.0
        %v5650 = vmax.f32 %v5458, 0.0
        %v5651 = vmax.f32 %v5459, 0.0
        %v5652 = vmax.f32 %v5460, 0.0
        %v5653 = vmax.f32 %v5461, 0.0
        %v5654 = vmax.f32 %v5462, 0.0
        %v5655 = vmax.f32 %v5463, 0.0
        %v5656 = vmax.f32 %v5464, 0.0
        %v5657 = vmax.f32 %v5465, 0.0
        %v5658 = vmax.f32 %v5466, 0.0
        %v5659 = vmax.f32 %v5467, 0.0
        %v5660 = vmax.f32 %v5468, 0.0
        %v5661 = vmax.f32 %v5469, 0.0
        %v5662 = vmax.f32 %v5470, 0.0
        %v5663 = vmax.f32 %v5471, 0.0
        %v5664 = vmax.f32 %v5472, 0.0
        %v5665 = vmax.f32 %v5473, 0.0
        %v5666 = vmax.f32 %v5474, 0.0
        %v5667 = vmax.f32 %v5475, 0.0
        %v5668 = vmax.f32 %v5476, 0.0
        %v5669 = vmax.f32 %v5477, 0.0
        %v5670 = vmax.f32 %v5478, 0.0
        %v5671 = vmax.f32 %v5479, 0.0
        %v5672 = vmax.f32 %v5480, 0.0
        %v5673 = vmax.f32 %v5481, 0.0
        %v5674 = vmax.f32 %v5482, 0.0
        %v5675 = vmax.f32 %v5483, 0.0
        %v5676 = vmax.f32 %v5484, 0.0
        %v5677 = vmax.f32 %v5485, 0.0
        %v5678 = vmax.f32 %v5486, 0.0
        %v5679 = vmax.f32 %v5487, 0.0
        %v5680 = vmax.f32 %v5488, 0.0
        %v5681 = vmax.f32 %v5489, 0.0
        %v5682 = vmax.f32 %v5490, 0.0
        %v5683 = vmax.f32 %v5491, 0.0
        %v5684 = vmax.f32 %v5492, 0.0
        %v5685 = vmax.f32 %v5493, 0.0
        %v5686 = vmax.f32 %v5494, 0.0
        %v5687 = vmax.f32 %v5495, 0.0
        %v5688 = vmax.f32 %v5496, 0.0
        %v5689 = vmax.f32 %v5497, 0.0
        %v5690 = vmax.f32 %v5498, 0.0
        %v5691 = vmax.f32 %v5499, 0.0
        %v5692 = vmax.f32 %v5500, 0.0
        %v5693 = vmax.f32 %v5501, 0.0
        %v5694 = vmax.f32 %v5502, 0.0
        %v5695 = vmax.f32 %v5503, 0.0
        %v5696 = vmax.f32 %v5504, 0.0
        %v5697 = vmax.f32 %v5505, 0.0
        %v5698 = vmax.f32 %v5506, 0.0
        %v5699 = vmax.f32 %v5507, 0.0
        %v5700 = vmax.f32 %v5508, 0.0
        %v5701 = vmax.f32 %v5509, 0.0
        %v5702 = vmax.f32 %v5510, 0.0
        %v5703 = vmax.f32 %v5511, 0.0
        %v5704 = vmax.f32 %v5512, 0.0
        %v5705 = vmax.f32 %v5513, 0.0
        %v5706 = vmax.f32 %v5514, 0.0
        %v5707 = vmax.f32 %v5515, 0.0
        %v5708 = vmax.f32 %v5516, 0.0
        %v5709 = vmax.f32 %v5517, 0.0
        %v5710 = vmax.f32 %v5518, 0.0
        %v5711 = vmax.f32 %v5519, 0.0
        %v5712 = vmax.f32 %v5520, 0.0
        %v5713 = vmax.f32 %v5521, 0.0
        %v5714 = vmax.f32 %v5522, 0.0
        %v5715 = vmax.f32 %v5523, 0.0
        %v5716 = vmax.f32 %v5524, 0.0
        %v5717 = vmax.f32 %v5525, 0.0
        %v5718 = vmax.f32 %v5526, 0.0
        %v5719 = vmax.f32 %v5527, 0.0
        %v5720 = vmax.f32 %v5528, 0.0
        %v5721 = vmax.f32 %v5529, 0.0
        %v5722 = vmax.f32 %v5530, 0.0
        %v5723 = vmax.f32 %v5531, 0.0
        %v5724 = vmax.f32 %v5532, 0.0
        %v5725 = vmax.f32 %v5533, %v5536
        %v5726 = vrot.slane %v5725, 4
        %v5727 = vmax.f32 %v5725, %v5726
        %v5728 = vrot.slane %v5727, 2
        %v5729 = vmax.f32 %v5727, %v5728
        %v5730 = vrot.slane %v5729, 1
        %v5731 = vmax.f32 %v5729, %v5730
        %v5732 = vmax.f32 %v5534, %v5537
        %v5733 = vrot.slane %v5732, 4
        %v5734 = vmax.f32 %v5732, %v5733
        %v5735 = vrot.slane %v5734, 2
        %v5736 = vmax.f32 %v5734, %v5735
        %v5737 = vrot.slane %v5736, 1
        %v5738 = vmax.f32 %v5736, %v5737
        %v5739 = vmax.f32 %v5535, %v5538
        %v5740 = vrot.slane %v5739, 4
        %v5741 = vmax.f32 %v5739, %v5740
        %v5742 = vrot.slane %v5741, 2
        %v5743 = vmax.f32 %v5741, %v5742
        %v5744 = vrot.slane %v5743, 1
        %v5745 = vmax.f32 %v5743, %v5744
        %v5746 = vmax.f32 %v5539, %v5542
        %v5747 = vrot.slane %v5746, 4
        %v5748 = vmax.f32 %v5746, %v5747
        %v5749 = vrot.slane %v5748, 2
        %v5750 = vmax.f32 %v5748, %v5749
        %v5751 = vrot.slane %v5750, 1
        %v5752 = vmax.f32 %v5750, %v5751
        %v5753 = vmax.f32 %v5540, %v5543
        %v5754 = vrot.slane %v5753, 4
        %v5755 = vmax.f32 %v5753, %v5754
        %v5756 = vrot.slane %v5755, 2
        %v5757 = vmax.f32 %v5755, %v5756
        %v5758 = vrot.slane %v5757, 1
        %v5759 = vmax.f32 %v5757, %v5758
        %v5760 = vmax.f32 %v5541, %v5544
        %v5761 = vrot.slane %v5760, 4
        %v5762 = vmax.f32 %v5760, %v5761
        %v5763 = vrot.slane %v5762, 2
        %v5764 = vmax.f32 %v5762, %v5763
        %v5765 = vrot.slane %v5764, 1
        %v5766 = vmax.f32 %v5764, %v5765
        %v5767 = vmax.f32 %v5545, %v5548
        %v5768 = vrot.slane %v5767, 4
        %v5769 = vmax.f32 %v5767, %v5768
        %v5770 = vrot.slane %v5769, 2
        %v5771 = vmax.f32 %v5769, %v5770
        %v5772 = vrot.slane %v5771, 1
        %v5773 = vmax.f32 %v5771, %v5772
        %v5774 = vmax.f32 %v5546, %v5549
        %v5775 = vrot.slane %v5774, 4
        %v5776 = vmax.f32 %v5774, %v5775
        %v5777 = vrot.slane %v5776, 2
        %v5778 = vmax.f32 %v5776, %v5777
        %v5779 = vrot.slane %v5778, 1
        %v5780 = vmax.f32 %v5778, %v5779
        %v5781 = vmax.f32 %v5547, %v5550
        %v5782 = vrot.slane %v5781, 4
        %v5783 = vmax.f32 %v5781, %v5782
        %v5784 = vrot.slane %v5783, 2
        %v5785 = vmax.f32 %v5783, %v5784
        %v5786 = vrot.slane %v5785, 1
        %v5787 = vmax.f32 %v5785, %v5786
        %v5788 = vmax.f32 %v5551, %v5554
        %v5789 = vrot.slane %v5788, 4
        %v5790 = vmax.f32 %v5788, %v5789
        %v5791 = vrot.slane %v5790, 2
        %v5792 = vmax.f32 %v5790, %v5791
        %v5793 = vrot.slane %v5792, 1
        %v5794 = vmax.f32 %v5792, %v5793
        %v5795 = vmax.f32 %v5552, %v5555
        %v5796 = vrot.slane %v5795, 4
        %v5797 = vmax.f32 %v5795, %v5796
        %v5798 = vrot.slane %v5797, 2
        %v5799 = vmax.f32 %v5797, %v5798
        %v5800 = vrot.slane %v5799, 1
        %v5801 = vmax.f32 %v5799, %v5800
        %v5802 = vmax.f32 %v5553, %v5556
        %v5803 = vrot.slane %v5802, 4
        %v5804 = vmax.f32 %v5802, %v5803
        %v5805 = vrot.slane %v5804, 2
        %v5806 = vmax.f32 %v5804, %v5805
        %v5807 = vrot.slane %v5806, 1
        %v5808 = vmax.f32 %v5806, %v5807
        %v5809 = vmax.f32 %v5557, %v5560
        %v5810 = vrot.slane %v5809, 4
        %v5811 = vmax.f32 %v5809, %v5810
        %v5812 = vrot.slane %v5811, 2
        %v5813 = vmax.f32 %v5811, %v5812
        %v5814 = vrot.slane %v5813, 1
        %v5815 = vmax.f32 %v5813, %v5814
        %v5816 = vmax.f32 %v5558, %v5561
        %v5817 = vrot.slane %v5816, 4
        %v5818 = vmax.f32 %v5816, %v5817
        %v5819 = vrot.slane %v5818, 2
        %v5820 = vmax.f32 %v5818, %v5819
        %v5821 = vrot.slane %v5820, 1
        %v5822 = vmax.f32 %v5820, %v5821
        %v5823 = vmax.f32 %v5559, %v5562
        %v5824 = vrot.slane %v5823, 4
        %v5825 = vmax.f32 %v5823, %v5824
        %v5826 = vrot.slane %v5825, 2
        %v5827 = vmax.f32 %v5825, %v5826
        %v5828 = vrot.slane %v5827, 1
        %v5829 = vmax.f32 %v5827, %v5828
        %v5830 = vmax.f32 %v5563, %v5566
        %v5831 = vrot.slane %v5830, 4
        %v5832 = vmax.f32 %v5830, %v5831
        %v5833 = vrot.slane %v5832, 2
        %v5834 = vmax.f32 %v5832, %v5833
        %v5835 = vrot.slane %v5834, 1
        %v5836 = vmax.f32 %v5834, %v5835
        %v5837 = vmax.f32 %v5564, %v5567
        %v5838 = vrot.slane %v5837, 4
        %v5839 = vmax.f32 %v5837, %v5838
        %v5840 = vrot.slane %v5839, 2
        %v5841 = vmax.f32 %v5839, %v5840
        %v5842 = vrot.slane %v5841, 1
        %v5843 = vmax.f32 %v5841, %v5842
        %v5844 = vmax.f32 %v5565, %v5568
        %v5845 = vrot.slane %v5844, 4
        %v5846 = vmax.f32 %v5844, %v5845
        %v5847 = vrot.slane %v5846, 2
        %v5848 = vmax.f32 %v5846, %v5847
        %v5849 = vrot.slane %v5848, 1
        %v5850 = vmax.f32 %v5848, %v5849
        %v5851 = vmax.f32 %v5569, %v5572
        %v5852 = vrot.slane %v5851, 4
        %v5853 = vmax.f32 %v5851, %v5852
        %v5854 = vrot.slane %v5853, 2
        %v5855 = vmax.f32 %v5853, %v5854
        %v5856 = vrot.slane %v5855, 1
        %v5857 = vmax.f32 %v5855, %v5856
        %v5858 = vmax.f32 %v5570, %v5573
        %v5859 = vrot.slane %v5858, 4
        %v5860 = vmax.f32 %v5858, %v5859
        %v5861 = vrot.slane %v5860, 2
        %v5862 = vmax.f32 %v5860, %v5861
        %v5863 = vrot.slane %v5862, 1
        %v5864 = vmax.f32 %v5862, %v5863
        %v5865 = vmax.f32 %v5571, %v5574
        %v5866 = vrot.slane %v5865, 4
        %v5867 = vmax.f32 %v5865, %v5866
        %v5868 = vrot.slane %v5867, 2
        %v5869 = vmax.f32 %v5867, %v5868
        %v5870 = vrot.slane %v5869, 1
        %v5871 = vmax.f32 %v5869, %v5870
        %v5872 = vmax.f32 %v5575, %v5578
        %v5873 = vrot.slane %v5872, 4
        %v5874 = vmax.f32 %v5872, %v5873
        %v5875 = vrot.slane %v5874, 2
        %v5876 = vmax.f32 %v5874, %v5875
        %v5877 = vrot.slane %v5876, 1
        %v5878 = vmax.f32 %v5876, %v5877
        %v5879 = vmax.f32 %v5576, %v5579
        %v5880 = vrot.slane %v5879, 4
        %v5881 = vmax.f32 %v5879, %v5880
        %v5882 = vrot.slane %v5881, 2
        %v5883 = vmax.f32 %v5881, %v5882
        %v5884 = vrot.slane %v5883, 1
        %v5885 = vmax.f32 %v5883, %v5884
        %v5886 = vmax.f32 %v5577, %v5580
        %v5887 = vrot.slane %v5886, 4
        %v5888 = vmax.f32 %v5886, %v5887
        %v5889 = vrot.slane %v5888, 2
        %v5890 = vmax.f32 %v5888, %v5889
        %v5891 = vrot.slane %v5890, 1
        %v5892 = vmax.f32 %v5890, %v5891
        %v5893 = vmax.f32 %v5581, %v5584
        %v5894 = vrot.slane %v5893, 4
        %v5895 = vmax.f32 %v5893, %v5894
        %v5896 = vrot.slane %v5895, 2
        %v5897 = vmax.f32 %v5895, %v5896
        %v5898 = vrot.slane %v5897, 1
        %v5899 = vmax.f32 %v5897, %v5898
        %v5900 = vmax.f32 %v5582, %v5585
        %v5901 = vrot.slane %v5900, 4
        %v5902 = vmax.f32 %v5900, %v5901
        %v5903 = vrot.slane %v5902, 2
        %v5904 = vmax.f32 %v5902, %v5903
        %v5905 = vrot.slane %v5904, 1
        %v5906 = vmax.f32 %v5904, %v5905
        %v5907 = vmax.f32 %v5583, %v5586
        %v5908 = vrot.slane %v5907, 4
        %v5909 = vmax.f32 %v5907, %v5908
        %v5910 = vrot.slane %v5909, 2
        %v5911 = vmax.f32 %v5909, %v5910
        %v5912 = vrot.slane %v5911, 1
        %v5913 = vmax.f32 %v5911, %v5912
        %v5914 = vmax.f32 %v5587, %v5590
        %v5915 = vrot.slane %v5914, 4
        %v5916 = vmax.f32 %v5914, %v5915
        %v5917 = vrot.slane %v5916, 2
        %v5918 = vmax.f32 %v5916, %v5917
        %v5919 = vrot.slane %v5918, 1
        %v5920 = vmax.f32 %v5918, %v5919
        %v5921 = vmax.f32 %v5588, %v5591
        %v5922 = vrot.slane %v5921, 4
        %v5923 = vmax.f32 %v5921, %v5922
        %v5924 = vrot.slane %v5923, 2
        %v5925 = vmax.f32 %v5923, %v5924
        %v5926 = vrot.slane %v5925, 1
        %v5927 = vmax.f32 %v5925, %v5926
        %v5928 = vmax.f32 %v5589, %v5592
        %v5929 = vrot.slane %v5928, 4
        %v5930 = vmax.f32 %v5928, %v5929
        %v5931 = vrot.slane %v5930, 2
        %v5932 = vmax.f32 %v5930, %v5931
        %v5933 = vrot.slane %v5932, 1
        %v5934 = vmax.f32 %v5932, %v5933
        %v5935 = vmax.f32 %v5593, %v5596
        %v5936 = vrot.slane %v5935, 4
        %v5937 = vmax.f32 %v5935, %v5936
        %v5938 = vrot.slane %v5937, 2
        %v5939 = vmax.f32 %v5937, %v5938
        %v5940 = vrot.slane %v5939, 1
        %v5941 = vmax.f32 %v5939, %v5940
        %v5942 = vmax.f32 %v5594, %v5597
        %v5943 = vrot.slane %v5942, 4
        %v5944 = vmax.f32 %v5942, %v5943
        %v5945 = vrot.slane %v5944, 2
        %v5946 = vmax.f32 %v5944, %v5945
        %v5947 = vrot.slane %v5946, 1
        %v5948 = vmax.f32 %v5946, %v5947
        %v5949 = vmax.f32 %v5595, %v5598
        %v5950 = vrot.slane %v5949, 4
        %v5951 = vmax.f32 %v5949, %v5950
        %v5952 = vrot.slane %v5951, 2
        %v5953 = vmax.f32 %v5951, %v5952
        %v5954 = vrot.slane %v5953, 1
        %v5955 = vmax.f32 %v5953, %v5954
        %v5956 = vmax.f32 %v5599, %v5602
        %v5957 = vrot.slane %v5956, 4
        %v5958 = vmax.f32 %v5956, %v5957
        %v5959 = vrot.slane %v5958, 2
        %v5960 = vmax.f32 %v5958, %v5959
        %v5961 = vrot.slane %v5960, 1
        %v5962 = vmax.f32 %v5960, %v5961
        %v5963 = vmax.f32 %v5600, %v5603
        %v5964 = vrot.slane %v5963, 4
        %v5965 = vmax.f32 %v5963, %v5964
        %v5966 = vrot.slane %v5965, 2
        %v5967 = vmax.f32 %v5965, %v5966
        %v5968 = vrot.slane %v5967, 1
        %v5969 = vmax.f32 %v5967, %v5968
        %v5970 = vmax.f32 %v5601, %v5604
        %v5971 = vrot.slane %v5970, 4
        %v5972 = vmax.f32 %v5970, %v5971
        %v5973 = vrot.slane %v5972, 2
        %v5974 = vmax.f32 %v5972, %v5973
        %v5975 = vrot.slane %v5974, 1
        %v5976 = vmax.f32 %v5974, %v5975
        %v5977 = vmax.f32 %v5605, %v5608
        %v5978 = vrot.slane %v5977, 4
        %v5979 = vmax.f32 %v5977, %v5978
        %v5980 = vrot.slane %v5979, 2
        %v5981 = vmax.f32 %v5979, %v5980
        %v5982 = vrot.slane %v5981, 1
        %v5983 = vmax.f32 %v5981, %v5982
        %v5984 = vmax.f32 %v5606, %v5609
        %v5985 = vrot.slane %v5984, 4
        %v5986 = vmax.f32 %v5984, %v5985
        %v5987 = vrot.slane %v5986, 2
        %v5988 = vmax.f32 %v5986, %v5987
        %v5989 = vrot.slane %v5988, 1
        %v5990 = vmax.f32 %v5988, %v5989
        %v5991 = vmax.f32 %v5607, %v5610
        %v5992 = vrot.slane %v5991, 4
        %v5993 = vmax.f32 %v5991, %v5992
        %v5994 = vrot.slane %v5993, 2
        %v5995 = vmax.f32 %v5993, %v5994
        %v5996 = vrot.slane %v5995, 1
        %v5997 = vmax.f32 %v5995, %v5996
        %v5998 = vmax.f32 %v5611, %v5614
        %v5999 = vrot.slane %v5998, 4
        %v6000 = vmax.f32 %v5998, %v5999
        %v6001 = vrot.slane %v6000, 2
        %v6002 = vmax.f32 %v6000, %v6001
        %v6003 = vrot.slane %v6002, 1
        %v6004 = vmax.f32 %v6002, %v6003
        %v6005 = vmax.f32 %v5612, %v5615
        %v6006 = vrot.slane %v6005, 4
        %v6007 = vmax.f32 %v6005, %v6006
        %v6008 = vrot.slane %v6007, 2
        %v6009 = vmax.f32 %v6007, %v6008
        %v6010 = vrot.slane %v6009, 1
        %v6011 = vmax.f32 %v6009, %v6010
        %v6012 = vmax.f32 %v5613, %v5616
        %v6013 = vrot.slane %v6012, 4
        %v6014 = vmax.f32 %v6012, %v6013
        %v6015 = vrot.slane %v6014, 2
        %v6016 = vmax.f32 %v6014, %v6015
        %v6017 = vrot.slane %v6016, 1
        %v6018 = vmax.f32 %v6016, %v6017
        %v6019 = vmax.f32 %v5617, %v5620
        %v6020 = vrot.slane %v6019, 4
        %v6021 = vmax.f32 %v6019, %v6020
        %v6022 = vrot.slane %v6021, 2
        %v6023 = vmax.f32 %v6021, %v6022
        %v6024 = vrot.slane %v6023, 1
        %v6025 = vmax.f32 %v6023, %v6024
        %v6026 = vmax.f32 %v5618, %v5621
        %v6027 = vrot.slane %v6026, 4
        %v6028 = vmax.f32 %v6026, %v6027
        %v6029 = vrot.slane %v6028, 2
        %v6030 = vmax.f32 %v6028, %v6029
        %v6031 = vrot.slane %v6030, 1
        %v6032 = vmax.f32 %v6030, %v6031
        %v6033 = vmax.f32 %v5619, %v5622
        %v6034 = vrot.slane %v6033, 4
        %v6035 = vmax.f32 %v6033, %v6034
        %v6036 = vrot.slane %v6035, 2
        %v6037 = vmax.f32 %v6035, %v6036
        %v6038 = vrot.slane %v6037, 1
        %v6039 = vmax.f32 %v6037, %v6038
        %v6040 = vmax.f32 %v5623, %v5626
        %v6041 = vrot.slane %v6040, 4
        %v6042 = vmax.f32 %v6040, %v6041
        %v6043 = vrot.slane %v6042, 2
        %v6044 = vmax.f32 %v6042, %v6043
        %v6045 = vrot.slane %v6044, 1
        %v6046 = vmax.f32 %v6044, %v6045
        %v6047 = vmax.f32 %v5624, %v5627
        %v6048 = vrot.slane %v6047, 4
        %v6049 = vmax.f32 %v6047, %v6048
        %v6050 = vrot.slane %v6049, 2
        %v6051 = vmax.f32 %v6049, %v6050
        %v6052 = vrot.slane %v6051, 1
        %v6053 = vmax.f32 %v6051, %v6052
        %v6054 = vmax.f32 %v5625, %v5628
        %v6055 = vrot.slane %v6054, 4
        %v6056 = vmax.f32 %v6054, %v6055
        %v6057 = vrot.slane %v6056, 2
        %v6058 = vmax.f32 %v6056, %v6057
        %v6059 = vrot.slane %v6058, 1
        %v6060 = vmax.f32 %v6058, %v6059
        %v6061 = vmax.f32 %v5629, %v5632
        %v6062 = vrot.slane %v6061, 4
        %v6063 = vmax.f32 %v6061, %v6062
        %v6064 = vrot.slane %v6063, 2
        %v6065 = vmax.f32 %v6063, %v6064
        %v6066 = vrot.slane %v6065, 1
        %v6067 = vmax.f32 %v6065, %v6066
        %v6068 = vmax.f32 %v5630, %v5633
        %v6069 = vrot.slane %v6068, 4
        %v6070 = vmax.f32 %v6068, %v6069
        %v6071 = vrot.slane %v6070, 2
        %v6072 = vmax.f32 %v6070, %v6071
        %v6073 = vrot.slane %v6072, 1
        %v6074 = vmax.f32 %v6072, %v6073
        %v6075 = vmax.f32 %v5631, %v5634
        %v6076 = vrot.slane %v6075, 4
        %v6077 = vmax.f32 %v6075, %v6076
        %v6078 = vrot.slane %v6077, 2
        %v6079 = vmax.f32 %v6077, %v6078
        %v6080 = vrot.slane %v6079, 1
        %v6081 = vmax.f32 %v6079, %v6080
        %v6082 = vmax.f32 %v5635, %v5638
        %v6083 = vrot.slane %v6082, 4
        %v6084 = vmax.f32 %v6082, %v6083
        %v6085 = vrot.slane %v6084, 2
        %v6086 = vmax.f32 %v6084, %v6085
        %v6087 = vrot.slane %v6086, 1
        %v6088 = vmax.f32 %v6086, %v6087
        %v6089 = vmax.f32 %v5636, %v5639
        %v6090 = vrot.slane %v6089, 4
        %v6091 = vmax.f32 %v6089, %v6090
        %v6092 = vrot.slane %v6091, 2
        %v6093 = vmax.f32 %v6091, %v6092
        %v6094 = vrot.slane %v6093, 1
        %v6095 = vmax.f32 %v6093, %v6094
        %v6096 = vmax.f32 %v5637, %v5640
        %v6097 = vrot.slane %v6096, 4
        %v6098 = vmax.f32 %v6096, %v6097
        %v6099 = vrot.slane %v6098, 2
        %v6100 = vmax.f32 %v6098, %v6099
        %v6101 = vrot.slane %v6100, 1
        %v6102 = vmax.f32 %v6100, %v6101
        %v6103 = vmax.f32 %v5641, %v5644
        %v6104 = vrot.slane %v6103, 4
        %v6105 = vmax.f32 %v6103, %v6104
        %v6106 = vrot.slane %v6105, 2
        %v6107 = vmax.f32 %v6105, %v6106
        %v6108 = vrot.slane %v6107, 1
        %v6109 = vmax.f32 %v6107, %v6108
        %v6110 = vmax.f32 %v5642, %v5645
        %v6111 = vrot.slane %v6110, 4
        %v6112 = vmax.f32 %v6110, %v6111
        %v6113 = vrot.slane %v6112, 2
        %v6114 = vmax.f32 %v6112, %v6113
        %v6115 = vrot.slane %v6114, 1
        %v6116 = vmax.f32 %v6114, %v6115
        %v6117 = vmax.f32 %v5643, %v5646
        %v6118 = vrot.slane %v6117, 4
        %v6119 = vmax.f32 %v6117, %v6118
        %v6120 = vrot.slane %v6119, 2
        %v6121 = vmax.f32 %v6119, %v6120
        %v6122 = vrot.slane %v6121, 1
        %v6123 = vmax.f32 %v6121, %v6122
        %v6124 = vmax.f32 %v5647, %v5650
        %v6125 = vrot.slane %v6124, 4
        %v6126 = vmax.f32 %v6124, %v6125
        %v6127 = vrot.slane %v6126, 2
        %v6128 = vmax.f32 %v6126, %v6127
        %v6129 = vrot.slane %v6128, 1
        %v6130 = vmax.f32 %v6128, %v6129
        %v6131 = vmax.f32 %v5648, %v5651
        %v6132 = vrot.slane %v6131, 4
        %v6133 = vmax.f32 %v6131, %v6132
        %v6134 = vrot.slane %v6133, 2
        %v6135 = vmax.f32 %v6133, %v6134
        %v6136 = vrot.slane %v6135, 1
        %v6137 = vmax.f32 %v6135, %v6136
        %v6138 = vmax.f32 %v5649, %v5652
        %v6139 = vrot.slane %v6138, 4
        %v6140 = vmax.f32 %v6138, %v6139
        %v6141 = vrot.slane %v6140, 2
        %v6142 = vmax.f32 %v6140, %v6141
        %v6143 = vrot.slane %v6142, 1
        %v6144 = vmax.f32 %v6142, %v6143
        %v6145 = vmax.f32 %v5653, %v5656
        %v6146 = vrot.slane %v6145, 4
        %v6147 = vmax.f32 %v6145, %v6146
        %v6148 = vrot.slane %v6147, 2
        %v6149 = vmax.f32 %v6147, %v6148
        %v6150 = vrot.slane %v6149, 1
        %v6151 = vmax.f32 %v6149, %v6150
        %v6152 = vmax.f32 %v5654, %v5657
        %v6153 = vrot.slane %v6152, 4
        %v6154 = vmax.f32 %v6152, %v6153
        %v6155 = vrot.slane %v6154, 2
        %v6156 = vmax.f32 %v6154, %v6155
        %v6157 = vrot.slane %v6156, 1
        %v6158 = vmax.f32 %v6156, %v6157
        %v6159 = vmax.f32 %v5655, %v5658
        %v6160 = vrot.slane %v6159, 4
        %v6161 = vmax.f32 %v6159, %v6160
        %v6162 = vrot.slane %v6161, 2
        %v6163 = vmax.f32 %v6161, %v6162
        %v6164 = vrot.slane %v6163, 1
        %v6165 = vmax.f32 %v6163, %v6164
        %v6166 = vmax.f32 %v5659, %v5662
        %v6167 = vrot.slane %v6166, 4
        %v6168 = vmax.f32 %v6166, %v6167
        %v6169 = vrot.slane %v6168, 2
        %v6170 = vmax.f32 %v6168, %v6169
        %v6171 = vrot.slane %v6170, 1
        %v6172 = vmax.f32 %v6170, %v6171
        %v6173 = vmax.f32 %v5660, %v5663
        %v6174 = vrot.slane %v6173, 4
        %v6175 = vmax.f32 %v6173, %v6174
        %v6176 = vrot.slane %v6175, 2
        %v6177 = vmax.f32 %v6175, %v6176
        %v6178 = vrot.slane %v6177, 1
        %v6179 = vmax.f32 %v6177, %v6178
        %v6180 = vmax.f32 %v5661, %v5664
        %v6181 = vrot.slane %v6180, 4
        %v6182 = vmax.f32 %v6180, %v6181
        %v6183 = vrot.slane %v6182, 2
        %v6184 = vmax.f32 %v6182, %v6183
        %v6185 = vrot.slane %v6184, 1
        %v6186 = vmax.f32 %v6184, %v6185
        %v6187 = vmax.f32 %v5665, %v5668
        %v6188 = vrot.slane %v6187, 4
        %v6189 = vmax.f32 %v6187, %v6188
        %v6190 = vrot.slane %v6189, 2
        %v6191 = vmax.f32 %v6189, %v6190
        %v6192 = vrot.slane %v6191, 1
        %v6193 = vmax.f32 %v6191, %v6192
        %v6194 = vmax.f32 %v5666, %v5669
        %v6195 = vrot.slane %v6194, 4
        %v6196 = vmax.f32 %v6194, %v6195
        %v6197 = vrot.slane %v6196, 2
        %v6198 = vmax.f32 %v6196, %v6197
        %v6199 = vrot.slane %v6198, 1
        %v6200 = vmax.f32 %v6198, %v6199
        %v6201 = vmax.f32 %v5667, %v5670
        %v6202 = vrot.slane %v6201, 4
        %v6203 = vmax.f32 %v6201, %v6202
        %v6204 = vrot.slane %v6203, 2
        %v6205 = vmax.f32 %v6203, %v6204
        %v6206 = vrot.slane %v6205, 1
        %v6207 = vmax.f32 %v6205, %v6206
        %v6208 = vmax.f32 %v5671, %v5674
        %v6209 = vrot.slane %v6208, 4
        %v6210 = vmax.f32 %v6208, %v6209
        %v6211 = vrot.slane %v6210, 2
        %v6212 = vmax.f32 %v6210, %v6211
        %v6213 = vrot.slane %v6212, 1
        %v6214 = vmax.f32 %v6212, %v6213
        %v6215 = vmax.f32 %v5672, %v5675
        %v6216 = vrot.slane %v6215, 4
        %v6217 = vmax.f32 %v6215, %v6216
        %v6218 = vrot.slane %v6217, 2
        %v6219 = vmax.f32 %v6217, %v6218
        %v6220 = vrot.slane %v6219, 1
        %v6221 = vmax.f32 %v6219, %v6220
        %v6222 = vmax.f32 %v5673, %v5676
        %v6223 = vrot.slane %v6222, 4
        %v6224 = vmax.f32 %v6222, %v6223
        %v6225 = vrot.slane %v6224, 2
        %v6226 = vmax.f32 %v6224, %v6225
        %v6227 = vrot.slane %v6226, 1
        %v6228 = vmax.f32 %v6226, %v6227
        %v6229 = vmax.f32 %v5677, %v5680
        %v6230 = vrot.slane %v6229, 4
        %v6231 = vmax.f32 %v6229, %v6230
        %v6232 = vrot.slane %v6231, 2
        %v6233 = vmax.f32 %v6231, %v6232
        %v6234 = vrot.slane %v6233, 1
        %v6235 = vmax.f32 %v6233, %v6234
        %v6236 = vmax.f32 %v5678, %v5681
        %v6237 = vrot.slane %v6236, 4
        %v6238 = vmax.f32 %v6236, %v6237
        %v6239 = vrot.slane %v6238, 2
        %v6240 = vmax.f32 %v6238, %v6239
        %v6241 = vrot.slane %v6240, 1
        %v6242 = vmax.f32 %v6240, %v6241
        %v6243 = vmax.f32 %v5679, %v5682
        %v6244 = vrot.slane %v6243, 4
        %v6245 = vmax.f32 %v6243, %v6244
        %v6246 = vrot.slane %v6245, 2
        %v6247 = vmax.f32 %v6245, %v6246
        %v6248 = vrot.slane %v6247, 1
        %v6249 = vmax.f32 %v6247, %v6248
        %v6250 = vmax.f32 %v5683, %v5686
        %v6251 = vrot.slane %v6250, 4
        %v6252 = vmax.f32 %v6250, %v6251
        %v6253 = vrot.slane %v6252, 2
        %v6254 = vmax.f32 %v6252, %v6253
        %v6255 = vrot.slane %v6254, 1
        %v6256 = vmax.f32 %v6254, %v6255
        %v6257 = vmax.f32 %v5684, %v5687
        %v6258 = vrot.slane %v6257, 4
        %v6259 = vmax.f32 %v6257, %v6258
        %v6260 = vrot.slane %v6259, 2
        %v6261 = vmax.f32 %v6259, %v6260
        %v6262 = vrot.slane %v6261, 1
        %v6263 = vmax.f32 %v6261, %v6262
        %v6264 = vmax.f32 %v5685, %v5688
        %v6265 = vrot.slane %v6264, 4
        %v6266 = vmax.f32 %v6264, %v6265
        %v6267 = vrot.slane %v6266, 2
        %v6268 = vmax.f32 %v6266, %v6267
        %v6269 = vrot.slane %v6268, 1
        %v6270 = vmax.f32 %v6268, %v6269
        %v6271 = vmax.f32 %v5689, %v5692
        %v6272 = vrot.slane %v6271, 4
        %v6273 = vmax.f32 %v6271, %v6272
        %v6274 = vrot.slane %v6273, 2
        %v6275 = vmax.f32 %v6273, %v6274
        %v6276 = vrot.slane %v6275, 1
        %v6277 = vmax.f32 %v6275, %v6276
        %v6278 = vmax.f32 %v5690, %v5693
        %v6279 = vrot.slane %v6278, 4
        %v6280 = vmax.f32 %v6278, %v6279
        %v6281 = vrot.slane %v6280, 2
        %v6282 = vmax.f32 %v6280, %v6281
        %v6283 = vrot.slane %v6282, 1
        %v6284 = vmax.f32 %v6282, %v6283
        %v6285 = vmax.f32 %v5691, %v5694
        %v6286 = vrot.slane %v6285, 4
        %v6287 = vmax.f32 %v6285, %v6286
        %v6288 = vrot.slane %v6287, 2
        %v6289 = vmax.f32 %v6287, %v6288
        %v6290 = vrot.slane %v6289, 1
        %v6291 = vmax.f32 %v6289, %v6290
        %v6292 = vmax.f32 %v5695, %v5698
        %v6293 = vrot.slane %v6292, 4
        %v6294 = vmax.f32 %v6292, %v6293
        %v6295 = vrot.slane %v6294, 2
        %v6296 = vmax.f32 %v6294, %v6295
        %v6297 = vrot.slane %v6296, 1
        %v6298 = vmax.f32 %v6296, %v6297
        %v6299 = vmax.f32 %v5696, %v5699
        %v6300 = vrot.slane %v6299, 4
        %v6301 = vmax.f32 %v6299, %v6300
        %v6302 = vrot.slane %v6301, 2
        %v6303 = vmax.f32 %v6301, %v6302
        %v6304 = vrot.slane %v6303, 1
        %v6305 = vmax.f32 %v6303, %v6304
        %v6306 = vmax.f32 %v5697, %v5700
        %v6307 = vrot.slane %v6306, 4
        %v6308 = vmax.f32 %v6306, %v6307
        %v6309 = vrot.slane %v6308, 2
        %v6310 = vmax.f32 %v6308, %v6309
        %v6311 = vrot.slane %v6310, 1
        %v6312 = vmax.f32 %v6310, %v6311
        %v6313 = vmax.f32 %v5701, %v5704
        %v6314 = vrot.slane %v6313, 4
        %v6315 = vmax.f32 %v6313, %v6314
        %v6316 = vrot.slane %v6315, 2
        %v6317 = vmax.f32 %v6315, %v6316
        %v6318 = vrot.slane %v6317, 1
        %v6319 = vmax.f32 %v6317, %v6318
        %v6320 = vmax.f32 %v5702, %v5705
        %v6321 = vrot.slane %v6320, 4
        %v6322 = vmax.f32 %v6320, %v6321
        %v6323 = vrot.slane %v6322, 2
        %v6324 = vmax.f32 %v6322, %v6323
        %v6325 = vrot.slane %v6324, 1
        %v6326 = vmax.f32 %v6324, %v6325
        %v6327 = vmax.f32 %v5703, %v5706
        %v6328 = vrot.slane %v6327, 4
        %v6329 = vmax.f32 %v6327, %v6328
        %v6330 = vrot.slane %v6329, 2
        %v6331 = vmax.f32 %v6329, %v6330
        %v6332 = vrot.slane %v6331, 1
        %v6333 = vmax.f32 %v6331, %v6332
        %v6334 = vmax.f32 %v5707, %v5710
        %v6335 = vrot.slane %v6334, 4
        %v6336 = vmax.f32 %v6334, %v6335
        %v6337 = vrot.slane %v6336, 2
        %v6338 = vmax.f32 %v6336, %v6337
        %v6339 = vrot.slane %v6338, 1
        %v6340 = vmax.f32 %v6338, %v6339
        %v6341 = vmax.f32 %v5708, %v5711
        %v6342 = vrot.slane %v6341, 4
        %v6343 = vmax.f32 %v6341, %v6342
        %v6344 = vrot.slane %v6343, 2
        %v6345 = vmax.f32 %v6343, %v6344
        %v6346 = vrot.slane %v6345, 1
        %v6347 = vmax.f32 %v6345, %v6346
        %v6348 = vmax.f32 %v5709, %v5712
        %v6349 = vrot.slane %v6348, 4
        %v6350 = vmax.f32 %v6348, %v6349
        %v6351 = vrot.slane %v6350, 2
        %v6352 = vmax.f32 %v6350, %v6351
        %v6353 = vrot.slane %v6352, 1
        %v6354 = vmax.f32 %v6352, %v6353
        %v6355 = vmax.f32 %v5713, %v5716
        %v6356 = vrot.slane %v6355, 4
        %v6357 = vmax.f32 %v6355, %v6356
        %v6358 = vrot.slane %v6357, 2
        %v6359 = vmax.f32 %v6357, %v6358
        %v6360 = vrot.slane %v6359, 1
        %v6361 = vmax.f32 %v6359, %v6360
        %v6362 = vmax.f32 %v5714, %v5717
        %v6363 = vrot.slane %v6362, 4
        %v6364 = vmax.f32 %v6362, %v6363
        %v6365 = vrot.slane %v6364, 2
        %v6366 = vmax.f32 %v6364, %v6365
        %v6367 = vrot.slane %v6366, 1
        %v6368 = vmax.f32 %v6366, %v6367
        %v6369 = vmax.f32 %v5715, %v5718
        %v6370 = vrot.slane %v6369, 4
        %v6371 = vmax.f32 %v6369, %v6370
        %v6372 = vrot.slane %v6371, 2
        %v6373 = vmax.f32 %v6371, %v6372
        %v6374 = vrot.slane %v6373, 1
        %v6375 = vmax.f32 %v6373, %v6374
        %v6376 = vmax.f32 %v5719, %v5722
        %v6377 = vrot.slane %v6376, 4
        %v6378 = vmax.f32 %v6376, %v6377
        %v6379 = vrot.slane %v6378, 2
        %v6380 = vmax.f32 %v6378, %v6379
        %v6381 = vrot.slane %v6380, 1
        %v6382 = vmax.f32 %v6380, %v6381
        %v6383 = vmax.f32 %v5720, %v5723
        %v6384 = vrot.slane %v6383, 4
        %v6385 = vmax.f32 %v6383, %v6384
        %v6386 = vrot.slane %v6385, 2
        %v6387 = vmax.f32 %v6385, %v6386
        %v6388 = vrot.slane %v6387, 1
        %v6389 = vmax.f32 %v6387, %v6388
        %v6390 = vmax.f32 %v5721, %v5724
        %v6391 = vrot.slane %v6390, 4
        %v6392 = vmax.f32 %v6390, %v6391
        %v6393 = vrot.slane %v6392, 2
        %v6394 = vmax.f32 %v6392, %v6393
        %v6395 = vrot.slane %v6394, 1
        %v6396 = vmax.f32 %v6394, %v6395
        %vm6493 = vcmask 1041409
        %v6494 = vsel %vm6493, %v5752, %v5731
        %vm6495 = vcmask 1042434
        %v6496 = vsel %vm6495, %v5773, %v6494
        %vm6497 = vcmask 1043459
        %v6498 = vsel %vm6497, %v5794, %v6496
        %vm6499 = vcmask 1044484
        %v6500 = vsel %vm6499, %v5815, %v6498
        %vm6501 = vcmask 1045509
        %v6502 = vsel %vm6501, %v5836, %v6500
        %vm6503 = vcmask 1046534
        %v6504 = vsel %vm6503, %v5857, %v6502
        %vm6505 = vcmask 1047559
        %v6506 = vsel %vm6505, %v5878, %v6504
        %v6507 = vsel %vm6493, %v5759, %v5738
        %v6508 = vsel %vm6495, %v5780, %v6507
        %v6509 = vsel %vm6497, %v5801, %v6508
        %v6510 = vsel %vm6499, %v5822, %v6509
        %v6511 = vsel %vm6501, %v5843, %v6510
        %v6512 = vsel %vm6503, %v5864, %v6511
        %v6513 = vsel %vm6505, %v5885, %v6512
        %v6514 = vsel %vm6493, %v5766, %v5745
        %v6515 = vsel %vm6495, %v5787, %v6514
        %v6516 = vsel %vm6497, %v5808, %v6515
        %v6517 = vsel %vm6499, %v5829, %v6516
        %v6518 = vsel %vm6501, %v5850, %v6517
        %v6519 = vsel %vm6503, %v5871, %v6518
        %v6520 = vsel %vm6505, %v5892, %v6519
        %v6521 = vsel %vm6493, %v5920, %v5899
        %v6522 = vsel %vm6495, %v5941, %v6521
        %v6523 = vsel %vm6497, %v5962, %v6522
        %v6524 = vsel %vm6499, %v5983, %v6523
        %v6525 = vsel %vm6501, %v6004, %v6524
        %v6526 = vsel %vm6503, %v6025, %v6525
        %v6527 = vsel %vm6505, %v6046, %v6526
        %v6528 = vsel %vm6493, %v5927, %v5906
        %v6529 = vsel %vm6495, %v5948, %v6528
        %v6530 = vsel %vm6497, %v5969, %v6529
        %v6531 = vsel %vm6499, %v5990, %v6530
        %v6532 = vsel %vm6501, %v6011, %v6531
        %v6533 = vsel %vm6503, %v6032, %v6532
        %v6534 = vsel %vm6505, %v6053, %v6533
        %v6535 = vsel %vm6493, %v5934, %v5913
        %v6536 = vsel %vm6495, %v5955, %v6535
        %v6537 = vsel %vm6497, %v5976, %v6536
        %v6538 = vsel %vm6499, %v5997, %v6537
        %v6539 = vsel %vm6501, %v6018, %v6538
        %v6540 = vsel %vm6503, %v6039, %v6539
        %v6541 = vsel %vm6505, %v6060, %v6540
        %v6542 = vsel %vm6493, %v6088, %v6067
        %v6543 = vsel %vm6495, %v6109, %v6542
        %v6544 = vsel %vm6497, %v6130, %v6543
        %v6545 = vsel %vm6499, %v6151, %v6544
        %v6546 = vsel %vm6501, %v6172, %v6545
        %v6547 = vsel %vm6503, %v6193, %v6546
        %v6548 = vsel %vm6505, %v6214, %v6547
        %v6549 = vsel %vm6493, %v6095, %v6074
        %v6550 = vsel %vm6495, %v6116, %v6549
        %v6551 = vsel %vm6497, %v6137, %v6550
        %v6552 = vsel %vm6499, %v6158, %v6551
        %v6553 = vsel %vm6501, %v6179, %v6552
        %v6554 = vsel %vm6503, %v6200, %v6553
        %v6555 = vsel %vm6505, %v6221, %v6554
        %v6556 = vsel %vm6493, %v6102, %v6081
        %v6557 = vsel %vm6495, %v6123, %v6556
        %v6558 = vsel %vm6497, %v6144, %v6557
        %v6559 = vsel %vm6499, %v6165, %v6558
        %v6560 = vsel %vm6501, %v6186, %v6559
        %v6561 = vsel %vm6503, %v6207, %v6560
        %v6562 = vsel %vm6505, %v6228, %v6561
        %v6563 = vsel %vm6493, %v6256, %v6235
        %v6564 = vsel %vm6495, %v6277, %v6563
        %v6565 = vsel %vm6497, %v6298, %v6564
        %v6566 = vsel %vm6499, %v6319, %v6565
        %v6567 = vsel %vm6501, %v6340, %v6566
        %v6568 = vsel %vm6503, %v6361, %v6567
        %v6569 = vsel %vm6505, %v6382, %v6568
        %v6570 = vsel %vm6493, %v6263, %v6242
        %v6571 = vsel %vm6495, %v6284, %v6570
        %v6572 = vsel %vm6497, %v6305, %v6571
        %v6573 = vsel %vm6499, %v6326, %v6572
        %v6574 = vsel %vm6501, %v6347, %v6573
        %v6575 = vsel %vm6503, %v6368, %v6574
        %v6576 = vsel %vm6505, %v6389, %v6575
        %v6577 = vsel %vm6493, %v6270, %v6249
        %v6578 = vsel %vm6495, %v6291, %v6577
        %v6579 = vsel %vm6497, %v6312, %v6578
        %v6580 = vsel %vm6499, %v6333, %v6579
        %v6581 = vsel %vm6501, %v6354, %v6580
        %v6582 = vsel %vm6503, %v6375, %v6581
        %v6583 = vsel %vm6505, %v6396, %v6582
        %6596 = vst [vmem:[%s256] sm:$0xff] %v6506
        %6597 = vst [vmem:[%s256 + $0x8] sm:$0xff] %v6513
        %6598 = vst [vmem:[%s256 + $0x10] sm:$0xff] %v6520
        %6599 = vst [vmem:[%s256 + $0x18] sm:$0xff] %v6527
        %6600 = vst [vmem:[%s256 + $0x20] sm:$0xff] %v6534
        %6601 = vst [vmem:[%s256 + $0x28] sm:$0xff] %v6541
        %6602 = vst [vmem:[%s256 + $0x30] sm:$0xff] %v6548
        %6603 = vst [vmem:[%s256 + $0x38] sm:$0xff] %v6555
        %6604 = vst [vmem:[%s256 + $0x40] sm:$0xff] %v6562
        %6605 = vst [vmem:[%s256 + $0x48] sm:$0xff] %v6569
        %6606 = vst [vmem:[%s256 + $0x50] sm:$0xff] %v6576
        %6607 = vst [vmem:[%s256 + $0x58] sm:$0xff] %v6583
        %v6608 = vpack.c.bf16 %v5731, %v5731
        %v6609 = vpack.c.bf16 %v5738, %v5738
        %v6610 = vpack.c.bf16 %v5745, %v5745
        %v6611 = vpack.c.bf16 %v5752, %v5752
        %v6612 = vpack.c.bf16 %v5759, %v5759
        %v6613 = vpack.c.bf16 %v5766, %v5766
        %v6614 = vpack.c.bf16 %v5773, %v5773
        %v6615 = vpack.c.bf16 %v5780, %v5780
        %v6616 = vpack.c.bf16 %v5787, %v5787
        %v6617 = vpack.c.bf16 %v5794, %v5794
        %v6618 = vpack.c.bf16 %v5801, %v5801
        %v6619 = vpack.c.bf16 %v5808, %v5808
        %v6620 = vpack.c.bf16 %v5815, %v5815
        %v6621 = vpack.c.bf16 %v5822, %v5822
        %v6622 = vpack.c.bf16 %v5829, %v5829
        %v6623 = vpack.c.bf16 %v5836, %v5836
        %v6624 = vpack.c.bf16 %v5843, %v5843
        %v6625 = vpack.c.bf16 %v5850, %v5850
        %v6626 = vpack.c.bf16 %v5857, %v5857
        %v6627 = vpack.c.bf16 %v5864, %v5864
        %v6628 = vpack.c.bf16 %v5871, %v5871
        %v6629 = vpack.c.bf16 %v5878, %v5878
        %v6630 = vpack.c.bf16 %v5885, %v5885
        %v6631 = vpack.c.bf16 %v5892, %v5892
        %v6632 = vpack.c.bf16 %v5899, %v5899
        %v6633 = vpack.c.bf16 %v5906, %v5906
        %v6634 = vpack.c.bf16 %v5913, %v5913
        %v6635 = vpack.c.bf16 %v5920, %v5920
        %v6636 = vpack.c.bf16 %v5927, %v5927
        %v6637 = vpack.c.bf16 %v5934, %v5934
        %v6638 = vpack.c.bf16 %v5941, %v5941
        %v6639 = vpack.c.bf16 %v5948, %v5948
        %v6640 = vpack.c.bf16 %v5955, %v5955
        %v6641 = vpack.c.bf16 %v5962, %v5962
        %v6642 = vpack.c.bf16 %v5969, %v5969
        %v6643 = vpack.c.bf16 %v5976, %v5976
        %v6644 = vpack.c.bf16 %v5983, %v5983
        %v6645 = vpack.c.bf16 %v5990, %v5990
        %v6646 = vpack.c.bf16 %v5997, %v5997
        %v6647 = vpack.c.bf16 %v6004, %v6004
        %v6648 = vpack.c.bf16 %v6011, %v6011
        %v6649 = vpack.c.bf16 %v6018, %v6018
        %v6650 = vpack.c.bf16 %v6025, %v6025
        %v6651 = vpack.c.bf16 %v6032, %v6032
        %v6652 = vpack.c.bf16 %v6039, %v6039
        %v6653 = vpack.c.bf16 %v6046, %v6046
        %v6654 = vpack.c.bf16 %v6053, %v6053
        %v6655 = vpack.c.bf16 %v6060, %v6060
        %v6656 = vpack.c.bf16 %v6067, %v6067
        %v6657 = vpack.c.bf16 %v6074, %v6074
        %v6658 = vpack.c.bf16 %v6081, %v6081
        %v6659 = vpack.c.bf16 %v6088, %v6088
        %v6660 = vpack.c.bf16 %v6095, %v6095
        %v6661 = vpack.c.bf16 %v6102, %v6102
        %v6662 = vpack.c.bf16 %v6109, %v6109
        %v6663 = vpack.c.bf16 %v6116, %v6116
        %v6664 = vpack.c.bf16 %v6123, %v6123
        %v6665 = vpack.c.bf16 %v6130, %v6130
        %v6666 = vpack.c.bf16 %v6137, %v6137
        %v6667 = vpack.c.bf16 %v6144, %v6144
        %v6668 = vpack.c.bf16 %v6151, %v6151
        %v6669 = vpack.c.bf16 %v6158, %v6158
        %v6670 = vpack.c.bf16 %v6165, %v6165
        %v6671 = vpack.c.bf16 %v6172, %v6172
        %v6672 = vpack.c.bf16 %v6179, %v6179
        %v6673 = vpack.c.bf16 %v6186, %v6186
        %v6674 = vpack.c.bf16 %v6193, %v6193
        %v6675 = vpack.c.bf16 %v6200, %v6200
        %v6676 = vpack.c.bf16 %v6207, %v6207
        %v6677 = vpack.c.bf16 %v6214, %v6214
        %v6678 = vpack.c.bf16 %v6221, %v6221
        %v6679 = vpack.c.bf16 %v6228, %v6228
        %v6680 = vpack.c.bf16 %v6235, %v6235
        %v6681 = vpack.c.bf16 %v6242, %v6242
        %v6682 = vpack.c.bf16 %v6249, %v6249
        %v6683 = vpack.c.bf16 %v6256, %v6256
        %v6684 = vpack.c.bf16 %v6263, %v6263
        %v6685 = vpack.c.bf16 %v6270, %v6270
        %v6686 = vpack.c.bf16 %v6277, %v6277
        %v6687 = vpack.c.bf16 %v6284, %v6284
        %v6688 = vpack.c.bf16 %v6291, %v6291
        %v6689 = vpack.c.bf16 %v6298, %v6298
        %v6690 = vpack.c.bf16 %v6305, %v6305
        %v6691 = vpack.c.bf16 %v6312, %v6312
        %v6692 = vpack.c.bf16 %v6319, %v6319
        %v6693 = vpack.c.bf16 %v6326, %v6326
        %v6694 = vpack.c.bf16 %v6333, %v6333
        %v6695 = vpack.c.bf16 %v6340, %v6340
        %v6696 = vpack.c.bf16 %v6347, %v6347
        %v6697 = vpack.c.bf16 %v6354, %v6354
        %v6698 = vpack.c.bf16 %v6361, %v6361
        %v6699 = vpack.c.bf16 %v6368, %v6368
        %v6700 = vpack.c.bf16 %v6375, %v6375
        %v6701 = vpack.c.bf16 %v6382, %v6382
        %v6702 = vpack.c.bf16 %v6389, %v6389
        %v6703 = vpack.c.bf16 %v6396, %v6396
        %v6704 = vld [vmem:[%s3] sm:$0xf]
        %v6705 = vld [vmem:[%s3 + $0x4] sm:$0xf]
        %v6706 = vld [vmem:[%s3 + $0x8] sm:$0xf]
        %v6707 = vld [vmem:[%s3 + $0xc] sm:$0xf]
        %v6708 = vld [vmem:[%s3 + $0x10] sm:$0xf]
        %v6709 = vld [vmem:[%s3 + $0x14] sm:$0xf]
        %v6710 = vld [vmem:[%s3 + $0x18] sm:$0xf]
        %v6711 = vld [vmem:[%s3 + $0x1c] sm:$0xf]
        %v6712 = vld [vmem:[%s3 + $0x20] sm:$0xf]
        %v6713 = vld [vmem:[%s3 + $0x24] sm:$0xf]
        %v6714 = vld [vmem:[%s3 + $0x28] sm:$0xf]
        %v6715 = vld [vmem:[%s3 + $0x2c] sm:$0xf]
        %v6716 = vld [vmem:[%s3 + $0x30] sm:$0xf]
        %v6717 = vld [vmem:[%s3 + $0x34] sm:$0xf]
        %v6718 = vld [vmem:[%s3 + $0x38] sm:$0xf]
        %v6719 = vld [vmem:[%s3 + $0x3c] sm:$0xf]
        %v6720 = vld [vmem:[%s3 + $0x40] sm:$0xf]
        %v6721 = vld [vmem:[%s3 + $0x44] sm:$0xf]
        %v6722 = vld [vmem:[%s3 + $0x48] sm:$0xf]
        %v6723 = vld [vmem:[%s3 + $0x4c] sm:$0xf]
        %v6724 = vld [vmem:[%s3 + $0x50] sm:$0xf]
        %v6725 = vld [vmem:[%s3 + $0x54] sm:$0xf]
        %v6726 = vld [vmem:[%s3 + $0x58] sm:$0xf]
        %v6727 = vld [vmem:[%s3 + $0x5c] sm:$0xf]
        %v6728 = vld [vmem:[%s3 + $0x60] sm:$0xf]
        %v6729 = vld [vmem:[%s3 + $0x64] sm:$0xf]
        %v6730 = vld [vmem:[%s3 + $0x68] sm:$0xf]
        %v6731 = vld [vmem:[%s3 + $0x6c] sm:$0xf]
        %v6732 = vld [vmem:[%s3 + $0x70] sm:$0xf]
        %v6733 = vld [vmem:[%s3 + $0x74] sm:$0xf]
        %v6734 = vld [vmem:[%s3 + $0x78] sm:$0xf]
        %v6735 = vld [vmem:[%s3 + $0x7c] sm:$0xf]
        %v6736 = vld [vmem:[%s3 + $0x80] sm:$0xf]
        %v6737 = vld [vmem:[%s3 + $0x84] sm:$0xf]
        %v6738 = vld [vmem:[%s3 + $0x88] sm:$0xf]
        %v6739 = vld [vmem:[%s3 + $0x8c] sm:$0xf]
        %v6740 = vld [vmem:[%s3 + $0x90] sm:$0xf]
        %v6741 = vld [vmem:[%s3 + $0x94] sm:$0xf]
        %v6742 = vld [vmem:[%s3 + $0x98] sm:$0xf]
        %v6743 = vld [vmem:[%s3 + $0x9c] sm:$0xf]
        %v6744 = vld [vmem:[%s3 + $0xa0] sm:$0xf]
        %v6745 = vld [vmem:[%s3 + $0xa4] sm:$0xf]
        %v6746 = vld [vmem:[%s3 + $0xa8] sm:$0xf]
        %v6747 = vld [vmem:[%s3 + $0xac] sm:$0xf]
        %v6748 = vld [vmem:[%s3 + $0xb0] sm:$0xf]
        %v6749 = vld [vmem:[%s3 + $0xb4] sm:$0xf]
        %v6750 = vld [vmem:[%s3 + $0xb8] sm:$0xf]
        %v6751 = vld [vmem:[%s3 + $0xbc] sm:$0xf]
        %v6752 = vld [vmem:[%s4] sm:$0x1]
        %v6754 = vlaneseq
        %v6755 = vshrl.u32 %v6754, 7
        %v6756 = vsub.s32 0, %v6755
        %v6757 = vrot.slane %v6752, %v6756
        %v6855 = vunpack.c.l.b16 %v6608
        %v6856 = vunpack.c.l.b16 %v6609
        %v6857 = vunpack.c.l.b16 %v6610
        %v6858 = vunpack.c.l.b16 %v6611
        %v6859 = vunpack.c.l.b16 %v6612
        %v6860 = vunpack.c.l.b16 %v6613
        %v6861 = vunpack.c.l.b16 %v6614
        %v6862 = vunpack.c.l.b16 %v6615
        %v6863 = vunpack.c.l.b16 %v6616
        %v6864 = vunpack.c.l.b16 %v6617
        %v6865 = vunpack.c.l.b16 %v6618
        %v6866 = vunpack.c.l.b16 %v6619
        %v6867 = vunpack.c.l.b16 %v6620
        %v6868 = vunpack.c.l.b16 %v6621
        %v6869 = vunpack.c.l.b16 %v6622
        %v6870 = vunpack.c.l.b16 %v6623
        %v6871 = vunpack.c.l.b16 %v6624
        %v6872 = vunpack.c.l.b16 %v6625
        %v6873 = vunpack.c.l.b16 %v6626
        %v6874 = vunpack.c.l.b16 %v6627
        %v6875 = vunpack.c.l.b16 %v6628
        %v6876 = vunpack.c.l.b16 %v6629
        %v6877 = vunpack.c.l.b16 %v6630
        %v6878 = vunpack.c.l.b16 %v6631
        %v6879 = vunpack.c.l.b16 %v6632
        %v6880 = vunpack.c.l.b16 %v6633
        %v6881 = vunpack.c.l.b16 %v6634
        %v6882 = vunpack.c.l.b16 %v6635
        %v6883 = vunpack.c.l.b16 %v6636
        %v6884 = vunpack.c.l.b16 %v6637
        %v6885 = vunpack.c.l.b16 %v6638
        %v6886 = vunpack.c.l.b16 %v6639
        %v6887 = vunpack.c.l.b16 %v6640
        %v6888 = vunpack.c.l.b16 %v6641
        %v6889 = vunpack.c.l.b16 %v6642
        %v6890 = vunpack.c.l.b16 %v6643
        %v6891 = vunpack.c.l.b16 %v6644
        %v6892 = vunpack.c.l.b16 %v6645
        %v6893 = vunpack.c.l.b16 %v6646
        %v6894 = vunpack.c.l.b16 %v6647
        %v6895 = vunpack.c.l.b16 %v6648
        %v6896 = vunpack.c.l.b16 %v6649
        %v6897 = vunpack.c.l.b16 %v6650
        %v6898 = vunpack.c.l.b16 %v6651
        %v6899 = vunpack.c.l.b16 %v6652
        %v6900 = vunpack.c.l.b16 %v6653
        %v6901 = vunpack.c.l.b16 %v6654
        %v6902 = vunpack.c.l.b16 %v6655
        %v6903 = vunpack.c.l.b16 %v6656
        %v6904 = vunpack.c.l.b16 %v6657
        %v6905 = vunpack.c.l.b16 %v6658
        %v6906 = vunpack.c.l.b16 %v6659
        %v6907 = vunpack.c.l.b16 %v6660
        %v6908 = vunpack.c.l.b16 %v6661
        %v6909 = vunpack.c.l.b16 %v6662
        %v6910 = vunpack.c.l.b16 %v6663
        %v6911 = vunpack.c.l.b16 %v6664
        %v6912 = vunpack.c.l.b16 %v6665
        %v6913 = vunpack.c.l.b16 %v6666
        %v6914 = vunpack.c.l.b16 %v6667
        %v6915 = vunpack.c.l.b16 %v6668
        %v6916 = vunpack.c.l.b16 %v6669
        %v6917 = vunpack.c.l.b16 %v6670
        %v6918 = vunpack.c.l.b16 %v6671
        %v6919 = vunpack.c.l.b16 %v6672
        %v6920 = vunpack.c.l.b16 %v6673
        %v6921 = vunpack.c.l.b16 %v6674
        %v6922 = vunpack.c.l.b16 %v6675
        %v6923 = vunpack.c.l.b16 %v6676
        %v6924 = vunpack.c.l.b16 %v6677
        %v6925 = vunpack.c.l.b16 %v6678
        %v6926 = vunpack.c.l.b16 %v6679
        %v6927 = vunpack.c.l.b16 %v6680
        %v6928 = vunpack.c.l.b16 %v6681
        %v6929 = vunpack.c.l.b16 %v6682
        %v6930 = vunpack.c.l.b16 %v6683
        %v6931 = vunpack.c.l.b16 %v6684
        %v6932 = vunpack.c.l.b16 %v6685
        %v6933 = vunpack.c.l.b16 %v6686
        %v6934 = vunpack.c.l.b16 %v6687
        %v6935 = vunpack.c.l.b16 %v6688
        %v6936 = vunpack.c.l.b16 %v6689
        %v6937 = vunpack.c.l.b16 %v6690
        %v6938 = vunpack.c.l.b16 %v6691
        %v6939 = vunpack.c.l.b16 %v6692
        %v6940 = vunpack.c.l.b16 %v6693
        %v6941 = vunpack.c.l.b16 %v6694
        %v6942 = vunpack.c.l.b16 %v6695
        %v6943 = vunpack.c.l.b16 %v6696
        %v6944 = vunpack.c.l.b16 %v6697
        %v6945 = vunpack.c.l.b16 %v6698
        %v6946 = vunpack.c.l.b16 %v6699
        %v6947 = vunpack.c.l.b16 %v6700
        %v6948 = vunpack.c.l.b16 %v6701
        %v6949 = vunpack.c.l.b16 %v6702
        %v6950 = vunpack.c.l.b16 %v6703
        %v6951 = vsel %vm6493, %v6858, %v6855
        %v6952 = vsel %vm6495, %v6861, %v6951
        %v6953 = vsel %vm6497, %v6864, %v6952
        %v6954 = vsel %vm6499, %v6867, %v6953
        %v6955 = vsel %vm6501, %v6870, %v6954
        %v6956 = vsel %vm6503, %v6873, %v6955
        %v6957 = vsel %vm6505, %v6876, %v6956
        %v6958 = vsel %vm6493, %v6859, %v6856
        %v6959 = vsel %vm6495, %v6862, %v6958
        %v6960 = vsel %vm6497, %v6865, %v6959
        %v6961 = vsel %vm6499, %v6868, %v6960
        %v6962 = vsel %vm6501, %v6871, %v6961
        %v6963 = vsel %vm6503, %v6874, %v6962
        %v6964 = vsel %vm6505, %v6877, %v6963
        %v6965 = vsel %vm6493, %v6860, %v6857
        %v6966 = vsel %vm6495, %v6863, %v6965
        %v6967 = vsel %vm6497, %v6866, %v6966
        %v6968 = vsel %vm6499, %v6869, %v6967
        %v6969 = vsel %vm6501, %v6872, %v6968
        %v6970 = vsel %vm6503, %v6875, %v6969
        %v6971 = vsel %vm6505, %v6878, %v6970
        %v6972 = vsel %vm6493, %v6882, %v6879
        %v6973 = vsel %vm6495, %v6885, %v6972
        %v6974 = vsel %vm6497, %v6888, %v6973
        %v6975 = vsel %vm6499, %v6891, %v6974
        %v6976 = vsel %vm6501, %v6894, %v6975
        %v6977 = vsel %vm6503, %v6897, %v6976
        %v6978 = vsel %vm6505, %v6900, %v6977
        %v6979 = vsel %vm6493, %v6883, %v6880
        %v6980 = vsel %vm6495, %v6886, %v6979
        %v6981 = vsel %vm6497, %v6889, %v6980
        %v6982 = vsel %vm6499, %v6892, %v6981
        %v6983 = vsel %vm6501, %v6895, %v6982
        %v6984 = vsel %vm6503, %v6898, %v6983
        %v6985 = vsel %vm6505, %v6901, %v6984
        %v6986 = vsel %vm6493, %v6884, %v6881
        %v6987 = vsel %vm6495, %v6887, %v6986
        %v6988 = vsel %vm6497, %v6890, %v6987
        %v6989 = vsel %vm6499, %v6893, %v6988
        %v6990 = vsel %vm6501, %v6896, %v6989
        %v6991 = vsel %vm6503, %v6899, %v6990
        %v6992 = vsel %vm6505, %v6902, %v6991
        %v6993 = vsel %vm6493, %v6906, %v6903
        %v6994 = vsel %vm6495, %v6909, %v6993
        %v6995 = vsel %vm6497, %v6912, %v6994
        %v6996 = vsel %vm6499, %v6915, %v6995
        %v6997 = vsel %vm6501, %v6918, %v6996
        %v6998 = vsel %vm6503, %v6921, %v6997
        %v6999 = vsel %vm6505, %v6924, %v6998
        %v7000 = vsel %vm6493, %v6907, %v6904
        %v7001 = vsel %vm6495, %v6910, %v7000
        %v7002 = vsel %vm6497, %v6913, %v7001
        %v7003 = vsel %vm6499, %v6916, %v7002
        %v7004 = vsel %vm6501, %v6919, %v7003
        %v7005 = vsel %vm6503, %v6922, %v7004
        %v7006 = vsel %vm6505, %v6925, %v7005
        %v7007 = vsel %vm6493, %v6908, %v6905
        %v7008 = vsel %vm6495, %v6911, %v7007
        %v7009 = vsel %vm6497, %v6914, %v7008
        %v7010 = vsel %vm6499, %v6917, %v7009
        %v7011 = vsel %vm6501, %v6920, %v7010
        %v7012 = vsel %vm6503, %v6923, %v7011
        %v7013 = vsel %vm6505, %v6926, %v7012
        %v7014 = vsel %vm6493, %v6930, %v6927
        %v7015 = vsel %vm6495, %v6933, %v7014
        %v7016 = vsel %vm6497, %v6936, %v7015
        %v7017 = vsel %vm6499, %v6939, %v7016
        %v7018 = vsel %vm6501, %v6942, %v7017
        %v7019 = vsel %vm6503, %v6945, %v7018
        %v7020 = vsel %vm6505, %v6948, %v7019
        %v7021 = vsel %vm6493, %v6931, %v6928
        %v7022 = vsel %vm6495, %v6934, %v7021
        %v7023 = vsel %vm6497, %v6937, %v7022
        %v7024 = vsel %vm6499, %v6940, %v7023
        %v7025 = vsel %vm6501, %v6943, %v7024
        %v7026 = vsel %vm6503, %v6946, %v7025
        %v7027 = vsel %vm6505, %v6949, %v7026
        %v7028 = vsel %vm6493, %v6932, %v6929
        %v7029 = vsel %vm6495, %v6935, %v7028
        %v7030 = vsel %vm6497, %v6938, %v7029
        %v7031 = vsel %vm6499, %v6941, %v7030
        %v7032 = vsel %vm6501, %v6944, %v7031
        %v7033 = vsel %vm6503, %v6947, %v7032
        %v7034 = vsel %vm6505, %v6950, %v7033
        %v7035 = vpack.c.b16 %v6978, %v6957
        %v7036 = vpack.c.b16 %v6985, %v6964
        %v7037 = vpack.c.b16 %v6992, %v6971
        %v7038 = vpack.c.b16 %v7020, %v6999
        %v7039 = vpack.c.b16 %v7027, %v7006
        %v7040 = vpack.c.b16 %v7034, %v7013
        %v7095 = vunpack.c.l.b16 %v6704
        %v7096 = vunpack.c.l.b16 %v6705
        %v7097 = vunpack.c.l.b16 %v6706
        %v7098 = vunpack.c.l.b16 %v6707
        %v7099 = vunpack.c.l.b16 %v6708
        %v7100 = vunpack.c.l.b16 %v6709
        %v7101 = vunpack.c.l.b16 %v6710
        %v7102 = vunpack.c.l.b16 %v6711
        %v7103 = vunpack.c.l.b16 %v6712
        %v7104 = vunpack.c.l.b16 %v6713
        %v7105 = vunpack.c.l.b16 %v6714
        %v7106 = vunpack.c.l.b16 %v6715
        %v7107 = vunpack.c.l.b16 %v6716
        %v7108 = vunpack.c.l.b16 %v6717
        %v7109 = vunpack.c.l.b16 %v6718
        %v7110 = vunpack.c.l.b16 %v6719
        %v7111 = vunpack.c.l.b16 %v6720
        %v7112 = vunpack.c.l.b16 %v6721
        %v7113 = vunpack.c.l.b16 %v6722
        %v7114 = vunpack.c.l.b16 %v6723
        %v7115 = vunpack.c.l.b16 %v6724
        %v7116 = vunpack.c.l.b16 %v6725
        %v7117 = vunpack.c.l.b16 %v6726
        %v7118 = vunpack.c.l.b16 %v6727
        %v7119 = vunpack.c.l.b16 %v6728
        %v7120 = vunpack.c.l.b16 %v6729
        %v7121 = vunpack.c.l.b16 %v6730
        %v7122 = vunpack.c.l.b16 %v6731
        %v7123 = vunpack.c.l.b16 %v6732
        %v7124 = vunpack.c.l.b16 %v6733
        %v7125 = vunpack.c.l.b16 %v6734
        %v7126 = vunpack.c.l.b16 %v6735
        %v7127 = vunpack.c.l.b16 %v6736
        %v7128 = vunpack.c.l.b16 %v6737
        %v7129 = vunpack.c.l.b16 %v6738
        %v7130 = vunpack.c.l.b16 %v6739
        %v7131 = vunpack.c.l.b16 %v6740
        %v7132 = vunpack.c.l.b16 %v6741
        %v7133 = vunpack.c.l.b16 %v6742
        %v7134 = vunpack.c.l.b16 %v6743
        %v7135 = vunpack.c.l.b16 %v6744
        %v7136 = vunpack.c.l.b16 %v6745
        %v7137 = vunpack.c.l.b16 %v6746
        %v7138 = vunpack.c.l.b16 %v6747
        %v7139 = vunpack.c.l.b16 %v6748
        %v7140 = vunpack.c.l.b16 %v6749
        %v7141 = vunpack.c.l.b16 %v6750
        %v7142 = vunpack.c.l.b16 %v6751
        %v7143 = vpack.c.b16 %v7096, %v7095
        %v7144 = vpack.c.b16 %v7098, %v7097
        %v7145 = vpack.c.b16 %v7100, %v7099
        %v7146 = vpack.c.b16 %v7102, %v7101
        %v7147 = vpack.c.b16 %v7104, %v7103
        %v7148 = vpack.c.b16 %v7106, %v7105
        %v7149 = vpack.c.b16 %v7108, %v7107
        %v7150 = vpack.c.b16 %v7110, %v7109
        %v7151 = vpack.c.b16 %v7112, %v7111
        %v7152 = vpack.c.b16 %v7114, %v7113
        %v7153 = vpack.c.b16 %v7116, %v7115
        %v7154 = vpack.c.b16 %v7118, %v7117
        %v7155 = vpack.c.b16 %v7120, %v7119
        %v7156 = vpack.c.b16 %v7122, %v7121
        %v7157 = vpack.c.b16 %v7124, %v7123
        %v7158 = vpack.c.b16 %v7126, %v7125
        %v7159 = vpack.c.b16 %v7128, %v7127
        %v7160 = vpack.c.b16 %v7130, %v7129
        %v7161 = vpack.c.b16 %v7132, %v7131
        %v7162 = vpack.c.b16 %v7134, %v7133
        %v7163 = vpack.c.b16 %v7136, %v7135
        %v7164 = vpack.c.b16 %v7138, %v7137
        %v7165 = vpack.c.b16 %v7140, %v7139
        %v7166 = vpack.c.b16 %v7142, %v7141
        %7191 = vmatprep.subr.bf16.mxu0 0
        %7192 = vmatpush1.bf16.msra.mxu0 %v7150
        %7193 = vmatprep.subr.bf16.mxu0 0
        %7194 = vmatpush1.bf16.msra.mxu0 %v7149
        %7195 = vmatprep.subr.bf16.mxu0 0
        %7196 = vmatpush1.bf16.msra.mxu0 %v7148
        %7197 = vmatprep.subr.bf16.mxu0 0
        %7198 = vmatpush1.bf16.msra.mxu0 %v7147
        %7199 = vmatprep.subr.bf16.mxu0 0
        %7200 = vmatpush1.bf16.msra.mxu0 %v7146
        %7201 = vmatprep.subr.bf16.mxu0 0
        %7202 = vmatpush1.bf16.msra.mxu0 %v7145
        %7203 = vmatprep.subr.bf16.mxu0 0
        %7204 = vmatpush1.bf16.msra.mxu0 %v7144
        %7205 = vmatprep.subr.bf16.mxu0 0
        %7206 = vmatpush1.bf16.msra.mxu0 %v7143
        %7207 = vmatprep.subr.bf16.mxu0 0
        %7208 = vmatpush2.bf16.msra.mxu0 %v7158
        %7209 = vmatprep.subr.bf16.mxu0 0
        %7210 = vmatpush2.bf16.msra.mxu0 %v7157
        %7211 = vmatprep.subr.bf16.mxu0 0
        %7212 = vmatpush2.bf16.msra.mxu0 %v7156
        %7213 = vmatprep.subr.bf16.mxu0 0
        %7214 = vmatpush2.bf16.msra.mxu0 %v7155
        %7215 = vmatprep.subr.bf16.mxu0 0
        %7216 = vmatpush2.bf16.msra.mxu0 %v7154
        %7217 = vmatprep.subr.bf16.mxu0 0
        %7218 = vmatpush2.bf16.msra.mxu0 %v7153
        %7219 = vmatprep.subr.bf16.mxu0 0
        %7220 = vmatpush2.bf16.msra.mxu0 %v7152
        %7221 = vmatprep.subr.bf16.mxu0 0
        %7222 = vmatpush2.bf16.msra.mxu0 %v7151
        %7223 = vmatprep.mubr.bf16.mxu0 %v7036
        %7224 = vmatmul.mubr.bf16.gmra.mxu0 %v7035
        %v7225 = vpop.f32.mrf.mxu0
        %v7226 = vadd.f32 %v6757, %v7225
        %v7227 = vpop.f32.mrf.mxu0
        %v7228 = vpop.f32.mrf.mxu0
        %v7229 = vadd.f32 %v6757, %v7228
        %v7230 = vpop.f32.mrf.mxu0
        %7231 = vmatprep.mubr.bf16.mxu0 %v7039
        %7232 = vmatmul.mubr.bf16.gmra.mxu0 %v7038
        %v7233 = vpop.f32.mrf.mxu0
        %v7234 = vadd.f32 %v6757, %v7233
        %v7235 = vpop.f32.mrf.mxu0
        %v7236 = vpop.f32.mrf.mxu0
        %v7237 = vadd.f32 %v6757, %v7236
        %v7238 = vpop.f32.mrf.mxu0
        %7239 = vdwg.mxu0
        %7240 = vmatprep.subr.bf16.mxu0 0
        %7241 = vmatpush1.bf16.msra.mxu0 %v7166
        %7242 = vmatprep.subr.bf16.mxu0 0
        %7243 = vmatpush1.bf16.msra.mxu0 %v7165
        %7244 = vmatprep.subr.bf16.mxu0 0
        %7245 = vmatpush1.bf16.msra.mxu0 %v7164
        %7246 = vmatprep.subr.bf16.mxu0 0
        %7247 = vmatpush1.bf16.msra.mxu0 %v7163
        %7248 = vmatprep.subr.bf16.mxu0 0
        %7249 = vmatpush1.bf16.msra.mxu0 %v7162
        %7250 = vmatprep.subr.bf16.mxu0 0
        %7251 = vmatpush1.bf16.msra.mxu0 %v7161
        %7252 = vmatprep.subr.bf16.mxu0 0
        %7253 = vmatpush1.bf16.msra.mxu0 %v7160
        %7254 = vmatprep.subr.bf16.mxu0 0
        %7255 = vmatpush1.bf16.msra.mxu0 %v7159
        %7256 = vmatprep.subr.bf16.mxu0 0
        %7257 = vmatpush2.bf16.msra.mxu0 0
        %7258 = vmatprep.subr.bf16.mxu0 0
        %7259 = vmatpush2.bf16.msra.mxu0 0
        %7260 = vmatprep.subr.bf16.mxu0 0
        %7261 = vmatpush2.bf16.msra.mxu0 0
        %7262 = vmatprep.subr.bf16.mxu0 0
        %7263 = vmatpush2.bf16.msra.mxu0 0
        %7264 = vmatprep.subr.bf16.mxu0 0
        %7265 = vmatpush2.bf16.msra.mxu0 0
        %7266 = vmatprep.subr.bf16.mxu0 0
        %7267 = vmatpush2.bf16.msra.mxu0 0
        %7268 = vmatprep.subr.bf16.mxu0 0
        %7269 = vmatpush2.bf16.msra.mxu0 0
        %7270 = vmatprep.subr.bf16.mxu0 0
        %7271 = vmatpush2.bf16.msra.mxu0 0
        %7272 = vmatprep.mubr.bf16.mxu0 0
        %7273 = vmatmul.mubr.bf16.gmra.mxu0 %v7037
        %v7274 = vpop.f32.mrf.mxu0
        %v7275 = vadd.f32 %v7226, %v7274
        %v7276 = vpop.f32.mrf.mxu0
        %v7277 = vpop.f32.mrf.mxu0
        %v7278 = vadd.f32 %v7229, %v7277
        %v7279 = vpop.f32.mrf.mxu0
        %7280 = vmatprep.mubr.bf16.mxu0 0
        %7281 = vmatmul.mubr.bf16.gmra.mxu0 %v7040
        %v7282 = vpop.f32.mrf.mxu0
        %v7283 = vadd.f32 %v7234, %v7282
        %v7284 = vpop.f32.mrf.mxu0
        %v7285 = vpop.f32.mrf.mxu0
        %v7286 = vadd.f32 %v7237, %v7285
        %v7287 = vpop.f32.mrf.mxu0
        %7288 = vdwg.mxu0
        %7289 = vmax.xlane.f32.xlu0 %v7275
        %v7290 = vpop.xlane.xlu0 %7289
        %7291 = vmax.xlane.f32.xlu0 %v7278
        %v7292 = vpop.xlane.xlu0 %7291
        %7293 = vmax.xlane.f32.xlu0 %v7283
        %v7294 = vpop.xlane.xlu0 %7293
        %7295 = vmax.xlane.f32.xlu0 %v7286
        %v7296 = vpop.xlane.xlu0 %7295
        %v7297 = vsub.f32 %v7275, %v7290
        %v7298 = vsub.f32 %v7278, %v7292
        %v7299 = vsub.f32 %v7283, %v7294
        %v7300 = vsub.f32 %v7286, %v7296
        %v7301 = vmul.f32 %v7297, 1.442695
        %v7302 = vpow.pop %v7301
        %v7303 = vmul.f32 %v7298, 1.442695
        %v7304 = vpow.pop %v7303
        %v7305 = vmul.f32 %v7299, 1.442695
        %v7306 = vpow.pop %v7305
        %v7307 = vmul.f32 %v7300, 1.442695
        %v7308 = vpow.pop %v7307
        %7309 = vadd.xlane.f32.xlu0 %v7302
        %v7310 = vpop.xlane.xlu0 %7309
        %7311 = vadd.xlane.f32.xlu0 %v7304
        %v7312 = vpop.xlane.xlu0 %7311
        %7313 = vadd.xlane.f32.xlu0 %v7306
        %v7314 = vpop.xlane.xlu0 %7313
        %7315 = vadd.xlane.f32.xlu0 %v7308
        %v7316 = vpop.xlane.xlu0 %7315
        %v7317 = vrcp.pop %v7310
        %v7318 = vrcp.pop %v7312
        %v7319 = vrcp.pop %v7314
        %v7320 = vrcp.pop %v7316
        %v7321 = vmul.f32 %v7302, %v7317
        %v7322 = vmul.f32 %v7304, %v7318
        %v7323 = vmul.f32 %v7306, %v7319
        %v7324 = vmul.f32 %v7308, %v7320
        %7325 = vst [vmem:[%s249] sm:$0xff] %v7321
        %7326 = vst [vmem:[%s249 + $0x8] sm:$0xff] %v7322
        %7327 = vst [vmem:[%s249 + $0x10] sm:$0xff] %v7323
        %7328 = vst [vmem:[%s249 + $0x18] sm:$0xff] %v7324
        %s7329 = sand.u32 %s142, 1
        %s7330 = scalar_lea.sflag [#allocation3], %s7329
        %s7331 = sand.u32 %s142, 1
        %s7332 = smul.addr %s7331, 32
        %s7333 = scalar_lea.vmem [#allocation2], %s7332
        %s7334 = sand.u32 %s168, 1
        %s7335 = scalar_lea.sflag [#allocation5], %s7334
        %s7336 = sand.u32 %s168, 1
        %s7337 = smul.addr %s7336, 96
        %s7338 = scalar_lea.vmem [#allocation4], %s7337
        // Predicated region
        $region41: #{tpu_custom_call.1} parent=39 // pred_check
          %p7339 = pneg %p152
        $region42: #{tpu_custom_call.1} parent=39 // pred_check_branch
          %7341 = sbr.rel (%p7339) target = $region44
        $region43: #{tpu_custom_call.1} parent=39 // pred_region
          %s7342 = smul.u32 4, %s24
          %s7344 = ssub.s32 512, 512
          %7345 = vsyncadd %s7330, %s7344
          %s7346 = smul.addr %s7342, 128
          %s7347 = scalar_lea.hbm %s5, %s7346
          %s7348 = sshll.u32 %s7333, 4
          %s7349 = int_to_ptr.vmem [resolvable:$true] %s7348
          %7354 = dma.vmem_to_hbm [thread:$0]  %s7349, 512, %s7347, %s7330, 128, 128, 8
        $region44: #{tpu_custom_call.1} parent=39 // pred_fallthru
          _
        // Predicated region
        $region45: #{tpu_custom_call.1} parent=39 // pred_check
          %p7355 = pneg %p178
        $region46: #{tpu_custom_call.1} parent=39 // pred_check_branch
          %7357 = sbr.rel (%p7355) target = $region48
        $region47: #{tpu_custom_call.1} parent=39 // pred_region
          %s7358 = smul.u32 4, %s24
          %s7360 = ssub.s32 1536, 1536
          %7361 = vsyncadd %s7335, %s7360
          %s7362 = smul.addr %s7358, 3
          %s7363 = smul.addr %s7362, 128
          %s7364 = scalar_lea.hbm %s6, %s7363
          %s7365 = sshll.u32 %s7338, 4
          %s7366 = int_to_ptr.vmem [resolvable:$true] %s7365
          %7371 = dma.vmem_to_hbm [thread:$0]  %s7366, 1536, %s7364, %s7335, 384, 384, 24
        $region48: #{tpu_custom_call.1} parent=39 // pred_fallthru
          _
      $region40: #{tpu_custom_call.1} parent=5 // pred_fallthru
        _
      %p7372 = scmp.le.s32.totalorder 2, %s19
      // Predicated region
      $region49: #{tpu_custom_call.1} parent=5 // pred_check
        %p7373 = pneg %p7372
      $region50: #{tpu_custom_call.1} parent=5 // pred_check_branch
        %7375 = sbr.rel (%p7373) target = $region52
      $region51: #{tpu_custom_call.1} parent=5 // pred_region
        %s7376 = ssub.s32 %s19, 2
        // Predicated region
        $region53: #{tpu_custom_call.1} parent=51 // pred_check
          %p7377 = pneg %p158
        $region54: #{tpu_custom_call.1} parent=51 // pred_check_branch
          %7379 = sbr.rel (%p7377) target = $region56
        $region55: #{tpu_custom_call.1} parent=51 // pred_region
          %s7380 = sand.u32 %s143, 1
          %s7381 = scalar_lea.sflag [#allocation3], %s7380
          %s7382 = sand.u32 %s143, 1
          %s7383 = smul.addr %s7382, 32
          %s7384 = scalar_lea.vmem [#allocation2], %s7383
          %7385 = dma.done %s7381, 512
        $region56: #{tpu_custom_call.1} parent=51 // pred_fallthru
          _
        // Predicated region
        $region57: #{tpu_custom_call.1} parent=51 // pred_check
          %p7386 = pneg %p184
        $region58: #{tpu_custom_call.1} parent=51 // pred_check_branch
          %7388 = sbr.rel (%p7386) target = $region60
        $region59: #{tpu_custom_call.1} parent=51 // pred_region
          %s7389 = sand.u32 %s169, 1
          %s7390 = scalar_lea.sflag [#allocation5], %s7389
          %s7391 = sand.u32 %s169, 1
          %s7392 = smul.addr %s7391, 96
          %s7393 = scalar_lea.vmem [#allocation4], %s7392
          %7394 = dma.done %s7390, 1536
        $region60: #{tpu_custom_call.1} parent=51 // pred_fallthru
          _
      $region52: #{tpu_custom_call.1} parent=5 // pred_fallthru
        _
    $region6: #{tpu_custom_call.1} parent=1 // loop_footer
      %s23 = sadd.s32 1, %s19
    $region7: #{tpu_custom_call.1} parent=1 // loop_footer_branch
      %18 = sbr.rel target = $region3
    $region8: #{tpu_custom_call.1} parent=1 // loop_exit
      _
    %7395 = vsyncpa [#allocation3], 1
    %s7396 = scalar_lea.sflag [#allocation3], 1
    %7397 = vsyncpa %s7396, 1
    %7398 = vsyncpa [#allocation5], 1
    %s7399 = scalar_lea.sflag [#allocation5], 1
    %7400 = vsyncpa %s7399, 1

</llo_original>
